<compile_context>
chip_gen: v6e
topology: v6e:2x2x1
jax: 0.10.0
libtpu: 0.0.40
codegen_flags: <defaults>
</compile_context>

<pallas_src>
import functools

import jax
import jax.numpy as jnp
from jax import lax
from jax.experimental import pallas as pl
from jax.experimental.pallas import tpu as pltpu


def _round_up(v, m):
    return ((v + m - 1) // m) * m


# ----------------------------------------------------------------------------
# Kernel 1: fused features
#   conv1 (VPU, chunked) + conv2 (single K=288 MXU dot) + bias/ReLU + max-pool
#   Row layout everywhere: r = h * W + w (image rows flattened), channels in lanes.
# ----------------------------------------------------------------------------
def _features_kernel(x_ref, w1_ref, b1_ref, w2_ref, b2_ref, o_ref, a1_ref, *,
                     k1, W, hp, R2, CH, n_chunks):
    w1 = w1_ref[...]                                     # (k1*k1, 32) f32
    b1 = b1_ref[...]                                     # (1, 32)     f32
    b2 = b2_ref[...]                                     # (1, 64)     f32

    # ---- conv1 (Cin=1): k1*k1 shifted VPU multiply-adds, chunked over rows
    #      to bound vreg live ranges (review item: conv1 vreg pressure). ------
    def conv1_chunk(i, carry):
        s0 = pl.multiple_of(i * CH, CH)
        acc = jnp.zeros((CH, 32), jnp.float32)
        for k in range(k1 * k1):
            di, dj = divmod(k, k1)
            xs = x_ref[0, pl.ds(s0 + di * W + dj, CH), :]           # (CH, 1)
            acc = acc + xs * w1[k:k + 1, :]
        a1_ref[pl.ds(s0, CH), :] = jnp.maximum(acc + b1, 0.0).astype(jnp.bfloat16)
        return carry

    lax.fori_loop(0, n_chunks, conv1_chunk, 0, unroll=True)

    # ---- conv2 (3x3, 32->64): one K=288 MXU dot on an in-register im2col.
    #      Rows with image-col >= valid width are garbage and never pooled. ---
    taps = []
    for k in range(9):
        di, dj = divmod(k, 3)
        taps.append(a1_ref[pl.ds(di * W + dj, R2), :])              # (R2, 32) bf16
    a_col = jnp.concatenate(taps, axis=1)                           # (R2, 288)
    c2 = jnp.dot(a_col, w2_ref[...], preferred_element_type=jnp.float32)
    c2 = jnp.maximum(c2 + b2, 0.0)                                  # (R2, 64) f32

    # ---- 2x2 / stride-2 max-pool on the value (no scratch, no strided loads),
    #      then a single lane-dense (hp, hp*64) store. ------------------------
    c2p = c2[:hp * 2 * W].reshape(hp, 2 * W, 64)                    # free reshape
    vm = jnp.maximum(c2p[:, 0:W, :], c2p[:, W:2 * W, :])            # max over h pairs
    hm = jnp.maximum(vm[:, 0:2 * hp, :], vm[:, 1:2 * hp + 1, :])    # max over adjacent w
    pooled = jnp.concatenate([hm[:, 2 * wp, :] for wp in range(hp)], axis=1)
    o_ref[0, :, :] = pooled.astype(o_ref.dtype)                     # (hp, hp*64) = (6, 384)


def features_forward(x_nchw, w1, b1, w2, b2, *, k1, dims):
    N, C, Hin, Win = x_nchw.shape
    assert C == 1 and Hin == Win
    W = Win
    h2, hp = dims["h2"], dims["hp"]
    R2 = h2 * W                               # conv2 output rows (r = h*W + w)
    CH = 64                                   # conv1 row-chunk size
    need_a1 = R2 + 2 * (W + 1)                # a1 rows needed by the 3x3 conv2 taps
    n_chunks = -(-need_a1 // CH)
    R1 = n_chunks * CH                        # a1 scratch rows (chunk-aligned)
    need_x = R1 + (k1 - 1) * (W + 1)          # flattened-x rows needed by conv1 taps
    rows = -(-need_x // W)
    pad_rows = max(rows - Hin, 0)
    XR = (Hin + pad_rows) * W

    x = x_nchw.reshape(N, Hin, W)
    if pad_rows:
        x = jnp.pad(x, ((0, 0), (0, pad_rows), (0, 0)))
    x = x.reshape(N, XR, 1)

    kern = functools.partial(_features_kernel, k1=k1, W=W, hp=hp, R2=R2,
                             CH=CH, n_chunks=n_chunks)
    # grid=(N,), "parallel": at batch>=2 both v7x TensorCores stay busy.
    # (Batching >1 image per step only pays off at larger N; kept at 1 here.)
    return pl.pallas_call(
        kern,
        out_shape=jax.ShapeDtypeStruct((N, hp, hp * 64), jnp.bfloat16),
        grid_spec=pltpu.PrefetchScalarGridSpec(
            num_scalar_prefetch=0,
            grid=(N,),
            in_specs=[
                pl.BlockSpec((1, XR, 1), lambda n: (n, 0, 0)),
                pl.BlockSpec((k1 * k1, 32), lambda n: (0, 0)),
                pl.BlockSpec((1, 32), lambda n: (0, 0)),
                pl.BlockSpec((9 * 32, 64), lambda n: (0, 0)),
                pl.BlockSpec((1, 64), lambda n: (0, 0)),
            ],
            out_specs=pl.BlockSpec((1, hp, hp * 64), lambda n: (n, 0, 0)),
            scratch_shapes=[pltpu.VMEM((R1, 32), jnp.bfloat16)],
        ),
        compiler_params=pltpu.CompilerParams(
            dimension_semantics=("parallel",),
            vmem_limit_bytes=32 * 1024 * 1024),
    )(x, w1, b1, w2, b2)


# ----------------------------------------------------------------------------
# Kernel 2: fused FC head  (fc1 + bias + ReLU + fc2 + bias + softmax)
#   Full-K / full-N tiles: both weight matrices live in VMEM, one grid step
#   per M tile (single step at small batch).
# ----------------------------------------------------------------------------
def _fc_head_kernel(x_ref, w1_ref, b1_ref, w2_ref, b2_ref, o_ref):
    h = jnp.dot(x_ref[...], w1_ref[...], preferred_element_type=jnp.float32)
    h = jnp.maximum(h + b1_ref[...], 0.0).astype(jnp.bfloat16)
    y = jnp.dot(h, w2_ref[...], preferred_element_type=jnp.float32) + b2_ref[...]
    y = y - jnp.max(y, axis=-1, keepdims=True)
    e = jnp.exp(y)
    o_ref[...] = (e * pl.reciprocal(jnp.sum(e, axis=-1, keepdims=True),
                                    approx=True)).astype(o_ref.dtype)


def fc_head_forward(x_flat, w1, b1, w2, b2):
    M, K = x_flat.shape
    H = w1.shape[1]
    NP = w2.shape[1]
    if M <= 256:
        tm, Mp = M, M                         # single M tile, no padding
    else:
        tm = 256                              # tile M; pad instead of hunting divisors
        Mp = _round_up(M, tm)
        if Mp != M:
            x_flat = jnp.pad(x_flat, ((0, Mp - M), (0, 0)))
    out = pl.pallas_call(
        _fc_head_kernel,
        out_shape=jax.ShapeDtypeStruct((Mp, NP), jnp.float32),
        grid_spec=pltpu.PrefetchScalarGridSpec(
            num_scalar_prefetch=0,
            grid=(Mp // tm,),
            in_specs=[
                pl.BlockSpec((tm, K), lambda i: (i, 0)),
                pl.BlockSpec((K, H), lambda i: (0, 0)),
                pl.BlockSpec((1, H), lambda i: (0, 0)),
                pl.BlockSpec((H, NP), lambda i: (0, 0)),
                pl.BlockSpec((1, NP), lambda i: (0, 0)),
            ],
            out_specs=pl.BlockSpec((tm, NP), lambda i: (i, 0)),
        ),
        compiler_params=pltpu.CompilerParams(
            dimension_semantics=("parallel",),
            vmem_limit_bytes=32 * 1024 * 1024),
    )(x_flat, w1, b1, w2, b2)
    return out[:M]


# ----------------------------------------------------------------------------
# Parameters (deterministic, synthetic), forward pass and pure-JAX reference
# ----------------------------------------------------------------------------
def init_params(key, n_input, n_output, w_size):
    h1 = n_input - w_size + 1          # after conv1
    h2 = h1 - 2                        # after conv2 (3x3)
    hp = h2 // 2                       # after maxpool
    flat = 64 * hp * hp
    n_pad = _round_up(max(n_output, 128), 128)

    ks = jax.random.split(key, 8)
    s = 0.05
    conv1_w = jax.random.normal(ks[0], (32, 1, w_size, w_size), jnp.float32) * s
    conv1_b = jax.random.normal(ks[1], (32,), jnp.float32) * s
    conv2_w = jax.random.normal(ks[2], (64, 32, 3, 3), jnp.float32) * s
    conv2_b = jax.random.normal(ks[3], (64,), jnp.float32) * s
    fc1_w_pt = jax.random.normal(ks[4], (flat, 512), jnp.float32) * s   # rows in NCHW-flat order
    fc1_b = jax.random.normal(ks[5], (512,), jnp.float32) * s
    fc2_w_pt = jax.random.normal(ks[6], (512, n_output), jnp.float32) * s
    fc2_b_pt = jax.random.normal(ks[7], (n_output,), jnp.float32) * s

    # conv1: (Cout,1,kh,kw) -> (kh*kw, Cout), row = di*kw + dj (f32, VPU path)
    w1 = jnp.transpose(conv1_w[:, 0, :, :], (1, 2, 0)).reshape(w_size * w_size, 32)
    # conv2: (Cout,Cin,3,3) -> (9*Cin, Cout), row = (3*di+dj)*32 + cin (bf16, MXU)
    w2 = jnp.transpose(conv2_w, (2, 3, 1, 0)).reshape(9 * 32, 64).astype(jnp.bfloat16)
    # fc1: absorb the kernel's (h, w, c) flatten order into the weight rows
    perm = jnp.transpose(jnp.arange(flat).reshape(64, hp, hp), (1, 2, 0)).reshape(flat)
    fc1_w = fc1_w_pt[perm].astype(jnp.bfloat16)
    # fc2: pad outputs to 128 lanes; padded columns: zero weight, -1e30 bias
    fc2_w = jnp.zeros((512, n_pad), jnp.float32).at[:, :n_output].set(fc2_w_pt)
    fc2_w = fc2_w.astype(jnp.bfloat16)
    fc2_b = jnp.full((n_pad,), -1e30, jnp.float32).at[:n_output].set(fc2_b_pt)

    params = dict(w1=w1, b1=conv1_b.reshape(1, 32),
                  w2=w2, b2=conv2_b.reshape(1, 64),
                  fc1_w=fc1_w, fc1_b=fc1_b.reshape(1, 512),
                  fc2_w=fc2_w, fc2_b=fc2_b.reshape(1, n_pad))
    raw = dict(conv1_w=conv1_w, conv1_b=conv1_b, conv2_w=conv2_w, conv2_b=conv2_b,
               fc1_w=fc1_w_pt, fc1_b=fc1_b, fc2_w=fc2_w_pt, fc2_b=fc2_b_pt)
    dims = dict(h1=h1, h2=h2, hp=hp, flat=flat, n_output=n_output, n_pad=n_pad)
    return params, raw, dims


def net_forward(x_nchw, params, *, dims, w_size):
    N = x_nchw.shape[0]
    # Conv1+ReLU+Conv2+ReLU+MaxPool fused; output is lane-dense (N, hp, hp*64) bf16.
    feats = features_forward(x_nchw, params["w1"], params["b1"],
                             params["w2"], params["b2"], k1=w_size, dims=dims)
    # Dropout(p=0.25): identity at inference time.
    # TODO(synk): training-mode dropout (random masking) not implemented.
    flat = feats.reshape(N, dims["flat"])                       # free reshape, no transpose
    probs = fc_head_forward(flat, params["fc1_w"], params["fc1_b"],
                            params["fc2_w"], params["fc2_b"])
    return probs[:, :dims["n_output"]]                          # drop lane padding


def net_reference(x_nchw, raw):
    """Pure-JAX (XLA) reference of the PyTorch module for correctness checking."""
    dn = ("NCHW", "OIHW", "NCHW")
    y = lax.conv_general_dilated(x_nchw, raw["conv1_w"], (1, 1), "VALID",
                                 dimension_numbers=dn)
    y = jnp.maximum(y + raw["conv1_b"][None, :, None, None], 0.0)
    y = lax.conv_general_dilated(y, raw["conv2_w"], (1, 1), "VALID",
                                 dimension_numbers=dn)
    y = jnp.maximum(y + raw["conv2_b"][None, :, None, None], 0.0)
    y = lax.reduce_window(y, -jnp.inf, lax.max, (1, 1, 2, 2), (1, 1, 2, 2), "VALID")
    flat = y.reshape(y.shape[0], -1)
    h = jnp.maximum(flat @ raw["fc1_w"] + raw["fc1_b"], 0.0)
    logits = h @ raw["fc2_w"] + raw["fc2_b"]
    return jax.nn.softmax(logits, axis=1)


if __name__ == "__main__":
    n_input, w_size, n_output, batch = 16, 3, 10, 2

    key = jax.random.PRNGKey(0)
    k_param, k_x = jax.random.split(key)
    params, raw, dims = init_params(k_param, n_input, n_output, w_size)

    x = jax.random.normal(k_x, (batch, 1, n_input, n_input), jnp.float32)

    fwd = jax.jit(functools.partial(net_forward, dims=dims, w_size=w_size))
    out = jax.block_until_ready(fwd(x, params))

    assert out.shape == (batch, n_output), out.shape
    assert bool(jnp.all(out >= 0.0))
    # softmax rows sum to ~1 (bf16 matmuls + approx EUP reciprocal)
    assert bool(jnp.allclose(jnp.sum(out, axis=1), 1.0, atol=1e-2)), jnp.sum(out, axis=1)

    # pure-JAX reference check (bf16 weights/activations + approx reciprocal
    # keep the kernel within a few 1e-4 of the f32 reference)
    ref = net_reference(x, raw)
    err = float(jnp.max(jnp.abs(out - ref)))
    assert err < 7e-3, f"max |pallas - reference| = {err}"

    print("KERNEL_OK")
</pallas_src>

<mosaic_0001>
module attributes {stable_mosaic.version = 11 : i64} {
  func.func @_features_kernel(%arg0: i32, %arg1: memref<1x304x1xf32, #tpu.memory_space<vmem>>, %arg2: memref<9x32xf32, #tpu.memory_space<vmem>>, %arg3: memref<1x32xf32, #tpu.memory_space<vmem>>, %arg4: memref<288x64xbf16, #tpu.memory_space<vmem>>, %arg5: memref<1x64xf32, #tpu.memory_space<vmem>>, %arg6: memref<1x6x384xbf16, #tpu.memory_space<vmem>>, %arg7: memref<256x32xbf16, #tpu.memory_space<vmem>>) attributes {dimension_semantics = [#tpu.dimension_semantics<parallel>], iteration_bounds = array<i64: 2>, scalar_prefetch = 0 : i64, scratch_operands = 1 : i64, tpu.core_type = #tpu.core_type<tc>, window_params = [{transform_indices = @transform_0, window_bounds = array<i64: 1, 304, 1>}, {pipeline_mode = #tpu.pipeline_mode<synchronous>, transform_indices = @transform_1, window_bounds = array<i64: 9, 32>}, {pipeline_mode = #tpu.pipeline_mode<synchronous>, transform_indices = @transform_2, window_bounds = array<i64: 1, 32>}, {pipeline_mode = #tpu.pipeline_mode<synchronous>, transform_indices = @transform_3, window_bounds = array<i64: 288, 64>}, {pipeline_mode = #tpu.pipeline_mode<synchronous>, transform_indices = @transform_4, window_bounds = array<i64: 1, 64>}, {transform_indices = @transform_5, window_bounds = array<i64: 1, 6, 384>}]} {
    %c0 = arith.constant 0 : index
    %c0_0 = arith.constant 0 : index
    %0 = vector.load %arg2[%c0, %c0_0] : memref<9x32xf32, #tpu.memory_space<vmem>>, vector<9x32xf32>
    %c0_1 = arith.constant 0 : index
    %c0_2 = arith.constant 0 : index
    %1 = vector.load %arg3[%c0_1, %c0_2] : memref<1x32xf32, #tpu.memory_space<vmem>>, vector<1x32xf32>
    %c0_3 = arith.constant 0 : index
    %c0_4 = arith.constant 0 : index
    %2 = vector.load %arg5[%c0_3, %c0_4] : memref<1x64xf32, #tpu.memory_space<vmem>>, vector<1x64xf32>
    %c0_i32 = arith.constant 0 : i32
    %c64_i32 = arith.constant 64 : i32
    %3 = arith.muli %c0_i32, %c64_i32 : i32
    %4 = tpu.assume_multiple %3, 64 : i32
    %cst = arith.constant 0.000000e+00 : f32
    %5 = vector.broadcast %cst : f32 to vector<64x32xf32>
    %c0_i32_5 = arith.constant 0 : i32
    %6 = arith.addi %4, %c0_i32_5 : i32
    %c0_i32_6 = arith.constant 0 : i32
    %7 = arith.addi %6, %c0_i32_6 : i32
    %c0_7 = arith.constant 0 : index
    %8 = arith.index_cast %7 : i32 to index
    %c0_8 = arith.constant 0 : index
    %9 = vector.load %arg1[%c0_7, %8, %c0_8] : memref<1x304x1xf32, #tpu.memory_space<vmem>>, vector<1x64x1xf32>
    %10 = vector.shape_cast %9 : vector<1x64x1xf32> to vector<64x1xf32>
    %11 = vector.extract_strided_slice %0 {offsets = [0, 0], sizes = [1, 32], strides = [1, 1]} : vector<9x32xf32> to vector<1x32xf32>
    %12 = vector.broadcast %10 : vector<64x1xf32> to vector<64x32xf32>
    %13 = vector.broadcast %11 : vector<1x32xf32> to vector<64x32xf32>
    %14 = arith.mulf %12, %13 : vector<64x32xf32>
    %15 = arith.addf %5, %14 : vector<64x32xf32>
    %c0_i32_9 = arith.constant 0 : i32
    %16 = arith.addi %4, %c0_i32_9 : i32
    %c1_i32 = arith.constant 1 : i32
    %17 = arith.addi %16, %c1_i32 : i32
    %c0_10 = arith.constant 0 : index
    %18 = arith.index_cast %17 : i32 to index
    %c0_11 = arith.constant 0 : index
    %19 = vector.load %arg1[%c0_10, %18, %c0_11] : memref<1x304x1xf32, #tpu.memory_space<vmem>>, vector<1x64x1xf32>
    %20 = vector.shape_cast %19 : vector<1x64x1xf32> to vector<64x1xf32>
    %21 = vector.extract_strided_slice %0 {offsets = [1, 0], sizes = [1, 32], strides = [1, 1]} : vector<9x32xf32> to vector<1x32xf32>
    %22 = vector.broadcast %20 : vector<64x1xf32> to vector<64x32xf32>
    %23 = vector.broadcast %21 : vector<1x32xf32> to vector<64x32xf32>
    %24 = arith.mulf %22, %23 : vector<64x32xf32>
    %25 = arith.addf %15, %24 : vector<64x32xf32>
    %c0_i32_12 = arith.constant 0 : i32
    %26 = arith.addi %4, %c0_i32_12 : i32
    %c2_i32 = arith.constant 2 : i32
    %27 = arith.addi %26, %c2_i32 : i32
    %c0_13 = arith.constant 0 : index
    %28 = arith.index_cast %27 : i32 to index
    %c0_14 = arith.constant 0 : index
    %29 = vector.load %arg1[%c0_13, %28, %c0_14] : memref<1x304x1xf32, #tpu.memory_space<vmem>>, vector<1x64x1xf32>
    %30 = vector.shape_cast %29 : vector<1x64x1xf32> to vector<64x1xf32>
    %31 = vector.extract_strided_slice %0 {offsets = [2, 0], sizes = [1, 32], strides = [1, 1]} : vector<9x32xf32> to vector<1x32xf32>
    %32 = vector.broadcast %30 : vector<64x1xf32> to vector<64x32xf32>
    %33 = vector.broadcast %31 : vector<1x32xf32> to vector<64x32xf32>
    %34 = arith.mulf %32, %33 : vector<64x32xf32>
    %35 = arith.addf %25, %34 : vector<64x32xf32>
    %c16_i32 = arith.constant 16 : i32
    %36 = arith.addi %4, %c16_i32 : i32
    %c0_i32_15 = arith.constant 0 : i32
    %37 = arith.addi %36, %c0_i32_15 : i32
    %c0_16 = arith.constant 0 : index
    %38 = arith.index_cast %37 : i32 to index
    %c0_17 = arith.constant 0 : index
    %39 = vector.load %arg1[%c0_16, %38, %c0_17] : memref<1x304x1xf32, #tpu.memory_space<vmem>>, vector<1x64x1xf32>
    %40 = vector.shape_cast %39 : vector<1x64x1xf32> to vector<64x1xf32>
    %41 = vector.extract_strided_slice %0 {offsets = [3, 0], sizes = [1, 32], strides = [1, 1]} : vector<9x32xf32> to vector<1x32xf32>
    %42 = vector.broadcast %40 : vector<64x1xf32> to vector<64x32xf32>
    %43 = vector.broadcast %41 : vector<1x32xf32> to vector<64x32xf32>
    %44 = arith.mulf %42, %43 : vector<64x32xf32>
    %45 = arith.addf %35, %44 : vector<64x32xf32>
    %c16_i32_18 = arith.constant 16 : i32
    %46 = arith.addi %4, %c16_i32_18 : i32
    %c1_i32_19 = arith.constant 1 : i32
    %47 = arith.addi %46, %c1_i32_19 : i32
    %c0_20 = arith.constant 0 : index
    %48 = arith.index_cast %47 : i32 to index
    %c0_21 = arith.constant 0 : index
    %49 = vector.load %arg1[%c0_20, %48, %c0_21] : memref<1x304x1xf32, #tpu.memory_space<vmem>>, vector<1x64x1xf32>
    %50 = vector.shape_cast %49 : vector<1x64x1xf32> to vector<64x1xf32>
    %51 = vector.extract_strided_slice %0 {offsets = [4, 0], sizes = [1, 32], strides = [1, 1]} : vector<9x32xf32> to vector<1x32xf32>
    %52 = vector.broadcast %50 : vector<64x1xf32> to vector<64x32xf32>
    %53 = vector.broadcast %51 : vector<1x32xf32> to vector<64x32xf32>
    %54 = arith.mulf %52, %53 : vector<64x32xf32>
    %55 = arith.addf %45, %54 : vector<64x32xf32>
    %c16_i32_22 = arith.constant 16 : i32
    %56 = arith.addi %4, %c16_i32_22 : i32
    %c2_i32_23 = arith.constant 2 : i32
    %57 = arith.addi %56, %c2_i32_23 : i32
    %c0_24 = arith.constant 0 : index
    %58 = arith.index_cast %57 : i32 to index
    %c0_25 = arith.constant 0 : index
    %59 = vector.load %arg1[%c0_24, %58, %c0_25] : memref<1x304x1xf32, #tpu.memory_space<vmem>>, vector<1x64x1xf32>
    %60 = vector.shape_cast %59 : vector<1x64x1xf32> to vector<64x1xf32>
    %61 = vector.extract_strided_slice %0 {offsets = [5, 0], sizes = [1, 32], strides = [1, 1]} : vector<9x32xf32> to vector<1x32xf32>
    %62 = vector.broadcast %60 : vector<64x1xf32> to vector<64x32xf32>
    %63 = vector.broadcast %61 : vector<1x32xf32> to vector<64x32xf32>
    %64 = arith.mulf %62, %63 : vector<64x32xf32>
    %65 = arith.addf %55, %64 : vector<64x32xf32>
    %c32_i32 = arith.constant 32 : i32
    %66 = arith.addi %4, %c32_i32 : i32
    %c0_i32_26 = arith.constant 0 : i32
    %67 = arith.addi %66, %c0_i32_26 : i32
    %c0_27 = arith.constant 0 : index
    %68 = arith.index_cast %67 : i32 to index
    %c0_28 = arith.constant 0 : index
    %69 = vector.load %arg1[%c0_27, %68, %c0_28] : memref<1x304x1xf32, #tpu.memory_space<vmem>>, vector<1x64x1xf32>
    %70 = vector.shape_cast %69 : vector<1x64x1xf32> to vector<64x1xf32>
    %71 = vector.extract_strided_slice %0 {offsets = [6, 0], sizes = [1, 32], strides = [1, 1]} : vector<9x32xf32> to vector<1x32xf32>
    %72 = vector.broadcast %70 : vector<64x1xf32> to vector<64x32xf32>
    %73 = vector.broadcast %71 : vector<1x32xf32> to vector<64x32xf32>
    %74 = arith.mulf %72, %73 : vector<64x32xf32>
    %75 = arith.addf %65, %74 : vector<64x32xf32>
    %c32_i32_29 = arith.constant 32 : i32
    %76 = arith.addi %4, %c32_i32_29 : i32
    %c1_i32_30 = arith.constant 1 : i32
    %77 = arith.addi %76, %c1_i32_30 : i32
    %c0_31 = arith.constant 0 : index
    %78 = arith.index_cast %77 : i32 to index
    %c0_32 = arith.constant 0 : index
    %79 = vector.load %arg1[%c0_31, %78, %c0_32] : memref<1x304x1xf32, #tpu.memory_space<vmem>>, vector<1x64x1xf32>
    %80 = vector.shape_cast %79 : vector<1x64x1xf32> to vector<64x1xf32>
    %81 = vector.extract_strided_slice %0 {offsets = [7, 0], sizes = [1, 32], strides = [1, 1]} : vector<9x32xf32> to vector<1x32xf32>
    %82 = vector.broadcast %80 : vector<64x1xf32> to vector<64x32xf32>
    %83 = vector.broadcast %81 : vector<1x32xf32> to vector<64x32xf32>
    %84 = arith.mulf %82, %83 : vector<64x32xf32>
    %85 = arith.addf %75, %84 : vector<64x32xf32>
    %c32_i32_33 = arith.constant 32 : i32
    %86 = arith.addi %4, %c32_i32_33 : i32
    %c2_i32_34 = arith.constant 2 : i32
    %87 = arith.addi %86, %c2_i32_34 : i32
    %c0_35 = arith.constant 0 : index
    %88 = arith.index_cast %87 : i32 to index
    %c0_36 = arith.constant 0 : index
    %89 = vector.load %arg1[%c0_35, %88, %c0_36] : memref<1x304x1xf32, #tpu.memory_space<vmem>>, vector<1x64x1xf32>
    %90 = vector.shape_cast %89 : vector<1x64x1xf32> to vector<64x1xf32>
    %91 = vector.extract_strided_slice %0 {offsets = [8, 0], sizes = [1, 32], strides = [1, 1]} : vector<9x32xf32> to vector<1x32xf32>
    %92 = vector.broadcast %90 : vector<64x1xf32> to vector<64x32xf32>
    %93 = vector.broadcast %91 : vector<1x32xf32> to vector<64x32xf32>
    %94 = arith.mulf %92, %93 : vector<64x32xf32>
    %95 = arith.addf %85, %94 : vector<64x32xf32>
    %96 = vector.broadcast %1 : vector<1x32xf32> to vector<64x32xf32>
    %97 = arith.addf %95, %96 : vector<64x32xf32>
    %cst_37 = arith.constant 0.000000e+00 : f32
    %98 = vector.broadcast %cst_37 : f32 to vector<64x32xf32>
    %99 = arith.maximumf %97, %98 : vector<64x32xf32>
    %100 = arith.truncf %99 : vector<64x32xf32> to vector<64x32xbf16>
    %101 = arith.index_cast %4 : i32 to index
    %c0_38 = arith.constant 0 : index
    %102 = vector.load %arg7[%101, %c0_38] : memref<256x32xbf16, #tpu.memory_space<vmem>>, vector<64x32xbf16>
    tpu.vector_store %arg7[%101, %c0_38], %100 {strides = array<i32>} : memref<256x32xbf16, #tpu.memory_space<vmem>>, vector<64x32xbf16>,
    %c1_i32_39 = arith.constant 1 : i32
    %c64_i32_40 = arith.constant 64 : i32
    %103 = arith.muli %c1_i32_39, %c64_i32_40 : i32
    %104 = tpu.assume_multiple %103, 64 : i32
    %cst_41 = arith.constant 0.000000e+00 : f32
    %105 = vector.broadcast %cst_41 : f32 to vector<64x32xf32>
    %c0_i32_42 = arith.constant 0 : i32
    %106 = arith.addi %104, %c0_i32_42 : i32
    %c0_i32_43 = arith.constant 0 : i32
    %107 = arith.addi %106, %c0_i32_43 : i32
    %c0_44 = arith.constant 0 : index
    %108 = arith.index_cast %107 : i32 to index
    %c0_45 = arith.constant 0 : index
    %109 = vector.load %arg1[%c0_44, %108, %c0_45] : memref<1x304x1xf32, #tpu.memory_space<vmem>>, vector<1x64x1xf32>
    %110 = vector.shape_cast %109 : vector<1x64x1xf32> to vector<64x1xf32>
    %111 = vector.extract_strided_slice %0 {offsets = [0, 0], sizes = [1, 32], strides = [1, 1]} : vector<9x32xf32> to vector<1x32xf32>
    %112 = vector.broadcast %110 : vector<64x1xf32> to vector<64x32xf32>
    %113 = vector.broadcast %111 : vector<1x32xf32> to vector<64x32xf32>
    %114 = arith.mulf %112, %113 : vector<64x32xf32>
    %115 = arith.addf %105, %114 : vector<64x32xf32>
    %c0_i32_46 = arith.constant 0 : i32
    %116 = arith.addi %104, %c0_i32_46 : i32
    %c1_i32_47 = arith.constant 1 : i32
    %117 = arith.addi %116, %c1_i32_47 : i32
    %c0_48 = arith.constant 0 : index
    %118 = arith.index_cast %117 : i32 to index
    %c0_49 = arith.constant 0 : index
    %119 = vector.load %arg1[%c0_48, %118, %c0_49] : memref<1x304x1xf32, #tpu.memory_space<vmem>>, vector<1x64x1xf32>
    %120 = vector.shape_cast %119 : vector<1x64x1xf32> to vector<64x1xf32>
    %121 = vector.extract_strided_slice %0 {offsets = [1, 0], sizes = [1, 32], strides = [1, 1]} : vector<9x32xf32> to vector<1x32xf32>
    %122 = vector.broadcast %120 : vector<64x1xf32> to vector<64x32xf32>
    %123 = vector.broadcast %121 : vector<1x32xf32> to vector<64x32xf32>
    %124 = arith.mulf %122, %123 : vector<64x32xf32>
    %125 = arith.addf %115, %124 : vector<64x32xf32>
    %c0_i32_50 = arith.constant 0 : i32
    %126 = arith.addi %104, %c0_i32_50 : i32
    %c2_i32_51 = arith.constant 2 : i32
    %127 = arith.addi %126, %c2_i32_51 : i32
    %c0_52 = arith.constant 0 : index
    %128 = arith.index_cast %127 : i32 to index
    %c0_53 = arith.constant 0 : index
    %129 = vector.load %arg1[%c0_52, %128, %c0_53] : memref<1x304x1xf32, #tpu.memory_space<vmem>>, vector<1x64x1xf32>
    %130 = vector.shape_cast %129 : vector<1x64x1xf32> to vector<64x1xf32>
    %131 = vector.extract_strided_slice %0 {offsets = [2, 0], sizes = [1, 32], strides = [1, 1]} : vector<9x32xf32> to vector<1x32xf32>
    %132 = vector.broadcast %130 : vector<64x1xf32> to vector<64x32xf32>
    %133 = vector.broadcast %131 : vector<1x32xf32> to vector<64x32xf32>
    %134 = arith.mulf %132, %133 : vector<64x32xf32>
    %135 = arith.addf %125, %134 : vector<64x32xf32>
    %c16_i32_54 = arith.constant 16 : i32
    %136 = arith.addi %104, %c16_i32_54 : i32
    %c0_i32_55 = arith.constant 0 : i32
    %137 = arith.addi %136, %c0_i32_55 : i32
    %c0_56 = arith.constant 0 : index
    %138 = arith.index_cast %137 : i32 to index
    %c0_57 = arith.constant 0 : index
    %139 = vector.load %arg1[%c0_56, %138, %c0_57] : memref<1x304x1xf32, #tpu.memory_space<vmem>>, vector<1x64x1xf32>
    %140 = vector.shape_cast %139 : vector<1x64x1xf32> to vector<64x1xf32>
    %141 = vector.extract_strided_slice %0 {offsets = [3, 0], sizes = [1, 32], strides = [1, 1]} : vector<9x32xf32> to vector<1x32xf32>
    %142 = vector.broadcast %140 : vector<64x1xf32> to vector<64x32xf32>
    %143 = vector.broadcast %141 : vector<1x32xf32> to vector<64x32xf32>
    %144 = arith.mulf %142, %143 : vector<64x32xf32>
    %145 = arith.addf %135, %144 : vector<64x32xf32>
    %c16_i32_58 = arith.constant 16 : i32
    %146 = arith.addi %104, %c16_i32_58 : i32
    %c1_i32_59 = arith.constant 1 : i32
    %147 = arith.addi %146, %c1_i32_59 : i32
    %c0_60 = arith.constant 0 : index
    %148 = arith.index_cast %147 : i32 to index
    %c0_61 = arith.constant 0 : index
    %149 = vector.load %arg1[%c0_60, %148, %c0_61] : memref<1x304x1xf32, #tpu.memory_space<vmem>>, vector<1x64x1xf32>
    %150 = vector.shape_cast %149 : vector<1x64x1xf32> to vector<64x1xf32>
    %151 = vector.extract_strided_slice %0 {offsets = [4, 0], sizes = [1, 32], strides = [1, 1]} : vector<9x32xf32> to vector<1x32xf32>
    %152 = vector.broadcast %150 : vector<64x1xf32> to vector<64x32xf32>
    %153 = vector.broadcast %151 : vector<1x32xf32> to vector<64x32xf32>
    %154 = arith.mulf %152, %153 : vector<64x32xf32>
    %155 = arith.addf %145, %154 : vector<64x32xf32>
    %c16_i32_62 = arith.constant 16 : i32
    %156 = arith.addi %104, %c16_i32_62 : i32
    %c2_i32_63 = arith.constant 2 : i32
    %157 = arith.addi %156, %c2_i32_63 : i32
    %c0_64 = arith.constant 0 : index
    %158 = arith.index_cast %157 : i32 to index
    %c0_65 = arith.constant 0 : index
    %159 = vector.load %arg1[%c0_64, %158, %c0_65] : memref<1x304x1xf32, #tpu.memory_space<vmem>>, vector<1x64x1xf32>
    %160 = vector.shape_cast %159 : vector<1x64x1xf32> to vector<64x1xf32>
    %161 = vector.extract_strided_slice %0 {offsets = [5, 0], sizes = [1, 32], strides = [1, 1]} : vector<9x32xf32> to vector<1x32xf32>
    %162 = vector.broadcast %160 : vector<64x1xf32> to vector<64x32xf32>
    %163 = vector.broadcast %161 : vector<1x32xf32> to vector<64x32xf32>
    %164 = arith.mulf %162, %163 : vector<64x32xf32>
    %165 = arith.addf %155, %164 : vector<64x32xf32>
    %c32_i32_66 = arith.constant 32 : i32
    %166 = arith.addi %104, %c32_i32_66 : i32
    %c0_i32_67 = arith.constant 0 : i32
    %167 = arith.addi %166, %c0_i32_67 : i32
    %c0_68 = arith.constant 0 : index
    %168 = arith.index_cast %167 : i32 to index
    %c0_69 = arith.constant 0 : index
    %169 = vector.load %arg1[%c0_68, %168, %c0_69] : memref<1x304x1xf32, #tpu.memory_space<vmem>>, vector<1x64x1xf32>
    %170 = vector.shape_cast %169 : vector<1x64x1xf32> to vector<64x1xf32>
    %171 = vector.extract_strided_slice %0 {offsets = [6, 0], sizes = [1, 32], strides = [1, 1]} : vector<9x32xf32> to vector<1x32xf32>
    %172 = vector.broadcast %170 : vector<64x1xf32> to vector<64x32xf32>
    %173 = vector.broadcast %171 : vector<1x32xf32> to vector<64x32xf32>
    %174 = arith.mulf %172, %173 : vector<64x32xf32>
    %175 = arith.addf %165, %174 : vector<64x32xf32>
    %c32_i32_70 = arith.constant 32 : i32
    %176 = arith.addi %104, %c32_i32_70 : i32
    %c1_i32_71 = arith.constant 1 : i32
    %177 = arith.addi %176, %c1_i32_71 : i32
    %c0_72 = arith.constant 0 : index
    %178 = arith.index_cast %177 : i32 to index
    %c0_73 = arith.constant 0 : index
    %179 = vector.load %arg1[%c0_72, %178, %c0_73] : memref<1x304x1xf32, #tpu.memory_space<vmem>>, vector<1x64x1xf32>
    %180 = vector.shape_cast %179 : vector<1x64x1xf32> to vector<64x1xf32>
    %181 = vector.extract_strided_slice %0 {offsets = [7, 0], sizes = [1, 32], strides = [1, 1]} : vector<9x32xf32> to vector<1x32xf32>
    %182 = vector.broadcast %180 : vector<64x1xf32> to vector<64x32xf32>
    %183 = vector.broadcast %181 : vector<1x32xf32> to vector<64x32xf32>
    %184 = arith.mulf %182, %183 : vector<64x32xf32>
    %185 = arith.addf %175, %184 : vector<64x32xf32>
    %c32_i32_74 = arith.constant 32 : i32
    %186 = arith.addi %104, %c32_i32_74 : i32
    %c2_i32_75 = arith.constant 2 : i32
    %187 = arith.addi %186, %c2_i32_75 : i32
    %c0_76 = arith.constant 0 : index
    %188 = arith.index_cast %187 : i32 to index
    %c0_77 = arith.constant 0 : index
    %189 = vector.load %arg1[%c0_76, %188, %c0_77] : memref<1x304x1xf32, #tpu.memory_space<vmem>>, vector<1x64x1xf32>
    %190 = vector.shape_cast %189 : vector<1x64x1xf32> to vector<64x1xf32>
    %191 = vector.extract_strided_slice %0 {offsets = [8, 0], sizes = [1, 32], strides = [1, 1]} : vector<9x32xf32> to vector<1x32xf32>
    %192 = vector.broadcast %190 : vector<64x1xf32> to vector<64x32xf32>
    %193 = vector.broadcast %191 : vector<1x32xf32> to vector<64x32xf32>
    %194 = arith.mulf %192, %193 : vector<64x32xf32>
    %195 = arith.addf %185, %194 : vector<64x32xf32>
    %196 = vector.broadcast %1 : vector<1x32xf32> to vector<64x32xf32>
    %197 = arith.addf %195, %196 : vector<64x32xf32>
    %cst_78 = arith.constant 0.000000e+00 : f32
    %198 = vector.broadcast %cst_78 : f32 to vector<64x32xf32>
    %199 = arith.maximumf %197, %198 : vector<64x32xf32>
    %200 = arith.truncf %199 : vector<64x32xf32> to vector<64x32xbf16>
    %201 = arith.index_cast %104 : i32 to index
    %c0_79 = arith.constant 0 : index
    %202 = vector.load %arg7[%201, %c0_79] : memref<256x32xbf16, #tpu.memory_space<vmem>>, vector<64x32xbf16>
    tpu.vector_store %arg7[%201, %c0_79], %200 {strides = array<i32>} : memref<256x32xbf16, #tpu.memory_space<vmem>>, vector<64x32xbf16>,
    %c2_i32_80 = arith.constant 2 : i32
    %c64_i32_81 = arith.constant 64 : i32
    %203 = arith.muli %c2_i32_80, %c64_i32_81 : i32
    %204 = tpu.assume_multiple %203, 64 : i32
    %cst_82 = arith.constant 0.000000e+00 : f32
    %205 = vector.broadcast %cst_82 : f32 to vector<64x32xf32>
    %c0_i32_83 = arith.constant 0 : i32
    %206 = arith.addi %204, %c0_i32_83 : i32
    %c0_i32_84 = arith.constant 0 : i32
    %207 = arith.addi %206, %c0_i32_84 : i32
    %c0_85 = arith.constant 0 : index
    %208 = arith.index_cast %207 : i32 to index
    %c0_86 = arith.constant 0 : index
    %209 = vector.load %arg1[%c0_85, %208, %c0_86] : memref<1x304x1xf32, #tpu.memory_space<vmem>>, vector<1x64x1xf32>
    %210 = vector.shape_cast %209 : vector<1x64x1xf32> to vector<64x1xf32>
    %211 = vector.extract_strided_slice %0 {offsets = [0, 0], sizes = [1, 32], strides = [1, 1]} : vector<9x32xf32> to vector<1x32xf32>
    %212 = vector.broadcast %210 : vector<64x1xf32> to vector<64x32xf32>
    %213 = vector.broadcast %211 : vector<1x32xf32> to vector<64x32xf32>
    %214 = arith.mulf %212, %213 : vector<64x32xf32>
    %215 = arith.addf %205, %214 : vector<64x32xf32>
    %c0_i32_87 = arith.constant 0 : i32
    %216 = arith.addi %204, %c0_i32_87 : i32
    %c1_i32_88 = arith.constant 1 : i32
    %217 = arith.addi %216, %c1_i32_88 : i32
    %c0_89 = arith.constant 0 : index
    %218 = arith.index_cast %217 : i32 to index
    %c0_90 = arith.constant 0 : index
    %219 = vector.load %arg1[%c0_89, %218, %c0_90] : memref<1x304x1xf32, #tpu.memory_space<vmem>>, vector<1x64x1xf32>
    %220 = vector.shape_cast %219 : vector<1x64x1xf32> to vector<64x1xf32>
    %221 = vector.extract_strided_slice %0 {offsets = [1, 0], sizes = [1, 32], strides = [1, 1]} : vector<9x32xf32> to vector<1x32xf32>
    %222 = vector.broadcast %220 : vector<64x1xf32> to vector<64x32xf32>
    %223 = vector.broadcast %221 : vector<1x32xf32> to vector<64x32xf32>
    %224 = arith.mulf %222, %223 : vector<64x32xf32>
    %225 = arith.addf %215, %224 : vector<64x32xf32>
    %c0_i32_91 = arith.constant 0 : i32
    %226 = arith.addi %204, %c0_i32_91 : i32
    %c2_i32_92 = arith.constant 2 : i32
    %227 = arith.addi %226, %c2_i32_92 : i32
    %c0_93 = arith.constant 0 : index
    %228 = arith.index_cast %227 : i32 to index
    %c0_94 = arith.constant 0 : index
    %229 = vector.load %arg1[%c0_93, %228, %c0_94] : memref<1x304x1xf32, #tpu.memory_space<vmem>>, vector<1x64x1xf32>
    %230 = vector.shape_cast %229 : vector<1x64x1xf32> to vector<64x1xf32>
    %231 = vector.extract_strided_slice %0 {offsets = [2, 0], sizes = [1, 32], strides = [1, 1]} : vector<9x32xf32> to vector<1x32xf32>
    %232 = vector.broadcast %230 : vector<64x1xf32> to vector<64x32xf32>
    %233 = vector.broadcast %231 : vector<1x32xf32> to vector<64x32xf32>
    %234 = arith.mulf %232, %233 : vector<64x32xf32>
    %235 = arith.addf %225, %234 : vector<64x32xf32>
    %c16_i32_95 = arith.constant 16 : i32
    %236 = arith.addi %204, %c16_i32_95 : i32
    %c0_i32_96 = arith.constant 0 : i32
    %237 = arith.addi %236, %c0_i32_96 : i32
    %c0_97 = arith.constant 0 : index
    %238 = arith.index_cast %237 : i32 to index
    %c0_98 = arith.constant 0 : index
    %239 = vector.load %arg1[%c0_97, %238, %c0_98] : memref<1x304x1xf32, #tpu.memory_space<vmem>>, vector<1x64x1xf32>
    %240 = vector.shape_cast %239 : vector<1x64x1xf32> to vector<64x1xf32>
    %241 = vector.extract_strided_slice %0 {offsets = [3, 0], sizes = [1, 32], strides = [1, 1]} : vector<9x32xf32> to vector<1x32xf32>
    %242 = vector.broadcast %240 : vector<64x1xf32> to vector<64x32xf32>
    %243 = vector.broadcast %241 : vector<1x32xf32> to vector<64x32xf32>
    %244 = arith.mulf %242, %243 : vector<64x32xf32>
    %245 = arith.addf %235, %244 : vector<64x32xf32>
    %c16_i32_99 = arith.constant 16 : i32
    %246 = arith.addi %204, %c16_i32_99 : i32
    %c1_i32_100 = arith.constant 1 : i32
    %247 = arith.addi %246, %c1_i32_100 : i32
    %c0_101 = arith.constant 0 : index
    %248 = arith.index_cast %247 : i32 to index
    %c0_102 = arith.constant 0 : index
    %249 = vector.load %arg1[%c0_101, %248, %c0_102] : memref<1x304x1xf32, #tpu.memory_space<vmem>>, vector<1x64x1xf32>
    %250 = vector.shape_cast %249 : vector<1x64x1xf32> to vector<64x1xf32>
    %251 = vector.extract_strided_slice %0 {offsets = [4, 0], sizes = [1, 32], strides = [1, 1]} : vector<9x32xf32> to vector<1x32xf32>
    %252 = vector.broadcast %250 : vector<64x1xf32> to vector<64x32xf32>
    %253 = vector.broadcast %251 : vector<1x32xf32> to vector<64x32xf32>
    %254 = arith.mulf %252, %253 : vector<64x32xf32>
    %255 = arith.addf %245, %254 : vector<64x32xf32>
    %c16_i32_103 = arith.constant 16 : i32
    %256 = arith.addi %204, %c16_i32_103 : i32
    %c2_i32_104 = arith.constant 2 : i32
    %257 = arith.addi %256, %c2_i32_104 : i32
    %c0_105 = arith.constant 0 : index
    %258 = arith.index_cast %257 : i32 to index
    %c0_106 = arith.constant 0 : index
    %259 = vector.load %arg1[%c0_105, %258, %c0_106] : memref<1x304x1xf32, #tpu.memory_space<vmem>>, vector<1x64x1xf32>
    %260 = vector.shape_cast %259 : vector<1x64x1xf32> to vector<64x1xf32>
    %261 = vector.extract_strided_slice %0 {offsets = [5, 0], sizes = [1, 32], strides = [1, 1]} : vector<9x32xf32> to vector<1x32xf32>
    %262 = vector.broadcast %260 : vector<64x1xf32> to vector<64x32xf32>
    %263 = vector.broadcast %261 : vector<1x32xf32> to vector<64x32xf32>
    %264 = arith.mulf %262, %263 : vector<64x32xf32>
    %265 = arith.addf %255, %264 : vector<64x32xf32>
    %c32_i32_107 = arith.constant 32 : i32
    %266 = arith.addi %204, %c32_i32_107 : i32
    %c0_i32_108 = arith.constant 0 : i32
    %267 = arith.addi %266, %c0_i32_108 : i32
    %c0_109 = arith.constant 0 : index
    %268 = arith.index_cast %267 : i32 to index
    %c0_110 = arith.constant 0 : index
    %269 = vector.load %arg1[%c0_109, %268, %c0_110] : memref<1x304x1xf32, #tpu.memory_space<vmem>>, vector<1x64x1xf32>
    %270 = vector.shape_cast %269 : vector<1x64x1xf32> to vector<64x1xf32>
    %271 = vector.extract_strided_slice %0 {offsets = [6, 0], sizes = [1, 32], strides = [1, 1]} : vector<9x32xf32> to vector<1x32xf32>
    %272 = vector.broadcast %270 : vector<64x1xf32> to vector<64x32xf32>
    %273 = vector.broadcast %271 : vector<1x32xf32> to vector<64x32xf32>
    %274 = arith.mulf %272, %273 : vector<64x32xf32>
    %275 = arith.addf %265, %274 : vector<64x32xf32>
    %c32_i32_111 = arith.constant 32 : i32
    %276 = arith.addi %204, %c32_i32_111 : i32
    %c1_i32_112 = arith.constant 1 : i32
    %277 = arith.addi %276, %c1_i32_112 : i32
    %c0_113 = arith.constant 0 : index
    %278 = arith.index_cast %277 : i32 to index
    %c0_114 = arith.constant 0 : index
    %279 = vector.load %arg1[%c0_113, %278, %c0_114] : memref<1x304x1xf32, #tpu.memory_space<vmem>>, vector<1x64x1xf32>
    %280 = vector.shape_cast %279 : vector<1x64x1xf32> to vector<64x1xf32>
    %281 = vector.extract_strided_slice %0 {offsets = [7, 0], sizes = [1, 32], strides = [1, 1]} : vector<9x32xf32> to vector<1x32xf32>
    %282 = vector.broadcast %280 : vector<64x1xf32> to vector<64x32xf32>
    %283 = vector.broadcast %281 : vector<1x32xf32> to vector<64x32xf32>
    %284 = arith.mulf %282, %283 : vector<64x32xf32>
    %285 = arith.addf %275, %284 : vector<64x32xf32>
    %c32_i32_115 = arith.constant 32 : i32
    %286 = arith.addi %204, %c32_i32_115 : i32
    %c2_i32_116 = arith.constant 2 : i32
    %287 = arith.addi %286, %c2_i32_116 : i32
    %c0_117 = arith.constant 0 : index
    %288 = arith.index_cast %287 : i32 to index
    %c0_118 = arith.constant 0 : index
    %289 = vector.load %arg1[%c0_117, %288, %c0_118] : memref<1x304x1xf32, #tpu.memory_space<vmem>>, vector<1x64x1xf32>
    %290 = vector.shape_cast %289 : vector<1x64x1xf32> to vector<64x1xf32>
    %291 = vector.extract_strided_slice %0 {offsets = [8, 0], sizes = [1, 32], strides = [1, 1]} : vector<9x32xf32> to vector<1x32xf32>
    %292 = vector.broadcast %290 : vector<64x1xf32> to vector<64x32xf32>
    %293 = vector.broadcast %291 : vector<1x32xf32> to vector<64x32xf32>
    %294 = arith.mulf %292, %293 : vector<64x32xf32>
    %295 = arith.addf %285, %294 : vector<64x32xf32>
    %296 = vector.broadcast %1 : vector<1x32xf32> to vector<64x32xf32>
    %297 = arith.addf %295, %296 : vector<64x32xf32>
    %cst_119 = arith.constant 0.000000e+00 : f32
    %298 = vector.broadcast %cst_119 : f32 to vector<64x32xf32>
    %299 = arith.maximumf %297, %298 : vector<64x32xf32>
    %300 = arith.truncf %299 : vector<64x32xf32> to vector<64x32xbf16>
    %301 = arith.index_cast %204 : i32 to index
    %c0_120 = arith.constant 0 : index
    %302 = vector.load %arg7[%301, %c0_120] : memref<256x32xbf16, #tpu.memory_space<vmem>>, vector<64x32xbf16>
    tpu.vector_store %arg7[%301, %c0_120], %300 {strides = array<i32>} : memref<256x32xbf16, #tpu.memory_space<vmem>>, vector<64x32xbf16>,
    %c3_i32 = arith.constant 3 : i32
    %c64_i32_121 = arith.constant 64 : i32
    %303 = arith.muli %c3_i32, %c64_i32_121 : i32
    %304 = tpu.assume_multiple %303, 64 : i32
    %cst_122 = arith.constant 0.000000e+00 : f32
    %305 = vector.broadcast %cst_122 : f32 to vector<64x32xf32>
    %c0_i32_123 = arith.constant 0 : i32
    %306 = arith.addi %304, %c0_i32_123 : i32
    %c0_i32_124 = arith.constant 0 : i32
    %307 = arith.addi %306, %c0_i32_124 : i32
    %c0_125 = arith.constant 0 : index
    %308 = arith.index_cast %307 : i32 to index
    %c0_126 = arith.constant 0 : index
    %309 = vector.load %arg1[%c0_125, %308, %c0_126] : memref<1x304x1xf32, #tpu.memory_space<vmem>>, vector<1x64x1xf32>
    %310 = vector.shape_cast %309 : vector<1x64x1xf32> to vector<64x1xf32>
    %311 = vector.extract_strided_slice %0 {offsets = [0, 0], sizes = [1, 32], strides = [1, 1]} : vector<9x32xf32> to vector<1x32xf32>
    %312 = vector.broadcast %310 : vector<64x1xf32> to vector<64x32xf32>
    %313 = vector.broadcast %311 : vector<1x32xf32> to vector<64x32xf32>
    %314 = arith.mulf %312, %313 : vector<64x32xf32>
    %315 = arith.addf %305, %314 : vector<64x32xf32>
    %c0_i32_127 = arith.constant 0 : i32
    %316 = arith.addi %304, %c0_i32_127 : i32
    %c1_i32_128 = arith.constant 1 : i32
    %317 = arith.addi %316, %c1_i32_128 : i32
    %c0_129 = arith.constant 0 : index
    %318 = arith.index_cast %317 : i32 to index
    %c0_130 = arith.constant 0 : index
    %319 = vector.load %arg1[%c0_129, %318, %c0_130] : memref<1x304x1xf32, #tpu.memory_space<vmem>>, vector<1x64x1xf32>
    %320 = vector.shape_cast %319 : vector<1x64x1xf32> to vector<64x1xf32>
    %321 = vector.extract_strided_slice %0 {offsets = [1, 0], sizes = [1, 32], strides = [1, 1]} : vector<9x32xf32> to vector<1x32xf32>
    %322 = vector.broadcast %320 : vector<64x1xf32> to vector<64x32xf32>
    %323 = vector.broadcast %321 : vector<1x32xf32> to vector<64x32xf32>
    %324 = arith.mulf %322, %323 : vector<64x32xf32>
    %325 = arith.addf %315, %324 : vector<64x32xf32>
    %c0_i32_131 = arith.constant 0 : i32
    %326 = arith.addi %304, %c0_i32_131 : i32
    %c2_i32_132 = arith.constant 2 : i32
    %327 = arith.addi %326, %c2_i32_132 : i32
    %c0_133 = arith.constant 0 : index
    %328 = arith.index_cast %327 : i32 to index
    %c0_134 = arith.constant 0 : index
    %329 = vector.load %arg1[%c0_133, %328, %c0_134] : memref<1x304x1xf32, #tpu.memory_space<vmem>>, vector<1x64x1xf32>
    %330 = vector.shape_cast %329 : vector<1x64x1xf32> to vector<64x1xf32>
    %331 = vector.extract_strided_slice %0 {offsets = [2, 0], sizes = [1, 32], strides = [1, 1]} : vector<9x32xf32> to vector<1x32xf32>
    %332 = vector.broadcast %330 : vector<64x1xf32> to vector<64x32xf32>
    %333 = vector.broadcast %331 : vector<1x32xf32> to vector<64x32xf32>
    %334 = arith.mulf %332, %333 : vector<64x32xf32>
    %335 = arith.addf %325, %334 : vector<64x32xf32>
    %c16_i32_135 = arith.constant 16 : i32
    %336 = arith.addi %304, %c16_i32_135 : i32
    %c0_i32_136 = arith.constant 0 : i32
    %337 = arith.addi %336, %c0_i32_136 : i32
    %c0_137 = arith.constant 0 : index
    %338 = arith.index_cast %337 : i32 to index
    %c0_138 = arith.constant 0 : index
    %339 = vector.load %arg1[%c0_137, %338, %c0_138] : memref<1x304x1xf32, #tpu.memory_space<vmem>>, vector<1x64x1xf32>
    %340 = vector.shape_cast %339 : vector<1x64x1xf32> to vector<64x1xf32>
    %341 = vector.extract_strided_slice %0 {offsets = [3, 0], sizes = [1, 32], strides = [1, 1]} : vector<9x32xf32> to vector<1x32xf32>
    %342 = vector.broadcast %340 : vector<64x1xf32> to vector<64x32xf32>
    %343 = vector.broadcast %341 : vector<1x32xf32> to vector<64x32xf32>
    %344 = arith.mulf %342, %343 : vector<64x32xf32>
    %345 = arith.addf %335, %344 : vector<64x32xf32>
    %c16_i32_139 = arith.constant 16 : i32
    %346 = arith.addi %304, %c16_i32_139 : i32
    %c1_i32_140 = arith.constant 1 : i32
    %347 = arith.addi %346, %c1_i32_140 : i32
    %c0_141 = arith.constant 0 : index
    %348 = arith.index_cast %347 : i32 to index
    %c0_142 = arith.constant 0 : index
    %349 = vector.load %arg1[%c0_141, %348, %c0_142] : memref<1x304x1xf32, #tpu.memory_space<vmem>>, vector<1x64x1xf32>
    %350 = vector.shape_cast %349 : vector<1x64x1xf32> to vector<64x1xf32>
    %351 = vector.extract_strided_slice %0 {offsets = [4, 0], sizes = [1, 32], strides = [1, 1]} : vector<9x32xf32> to vector<1x32xf32>
    %352 = vector.broadcast %350 : vector<64x1xf32> to vector<64x32xf32>
    %353 = vector.broadcast %351 : vector<1x32xf32> to vector<64x32xf32>
    %354 = arith.mulf %352, %353 : vector<64x32xf32>
    %355 = arith.addf %345, %354 : vector<64x32xf32>
    %c16_i32_143 = arith.constant 16 : i32
    %356 = arith.addi %304, %c16_i32_143 : i32
    %c2_i32_144 = arith.constant 2 : i32
    %357 = arith.addi %356, %c2_i32_144 : i32
    %c0_145 = arith.constant 0 : index
    %358 = arith.index_cast %357 : i32 to index
    %c0_146 = arith.constant 0 : index
    %359 = vector.load %arg1[%c0_145, %358, %c0_146] : memref<1x304x1xf32, #tpu.memory_space<vmem>>, vector<1x64x1xf32>
    %360 = vector.shape_cast %359 : vector<1x64x1xf32> to vector<64x1xf32>
    %361 = vector.extract_strided_slice %0 {offsets = [5, 0], sizes = [1, 32], strides = [1, 1]} : vector<9x32xf32> to vector<1x32xf32>
    %362 = vector.broadcast %360 : vector<64x1xf32> to vector<64x32xf32>
    %363 = vector.broadcast %361 : vector<1x32xf32> to vector<64x32xf32>
    %364 = arith.mulf %362, %363 : vector<64x32xf32>
    %365 = arith.addf %355, %364 : vector<64x32xf32>
    %c32_i32_147 = arith.constant 32 : i32
    %366 = arith.addi %304, %c32_i32_147 : i32
    %c0_i32_148 = arith.constant 0 : i32
    %367 = arith.addi %366, %c0_i32_148 : i32
    %c0_149 = arith.constant 0 : index
    %368 = arith.index_cast %367 : i32 to index
    %c0_150 = arith.constant 0 : index
    %369 = vector.load %arg1[%c0_149, %368, %c0_150] : memref<1x304x1xf32, #tpu.memory_space<vmem>>, vector<1x64x1xf32>
    %370 = vector.shape_cast %369 : vector<1x64x1xf32> to vector<64x1xf32>
    %371 = vector.extract_strided_slice %0 {offsets = [6, 0], sizes = [1, 32], strides = [1, 1]} : vector<9x32xf32> to vector<1x32xf32>
    %372 = vector.broadcast %370 : vector<64x1xf32> to vector<64x32xf32>
    %373 = vector.broadcast %371 : vector<1x32xf32> to vector<64x32xf32>
    %374 = arith.mulf %372, %373 : vector<64x32xf32>
    %375 = arith.addf %365, %374 : vector<64x32xf32>
    %c32_i32_151 = arith.constant 32 : i32
    %376 = arith.addi %304, %c32_i32_151 : i32
    %c1_i32_152 = arith.constant 1 : i32
    %377 = arith.addi %376, %c1_i32_152 : i32
    %c0_153 = arith.constant 0 : index
    %378 = arith.index_cast %377 : i32 to index
    %c0_154 = arith.constant 0 : index
    %379 = vector.load %arg1[%c0_153, %378, %c0_154] : memref<1x304x1xf32, #tpu.memory_space<vmem>>, vector<1x64x1xf32>
    %380 = vector.shape_cast %379 : vector<1x64x1xf32> to vector<64x1xf32>
    %381 = vector.extract_strided_slice %0 {offsets = [7, 0], sizes = [1, 32], strides = [1, 1]} : vector<9x32xf32> to vector<1x32xf32>
    %382 = vector.broadcast %380 : vector<64x1xf32> to vector<64x32xf32>
    %383 = vector.broadcast %381 : vector<1x32xf32> to vector<64x32xf32>
    %384 = arith.mulf %382, %383 : vector<64x32xf32>
    %385 = arith.addf %375, %384 : vector<64x32xf32>
    %c32_i32_155 = arith.constant 32 : i32
    %386 = arith.addi %304, %c32_i32_155 : i32
    %c2_i32_156 = arith.constant 2 : i32
    %387 = arith.addi %386, %c2_i32_156 : i32
    %c0_157 = arith.constant 0 : index
    %388 = arith.index_cast %387 : i32 to index
    %c0_158 = arith.constant 0 : index
    %389 = vector.load %arg1[%c0_157, %388, %c0_158] : memref<1x304x1xf32, #tpu.memory_space<vmem>>, vector<1x64x1xf32>
    %390 = vector.shape_cast %389 : vector<1x64x1xf32> to vector<64x1xf32>
    %391 = vector.extract_strided_slice %0 {offsets = [8, 0], sizes = [1, 32], strides = [1, 1]} : vector<9x32xf32> to vector<1x32xf32>
    %392 = vector.broadcast %390 : vector<64x1xf32> to vector<64x32xf32>
    %393 = vector.broadcast %391 : vector<1x32xf32> to vector<64x32xf32>
    %394 = arith.mulf %392, %393 : vector<64x32xf32>
    %395 = arith.addf %385, %394 : vector<64x32xf32>
    %396 = vector.broadcast %1 : vector<1x32xf32> to vector<64x32xf32>
    %397 = arith.addf %395, %396 : vector<64x32xf32>
    %cst_159 = arith.constant 0.000000e+00 : f32
    %398 = vector.broadcast %cst_159 : f32 to vector<64x32xf32>
    %399 = arith.maximumf %397, %398 : vector<64x32xf32>
    %400 = arith.truncf %399 : vector<64x32xf32> to vector<64x32xbf16>
    %401 = arith.index_cast %304 : i32 to index
    %c0_160 = arith.constant 0 : index
    %402 = vector.load %arg7[%401, %c0_160] : memref<256x32xbf16, #tpu.memory_space<vmem>>, vector<64x32xbf16>
    tpu.vector_store %arg7[%401, %c0_160], %400 {strides = array<i32>} : memref<256x32xbf16, #tpu.memory_space<vmem>>, vector<64x32xbf16>,
    %c4_i32 = arith.constant 4 : i32
    %c0_161 = arith.constant 0 : index
    %c0_162 = arith.constant 0 : index
    %403 = vector.load %arg7[%c0_161, %c0_162] : memref<256x32xbf16, #tpu.memory_space<vmem>>, vector<192x32xbf16>
    %c1 = arith.constant 1 : index
    %c0_163 = arith.constant 0 : index
    %404 = vector.load %arg7[%c1, %c0_163] : memref<256x32xbf16, #tpu.memory_space<vmem>>, vector<192x32xbf16>
    %c2 = arith.constant 2 : index
    %c0_164 = arith.constant 0 : index
    %405 = vector.load %arg7[%c2, %c0_164] : memref<256x32xbf16, #tpu.memory_space<vmem>>, vector<192x32xbf16>
    %c16 = arith.constant 16 : index
    %c0_165 = arith.constant 0 : index
    %406 = vector.load %arg7[%c16, %c0_165] : memref<256x32xbf16, #tpu.memory_space<vmem>>, vector<192x32xbf16>
    %c17 = arith.constant 17 : index
    %c0_166 = arith.constant 0 : index
    %407 = vector.load %arg7[%c17, %c0_166] : memref<256x32xbf16, #tpu.memory_space<vmem>>, vector<192x32xbf16>
    %c18 = arith.constant 18 : index
    %c0_167 = arith.constant 0 : index
    %408 = vector.load %arg7[%c18, %c0_167] : memref<256x32xbf16, #tpu.memory_space<vmem>>, vector<192x32xbf16>
    %c32 = arith.constant 32 : index
    %c0_168 = arith.constant 0 : index
    %409 = vector.load %arg7[%c32, %c0_168] : memref<256x32xbf16, #tpu.memory_space<vmem>>, vector<192x32xbf16>
    %c33 = arith.constant 33 : index
    %c0_169 = arith.constant 0 : index
    %410 = vector.load %arg7[%c33, %c0_169] : memref<256x32xbf16, #tpu.memory_space<vmem>>, vector<192x32xbf16>
    %c34 = arith.constant 34 : index
    %c0_170 = arith.constant 0 : index
    %411 = vector.load %arg7[%c34, %c0_170] : memref<256x32xbf16, #tpu.memory_space<vmem>>, vector<192x32xbf16>
    %412 = tpu.concatenate %403, %404, %405, %406, %407, %408, %409, %410, %411 in 1 : vector<192x32xbf16>, vector<192x32xbf16>, vector<192x32xbf16>, vector<192x32xbf16>, vector<192x32xbf16>, vector<192x32xbf16>, vector<192x32xbf16>, vector<192x32xbf16>, vector<192x32xbf16> -> vector<192x288xbf16>
    %c0_171 = arith.constant 0 : index
    %c0_172 = arith.constant 0 : index
    %413 = vector.load %arg4[%c0_171, %c0_172] : memref<288x64xbf16, #tpu.memory_space<vmem>>, vector<288x64xbf16>
    %cst_173 = arith.constant dense<0.000000e+00> : vector<192x64xf32>
    %414 = tpu.matmul %412, %413, %cst_173 {dimension_numbers = #tpu.dot_dimension_numbers<[1], [0], [0], [1], [0, 0, 1, 1], [], []>} : vector<192x288xbf16>, vector<288x64xbf16>, vector<192x64xf32> -> vector<192x64xf32>
    %415 = vector.broadcast %2 : vector<1x64xf32> to vector<192x64xf32>
    %416 = arith.addf %414, %415 : vector<192x64xf32>
    %cst_174 = arith.constant 0.000000e+00 : f32
    %417 = vector.broadcast %cst_174 : f32 to vector<192x64xf32>
    %418 = arith.maximumf %416, %417 : vector<192x64xf32>
    %419 = vector.shape_cast %418 : vector<192x64xf32> to vector<6x32x64xf32>
    %420 = vector.extract_strided_slice %419 {offsets = [0, 0, 0], sizes = [6, 16, 64], strides = [1, 1, 1]} : vector<6x32x64xf32> to vector<6x16x64xf32>
    %421 = vector.extract_strided_slice %419 {offsets = [0, 16, 0], sizes = [6, 16, 64], strides = [1, 1, 1]} : vector<6x32x64xf32> to vector<6x16x64xf32>
    %422 = arith.maximumf %420, %421 : vector<6x16x64xf32>
    %423 = vector.extract_strided_slice %422 {offsets = [0, 0, 0], sizes = [6, 12, 64], strides = [1, 1, 1]} : vector<6x16x64xf32> to vector<6x12x64xf32>
    %424 = vector.extract_strided_slice %422 {offsets = [0, 1, 0], sizes = [6, 12, 64], strides = [1, 1, 1]} : vector<6x16x64xf32> to vector<6x12x64xf32>
    %425 = arith.maximumf %423, %424 : vector<6x12x64xf32>
    %426 = vector.extract_strided_slice %425 {offsets = [0, 0, 0], sizes = [6, 1, 64], strides = [1, 1, 1]} : vector<6x12x64xf32> to vector<6x1x64xf32>
    %427 = vector.shape_cast %426 : vector<6x1x64xf32> to vector<6x64xf32>
    %428 = vector.extract_strided_slice %425 {offsets = [0, 2, 0], sizes = [6, 1, 64], strides = [1, 1, 1]} : vector<6x12x64xf32> to vector<6x1x64xf32>
    %429 = vector.shape_cast %428 : vector<6x1x64xf32> to vector<6x64xf32>
    %430 = vector.extract_strided_slice %425 {offsets = [0, 4, 0], sizes = [6, 1, 64], strides = [1, 1, 1]} : vector<6x12x64xf32> to vector<6x1x64xf32>
    %431 = vector.shape_cast %430 : vector<6x1x64xf32> to vector<6x64xf32>
    %432 = vector.extract_strided_slice %425 {offsets = [0, 6, 0], sizes = [6, 1, 64], strides = [1, 1, 1]} : vector<6x12x64xf32> to vector<6x1x64xf32>
    %433 = vector.shape_cast %432 : vector<6x1x64xf32> to vector<6x64xf32>
    %434 = vector.extract_strided_slice %425 {offsets = [0, 8, 0], sizes = [6, 1, 64], strides = [1, 1, 1]} : vector<6x12x64xf32> to vector<6x1x64xf32>
    %435 = vector.shape_cast %434 : vector<6x1x64xf32> to vector<6x64xf32>
    %436 = vector.extract_strided_slice %425 {offsets = [0, 10, 0], sizes = [6, 1, 64], strides = [1, 1, 1]} : vector<6x12x64xf32> to vector<6x1x64xf32>
    %437 = vector.shape_cast %436 : vector<6x1x64xf32> to vector<6x64xf32>
    %438 = tpu.concatenate %427, %429, %431, %433, %435, %437 in 1 : vector<6x64xf32>, vector<6x64xf32>, vector<6x64xf32>, vector<6x64xf32>, vector<6x64xf32>, vector<6x64xf32> -> vector<6x384xf32>
    %439 = arith.truncf %438 : vector<6x384xf32> to vector<6x384xbf16>
    %c0_175 = arith.constant 0 : index
    %c0_176 = arith.constant 0 : index
    %c0_177 = arith.constant 0 : index
    %440 = vector.load %arg6[%c0_175, %c0_176, %c0_177] : memref<1x6x384xbf16, #tpu.memory_space<vmem>>, vector<1x6x384xbf16>
    %441 = vector.shape_cast %440 : vector<1x6x384xbf16> to vector<6x384xbf16>
    %442 = vector.shape_cast %439 : vector<6x384xbf16> to vector<1x6x384xbf16>
    tpu.vector_store %arg6[%c0_175, %c0_176, %c0_177], %442 {strides = array<i32>} : memref<1x6x384xbf16, #tpu.memory_space<vmem>>, vector<1x6x384xbf16>,
    return
  }
  func.func @transform_0(%arg0: i32) -> (i32, i32, i32) {
    %c0_i32 = arith.constant 0 : i32
    %c0_i32_0 = arith.constant 0 : i32
    %c0_i32_1 = arith.constant 0 : i32
    return %arg0, %c0_i32, %c0_i32_0 : i32, i32, i32
  }
  func.func @transform_1(%arg0: i32) -> (i32, i32) {
    %c0_i32 = arith.constant 0 : i32
    %c0_i32_0 = arith.constant 0 : i32
    %c0_i32_1 = arith.constant 0 : i32
    return %c0_i32, %c0_i32_0 : i32, i32
  }
  func.func @transform_2(%arg0: i32) -> (i32, i32) {
    %c0_i32 = arith.constant 0 : i32
    %c0_i32_0 = arith.constant 0 : i32
    %c0_i32_1 = arith.constant 0 : i32
    return %c0_i32, %c0_i32_0 : i32, i32
  }
  func.func @transform_3(%arg0: i32) -> (i32, i32) {
    %c0_i32 = arith.constant 0 : i32
    %c0_i32_0 = arith.constant 0 : i32
    %c0_i32_1 = arith.constant 0 : i32
    return %c0_i32, %c0_i32_0 : i32, i32
  }
  func.func @transform_4(%arg0: i32) -> (i32, i32) {
    %c0_i32 = arith.constant 0 : i32
    %c0_i32_0 = arith.constant 0 : i32
    %c0_i32_1 = arith.constant 0 : i32
    return %c0_i32, %c0_i32_0 : i32, i32
  }
  func.func @transform_5(%arg0: i32) -> (i32, i32, i32) {
    %c0_i32 = arith.constant 0 : i32
    %c0_i32_0 = arith.constant 0 : i32
    %c0_i32_1 = arith.constant 0 : i32
    return %arg0, %c0_i32, %c0_i32_0 : i32, i32, i32
  }
}

module attributes {stable_mosaic.version = 11 : i64} {
  func.func @_fc_head_kernel(%arg0: i32, %arg1: memref<2x2304xbf16, #tpu.memory_space<vmem>>, %arg2: memref<2304x512xbf16, #tpu.memory_space<vmem>>, %arg3: memref<1x512xf32, #tpu.memory_space<vmem>>, %arg4: memref<512x128xbf16, #tpu.memory_space<vmem>>, %arg5: memref<1x128xf32, #tpu.memory_space<vmem>>, %arg6: memref<2x128xf32, #tpu.memory_space<vmem>>) attributes {dimension_semantics = [#tpu.dimension_semantics<parallel>], iteration_bounds = array<i64: 1>, scalar_prefetch = 0 : i64, scratch_operands = 0 : i64, tpu.core_type = #tpu.core_type<tc>, window_params = [{transform_indices = @transform_0, window_bounds = array<i64: 2, 2304>}, {pipeline_mode = #tpu.pipeline_mode<synchronous>, transform_indices = @transform_1, window_bounds = array<i64: 2304, 512>}, {pipeline_mode = #tpu.pipeline_mode<synchronous>, transform_indices = @transform_2, window_bounds = array<i64: 1, 512>}, {pipeline_mode = #tpu.pipeline_mode<synchronous>, transform_indices = @transform_3, window_bounds = array<i64: 512, 128>}, {pipeline_mode = #tpu.pipeline_mode<synchronous>, transform_indices = @transform_4, window_bounds = array<i64: 1, 128>}, {transform_indices = @transform_5, window_bounds = array<i64: 2, 128>}]} {
    %c0 = arith.constant 0 : index
    %c0_0 = arith.constant 0 : index
    %0 = vector.load %arg1[%c0, %c0_0] : memref<2x2304xbf16, #tpu.memory_space<vmem>>, vector<2x2304xbf16>
    %c0_1 = arith.constant 0 : index
    %c0_2 = arith.constant 0 : index
    %1 = vector.load %arg2[%c0_1, %c0_2] : memref<2304x512xbf16, #tpu.memory_space<vmem>>, vector<2304x512xbf16>
    %cst = arith.constant dense<0.000000e+00> : vector<2x512xf32>
    %2 = tpu.matmul %0, %1, %cst {dimension_numbers = #tpu.dot_dimension_numbers<[1], [0], [0], [1], [0, 0, 1, 1], [], []>} : vector<2x2304xbf16>, vector<2304x512xbf16>, vector<2x512xf32> -> vector<2x512xf32>
    %c0_3 = arith.constant 0 : index
    %c0_4 = arith.constant 0 : index
    %3 = vector.load %arg3[%c0_3, %c0_4] : memref<1x512xf32, #tpu.memory_space<vmem>>, vector<1x512xf32>
    %4 = vector.broadcast %3 : vector<1x512xf32> to vector<2x512xf32>
    %5 = arith.addf %2, %4 : vector<2x512xf32>
    %cst_5 = arith.constant 0.000000e+00 : f32
    %6 = vector.broadcast %cst_5 : f32 to vector<2x512xf32>
    %7 = arith.maximumf %5, %6 : vector<2x512xf32>
    %8 = arith.truncf %7 : vector<2x512xf32> to vector<2x512xbf16>
    %c0_6 = arith.constant 0 : index
    %c0_7 = arith.constant 0 : index
    %9 = vector.load %arg4[%c0_6, %c0_7] : memref<512x128xbf16, #tpu.memory_space<vmem>>, vector<512x128xbf16>
    %cst_8 = arith.constant dense<0.000000e+00> : vector<2x128xf32>
    %10 = tpu.matmul %8, %9, %cst_8 {dimension_numbers = #tpu.dot_dimension_numbers<[1], [0], [0], [1], [0, 0, 1, 1], [], []>} : vector<2x512xbf16>, vector<512x128xbf16>, vector<2x128xf32> -> vector<2x128xf32>
    %c0_9 = arith.constant 0 : index
    %c0_10 = arith.constant 0 : index
    %11 = vector.load %arg5[%c0_9, %c0_10] : memref<1x128xf32, #tpu.memory_space<vmem>>, vector<1x128xf32>
    %12 = vector.broadcast %11 : vector<1x128xf32> to vector<2x128xf32>
    %13 = arith.addf %10, %12 : vector<2x128xf32>
    %cst_11 = arith.constant dense<0xFF800000> : vector<2xf32>
    %14 = vector.multi_reduction <maximumf>, %13, %cst_11 [1] : vector<2x128xf32> to vector<2xf32>
    %15 = vector.shape_cast %14 : vector<2xf32> to vector<2x1xf32>
    %16 = vector.broadcast %15 : vector<2x1xf32> to vector<2x128xf32>
    %17 = arith.subf %13, %16 : vector<2x128xf32>
    %18 = math.exp %17 : vector<2x128xf32>
    %cst_12 = arith.constant dense<0.000000e+00> : vector<2xf32>
    %19 = vector.multi_reduction <add>, %18, %cst_12 [1] : vector<2x128xf32> to vector<2xf32>
    %20 = vector.shape_cast %19 : vector<2xf32> to vector<2x1xf32>
    %21 = tpu.reciprocal %20 {approx = true} : vector<2x1xf32> -> vector<2x1xf32>
    %22 = vector.broadcast %21 : vector<2x1xf32> to vector<2x128xf32>
    %23 = arith.mulf %18, %22 : vector<2x128xf32>
    %c0_13 = arith.constant 0 : index
    %c0_14 = arith.constant 0 : index
    %24 = vector.load %arg6[%c0_13, %c0_14] : memref<2x128xf32, #tpu.memory_space<vmem>>, vector<2x128xf32>
    tpu.vector_store %arg6[%c0_13, %c0_14], %23 {strides = array<i32>} : memref<2x128xf32, #tpu.memory_space<vmem>>, vector<2x128xf32>,
    return
  }
  func.func @transform_0(%arg0: i32) -> (i32, i32) {
    %c0_i32 = arith.constant 0 : i32
    %c0_i32_0 = arith.constant 0 : i32
    return %arg0, %c0_i32 : i32, i32
  }
  func.func @transform_1(%arg0: i32) -> (i32, i32) {
    %c0_i32 = arith.constant 0 : i32
    %c0_i32_0 = arith.constant 0 : i32
    %c0_i32_1 = arith.constant 0 : i32
    return %c0_i32, %c0_i32_0 : i32, i32
  }
  func.func @transform_2(%arg0: i32) -> (i32, i32) {
    %c0_i32 = arith.constant 0 : i32
    %c0_i32_0 = arith.constant 0 : i32
    %c0_i32_1 = arith.constant 0 : i32
    return %c0_i32, %c0_i32_0 : i32, i32
  }
  func.func @transform_3(%arg0: i32) -> (i32, i32) {
    %c0_i32 = arith.constant 0 : i32
    %c0_i32_0 = arith.constant 0 : i32
    %c0_i32_1 = arith.constant 0 : i32
    return %c0_i32, %c0_i32_0 : i32, i32
  }
  func.func @transform_4(%arg0: i32) -> (i32, i32) {
    %c0_i32 = arith.constant 0 : i32
    %c0_i32_0 = arith.constant 0 : i32
    %c0_i32_1 = arith.constant 0 : i32
    return %c0_i32, %c0_i32_0 : i32, i32
  }
  func.func @transform_5(%arg0: i32) -> (i32, i32) {
    %c0_i32 = arith.constant 0 : i32
    %c0_i32_0 = arith.constant 0 : i32
    return %arg0, %c0_i32 : i32, i32
  }
}

</mosaic_0001>

<llo_original>
// kernel: net_forward.2
$region0: #{net_forward.2}
  #allocation0 [shape = 'u32[]', space=smem, size = 0x4, offset = 0x4, fixed_abs, tag = 'smem constant byte address 0x4 - core index']
  #allocation1 [shape = 'u32[144,128]{1,0:T(1,128)}', space=vmem, size = 0x12000, scoped, tag = 'internal scratch']
  #allocation2 [shape = 'bf16[256,32]{1,0:T(8,128)(2,1)}', space=vmem, size = 0x10000, scoped, tag = 'scratch operand']
  %s0 = inlined_call_operand.vmem [shape: f32[2,304,1], index: 0, kind: input, shape index: {}]
  %s1 = inlined_call_operand.hbm [shape: f32[9,32], index: 1, kind: input, shape index: {}]
  %s2 = inlined_call_operand.hbm [shape: f32[1,32], index: 2, kind: input, shape index: {}]
  %s3 = inlined_call_operand.vmem [shape: bf16[288,64], index: 3, kind: input, shape index: {}]
  %s4 = inlined_call_operand.hbm [shape: f32[1,64], index: 4, kind: input, shape index: {}]
  %s5 = inlined_call_operand.vmem [shape: bf16[2,6,384], index: 5, kind: output, shape index: {}]
  %s6 = sld [smem:[#allocation0]]
  $region65: #{net_forward.2} parent=0
    _
  %s8 = ssub.s32 1, %s6
  %s9 = scalar_select 0, %s8, %s6
  $region1: #{net_forward.2} parent=0
    #allocation3 [shape = 'u8[8192]{0}', space=vmem, size = 0x2000, scoped, tag = 'input window, operand 1, single buffered']
    #allocation4 [shape = 's32[2]{0}', space=sflag, size = 0x8, scoped, tag = 'scoped memory for net_forward.2']
    #allocation5 [shape = 'u8[512]{0}', space=vmem, size = 0x400, scoped, tag = 'input window, operand 2, single buffered']
    #allocation6 [shape = 's32[1]{0}', space=sflag, size = 0x4, scoped, tag = 'scoped memory for net_forward.2']
    #allocation7 [shape = 'u8[512]{0}', space=vmem, size = 0x400, scoped, tag = 'input window, operand 4, single buffered']
    %10 = vsyncpa [#allocation4], 0
    %11 = vsyncpa [#allocation6], 0
    loop: start=0, step=1, limit=4
    $region2: #{net_forward.2} parent=1 // loop_pre_header
      _
    $region3: #{net_forward.2} parent=1 // loop_header
      %s13 = sphi 0, %s17
      %p14 = scmp.ge.s32.totalorder %s13, 4
      %s23 = sphi 0, %s25
      %s26 = sphi 0, %s23
      %s27 = sphi 0, %s26
      %s43 = sphi 0, %s27
      %s47 = sphi 0, %s47
      %s49 = sphi 0, %s47
      %s50 = sphi 0, %s49
      %s64 = sphi 0, %s50
      %s68 = sphi 0, %s68
      %s70 = sphi 0, %s68
      %s71 = sphi 0, %s70
      %s85 = sphi 0, %s71
      %s89 = sphi 0, %s89
      %s91 = sphi 0, %s89
      %s92 = sphi 0, %s91
      %s106 = sphi 0, %s92
      %s110 = sphi 0, %s110
      %s112 = sphi 0, %s110
      %s113 = sphi 0, %s112
      %s127 = sphi 0, %s113
      %s133 = sphi 0, %s135
      %s136 = sphi 0, %s133
      %s137 = sphi 0, %s136
      %s153 = sphi 0, %s137
    $region4: #{net_forward.2} parent=1 // loop_header_branch
      %16 = sbr.rel (%p14) target = $region8
    $region5: #{net_forward.2} parent=1 // loop_body
      %s18 = ssub.s32 %s13, 1
      %s19 = ssub.s32 %s13, 2
      %s20 = sadd.s32 %s13, 1
      %s21 = ssub.s32 %s13, %s20
      %p22 = scmp.eq.s32.totalorder %s21, 0
      %s24 = sadd.s32 %s23, 1
      %s25 = scalar_select %p22, %s23, %s24
      %p28 = pneg %p22
      %p29 = scmp.eq.s32.totalorder %s13, 1
      %p30 = por %p28, %p29
      %p31 = scmp.ne.s32.totalorder %s23, %s26
      %p32 = scmp.eq.s32.totalorder %s13, 0
      %p33 = por %p31, %p32
      %p34 = scmp.ne.s32.totalorder %s23, %s26
      %p35 = scmp.eq.s32.totalorder %s18, 1
      %p36 = por %p34, %p35
      %p37 = scmp.ne.s32.totalorder %s26, %s27
      %p38 = scmp.eq.s32.totalorder %s18, 0
      %p39 = por %p37, %p38
      %p40 = scmp.ne.s32.totalorder %s26, %s27
      %p41 = scmp.eq.s32.totalorder %s19, 1
      %p42 = por %p40, %p41
      %p44 = scmp.ne.s32.totalorder %s27, %s43
      %p45 = scmp.eq.s32.totalorder %s19, 0
      %p46 = por %p44, %p45
      %s48 = sadd.s32 %s47, 1
      %p51 = scmp.eq.s32.totalorder %s13, 1
      %p52 = scmp.ne.s32.totalorder %s47, %s49
      %p53 = scmp.eq.s32.totalorder %s13, 0
      %p54 = por %p52, %p53
      %p55 = scmp.ne.s32.totalorder %s47, %s49
      %p56 = scmp.eq.s32.totalorder %s18, 1
      %p57 = por %p55, %p56
      %p58 = scmp.ne.s32.totalorder %s49, %s50
      %p59 = scmp.eq.s32.totalorder %s18, 0
      %p60 = por %p58, %p59
      %p61 = scmp.ne.s32.totalorder %s49, %s50
      %p62 = scmp.eq.s32.totalorder %s19, 1
      %p63 = por %p61, %p62
      %p65 = scmp.ne.s32.totalorder %s50, %s64
      %p66 = scmp.eq.s32.totalorder %s19, 0
      %p67 = por %p65, %p66
      %s69 = sadd.s32 %s68, 1
      %p72 = scmp.eq.s32.totalorder %s13, 1
      %p73 = scmp.ne.s32.totalorder %s68, %s70
      %p74 = scmp.eq.s32.totalorder %s13, 0
      %p75 = por %p73, %p74
      %p76 = scmp.ne.s32.totalorder %s68, %s70
      %p77 = scmp.eq.s32.totalorder %s18, 1
      %p78 = por %p76, %p77
      %p79 = scmp.ne.s32.totalorder %s70, %s71
      %p80 = scmp.eq.s32.totalorder %s18, 0
      %p81 = por %p79, %p80
      %p82 = scmp.ne.s32.totalorder %s70, %s71
      %p83 = scmp.eq.s32.totalorder %s19, 1
      %p84 = por %p82, %p83
      %p86 = scmp.ne.s32.totalorder %s71, %s85
      %p87 = scmp.eq.s32.totalorder %s19, 0
      %p88 = por %p86, %p87
      %s90 = sadd.s32 %s89, 1
      %p93 = scmp.eq.s32.totalorder %s13, 1
      %p94 = scmp.ne.s32.totalorder %s89, %s91
      %p95 = scmp.eq.s32.totalorder %s13, 0
      %p96 = por %p94, %p95
      %p97 = scmp.ne.s32.totalorder %s89, %s91
      %p98 = scmp.eq.s32.totalorder %s18, 1
      %p99 = por %p97, %p98
      %p100 = scmp.ne.s32.totalorder %s91, %s92
      %p101 = scmp.eq.s32.totalorder %s18, 0
      %p102 = por %p100, %p101
      %p103 = scmp.ne.s32.totalorder %s91, %s92
      %p104 = scmp.eq.s32.totalorder %s19, 1
      %p105 = por %p103, %p104
      %p107 = scmp.ne.s32.totalorder %s92, %s106
      %p108 = scmp.eq.s32.totalorder %s19, 0
      %p109 = por %p107, %p108
      %s111 = sadd.s32 %s110, 1
      %p114 = scmp.eq.s32.totalorder %s13, 1
      %p115 = scmp.ne.s32.totalorder %s110, %s112
      %p116 = scmp.eq.s32.totalorder %s13, 0
      %p117 = por %p115, %p116
      %p118 = scmp.ne.s32.totalorder %s110, %s112
      %p119 = scmp.eq.s32.totalorder %s18, 1
      %p120 = por %p118, %p119
      %p121 = scmp.ne.s32.totalorder %s112, %s113
      %p122 = scmp.eq.s32.totalorder %s18, 0
      %p123 = por %p121, %p122
      %p124 = scmp.ne.s32.totalorder %s112, %s113
      %p125 = scmp.eq.s32.totalorder %s19, 1
      %p126 = por %p124, %p125
      %p128 = scmp.ne.s32.totalorder %s113, %s127
      %p129 = scmp.eq.s32.totalorder %s19, 0
      %p130 = por %p128, %p129
      %s131 = ssub.s32 %s13, %s20
      %p132 = scmp.eq.s32.totalorder %s131, 0
      %s134 = sadd.s32 %s133, 1
      %s135 = scalar_select %p132, %s133, %s134
      %p138 = pneg %p132
      %p139 = scmp.eq.s32.totalorder %s13, 1
      %p140 = por %p138, %p139
      %p141 = scmp.ne.s32.totalorder %s133, %s136
      %p142 = scmp.eq.s32.totalorder %s13, 0
      %p143 = por %p141, %p142
      %p144 = scmp.ne.s32.totalorder %s133, %s136
      %p145 = scmp.eq.s32.totalorder %s18, 1
      %p146 = por %p144, %p145
      %p147 = scmp.ne.s32.totalorder %s136, %s137
      %p148 = scmp.eq.s32.totalorder %s18, 0
      %p149 = por %p147, %p148
      %p150 = scmp.ne.s32.totalorder %s136, %s137
      %p151 = scmp.eq.s32.totalorder %s19, 1
      %p152 = por %p150, %p151
      %p154 = scmp.ne.s32.totalorder %s137, %s153
      %p155 = scmp.eq.s32.totalorder %s19, 0
      %p156 = por %p154, %p155
      %p157 = scmp.le.s32.totalorder 1, %s13
      %p158 = scmp.lt.s32.totalorder %s13, 3
      %p159 = pnand %p157, %p158
      %p160 = pneg %p159
      // Predicated region
      $region9: #{net_forward.2} parent=5 // pred_check
        _
      $region10: #{net_forward.2} parent=5 // pred_check_branch
        %162 = sbr.rel (%p159) target = $region12
      $region11: #{net_forward.2} parent=5 // pred_region
        %s163 = ssub.s32 %s13, 1
        // Predicated region
        $region13: #{net_forward.2} parent=11 // pred_check
          %p164 = pneg %p60
        $region14: #{net_forward.2} parent=11 // pred_check_branch
          %166 = sbr.rel (%p164) target = $region16
        $region15: #{net_forward.2} parent=11 // pred_region
          %s168 = ssub.s32 256, 256
          %169 = vsyncadd [#allocation4], %s168
          %s170 = sshll.u32 [#allocation3], 4
          %s171 = int_to_ptr.vmem [resolvable:$true] %s170
          %176 = dma.hbm_to_vmem [thread:$0]  %s1, 256, %s171, [#allocation4], 128, 128, 8
        $region16: #{net_forward.2} parent=11 // pred_fallthru
          _
        // Predicated region
        $region17: #{net_forward.2} parent=11 // pred_check
          %p177 = pneg %p81
        $region18: #{net_forward.2} parent=11 // pred_check_branch
          %179 = sbr.rel (%p177) target = $region20
        $region19: #{net_forward.2} parent=11 // pred_region
          %s181 = ssub.s32 16, 16
          %182 = vsyncadd [#allocation6], %s181
          %s184 = sshll.u32 [#allocation5], 4
          %s185 = int_to_ptr.vmem [resolvable:$true] %s184
          %187 = dma.hbm_to_vmem [thread:$0]  %s2, 16, %s185, [#allocation6]
        $region20: #{net_forward.2} parent=11 // pred_fallthru
          _
        // Predicated region
        $region21: #{net_forward.2} parent=11 // pred_check
          %p188 = pneg %p102
        $region22: #{net_forward.2} parent=11 // pred_check_branch
          %190 = sbr.rel (%p188) target = $region24
        $region23: #{net_forward.2} parent=11 // pred_region
          _
        $region24: #{net_forward.2} parent=11 // pred_fallthru
          _
        // Predicated region
        $region25: #{net_forward.2} parent=11 // pred_check
          %p191 = pneg %p123
        $region26: #{net_forward.2} parent=11 // pred_check_branch
          %193 = sbr.rel (%p191) target = $region28
        $region27: #{net_forward.2} parent=11 // pred_region
          %s195 = ssub.s32 16, 16
          %196 = vsyncadd [#allocation6], %s195
          %s198 = sshll.u32 [#allocation7], 4
          %s199 = int_to_ptr.vmem [resolvable:$true] %s198
          %201 = dma.hbm_to_vmem [thread:$0]  %s4, 16, %s199, [#allocation6]
        $region28: #{net_forward.2} parent=11 // pred_fallthru
          _
      $region12: #{net_forward.2} parent=5 // pred_fallthru
        _
      %p202 = scmp.lt.s32.totalorder %s13, 2
      // Predicated region
      $region29: #{net_forward.2} parent=5 // pred_check
        %p203 = pneg %p202
      $region30: #{net_forward.2} parent=5 // pred_check_branch
        %205 = sbr.rel (%p203) target = $region32
      $region31: #{net_forward.2} parent=5 // pred_region
        // Predicated region
        $region33: #{net_forward.2} parent=31 // pred_check
          %p206 = pneg %p33
        $region34: #{net_forward.2} parent=31 // pred_check_branch
          %208 = sbr.rel (%p206) target = $region36
        $region35: #{net_forward.2} parent=31 // pred_region
          %p209 = scmp.lt.s32.totalorder %s13, 1
          %s210 = scalar_select %p209, %s13, 1
          %s211 = smul.addr %s210, 38
          %s212 = smul.addr %s211, 8
          %s213 = scalar_lea.vmem %s0, %s212
        $region36: #{net_forward.2} parent=31 // pred_fallthru
          _
      $region32: #{net_forward.2} parent=5 // pred_fallthru
        _
      %p214 = scmp.le.s32.totalorder 1, %s13
      %p215 = scmp.lt.s32.totalorder %s13, 3
      %p216 = pnand %p214, %p215
      %p217 = pneg %p216
      // Predicated region
      $region37: #{net_forward.2} parent=5 // pred_check
        _
      $region38: #{net_forward.2} parent=5 // pred_check_branch
        %219 = sbr.rel (%p216) target = $region40
      $region39: #{net_forward.2} parent=5 // pred_region
        %s220 = ssub.s32 %s13, 1
        // Predicated region
        $region41: #{net_forward.2} parent=39 // pred_check
          %p221 = pneg %p60
        $region42: #{net_forward.2} parent=39 // pred_check_branch
          %223 = sbr.rel (%p221) target = $region44
        $region43: #{net_forward.2} parent=39 // pred_region
          %224 = dma.done [#allocation4], 256
        $region44: #{net_forward.2} parent=39 // pred_fallthru
          _
        // Predicated region
        $region45: #{net_forward.2} parent=39 // pred_check
          %p225 = pneg %p81
        $region46: #{net_forward.2} parent=39 // pred_check_branch
          %227 = sbr.rel (%p225) target = $region48
        $region47: #{net_forward.2} parent=39 // pred_region
          %228 = dma.done [#allocation6], 16
        $region48: #{net_forward.2} parent=39 // pred_fallthru
          _
        // Predicated region
        $region49: #{net_forward.2} parent=39 // pred_check
          %p229 = pneg %p123
        $region50: #{net_forward.2} parent=39 // pred_check_branch
          %231 = sbr.rel (%p229) target = $region52
        $region51: #{net_forward.2} parent=39 // pred_region
          %232 = dma.done [#allocation6], 16
        $region52: #{net_forward.2} parent=39 // pred_fallthru
          _
        %p233 = scmp.lt.s32.totalorder %s18, 1
        %s234 = scalar_select %p233, %s18, 1
        %s235 = smul.addr %s234, 38
        %s236 = smul.addr %s235, 8
        %s237 = scalar_lea.vmem %s0, %s236
        %p238 = pneg %p39
        %p239 = pneg %p36
        %p240 = pneg %p60
        %p241 = pneg %p57
        %p242 = pneg %p81
        %p243 = pneg %p78
        %p244 = pneg %p102
        %p245 = pneg %p99
        %p246 = pneg %p123
        %p247 = pneg %p120
        %p248 = pneg %p149
        %p249 = pneg %p146
        %p250 = scmp.lt.s32.totalorder %s18, 1
        %s251 = scalar_select %p250, %s18, 1
        %s252 = smul.addr %s251, 3
        %s253 = smul.addr %s252, 4
        %s254 = scalar_lea.vmem %s5, %s253
        %p255 = scmp.lt.s32.totalorder %s18, 1
        %s256 = scalar_select %p255, %s18, 1
        %s257 = smul.addr %s256, 38
        %s258 = smul.addr %s257, 8
        %s259 = scalar_lea.vmem %s0, %s258
        %p260 = scmp.lt.s32.totalorder %s18, 1
        %s261 = scalar_select %p260, %s18, 1
        %s262 = smul.addr %s261, 3
        %s263 = smul.addr %s262, 4
        %s264 = scalar_lea.vmem %s5, %s263
        %v266 = vld [vmem:[#allocation3] sm:$0xff]
        %v267 = vld [vmem:[#allocation3 + $0x8] sm:$0x1]
        %v268 = vld [vmem:[#allocation5] sm:$0x1]
        %v269 = vld [vmem:[#allocation7] sm:$0x1]
        %v270 = vld [vmem:[%s259] sm:$0xff]
        %v271 = vld [vmem:[%s259 + $0x8] sm:$0xff]
        %v272 = vld [vmem:[%s259 + $0x10] sm:$0xff]
        %v273 = vld [vmem:[%s259 + $0x18] sm:$0xff]
        %v274 = vld [vmem:[%s259 + $0x20] sm:$0xff]
        %v275 = vld [vmem:[%s259 + $0x28] sm:$0xff]
        %v276 = vld [vmem:[%s259 + $0x30] sm:$0xff]
        %v277 = vld [vmem:[%s259 + $0x38] sm:$0xff]
        %279 = vset.pattern.permute.xlu0 0
        %280 = vperm.xlu0 %279, %v270
        %v281 = vpop.permute.xlu0 %280
        %284 = vset.pattern.permute.xlu0 0
        %285 = vperm.xlu0 %284, %v271
        %v286 = vpop.permute.xlu0 %285
        %289 = vset.pattern.permute.xlu0 0
        %290 = vperm.xlu0 %289, %v272
        %v291 = vpop.permute.xlu0 %290
        %294 = vset.pattern.permute.xlu0 0
        %295 = vperm.xlu0 %294, %v273
        %v296 = vpop.permute.xlu0 %295
        %299 = vset.pattern.permute.xlu0 0
        %300 = vperm.xlu0 %299, %v274
        %v301 = vpop.permute.xlu0 %300
        %304 = vset.pattern.permute.xlu0 0
        %305 = vperm.xlu0 %304, %v275
        %v306 = vpop.permute.xlu0 %305
        %309 = vset.pattern.permute.xlu0 0
        %310 = vperm.xlu0 %309, %v276
        %v311 = vpop.permute.xlu0 %310
        %314 = vset.pattern.permute.xlu0 0
        %315 = vperm.xlu0 %314, %v277
        %v316 = vpop.permute.xlu0 %315
        %v318 = vlaneseq
        %v319 = vshrl.u32 %v318, 7
        %v320 = vsub.s32 0, %v319
        %v321 = vrot.slane %v266, %v320
        %v322 = vmul.f32 %v281, %v321
        %v323 = vmul.f32 %v286, %v321
        %v324 = vmul.f32 %v291, %v321
        %v325 = vmul.f32 %v296, %v321
        %v326 = vmul.f32 %v301, %v321
        %v327 = vmul.f32 %v306, %v321
        %v328 = vmul.f32 %v311, %v321
        %v329 = vmul.f32 %v316, %v321
        %v330 = vadd.f32 %v322, 0.0
        %v331 = vadd.f32 %v323, 0.0
        %v332 = vadd.f32 %v324, 0.0
        %v333 = vadd.f32 %v325, 0.0
        %v334 = vadd.f32 %v326, 0.0
        %v335 = vadd.f32 %v327, 0.0
        %v336 = vadd.f32 %v328, 0.0
        %v337 = vadd.f32 %v329, 0.0
        %s338 = sadd.s32 0, 1
        %s339 = scalar_lea.vmem %s259, %s338
        %v340 = vld [vmem:[%s339] sm:$0xff]
        %v341 = vld [vmem:[%s339 + $0x8] sm:$0xff]
        %v342 = vld [vmem:[%s339 + $0x10] sm:$0xff]
        %v343 = vld [vmem:[%s339 + $0x18] sm:$0xff]
        %v344 = vld [vmem:[%s339 + $0x20] sm:$0xff]
        %v345 = vld [vmem:[%s339 + $0x28] sm:$0xff]
        %v346 = vld [vmem:[%s339 + $0x30] sm:$0xff]
        %v347 = vld [vmem:[%s339 + $0x38] sm:$0xff]
        %349 = vset.pattern.permute.xlu0 0
        %350 = vperm.xlu0 %349, %v340
        %v351 = vpop.permute.xlu0 %350
        %354 = vset.pattern.permute.xlu0 0
        %355 = vperm.xlu0 %354, %v341
        %v356 = vpop.permute.xlu0 %355
        %359 = vset.pattern.permute.xlu0 0
        %360 = vperm.xlu0 %359, %v342
        %v361 = vpop.permute.xlu0 %360
        %364 = vset.pattern.permute.xlu0 0
        %365 = vperm.xlu0 %364, %v343
        %v366 = vpop.permute.xlu0 %365
        %369 = vset.pattern.permute.xlu0 0
        %370 = vperm.xlu0 %369, %v344
        %v371 = vpop.permute.xlu0 %370
        %374 = vset.pattern.permute.xlu0 0
        %375 = vperm.xlu0 %374, %v345
        %v376 = vpop.permute.xlu0 %375
        %379 = vset.pattern.permute.xlu0 0
        %380 = vperm.xlu0 %379, %v346
        %v381 = vpop.permute.xlu0 %380
        %384 = vset.pattern.permute.xlu0 0
        %385 = vperm.xlu0 %384, %v347
        %v386 = vpop.permute.xlu0 %385
        %v388 = vlaneseq
        %v389 = vshrl.u32 %v388, 7
        %v390 = vsub.s32 1, %v389
        %v391 = vrot.slane %v266, %v390
        %v392 = vmul.f32 %v351, %v391
        %v393 = vmul.f32 %v356, %v391
        %v394 = vmul.f32 %v361, %v391
        %v395 = vmul.f32 %v366, %v391
        %v396 = vmul.f32 %v371, %v391
        %v397 = vmul.f32 %v376, %v391
        %v398 = vmul.f32 %v381, %v391
        %v399 = vmul.f32 %v386, %v391
        %v400 = vadd.f32 %v330, %v392
        %v401 = vadd.f32 %v331, %v393
        %v402 = vadd.f32 %v332, %v394
        %v403 = vadd.f32 %v333, %v395
        %v404 = vadd.f32 %v334, %v396
        %v405 = vadd.f32 %v335, %v397
        %v406 = vadd.f32 %v336, %v398
        %v407 = vadd.f32 %v337, %v399
        %s408 = sadd.s32 0, 2
        %s409 = scalar_lea.vmem %s259, %s408
        %v410 = vld [vmem:[%s409] sm:$0xff]
        %v411 = vld [vmem:[%s409 + $0x8] sm:$0xff]
        %v412 = vld [vmem:[%s409 + $0x10] sm:$0xff]
        %v413 = vld [vmem:[%s409 + $0x18] sm:$0xff]
        %v414 = vld [vmem:[%s409 + $0x20] sm:$0xff]
        %v415 = vld [vmem:[%s409 + $0x28] sm:$0xff]
        %v416 = vld [vmem:[%s409 + $0x30] sm:$0xff]
        %v417 = vld [vmem:[%s409 + $0x38] sm:$0xff]
        %419 = vset.pattern.permute.xlu0 0
        %420 = vperm.xlu0 %419, %v410
        %v421 = vpop.permute.xlu0 %420
        %424 = vset.pattern.permute.xlu0 0
        %425 = vperm.xlu0 %424, %v411
        %v426 = vpop.permute.xlu0 %425
        %429 = vset.pattern.permute.xlu0 0
        %430 = vperm.xlu0 %429, %v412
        %v431 = vpop.permute.xlu0 %430
        %434 = vset.pattern.permute.xlu0 0
        %435 = vperm.xlu0 %434, %v413
        %v436 = vpop.permute.xlu0 %435
        %439 = vset.pattern.permute.xlu0 0
        %440 = vperm.xlu0 %439, %v414
        %v441 = vpop.permute.xlu0 %440
        %444 = vset.pattern.permute.xlu0 0
        %445 = vperm.xlu0 %444, %v415
        %v446 = vpop.permute.xlu0 %445
        %449 = vset.pattern.permute.xlu0 0
        %450 = vperm.xlu0 %449, %v416
        %v451 = vpop.permute.xlu0 %450
        %454 = vset.pattern.permute.xlu0 0
        %455 = vperm.xlu0 %454, %v417
        %v456 = vpop.permute.xlu0 %455
        %v458 = vlaneseq
        %v459 = vshrl.u32 %v458, 7
        %v460 = vsub.s32 2, %v459
        %v461 = vrot.slane %v266, %v460
        %v462 = vmul.f32 %v421, %v461
        %v463 = vmul.f32 %v426, %v461
        %v464 = vmul.f32 %v431, %v461
        %v465 = vmul.f32 %v436, %v461
        %v466 = vmul.f32 %v441, %v461
        %v467 = vmul.f32 %v446, %v461
        %v468 = vmul.f32 %v451, %v461
        %v469 = vmul.f32 %v456, %v461
        %v470 = vadd.f32 %v400, %v462
        %v471 = vadd.f32 %v401, %v463
        %v472 = vadd.f32 %v402, %v464
        %v473 = vadd.f32 %v403, %v465
        %v474 = vadd.f32 %v404, %v466
        %v475 = vadd.f32 %v405, %v467
        %v476 = vadd.f32 %v406, %v468
        %v477 = vadd.f32 %v407, %v469
        %s478 = sadd.s32 0, 16
        %s479 = scalar_lea.vmem %s259, %s478
        %v480 = vld [vmem:[%s479] sm:$0xff]
        %v481 = vld [vmem:[%s479 + $0x8] sm:$0xff]
        %v482 = vld [vmem:[%s479 + $0x10] sm:$0xff]
        %v483 = vld [vmem:[%s479 + $0x18] sm:$0xff]
        %v484 = vld [vmem:[%s479 + $0x20] sm:$0xff]
        %v485 = vld [vmem:[%s479 + $0x28] sm:$0xff]
        %v486 = vld [vmem:[%s479 + $0x30] sm:$0xff]
        %v487 = vld [vmem:[%s479 + $0x38] sm:$0xff]
        %489 = vset.pattern.permute.xlu0 0
        %490 = vperm.xlu0 %489, %v480
        %v491 = vpop.permute.xlu0 %490
        %494 = vset.pattern.permute.xlu0 0
        %495 = vperm.xlu0 %494, %v481
        %v496 = vpop.permute.xlu0 %495
        %499 = vset.pattern.permute.xlu0 0
        %500 = vperm.xlu0 %499, %v482
        %v501 = vpop.permute.xlu0 %500
        %504 = vset.pattern.permute.xlu0 0
        %505 = vperm.xlu0 %504, %v483
        %v506 = vpop.permute.xlu0 %505
        %509 = vset.pattern.permute.xlu0 0
        %510 = vperm.xlu0 %509, %v484
        %v511 = vpop.permute.xlu0 %510
        %514 = vset.pattern.permute.xlu0 0
        %515 = vperm.xlu0 %514, %v485
        %v516 = vpop.permute.xlu0 %515
        %519 = vset.pattern.permute.xlu0 0
        %520 = vperm.xlu0 %519, %v486
        %v521 = vpop.permute.xlu0 %520
        %524 = vset.pattern.permute.xlu0 0
        %525 = vperm.xlu0 %524, %v487
        %v526 = vpop.permute.xlu0 %525
        %v528 = vlaneseq
        %v529 = vshrl.u32 %v528, 7
        %v530 = vsub.s32 3, %v529
        %v531 = vrot.slane %v266, %v530
        %v532 = vmul.f32 %v491, %v531
        %v533 = vmul.f32 %v496, %v531
        %v534 = vmul.f32 %v501, %v531
        %v535 = vmul.f32 %v506, %v531
        %v536 = vmul.f32 %v511, %v531
        %v537 = vmul.f32 %v516, %v531
        %v538 = vmul.f32 %v521, %v531
        %v539 = vmul.f32 %v526, %v531
        %v540 = vadd.f32 %v470, %v532
        %v541 = vadd.f32 %v471, %v533
        %v542 = vadd.f32 %v472, %v534
        %v543 = vadd.f32 %v473, %v535
        %v544 = vadd.f32 %v474, %v536
        %v545 = vadd.f32 %v475, %v537
        %v546 = vadd.f32 %v476, %v538
        %v547 = vadd.f32 %v477, %v539
        %s548 = sadd.s32 0, 17
        %s549 = scalar_lea.vmem %s259, %s548
        %v550 = vld [vmem:[%s549] sm:$0xff]
        %v551 = vld [vmem:[%s549 + $0x8] sm:$0xff]
        %v552 = vld [vmem:[%s549 + $0x10] sm:$0xff]
        %v553 = vld [vmem:[%s549 + $0x18] sm:$0xff]
        %v554 = vld [vmem:[%s549 + $0x20] sm:$0xff]
        %v555 = vld [vmem:[%s549 + $0x28] sm:$0xff]
        %v556 = vld [vmem:[%s549 + $0x30] sm:$0xff]
        %v557 = vld [vmem:[%s549 + $0x38] sm:$0xff]
        %559 = vset.pattern.permute.xlu0 0
        %560 = vperm.xlu0 %559, %v550
        %v561 = vpop.permute.xlu0 %560
        %564 = vset.pattern.permute.xlu0 0
        %565 = vperm.xlu0 %564, %v551
        %v566 = vpop.permute.xlu0 %565
        %569 = vset.pattern.permute.xlu0 0
        %570 = vperm.xlu0 %569, %v552
        %v571 = vpop.permute.xlu0 %570
        %574 = vset.pattern.permute.xlu0 0
        %575 = vperm.xlu0 %574, %v553
        %v576 = vpop.permute.xlu0 %575
        %579 = vset.pattern.permute.xlu0 0
        %580 = vperm.xlu0 %579, %v554
        %v581 = vpop.permute.xlu0 %580
        %584 = vset.pattern.permute.xlu0 0
        %585 = vperm.xlu0 %584, %v555
        %v586 = vpop.permute.xlu0 %585
        %589 = vset.pattern.permute.xlu0 0
        %590 = vperm.xlu0 %589, %v556
        %v591 = vpop.permute.xlu0 %590
        %594 = vset.pattern.permute.xlu0 0
        %595 = vperm.xlu0 %594, %v557
        %v596 = vpop.permute.xlu0 %595
        %v598 = vlaneseq
        %v599 = vshrl.u32 %v598, 7
        %v600 = vsub.s32 4, %v599
        %v601 = vrot.slane %v266, %v600
        %v602 = vmul.f32 %v561, %v601
        %v603 = vmul.f32 %v566, %v601
        %v604 = vmul.f32 %v571, %v601
        %v605 = vmul.f32 %v576, %v601
        %v606 = vmul.f32 %v581, %v601
        %v607 = vmul.f32 %v586, %v601
        %v608 = vmul.f32 %v591, %v601
        %v609 = vmul.f32 %v596, %v601
        %v610 = vadd.f32 %v540, %v602
        %v611 = vadd.f32 %v541, %v603
        %v612 = vadd.f32 %v542, %v604
        %v613 = vadd.f32 %v543, %v605
        %v614 = vadd.f32 %v544, %v606
        %v615 = vadd.f32 %v545, %v607
        %v616 = vadd.f32 %v546, %v608
        %v617 = vadd.f32 %v547, %v609
        %s618 = sadd.s32 0, 18
        %s619 = scalar_lea.vmem %s259, %s618
        %v620 = vld [vmem:[%s619] sm:$0xff]
        %v621 = vld [vmem:[%s619 + $0x8] sm:$0xff]
        %v622 = vld [vmem:[%s619 + $0x10] sm:$0xff]
        %v623 = vld [vmem:[%s619 + $0x18] sm:$0xff]
        %v624 = vld [vmem:[%s619 + $0x20] sm:$0xff]
        %v625 = vld [vmem:[%s619 + $0x28] sm:$0xff]
        %v626 = vld [vmem:[%s619 + $0x30] sm:$0xff]
        %v627 = vld [vmem:[%s619 + $0x38] sm:$0xff]
        %629 = vset.pattern.permute.xlu0 0
        %630 = vperm.xlu0 %629, %v620
        %v631 = vpop.permute.xlu0 %630
        %634 = vset.pattern.permute.xlu0 0
        %635 = vperm.xlu0 %634, %v621
        %v636 = vpop.permute.xlu0 %635
        %639 = vset.pattern.permute.xlu0 0
        %640 = vperm.xlu0 %639, %v622
        %v641 = vpop.permute.xlu0 %640
        %644 = vset.pattern.permute.xlu0 0
        %645 = vperm.xlu0 %644, %v623
        %v646 = vpop.permute.xlu0 %645
        %649 = vset.pattern.permute.xlu0 0
        %650 = vperm.xlu0 %649, %v624
        %v651 = vpop.permute.xlu0 %650
        %654 = vset.pattern.permute.xlu0 0
        %655 = vperm.xlu0 %654, %v625
        %v656 = vpop.permute.xlu0 %655
        %659 = vset.pattern.permute.xlu0 0
        %660 = vperm.xlu0 %659, %v626
        %v661 = vpop.permute.xlu0 %660
        %664 = vset.pattern.permute.xlu0 0
        %665 = vperm.xlu0 %664, %v627
        %v666 = vpop.permute.xlu0 %665
        %v668 = vlaneseq
        %v669 = vshrl.u32 %v668, 7
        %v670 = vsub.s32 5, %v669
        %v671 = vrot.slane %v266, %v670
        %v672 = vmul.f32 %v631, %v671
        %v673 = vmul.f32 %v636, %v671
        %v674 = vmul.f32 %v641, %v671
        %v675 = vmul.f32 %v646, %v671
        %v676 = vmul.f32 %v651, %v671
        %v677 = vmul.f32 %v656, %v671
        %v678 = vmul.f32 %v661, %v671
        %v679 = vmul.f32 %v666, %v671
        %v680 = vadd.f32 %v610, %v672
        %v681 = vadd.f32 %v611, %v673
        %v682 = vadd.f32 %v612, %v674
        %v683 = vadd.f32 %v613, %v675
        %v684 = vadd.f32 %v614, %v676
        %v685 = vadd.f32 %v615, %v677
        %v686 = vadd.f32 %v616, %v678
        %v687 = vadd.f32 %v617, %v679
        %s688 = sadd.s32 0, 32
        %s689 = scalar_lea.vmem %s259, %s688
        %v690 = vld [vmem:[%s689] sm:$0xff]
        %v691 = vld [vmem:[%s689 + $0x8] sm:$0xff]
        %v692 = vld [vmem:[%s689 + $0x10] sm:$0xff]
        %v693 = vld [vmem:[%s689 + $0x18] sm:$0xff]
        %v694 = vld [vmem:[%s689 + $0x20] sm:$0xff]
        %v695 = vld [vmem:[%s689 + $0x28] sm:$0xff]
        %v696 = vld [vmem:[%s689 + $0x30] sm:$0xff]
        %v697 = vld [vmem:[%s689 + $0x38] sm:$0xff]
        %699 = vset.pattern.permute.xlu0 0
        %700 = vperm.xlu0 %699, %v690
        %v701 = vpop.permute.xlu0 %700
        %704 = vset.pattern.permute.xlu0 0
        %705 = vperm.xlu0 %704, %v691
        %v706 = vpop.permute.xlu0 %705
        %709 = vset.pattern.permute.xlu0 0
        %710 = vperm.xlu0 %709, %v692
        %v711 = vpop.permute.xlu0 %710
        %714 = vset.pattern.permute.xlu0 0
        %715 = vperm.xlu0 %714, %v693
        %v716 = vpop.permute.xlu0 %715
        %719 = vset.pattern.permute.xlu0 0
        %720 = vperm.xlu0 %719, %v694
        %v721 = vpop.permute.xlu0 %720
        %724 = vset.pattern.permute.xlu0 0
        %725 = vperm.xlu0 %724, %v695
        %v726 = vpop.permute.xlu0 %725
        %729 = vset.pattern.permute.xlu0 0
        %730 = vperm.xlu0 %729, %v696
        %v731 = vpop.permute.xlu0 %730
        %734 = vset.pattern.permute.xlu0 0
        %735 = vperm.xlu0 %734, %v697
        %v736 = vpop.permute.xlu0 %735
        %v738 = vlaneseq
        %v739 = vshrl.u32 %v738, 7
        %v740 = vsub.s32 6, %v739
        %v741 = vrot.slane %v266, %v740
        %v742 = vmul.f32 %v701, %v741
        %v743 = vmul.f32 %v706, %v741
        %v744 = vmul.f32 %v711, %v741
        %v745 = vmul.f32 %v716, %v741
        %v746 = vmul.f32 %v721, %v741
        %v747 = vmul.f32 %v726, %v741
        %v748 = vmul.f32 %v731, %v741
        %v749 = vmul.f32 %v736, %v741
        %v750 = vadd.f32 %v680, %v742
        %v751 = vadd.f32 %v681, %v743
        %v752 = vadd.f32 %v682, %v744
        %v753 = vadd.f32 %v683, %v745
        %v754 = vadd.f32 %v684, %v746
        %v755 = vadd.f32 %v685, %v747
        %v756 = vadd.f32 %v686, %v748
        %v757 = vadd.f32 %v687, %v749
        %s758 = sadd.s32 0, 33
        %s759 = scalar_lea.vmem %s259, %s758
        %v760 = vld [vmem:[%s759] sm:$0xff]
        %v761 = vld [vmem:[%s759 + $0x8] sm:$0xff]
        %v762 = vld [vmem:[%s759 + $0x10] sm:$0xff]
        %v763 = vld [vmem:[%s759 + $0x18] sm:$0xff]
        %v764 = vld [vmem:[%s759 + $0x20] sm:$0xff]
        %v765 = vld [vmem:[%s759 + $0x28] sm:$0xff]
        %v766 = vld [vmem:[%s759 + $0x30] sm:$0xff]
        %v767 = vld [vmem:[%s759 + $0x38] sm:$0xff]
        %769 = vset.pattern.permute.xlu0 0
        %770 = vperm.xlu0 %769, %v760
        %v771 = vpop.permute.xlu0 %770
        %774 = vset.pattern.permute.xlu0 0
        %775 = vperm.xlu0 %774, %v761
        %v776 = vpop.permute.xlu0 %775
        %779 = vset.pattern.permute.xlu0 0
        %780 = vperm.xlu0 %779, %v762
        %v781 = vpop.permute.xlu0 %780
        %784 = vset.pattern.permute.xlu0 0
        %785 = vperm.xlu0 %784, %v763
        %v786 = vpop.permute.xlu0 %785
        %789 = vset.pattern.permute.xlu0 0
        %790 = vperm.xlu0 %789, %v764
        %v791 = vpop.permute.xlu0 %790
        %794 = vset.pattern.permute.xlu0 0
        %795 = vperm.xlu0 %794, %v765
        %v796 = vpop.permute.xlu0 %795
        %799 = vset.pattern.permute.xlu0 0
        %800 = vperm.xlu0 %799, %v766
        %v801 = vpop.permute.xlu0 %800
        %804 = vset.pattern.permute.xlu0 0
        %805 = vperm.xlu0 %804, %v767
        %v806 = vpop.permute.xlu0 %805
        %v808 = vlaneseq
        %v809 = vshrl.u32 %v808, 7
        %v810 = vsub.s32 7, %v809
        %v811 = vrot.slane %v266, %v810
        %v812 = vmul.f32 %v771, %v811
        %v813 = vmul.f32 %v776, %v811
        %v814 = vmul.f32 %v781, %v811
        %v815 = vmul.f32 %v786, %v811
        %v816 = vmul.f32 %v791, %v811
        %v817 = vmul.f32 %v796, %v811
        %v818 = vmul.f32 %v801, %v811
        %v819 = vmul.f32 %v806, %v811
        %v820 = vadd.f32 %v750, %v812
        %v821 = vadd.f32 %v751, %v813
        %v822 = vadd.f32 %v752, %v814
        %v823 = vadd.f32 %v753, %v815
        %v824 = vadd.f32 %v754, %v816
        %v825 = vadd.f32 %v755, %v817
        %v826 = vadd.f32 %v756, %v818
        %v827 = vadd.f32 %v757, %v819
        %s828 = sadd.s32 0, 34
        %s829 = scalar_lea.vmem %s259, %s828
        %v830 = vld [vmem:[%s829] sm:$0xff]
        %v831 = vld [vmem:[%s829 + $0x8] sm:$0xff]
        %v832 = vld [vmem:[%s829 + $0x10] sm:$0xff]
        %v833 = vld [vmem:[%s829 + $0x18] sm:$0xff]
        %v834 = vld [vmem:[%s829 + $0x20] sm:$0xff]
        %v835 = vld [vmem:[%s829 + $0x28] sm:$0xff]
        %v836 = vld [vmem:[%s829 + $0x30] sm:$0xff]
        %v837 = vld [vmem:[%s829 + $0x38] sm:$0xff]
        %839 = vset.pattern.permute.xlu0 0
        %840 = vperm.xlu0 %839, %v830
        %v841 = vpop.permute.xlu0 %840
        %844 = vset.pattern.permute.xlu0 0
        %845 = vperm.xlu0 %844, %v831
        %v846 = vpop.permute.xlu0 %845
        %849 = vset.pattern.permute.xlu0 0
        %850 = vperm.xlu0 %849, %v832
        %v851 = vpop.permute.xlu0 %850
        %854 = vset.pattern.permute.xlu0 0
        %855 = vperm.xlu0 %854, %v833
        %v856 = vpop.permute.xlu0 %855
        %859 = vset.pattern.permute.xlu0 0
        %860 = vperm.xlu0 %859, %v834
        %v861 = vpop.permute.xlu0 %860
        %864 = vset.pattern.permute.xlu0 0
        %865 = vperm.xlu0 %864, %v835
        %v866 = vpop.permute.xlu0 %865
        %869 = vset.pattern.permute.xlu0 0
        %870 = vperm.xlu0 %869, %v836
        %v871 = vpop.permute.xlu0 %870
        %874 = vset.pattern.permute.xlu0 0
        %875 = vperm.xlu0 %874, %v837
        %v876 = vpop.permute.xlu0 %875
        %v878 = vlaneseq
        %v879 = vshrl.u32 %v878, 7
        %v880 = vsub.s32 0, %v879
        %v881 = vrot.slane %v267, %v880
        %v882 = vmul.f32 %v841, %v881
        %v883 = vmul.f32 %v846, %v881
        %v884 = vmul.f32 %v851, %v881
        %v885 = vmul.f32 %v856, %v881
        %v886 = vmul.f32 %v861, %v881
        %v887 = vmul.f32 %v866, %v881
        %v888 = vmul.f32 %v871, %v881
        %v889 = vmul.f32 %v876, %v881
        %v890 = vadd.f32 %v820, %v882
        %v891 = vadd.f32 %v821, %v883
        %v892 = vadd.f32 %v822, %v884
        %v893 = vadd.f32 %v823, %v885
        %v894 = vadd.f32 %v824, %v886
        %v895 = vadd.f32 %v825, %v887
        %v896 = vadd.f32 %v826, %v888
        %v897 = vadd.f32 %v827, %v889
        %v899 = vlaneseq
        %v900 = vshrl.u32 %v899, 7
        %v901 = vsub.s32 0, %v900
        %v902 = vrot.slane %v268, %v901
        %v904 = vadd.f32 %v890, %v902
        %v905 = vadd.f32 %v891, %v902
        %v906 = vadd.f32 %v892, %v902
        %v907 = vadd.f32 %v893, %v902
        %v908 = vadd.f32 %v894, %v902
        %v909 = vadd.f32 %v895, %v902
        %v910 = vadd.f32 %v896, %v902
        %v911 = vadd.f32 %v897, %v902
        %v912 = vmax.f32 %v904, 0.0
        %v913 = vmax.f32 %v905, 0.0
        %v914 = vmax.f32 %v906, 0.0
        %v915 = vmax.f32 %v907, 0.0
        %v916 = vmax.f32 %v908, 0.0
        %v917 = vmax.f32 %v909, 0.0
        %v918 = vmax.f32 %v910, 0.0
        %v919 = vmax.f32 %v911, 0.0
        %v920 = vpack.c.bf16 %v913, %v912
        %v921 = vpack.c.bf16 %v915, %v914
        %v922 = vpack.c.bf16 %v917, %v916
        %v923 = vpack.c.bf16 %v919, %v918
        %v928 = vunpack.c.l.b16 %v920
        %v929 = vunpack.c.h.b16 %v920
        %v930 = vunpack.c.l.b16 %v921
        %v931 = vunpack.c.h.b16 %v921
        %v932 = vunpack.c.l.b16 %v922
        %v933 = vunpack.c.h.b16 %v922
        %v934 = vunpack.c.l.b16 %v923
        %v935 = vunpack.c.h.b16 %v923
        %v936 = vpack.c.b16 %v928, %v928
        %v937 = vpack.c.b16 %v929, %v929
        %v938 = vpack.c.b16 %v930, %v930
        %v939 = vpack.c.b16 %v931, %v931
        %v940 = vpack.c.b16 %v932, %v932
        %v941 = vpack.c.b16 %v933, %v933
        %v942 = vpack.c.b16 %v934, %v934
        %v943 = vpack.c.b16 %v935, %v935
        %vm952 = vcmask 257024
        %953 = vst.msk [vmem:[#allocation2] sm:$0xf] %vm952, %v936
        %954 = vst.msk [vmem:[#allocation2 + $0x4] sm:$0xf] %vm952, %v937
        %955 = vst.msk [vmem:[#allocation2 + $0x8] sm:$0xf] %vm952, %v938
        %956 = vst.msk [vmem:[#allocation2 + $0xc] sm:$0xf] %vm952, %v939
        %957 = vst.msk [vmem:[#allocation2 + $0x10] sm:$0xf] %vm952, %v940
        %958 = vst.msk [vmem:[#allocation2 + $0x14] sm:$0xf] %vm952, %v941
        %959 = vst.msk [vmem:[#allocation2 + $0x18] sm:$0xf] %vm952, %v942
        %960 = vst.msk [vmem:[#allocation2 + $0x1c] sm:$0xf] %vm952, %v943
        %s961 = scalar_lea.vmem %s259, 64
        %v962 = vld [vmem:[%s961] sm:$0xff]
        %v963 = vld [vmem:[%s961 + $0x8] sm:$0xff]
        %v964 = vld [vmem:[%s961 + $0x10] sm:$0xff]
        %v965 = vld [vmem:[%s961 + $0x18] sm:$0xff]
        %v966 = vld [vmem:[%s961 + $0x20] sm:$0xff]
        %v967 = vld [vmem:[%s961 + $0x28] sm:$0xff]
        %v968 = vld [vmem:[%s961 + $0x30] sm:$0xff]
        %v969 = vld [vmem:[%s961 + $0x38] sm:$0xff]
        %971 = vset.pattern.permute.xlu0 0
        %972 = vperm.xlu0 %971, %v962
        %v973 = vpop.permute.xlu0 %972
        %976 = vset.pattern.permute.xlu0 0
        %977 = vperm.xlu0 %976, %v963
        %v978 = vpop.permute.xlu0 %977
        %981 = vset.pattern.permute.xlu0 0
        %982 = vperm.xlu0 %981, %v964
        %v983 = vpop.permute.xlu0 %982
        %986 = vset.pattern.permute.xlu0 0
        %987 = vperm.xlu0 %986, %v965
        %v988 = vpop.permute.xlu0 %987
        %991 = vset.pattern.permute.xlu0 0
        %992 = vperm.xlu0 %991, %v966
        %v993 = vpop.permute.xlu0 %992
        %996 = vset.pattern.permute.xlu0 0
        %997 = vperm.xlu0 %996, %v967
        %v998 = vpop.permute.xlu0 %997
        %1001 = vset.pattern.permute.xlu0 0
        %1002 = vperm.xlu0 %1001, %v968
        %v1003 = vpop.permute.xlu0 %1002
        %1006 = vset.pattern.permute.xlu0 0
        %1007 = vperm.xlu0 %1006, %v969
        %v1008 = vpop.permute.xlu0 %1007
        %v1010 = vmul.f32 %v973, %v321
        %v1011 = vmul.f32 %v978, %v321
        %v1012 = vmul.f32 %v983, %v321
        %v1013 = vmul.f32 %v988, %v321
        %v1014 = vmul.f32 %v993, %v321
        %v1015 = vmul.f32 %v998, %v321
        %v1016 = vmul.f32 %v1003, %v321
        %v1017 = vmul.f32 %v1008, %v321
        %v1018 = vadd.f32 %v1010, 0.0
        %v1019 = vadd.f32 %v1011, 0.0
        %v1020 = vadd.f32 %v1012, 0.0
        %v1021 = vadd.f32 %v1013, 0.0
        %v1022 = vadd.f32 %v1014, 0.0
        %v1023 = vadd.f32 %v1015, 0.0
        %v1024 = vadd.f32 %v1016, 0.0
        %v1025 = vadd.f32 %v1017, 0.0
        %s1026 = sadd.s32 64, 1
        %s1027 = scalar_lea.vmem %s259, %s1026
        %v1028 = vld [vmem:[%s1027] sm:$0xff]
        %v1029 = vld [vmem:[%s1027 + $0x8] sm:$0xff]
        %v1030 = vld [vmem:[%s1027 + $0x10] sm:$0xff]
        %v1031 = vld [vmem:[%s1027 + $0x18] sm:$0xff]
        %v1032 = vld [vmem:[%s1027 + $0x20] sm:$0xff]
        %v1033 = vld [vmem:[%s1027 + $0x28] sm:$0xff]
        %v1034 = vld [vmem:[%s1027 + $0x30] sm:$0xff]
        %v1035 = vld [vmem:[%s1027 + $0x38] sm:$0xff]
        %1037 = vset.pattern.permute.xlu0 0
        %1038 = vperm.xlu0 %1037, %v1028
        %v1039 = vpop.permute.xlu0 %1038
        %1042 = vset.pattern.permute.xlu0 0
        %1043 = vperm.xlu0 %1042, %v1029
        %v1044 = vpop.permute.xlu0 %1043
        %1047 = vset.pattern.permute.xlu0 0
        %1048 = vperm.xlu0 %1047, %v1030
        %v1049 = vpop.permute.xlu0 %1048
        %1052 = vset.pattern.permute.xlu0 0
        %1053 = vperm.xlu0 %1052, %v1031
        %v1054 = vpop.permute.xlu0 %1053
        %1057 = vset.pattern.permute.xlu0 0
        %1058 = vperm.xlu0 %1057, %v1032
        %v1059 = vpop.permute.xlu0 %1058
        %1062 = vset.pattern.permute.xlu0 0
        %1063 = vperm.xlu0 %1062, %v1033
        %v1064 = vpop.permute.xlu0 %1063
        %1067 = vset.pattern.permute.xlu0 0
        %1068 = vperm.xlu0 %1067, %v1034
        %v1069 = vpop.permute.xlu0 %1068
        %1072 = vset.pattern.permute.xlu0 0
        %1073 = vperm.xlu0 %1072, %v1035
        %v1074 = vpop.permute.xlu0 %1073
        %v1076 = vmul.f32 %v1039, %v391
        %v1077 = vmul.f32 %v1044, %v391
        %v1078 = vmul.f32 %v1049, %v391
        %v1079 = vmul.f32 %v1054, %v391
        %v1080 = vmul.f32 %v1059, %v391
        %v1081 = vmul.f32 %v1064, %v391
        %v1082 = vmul.f32 %v1069, %v391
        %v1083 = vmul.f32 %v1074, %v391
        %v1084 = vadd.f32 %v1018, %v1076
        %v1085 = vadd.f32 %v1019, %v1077
        %v1086 = vadd.f32 %v1020, %v1078
        %v1087 = vadd.f32 %v1021, %v1079
        %v1088 = vadd.f32 %v1022, %v1080
        %v1089 = vadd.f32 %v1023, %v1081
        %v1090 = vadd.f32 %v1024, %v1082
        %v1091 = vadd.f32 %v1025, %v1083
        %s1092 = sadd.s32 64, 2
        %s1093 = scalar_lea.vmem %s259, %s1092
        %v1094 = vld [vmem:[%s1093] sm:$0xff]
        %v1095 = vld [vmem:[%s1093 + $0x8] sm:$0xff]
        %v1096 = vld [vmem:[%s1093 + $0x10] sm:$0xff]
        %v1097 = vld [vmem:[%s1093 + $0x18] sm:$0xff]
        %v1098 = vld [vmem:[%s1093 + $0x20] sm:$0xff]
        %v1099 = vld [vmem:[%s1093 + $0x28] sm:$0xff]
        %v1100 = vld [vmem:[%s1093 + $0x30] sm:$0xff]
        %v1101 = vld [vmem:[%s1093 + $0x38] sm:$0xff]
        %1103 = vset.pattern.permute.xlu0 0
        %1104 = vperm.xlu0 %1103, %v1094
        %v1105 = vpop.permute.xlu0 %1104
        %1108 = vset.pattern.permute.xlu0 0
        %1109 = vperm.xlu0 %1108, %v1095
        %v1110 = vpop.permute.xlu0 %1109
        %1113 = vset.pattern.permute.xlu0 0
        %1114 = vperm.xlu0 %1113, %v1096
        %v1115 = vpop.permute.xlu0 %1114
        %1118 = vset.pattern.permute.xlu0 0
        %1119 = vperm.xlu0 %1118, %v1097
        %v1120 = vpop.permute.xlu0 %1119
        %1123 = vset.pattern.permute.xlu0 0
        %1124 = vperm.xlu0 %1123, %v1098
        %v1125 = vpop.permute.xlu0 %1124
        %1128 = vset.pattern.permute.xlu0 0
        %1129 = vperm.xlu0 %1128, %v1099
        %v1130 = vpop.permute.xlu0 %1129
        %1133 = vset.pattern.permute.xlu0 0
        %1134 = vperm.xlu0 %1133, %v1100
        %v1135 = vpop.permute.xlu0 %1134
        %1138 = vset.pattern.permute.xlu0 0
        %1139 = vperm.xlu0 %1138, %v1101
        %v1140 = vpop.permute.xlu0 %1139
        %v1142 = vmul.f32 %v1105, %v461
        %v1143 = vmul.f32 %v1110, %v461
        %v1144 = vmul.f32 %v1115, %v461
        %v1145 = vmul.f32 %v1120, %v461
        %v1146 = vmul.f32 %v1125, %v461
        %v1147 = vmul.f32 %v1130, %v461
        %v1148 = vmul.f32 %v1135, %v461
        %v1149 = vmul.f32 %v1140, %v461
        %v1150 = vadd.f32 %v1084, %v1142
        %v1151 = vadd.f32 %v1085, %v1143
        %v1152 = vadd.f32 %v1086, %v1144
        %v1153 = vadd.f32 %v1087, %v1145
        %v1154 = vadd.f32 %v1088, %v1146
        %v1155 = vadd.f32 %v1089, %v1147
        %v1156 = vadd.f32 %v1090, %v1148
        %v1157 = vadd.f32 %v1091, %v1149
        %s1158 = sadd.s32 64, 16
        %s1159 = scalar_lea.vmem %s259, %s1158
        %v1160 = vld [vmem:[%s1159] sm:$0xff]
        %v1161 = vld [vmem:[%s1159 + $0x8] sm:$0xff]
        %v1162 = vld [vmem:[%s1159 + $0x10] sm:$0xff]
        %v1163 = vld [vmem:[%s1159 + $0x18] sm:$0xff]
        %v1164 = vld [vmem:[%s1159 + $0x20] sm:$0xff]
        %v1165 = vld [vmem:[%s1159 + $0x28] sm:$0xff]
        %v1166 = vld [vmem:[%s1159 + $0x30] sm:$0xff]
        %v1167 = vld [vmem:[%s1159 + $0x38] sm:$0xff]
        %1169 = vset.pattern.permute.xlu0 0
        %1170 = vperm.xlu0 %1169, %v1160
        %v1171 = vpop.permute.xlu0 %1170
        %1174 = vset.pattern.permute.xlu0 0
        %1175 = vperm.xlu0 %1174, %v1161
        %v1176 = vpop.permute.xlu0 %1175
        %1179 = vset.pattern.permute.xlu0 0
        %1180 = vperm.xlu0 %1179, %v1162
        %v1181 = vpop.permute.xlu0 %1180
        %1184 = vset.pattern.permute.xlu0 0
        %1185 = vperm.xlu0 %1184, %v1163
        %v1186 = vpop.permute.xlu0 %1185
        %1189 = vset.pattern.permute.xlu0 0
        %1190 = vperm.xlu0 %1189, %v1164
        %v1191 = vpop.permute.xlu0 %1190
        %1194 = vset.pattern.permute.xlu0 0
        %1195 = vperm.xlu0 %1194, %v1165
        %v1196 = vpop.permute.xlu0 %1195
        %1199 = vset.pattern.permute.xlu0 0
        %1200 = vperm.xlu0 %1199, %v1166
        %v1201 = vpop.permute.xlu0 %1200
        %1204 = vset.pattern.permute.xlu0 0
        %1205 = vperm.xlu0 %1204, %v1167
        %v1206 = vpop.permute.xlu0 %1205
        %v1208 = vmul.f32 %v1171, %v531
        %v1209 = vmul.f32 %v1176, %v531
        %v1210 = vmul.f32 %v1181, %v531
        %v1211 = vmul.f32 %v1186, %v531
        %v1212 = vmul.f32 %v1191, %v531
        %v1213 = vmul.f32 %v1196, %v531
        %v1214 = vmul.f32 %v1201, %v531
        %v1215 = vmul.f32 %v1206, %v531
        %v1216 = vadd.f32 %v1150, %v1208
        %v1217 = vadd.f32 %v1151, %v1209
        %v1218 = vadd.f32 %v1152, %v1210
        %v1219 = vadd.f32 %v1153, %v1211
        %v1220 = vadd.f32 %v1154, %v1212
        %v1221 = vadd.f32 %v1155, %v1213
        %v1222 = vadd.f32 %v1156, %v1214
        %v1223 = vadd.f32 %v1157, %v1215
        %s1224 = sadd.s32 64, 17
        %s1225 = scalar_lea.vmem %s259, %s1224
        %v1226 = vld [vmem:[%s1225] sm:$0xff]
        %v1227 = vld [vmem:[%s1225 + $0x8] sm:$0xff]
        %v1228 = vld [vmem:[%s1225 + $0x10] sm:$0xff]
        %v1229 = vld [vmem:[%s1225 + $0x18] sm:$0xff]
        %v1230 = vld [vmem:[%s1225 + $0x20] sm:$0xff]
        %v1231 = vld [vmem:[%s1225 + $0x28] sm:$0xff]
        %v1232 = vld [vmem:[%s1225 + $0x30] sm:$0xff]
        %v1233 = vld [vmem:[%s1225 + $0x38] sm:$0xff]
        %1235 = vset.pattern.permute.xlu0 0
        %1236 = vperm.xlu0 %1235, %v1226
        %v1237 = vpop.permute.xlu0 %1236
        %1240 = vset.pattern.permute.xlu0 0
        %1241 = vperm.xlu0 %1240, %v1227
        %v1242 = vpop.permute.xlu0 %1241
        %1245 = vset.pattern.permute.xlu0 0
        %1246 = vperm.xlu0 %1245, %v1228
        %v1247 = vpop.permute.xlu0 %1246
        %1250 = vset.pattern.permute.xlu0 0
        %1251 = vperm.xlu0 %1250, %v1229
        %v1252 = vpop.permute.xlu0 %1251
        %1255 = vset.pattern.permute.xlu0 0
        %1256 = vperm.xlu0 %1255, %v1230
        %v1257 = vpop.permute.xlu0 %1256
        %1260 = vset.pattern.permute.xlu0 0
        %1261 = vperm.xlu0 %1260, %v1231
        %v1262 = vpop.permute.xlu0 %1261
        %1265 = vset.pattern.permute.xlu0 0
        %1266 = vperm.xlu0 %1265, %v1232
        %v1267 = vpop.permute.xlu0 %1266
        %1270 = vset.pattern.permute.xlu0 0
        %1271 = vperm.xlu0 %1270, %v1233
        %v1272 = vpop.permute.xlu0 %1271
        %v1274 = vmul.f32 %v1237, %v601
        %v1275 = vmul.f32 %v1242, %v601
        %v1276 = vmul.f32 %v1247, %v601
        %v1277 = vmul.f32 %v1252, %v601
        %v1278 = vmul.f32 %v1257, %v601
        %v1279 = vmul.f32 %v1262, %v601
        %v1280 = vmul.f32 %v1267, %v601
        %v1281 = vmul.f32 %v1272, %v601
        %v1282 = vadd.f32 %v1216, %v1274
        %v1283 = vadd.f32 %v1217, %v1275
        %v1284 = vadd.f32 %v1218, %v1276
        %v1285 = vadd.f32 %v1219, %v1277
        %v1286 = vadd.f32 %v1220, %v1278
        %v1287 = vadd.f32 %v1221, %v1279
        %v1288 = vadd.f32 %v1222, %v1280
        %v1289 = vadd.f32 %v1223, %v1281
        %s1290 = sadd.s32 64, 18
        %s1291 = scalar_lea.vmem %s259, %s1290
        %v1292 = vld [vmem:[%s1291] sm:$0xff]
        %v1293 = vld [vmem:[%s1291 + $0x8] sm:$0xff]
        %v1294 = vld [vmem:[%s1291 + $0x10] sm:$0xff]
        %v1295 = vld [vmem:[%s1291 + $0x18] sm:$0xff]
        %v1296 = vld [vmem:[%s1291 + $0x20] sm:$0xff]
        %v1297 = vld [vmem:[%s1291 + $0x28] sm:$0xff]
        %v1298 = vld [vmem:[%s1291 + $0x30] sm:$0xff]
        %v1299 = vld [vmem:[%s1291 + $0x38] sm:$0xff]
        %1301 = vset.pattern.permute.xlu0 0
        %1302 = vperm.xlu0 %1301, %v1292
        %v1303 = vpop.permute.xlu0 %1302
        %1306 = vset.pattern.permute.xlu0 0
        %1307 = vperm.xlu0 %1306, %v1293
        %v1308 = vpop.permute.xlu0 %1307
        %1311 = vset.pattern.permute.xlu0 0
        %1312 = vperm.xlu0 %1311, %v1294
        %v1313 = vpop.permute.xlu0 %1312
        %1316 = vset.pattern.permute.xlu0 0
        %1317 = vperm.xlu0 %1316, %v1295
        %v1318 = vpop.permute.xlu0 %1317
        %1321 = vset.pattern.permute.xlu0 0
        %1322 = vperm.xlu0 %1321, %v1296
        %v1323 = vpop.permute.xlu0 %1322
        %1326 = vset.pattern.permute.xlu0 0
        %1327 = vperm.xlu0 %1326, %v1297
        %v1328 = vpop.permute.xlu0 %1327
        %1331 = vset.pattern.permute.xlu0 0
        %1332 = vperm.xlu0 %1331, %v1298
        %v1333 = vpop.permute.xlu0 %1332
        %1336 = vset.pattern.permute.xlu0 0
        %1337 = vperm.xlu0 %1336, %v1299
        %v1338 = vpop.permute.xlu0 %1337
        %v1340 = vmul.f32 %v1303, %v671
        %v1341 = vmul.f32 %v1308, %v671
        %v1342 = vmul.f32 %v1313, %v671
        %v1343 = vmul.f32 %v1318, %v671
        %v1344 = vmul.f32 %v1323, %v671
        %v1345 = vmul.f32 %v1328, %v671
        %v1346 = vmul.f32 %v1333, %v671
        %v1347 = vmul.f32 %v1338, %v671
        %v1348 = vadd.f32 %v1282, %v1340
        %v1349 = vadd.f32 %v1283, %v1341
        %v1350 = vadd.f32 %v1284, %v1342
        %v1351 = vadd.f32 %v1285, %v1343
        %v1352 = vadd.f32 %v1286, %v1344
        %v1353 = vadd.f32 %v1287, %v1345
        %v1354 = vadd.f32 %v1288, %v1346
        %v1355 = vadd.f32 %v1289, %v1347
        %s1356 = sadd.s32 64, 32
        %s1357 = scalar_lea.vmem %s259, %s1356
        %v1358 = vld [vmem:[%s1357] sm:$0xff]
        %v1359 = vld [vmem:[%s1357 + $0x8] sm:$0xff]
        %v1360 = vld [vmem:[%s1357 + $0x10] sm:$0xff]
        %v1361 = vld [vmem:[%s1357 + $0x18] sm:$0xff]
        %v1362 = vld [vmem:[%s1357 + $0x20] sm:$0xff]
        %v1363 = vld [vmem:[%s1357 + $0x28] sm:$0xff]
        %v1364 = vld [vmem:[%s1357 + $0x30] sm:$0xff]
        %v1365 = vld [vmem:[%s1357 + $0x38] sm:$0xff]
        %1367 = vset.pattern.permute.xlu0 0
        %1368 = vperm.xlu0 %1367, %v1358
        %v1369 = vpop.permute.xlu0 %1368
        %1372 = vset.pattern.permute.xlu0 0
        %1373 = vperm.xlu0 %1372, %v1359
        %v1374 = vpop.permute.xlu0 %1373
        %1377 = vset.pattern.permute.xlu0 0
        %1378 = vperm.xlu0 %1377, %v1360
        %v1379 = vpop.permute.xlu0 %1378
        %1382 = vset.pattern.permute.xlu0 0
        %1383 = vperm.xlu0 %1382, %v1361
        %v1384 = vpop.permute.xlu0 %1383
        %1387 = vset.pattern.permute.xlu0 0
        %1388 = vperm.xlu0 %1387, %v1362
        %v1389 = vpop.permute.xlu0 %1388
        %1392 = vset.pattern.permute.xlu0 0
        %1393 = vperm.xlu0 %1392, %v1363
        %v1394 = vpop.permute.xlu0 %1393
        %1397 = vset.pattern.permute.xlu0 0
        %1398 = vperm.xlu0 %1397, %v1364
        %v1399 = vpop.permute.xlu0 %1398
        %1402 = vset.pattern.permute.xlu0 0
        %1403 = vperm.xlu0 %1402, %v1365
        %v1404 = vpop.permute.xlu0 %1403
        %v1406 = vmul.f32 %v1369, %v741
        %v1407 = vmul.f32 %v1374, %v741
        %v1408 = vmul.f32 %v1379, %v741
        %v1409 = vmul.f32 %v1384, %v741
        %v1410 = vmul.f32 %v1389, %v741
        %v1411 = vmul.f32 %v1394, %v741
        %v1412 = vmul.f32 %v1399, %v741
        %v1413 = vmul.f32 %v1404, %v741
        %v1414 = vadd.f32 %v1348, %v1406
        %v1415 = vadd.f32 %v1349, %v1407
        %v1416 = vadd.f32 %v1350, %v1408
        %v1417 = vadd.f32 %v1351, %v1409
        %v1418 = vadd.f32 %v1352, %v1410
        %v1419 = vadd.f32 %v1353, %v1411
        %v1420 = vadd.f32 %v1354, %v1412
        %v1421 = vadd.f32 %v1355, %v1413
        %s1422 = sadd.s32 64, 33
        %s1423 = scalar_lea.vmem %s259, %s1422
        %v1424 = vld [vmem:[%s1423] sm:$0xff]
        %v1425 = vld [vmem:[%s1423 + $0x8] sm:$0xff]
        %v1426 = vld [vmem:[%s1423 + $0x10] sm:$0xff]
        %v1427 = vld [vmem:[%s1423 + $0x18] sm:$0xff]
        %v1428 = vld [vmem:[%s1423 + $0x20] sm:$0xff]
        %v1429 = vld [vmem:[%s1423 + $0x28] sm:$0xff]
        %v1430 = vld [vmem:[%s1423 + $0x30] sm:$0xff]
        %v1431 = vld [vmem:[%s1423 + $0x38] sm:$0xff]
        %1433 = vset.pattern.permute.xlu0 0
        %1434 = vperm.xlu0 %1433, %v1424
        %v1435 = vpop.permute.xlu0 %1434
        %1438 = vset.pattern.permute.xlu0 0
        %1439 = vperm.xlu0 %1438, %v1425
        %v1440 = vpop.permute.xlu0 %1439
        %1443 = vset.pattern.permute.xlu0 0
        %1444 = vperm.xlu0 %1443, %v1426
        %v1445 = vpop.permute.xlu0 %1444
        %1448 = vset.pattern.permute.xlu0 0
        %1449 = vperm.xlu0 %1448, %v1427
        %v1450 = vpop.permute.xlu0 %1449
        %1453 = vset.pattern.permute.xlu0 0
        %1454 = vperm.xlu0 %1453, %v1428
        %v1455 = vpop.permute.xlu0 %1454
        %1458 = vset.pattern.permute.xlu0 0
        %1459 = vperm.xlu0 %1458, %v1429
        %v1460 = vpop.permute.xlu0 %1459
        %1463 = vset.pattern.permute.xlu0 0
        %1464 = vperm.xlu0 %1463, %v1430
        %v1465 = vpop.permute.xlu0 %1464
        %1468 = vset.pattern.permute.xlu0 0
        %1469 = vperm.xlu0 %1468, %v1431
        %v1470 = vpop.permute.xlu0 %1469
        %v1472 = vmul.f32 %v1435, %v811
        %v1473 = vmul.f32 %v1440, %v811
        %v1474 = vmul.f32 %v1445, %v811
        %v1475 = vmul.f32 %v1450, %v811
        %v1476 = vmul.f32 %v1455, %v811
        %v1477 = vmul.f32 %v1460, %v811
        %v1478 = vmul.f32 %v1465, %v811
        %v1479 = vmul.f32 %v1470, %v811
        %v1480 = vadd.f32 %v1414, %v1472
        %v1481 = vadd.f32 %v1415, %v1473
        %v1482 = vadd.f32 %v1416, %v1474
        %v1483 = vadd.f32 %v1417, %v1475
        %v1484 = vadd.f32 %v1418, %v1476
        %v1485 = vadd.f32 %v1419, %v1477
        %v1486 = vadd.f32 %v1420, %v1478
        %v1487 = vadd.f32 %v1421, %v1479
        %s1488 = sadd.s32 64, 34
        %s1489 = scalar_lea.vmem %s259, %s1488
        %v1490 = vld [vmem:[%s1489] sm:$0xff]
        %v1491 = vld [vmem:[%s1489 + $0x8] sm:$0xff]
        %v1492 = vld [vmem:[%s1489 + $0x10] sm:$0xff]
        %v1493 = vld [vmem:[%s1489 + $0x18] sm:$0xff]
        %v1494 = vld [vmem:[%s1489 + $0x20] sm:$0xff]
        %v1495 = vld [vmem:[%s1489 + $0x28] sm:$0xff]
        %v1496 = vld [vmem:[%s1489 + $0x30] sm:$0xff]
        %v1497 = vld [vmem:[%s1489 + $0x38] sm:$0xff]
        %1499 = vset.pattern.permute.xlu0 0
        %1500 = vperm.xlu0 %1499, %v1490
        %v1501 = vpop.permute.xlu0 %1500
        %1504 = vset.pattern.permute.xlu0 0
        %1505 = vperm.xlu0 %1504, %v1491
        %v1506 = vpop.permute.xlu0 %1505
        %1509 = vset.pattern.permute.xlu0 0
        %1510 = vperm.xlu0 %1509, %v1492
        %v1511 = vpop.permute.xlu0 %1510
        %1514 = vset.pattern.permute.xlu0 0
        %1515 = vperm.xlu0 %1514, %v1493
        %v1516 = vpop.permute.xlu0 %1515
        %1519 = vset.pattern.permute.xlu0 0
        %1520 = vperm.xlu0 %1519, %v1494
        %v1521 = vpop.permute.xlu0 %1520
        %1524 = vset.pattern.permute.xlu0 0
        %1525 = vperm.xlu0 %1524, %v1495
        %v1526 = vpop.permute.xlu0 %1525
        %1529 = vset.pattern.permute.xlu0 0
        %1530 = vperm.xlu0 %1529, %v1496
        %v1531 = vpop.permute.xlu0 %1530
        %1534 = vset.pattern.permute.xlu0 0
        %1535 = vperm.xlu0 %1534, %v1497
        %v1536 = vpop.permute.xlu0 %1535
        %v1538 = vmul.f32 %v1501, %v881
        %v1539 = vmul.f32 %v1506, %v881
        %v1540 = vmul.f32 %v1511, %v881
        %v1541 = vmul.f32 %v1516, %v881
        %v1542 = vmul.f32 %v1521, %v881
        %v1543 = vmul.f32 %v1526, %v881
        %v1544 = vmul.f32 %v1531, %v881
        %v1545 = vmul.f32 %v1536, %v881
        %v1546 = vadd.f32 %v1480, %v1538
        %v1547 = vadd.f32 %v1481, %v1539
        %v1548 = vadd.f32 %v1482, %v1540
        %v1549 = vadd.f32 %v1483, %v1541
        %v1550 = vadd.f32 %v1484, %v1542
        %v1551 = vadd.f32 %v1485, %v1543
        %v1552 = vadd.f32 %v1486, %v1544
        %v1553 = vadd.f32 %v1487, %v1545
        %v1554 = vadd.f32 %v1546, %v902
        %v1555 = vadd.f32 %v1547, %v902
        %v1556 = vadd.f32 %v1548, %v902
        %v1557 = vadd.f32 %v1549, %v902
        %v1558 = vadd.f32 %v1550, %v902
        %v1559 = vadd.f32 %v1551, %v902
        %v1560 = vadd.f32 %v1552, %v902
        %v1561 = vadd.f32 %v1553, %v902
        %v1562 = vmax.f32 %v1554, 0.0
        %v1563 = vmax.f32 %v1555, 0.0
        %v1564 = vmax.f32 %v1556, 0.0
        %v1565 = vmax.f32 %v1557, 0.0
        %v1566 = vmax.f32 %v1558, 0.0
        %v1567 = vmax.f32 %v1559, 0.0
        %v1568 = vmax.f32 %v1560, 0.0
        %v1569 = vmax.f32 %v1561, 0.0
        %v1570 = vpack.c.bf16 %v1563, %v1562
        %v1571 = vpack.c.bf16 %v1565, %v1564
        %v1572 = vpack.c.bf16 %v1567, %v1566
        %v1573 = vpack.c.bf16 %v1569, %v1568
        %v1578 = vunpack.c.l.b16 %v1570
        %v1579 = vunpack.c.h.b16 %v1570
        %v1580 = vunpack.c.l.b16 %v1571
        %v1581 = vunpack.c.h.b16 %v1571
        %v1582 = vunpack.c.l.b16 %v1572
        %v1583 = vunpack.c.h.b16 %v1572
        %v1584 = vunpack.c.l.b16 %v1573
        %v1585 = vunpack.c.h.b16 %v1573
        %v1586 = vpack.c.b16 %v1578, %v1578
        %v1587 = vpack.c.b16 %v1579, %v1579
        %v1588 = vpack.c.b16 %v1580, %v1580
        %v1589 = vpack.c.b16 %v1581, %v1581
        %v1590 = vpack.c.b16 %v1582, %v1582
        %v1591 = vpack.c.b16 %v1583, %v1583
        %v1592 = vpack.c.b16 %v1584, %v1584
        %v1593 = vpack.c.b16 %v1585, %v1585
        %s1602 = scalar_lea.vmem [#allocation2], 32
        %1603 = vst.msk [vmem:[%s1602] sm:$0xf] %vm952, %v1586
        %1604 = vst.msk [vmem:[%s1602 + $0x4] sm:$0xf] %vm952, %v1587
        %1605 = vst.msk [vmem:[%s1602 + $0x8] sm:$0xf] %vm952, %v1588
        %1606 = vst.msk [vmem:[%s1602 + $0xc] sm:$0xf] %vm952, %v1589
        %1607 = vst.msk [vmem:[%s1602 + $0x10] sm:$0xf] %vm952, %v1590
        %1608 = vst.msk [vmem:[%s1602 + $0x14] sm:$0xf] %vm952, %v1591
        %1609 = vst.msk [vmem:[%s1602 + $0x18] sm:$0xf] %vm952, %v1592
        %1610 = vst.msk [vmem:[%s1602 + $0x1c] sm:$0xf] %vm952, %v1593
        %s1611 = scalar_lea.vmem %s259, 128
        %v1612 = vld [vmem:[%s1611] sm:$0xff]
        %v1613 = vld [vmem:[%s1611 + $0x8] sm:$0xff]
        %v1614 = vld [vmem:[%s1611 + $0x10] sm:$0xff]
        %v1615 = vld [vmem:[%s1611 + $0x18] sm:$0xff]
        %v1616 = vld [vmem:[%s1611 + $0x20] sm:$0xff]
        %v1617 = vld [vmem:[%s1611 + $0x28] sm:$0xff]
        %v1618 = vld [vmem:[%s1611 + $0x30] sm:$0xff]
        %v1619 = vld [vmem:[%s1611 + $0x38] sm:$0xff]
        %1621 = vset.pattern.permute.xlu0 0
        %1622 = vperm.xlu0 %1621, %v1612
        %v1623 = vpop.permute.xlu0 %1622
        %1626 = vset.pattern.permute.xlu0 0
        %1627 = vperm.xlu0 %1626, %v1613
        %v1628 = vpop.permute.xlu0 %1627
        %1631 = vset.pattern.permute.xlu0 0
        %1632 = vperm.xlu0 %1631, %v1614
        %v1633 = vpop.permute.xlu0 %1632
        %1636 = vset.pattern.permute.xlu0 0
        %1637 = vperm.xlu0 %1636, %v1615
        %v1638 = vpop.permute.xlu0 %1637
        %1641 = vset.pattern.permute.xlu0 0
        %1642 = vperm.xlu0 %1641, %v1616
        %v1643 = vpop.permute.xlu0 %1642
        %1646 = vset.pattern.permute.xlu0 0
        %1647 = vperm.xlu0 %1646, %v1617
        %v1648 = vpop.permute.xlu0 %1647
        %1651 = vset.pattern.permute.xlu0 0
        %1652 = vperm.xlu0 %1651, %v1618
        %v1653 = vpop.permute.xlu0 %1652
        %1656 = vset.pattern.permute.xlu0 0
        %1657 = vperm.xlu0 %1656, %v1619
        %v1658 = vpop.permute.xlu0 %1657
        %v1660 = vmul.f32 %v1623, %v321
        %v1661 = vmul.f32 %v1628, %v321
        %v1662 = vmul.f32 %v1633, %v321
        %v1663 = vmul.f32 %v1638, %v321
        %v1664 = vmul.f32 %v1643, %v321
        %v1665 = vmul.f32 %v1648, %v321
        %v1666 = vmul.f32 %v1653, %v321
        %v1667 = vmul.f32 %v1658, %v321
        %v1668 = vadd.f32 %v1660, 0.0
        %v1669 = vadd.f32 %v1661, 0.0
        %v1670 = vadd.f32 %v1662, 0.0
        %v1671 = vadd.f32 %v1663, 0.0
        %v1672 = vadd.f32 %v1664, 0.0
        %v1673 = vadd.f32 %v1665, 0.0
        %v1674 = vadd.f32 %v1666, 0.0
        %v1675 = vadd.f32 %v1667, 0.0
        %s1676 = sadd.s32 128, 1
        %s1677 = scalar_lea.vmem %s259, %s1676
        %v1678 = vld [vmem:[%s1677] sm:$0xff]
        %v1679 = vld [vmem:[%s1677 + $0x8] sm:$0xff]
        %v1680 = vld [vmem:[%s1677 + $0x10] sm:$0xff]
        %v1681 = vld [vmem:[%s1677 + $0x18] sm:$0xff]
        %v1682 = vld [vmem:[%s1677 + $0x20] sm:$0xff]
        %v1683 = vld [vmem:[%s1677 + $0x28] sm:$0xff]
        %v1684 = vld [vmem:[%s1677 + $0x30] sm:$0xff]
        %v1685 = vld [vmem:[%s1677 + $0x38] sm:$0xff]
        %1687 = vset.pattern.permute.xlu0 0
        %1688 = vperm.xlu0 %1687, %v1678
        %v1689 = vpop.permute.xlu0 %1688
        %1692 = vset.pattern.permute.xlu0 0
        %1693 = vperm.xlu0 %1692, %v1679
        %v1694 = vpop.permute.xlu0 %1693
        %1697 = vset.pattern.permute.xlu0 0
        %1698 = vperm.xlu0 %1697, %v1680
        %v1699 = vpop.permute.xlu0 %1698
        %1702 = vset.pattern.permute.xlu0 0
        %1703 = vperm.xlu0 %1702, %v1681
        %v1704 = vpop.permute.xlu0 %1703
        %1707 = vset.pattern.permute.xlu0 0
        %1708 = vperm.xlu0 %1707, %v1682
        %v1709 = vpop.permute.xlu0 %1708
        %1712 = vset.pattern.permute.xlu0 0
        %1713 = vperm.xlu0 %1712, %v1683
        %v1714 = vpop.permute.xlu0 %1713
        %1717 = vset.pattern.permute.xlu0 0
        %1718 = vperm.xlu0 %1717, %v1684
        %v1719 = vpop.permute.xlu0 %1718
        %1722 = vset.pattern.permute.xlu0 0
        %1723 = vperm.xlu0 %1722, %v1685
        %v1724 = vpop.permute.xlu0 %1723
        %v1726 = vmul.f32 %v1689, %v391
        %v1727 = vmul.f32 %v1694, %v391
        %v1728 = vmul.f32 %v1699, %v391
        %v1729 = vmul.f32 %v1704, %v391
        %v1730 = vmul.f32 %v1709, %v391
        %v1731 = vmul.f32 %v1714, %v391
        %v1732 = vmul.f32 %v1719, %v391
        %v1733 = vmul.f32 %v1724, %v391
        %v1734 = vadd.f32 %v1668, %v1726
        %v1735 = vadd.f32 %v1669, %v1727
        %v1736 = vadd.f32 %v1670, %v1728
        %v1737 = vadd.f32 %v1671, %v1729
        %v1738 = vadd.f32 %v1672, %v1730
        %v1739 = vadd.f32 %v1673, %v1731
        %v1740 = vadd.f32 %v1674, %v1732
        %v1741 = vadd.f32 %v1675, %v1733
        %s1742 = sadd.s32 128, 2
        %s1743 = scalar_lea.vmem %s259, %s1742
        %v1744 = vld [vmem:[%s1743] sm:$0xff]
        %v1745 = vld [vmem:[%s1743 + $0x8] sm:$0xff]
        %v1746 = vld [vmem:[%s1743 + $0x10] sm:$0xff]
        %v1747 = vld [vmem:[%s1743 + $0x18] sm:$0xff]
        %v1748 = vld [vmem:[%s1743 + $0x20] sm:$0xff]
        %v1749 = vld [vmem:[%s1743 + $0x28] sm:$0xff]
        %v1750 = vld [vmem:[%s1743 + $0x30] sm:$0xff]
        %v1751 = vld [vmem:[%s1743 + $0x38] sm:$0xff]
        %1753 = vset.pattern.permute.xlu0 0
        %1754 = vperm.xlu0 %1753, %v1744
        %v1755 = vpop.permute.xlu0 %1754
        %1758 = vset.pattern.permute.xlu0 0
        %1759 = vperm.xlu0 %1758, %v1745
        %v1760 = vpop.permute.xlu0 %1759
        %1763 = vset.pattern.permute.xlu0 0
        %1764 = vperm.xlu0 %1763, %v1746
        %v1765 = vpop.permute.xlu0 %1764
        %1768 = vset.pattern.permute.xlu0 0
        %1769 = vperm.xlu0 %1768, %v1747
        %v1770 = vpop.permute.xlu0 %1769
        %1773 = vset.pattern.permute.xlu0 0
        %1774 = vperm.xlu0 %1773, %v1748
        %v1775 = vpop.permute.xlu0 %1774
        %1778 = vset.pattern.permute.xlu0 0
        %1779 = vperm.xlu0 %1778, %v1749
        %v1780 = vpop.permute.xlu0 %1779
        %1783 = vset.pattern.permute.xlu0 0
        %1784 = vperm.xlu0 %1783, %v1750
        %v1785 = vpop.permute.xlu0 %1784
        %1788 = vset.pattern.permute.xlu0 0
        %1789 = vperm.xlu0 %1788, %v1751
        %v1790 = vpop.permute.xlu0 %1789
        %v1792 = vmul.f32 %v1755, %v461
        %v1793 = vmul.f32 %v1760, %v461
        %v1794 = vmul.f32 %v1765, %v461
        %v1795 = vmul.f32 %v1770, %v461
        %v1796 = vmul.f32 %v1775, %v461
        %v1797 = vmul.f32 %v1780, %v461
        %v1798 = vmul.f32 %v1785, %v461
        %v1799 = vmul.f32 %v1790, %v461
        %v1800 = vadd.f32 %v1734, %v1792
        %v1801 = vadd.f32 %v1735, %v1793
        %v1802 = vadd.f32 %v1736, %v1794
        %v1803 = vadd.f32 %v1737, %v1795
        %v1804 = vadd.f32 %v1738, %v1796
        %v1805 = vadd.f32 %v1739, %v1797
        %v1806 = vadd.f32 %v1740, %v1798
        %v1807 = vadd.f32 %v1741, %v1799
        %s1808 = sadd.s32 128, 16
        %s1809 = scalar_lea.vmem %s259, %s1808
        %v1810 = vld [vmem:[%s1809] sm:$0xff]
        %v1811 = vld [vmem:[%s1809 + $0x8] sm:$0xff]
        %v1812 = vld [vmem:[%s1809 + $0x10] sm:$0xff]
        %v1813 = vld [vmem:[%s1809 + $0x18] sm:$0xff]
        %v1814 = vld [vmem:[%s1809 + $0x20] sm:$0xff]
        %v1815 = vld [vmem:[%s1809 + $0x28] sm:$0xff]
        %v1816 = vld [vmem:[%s1809 + $0x30] sm:$0xff]
        %v1817 = vld [vmem:[%s1809 + $0x38] sm:$0xff]
        %1819 = vset.pattern.permute.xlu0 0
        %1820 = vperm.xlu0 %1819, %v1810
        %v1821 = vpop.permute.xlu0 %1820
        %1824 = vset.pattern.permute.xlu0 0
        %1825 = vperm.xlu0 %1824, %v1811
        %v1826 = vpop.permute.xlu0 %1825
        %1829 = vset.pattern.permute.xlu0 0
        %1830 = vperm.xlu0 %1829, %v1812
        %v1831 = vpop.permute.xlu0 %1830
        %1834 = vset.pattern.permute.xlu0 0
        %1835 = vperm.xlu0 %1834, %v1813
        %v1836 = vpop.permute.xlu0 %1835
        %1839 = vset.pattern.permute.xlu0 0
        %1840 = vperm.xlu0 %1839, %v1814
        %v1841 = vpop.permute.xlu0 %1840
        %1844 = vset.pattern.permute.xlu0 0
        %1845 = vperm.xlu0 %1844, %v1815
        %v1846 = vpop.permute.xlu0 %1845
        %1849 = vset.pattern.permute.xlu0 0
        %1850 = vperm.xlu0 %1849, %v1816
        %v1851 = vpop.permute.xlu0 %1850
        %1854 = vset.pattern.permute.xlu0 0
        %1855 = vperm.xlu0 %1854, %v1817
        %v1856 = vpop.permute.xlu0 %1855
        %v1858 = vmul.f32 %v1821, %v531
        %v1859 = vmul.f32 %v1826, %v531
        %v1860 = vmul.f32 %v1831, %v531
        %v1861 = vmul.f32 %v1836, %v531
        %v1862 = vmul.f32 %v1841, %v531
        %v1863 = vmul.f32 %v1846, %v531
        %v1864 = vmul.f32 %v1851, %v531
        %v1865 = vmul.f32 %v1856, %v531
        %v1866 = vadd.f32 %v1800, %v1858
        %v1867 = vadd.f32 %v1801, %v1859
        %v1868 = vadd.f32 %v1802, %v1860
        %v1869 = vadd.f32 %v1803, %v1861
        %v1870 = vadd.f32 %v1804, %v1862
        %v1871 = vadd.f32 %v1805, %v1863
        %v1872 = vadd.f32 %v1806, %v1864
        %v1873 = vadd.f32 %v1807, %v1865
        %s1874 = sadd.s32 128, 17
        %s1875 = scalar_lea.vmem %s259, %s1874
        %v1876 = vld [vmem:[%s1875] sm:$0xff]
        %v1877 = vld [vmem:[%s1875 + $0x8] sm:$0xff]
        %v1878 = vld [vmem:[%s1875 + $0x10] sm:$0xff]
        %v1879 = vld [vmem:[%s1875 + $0x18] sm:$0xff]
        %v1880 = vld [vmem:[%s1875 + $0x20] sm:$0xff]
        %v1881 = vld [vmem:[%s1875 + $0x28] sm:$0xff]
        %v1882 = vld [vmem:[%s1875 + $0x30] sm:$0xff]
        %v1883 = vld [vmem:[%s1875 + $0x38] sm:$0xff]
        %1885 = vset.pattern.permute.xlu0 0
        %1886 = vperm.xlu0 %1885, %v1876
        %v1887 = vpop.permute.xlu0 %1886
        %1890 = vset.pattern.permute.xlu0 0
        %1891 = vperm.xlu0 %1890, %v1877
        %v1892 = vpop.permute.xlu0 %1891
        %1895 = vset.pattern.permute.xlu0 0
        %1896 = vperm.xlu0 %1895, %v1878
        %v1897 = vpop.permute.xlu0 %1896
        %1900 = vset.pattern.permute.xlu0 0
        %1901 = vperm.xlu0 %1900, %v1879
        %v1902 = vpop.permute.xlu0 %1901
        %1905 = vset.pattern.permute.xlu0 0
        %1906 = vperm.xlu0 %1905, %v1880
        %v1907 = vpop.permute.xlu0 %1906
        %1910 = vset.pattern.permute.xlu0 0
        %1911 = vperm.xlu0 %1910, %v1881
        %v1912 = vpop.permute.xlu0 %1911
        %1915 = vset.pattern.permute.xlu0 0
        %1916 = vperm.xlu0 %1915, %v1882
        %v1917 = vpop.permute.xlu0 %1916
        %1920 = vset.pattern.permute.xlu0 0
        %1921 = vperm.xlu0 %1920, %v1883
        %v1922 = vpop.permute.xlu0 %1921
        %v1924 = vmul.f32 %v1887, %v601
        %v1925 = vmul.f32 %v1892, %v601
        %v1926 = vmul.f32 %v1897, %v601
        %v1927 = vmul.f32 %v1902, %v601
        %v1928 = vmul.f32 %v1907, %v601
        %v1929 = vmul.f32 %v1912, %v601
        %v1930 = vmul.f32 %v1917, %v601
        %v1931 = vmul.f32 %v1922, %v601
        %v1932 = vadd.f32 %v1866, %v1924
        %v1933 = vadd.f32 %v1867, %v1925
        %v1934 = vadd.f32 %v1868, %v1926
        %v1935 = vadd.f32 %v1869, %v1927
        %v1936 = vadd.f32 %v1870, %v1928
        %v1937 = vadd.f32 %v1871, %v1929
        %v1938 = vadd.f32 %v1872, %v1930
        %v1939 = vadd.f32 %v1873, %v1931
        %s1940 = sadd.s32 128, 18
        %s1941 = scalar_lea.vmem %s259, %s1940
        %v1942 = vld [vmem:[%s1941] sm:$0xff]
        %v1943 = vld [vmem:[%s1941 + $0x8] sm:$0xff]
        %v1944 = vld [vmem:[%s1941 + $0x10] sm:$0xff]
        %v1945 = vld [vmem:[%s1941 + $0x18] sm:$0xff]
        %v1946 = vld [vmem:[%s1941 + $0x20] sm:$0xff]
        %v1947 = vld [vmem:[%s1941 + $0x28] sm:$0xff]
        %v1948 = vld [vmem:[%s1941 + $0x30] sm:$0xff]
        %v1949 = vld [vmem:[%s1941 + $0x38] sm:$0xff]
        %1951 = vset.pattern.permute.xlu0 0
        %1952 = vperm.xlu0 %1951, %v1942
        %v1953 = vpop.permute.xlu0 %1952
        %1956 = vset.pattern.permute.xlu0 0
        %1957 = vperm.xlu0 %1956, %v1943
        %v1958 = vpop.permute.xlu0 %1957
        %1961 = vset.pattern.permute.xlu0 0
        %1962 = vperm.xlu0 %1961, %v1944
        %v1963 = vpop.permute.xlu0 %1962
        %1966 = vset.pattern.permute.xlu0 0
        %1967 = vperm.xlu0 %1966, %v1945
        %v1968 = vpop.permute.xlu0 %1967
        %1971 = vset.pattern.permute.xlu0 0
        %1972 = vperm.xlu0 %1971, %v1946
        %v1973 = vpop.permute.xlu0 %1972
        %1976 = vset.pattern.permute.xlu0 0
        %1977 = vperm.xlu0 %1976, %v1947
        %v1978 = vpop.permute.xlu0 %1977
        %1981 = vset.pattern.permute.xlu0 0
        %1982 = vperm.xlu0 %1981, %v1948
        %v1983 = vpop.permute.xlu0 %1982
        %1986 = vset.pattern.permute.xlu0 0
        %1987 = vperm.xlu0 %1986, %v1949
        %v1988 = vpop.permute.xlu0 %1987
        %v1990 = vmul.f32 %v1953, %v671
        %v1991 = vmul.f32 %v1958, %v671
        %v1992 = vmul.f32 %v1963, %v671
        %v1993 = vmul.f32 %v1968, %v671
        %v1994 = vmul.f32 %v1973, %v671
        %v1995 = vmul.f32 %v1978, %v671
        %v1996 = vmul.f32 %v1983, %v671
        %v1997 = vmul.f32 %v1988, %v671
        %v1998 = vadd.f32 %v1932, %v1990
        %v1999 = vadd.f32 %v1933, %v1991
        %v2000 = vadd.f32 %v1934, %v1992
        %v2001 = vadd.f32 %v1935, %v1993
        %v2002 = vadd.f32 %v1936, %v1994
        %v2003 = vadd.f32 %v1937, %v1995
        %v2004 = vadd.f32 %v1938, %v1996
        %v2005 = vadd.f32 %v1939, %v1997
        %s2006 = sadd.s32 128, 32
        %s2007 = scalar_lea.vmem %s259, %s2006
        %v2008 = vld [vmem:[%s2007] sm:$0xff]
        %v2009 = vld [vmem:[%s2007 + $0x8] sm:$0xff]
        %v2010 = vld [vmem:[%s2007 + $0x10] sm:$0xff]
        %v2011 = vld [vmem:[%s2007 + $0x18] sm:$0xff]
        %v2012 = vld [vmem:[%s2007 + $0x20] sm:$0xff]
        %v2013 = vld [vmem:[%s2007 + $0x28] sm:$0xff]
        %v2014 = vld [vmem:[%s2007 + $0x30] sm:$0xff]
        %v2015 = vld [vmem:[%s2007 + $0x38] sm:$0xff]
        %2017 = vset.pattern.permute.xlu0 0
        %2018 = vperm.xlu0 %2017, %v2008
        %v2019 = vpop.permute.xlu0 %2018
        %2022 = vset.pattern.permute.xlu0 0
        %2023 = vperm.xlu0 %2022, %v2009
        %v2024 = vpop.permute.xlu0 %2023
        %2027 = vset.pattern.permute.xlu0 0
        %2028 = vperm.xlu0 %2027, %v2010
        %v2029 = vpop.permute.xlu0 %2028
        %2032 = vset.pattern.permute.xlu0 0
        %2033 = vperm.xlu0 %2032, %v2011
        %v2034 = vpop.permute.xlu0 %2033
        %2037 = vset.pattern.permute.xlu0 0
        %2038 = vperm.xlu0 %2037, %v2012
        %v2039 = vpop.permute.xlu0 %2038
        %2042 = vset.pattern.permute.xlu0 0
        %2043 = vperm.xlu0 %2042, %v2013
        %v2044 = vpop.permute.xlu0 %2043
        %2047 = vset.pattern.permute.xlu0 0
        %2048 = vperm.xlu0 %2047, %v2014
        %v2049 = vpop.permute.xlu0 %2048
        %2052 = vset.pattern.permute.xlu0 0
        %2053 = vperm.xlu0 %2052, %v2015
        %v2054 = vpop.permute.xlu0 %2053
        %v2056 = vmul.f32 %v2019, %v741
        %v2057 = vmul.f32 %v2024, %v741
        %v2058 = vmul.f32 %v2029, %v741
        %v2059 = vmul.f32 %v2034, %v741
        %v2060 = vmul.f32 %v2039, %v741
        %v2061 = vmul.f32 %v2044, %v741
        %v2062 = vmul.f32 %v2049, %v741
        %v2063 = vmul.f32 %v2054, %v741
        %v2064 = vadd.f32 %v1998, %v2056
        %v2065 = vadd.f32 %v1999, %v2057
        %v2066 = vadd.f32 %v2000, %v2058
        %v2067 = vadd.f32 %v2001, %v2059
        %v2068 = vadd.f32 %v2002, %v2060
        %v2069 = vadd.f32 %v2003, %v2061
        %v2070 = vadd.f32 %v2004, %v2062
        %v2071 = vadd.f32 %v2005, %v2063
        %s2072 = sadd.s32 128, 33
        %s2073 = scalar_lea.vmem %s259, %s2072
        %v2074 = vld [vmem:[%s2073] sm:$0xff]
        %v2075 = vld [vmem:[%s2073 + $0x8] sm:$0xff]
        %v2076 = vld [vmem:[%s2073 + $0x10] sm:$0xff]
        %v2077 = vld [vmem:[%s2073 + $0x18] sm:$0xff]
        %v2078 = vld [vmem:[%s2073 + $0x20] sm:$0xff]
        %v2079 = vld [vmem:[%s2073 + $0x28] sm:$0xff]
        %v2080 = vld [vmem:[%s2073 + $0x30] sm:$0xff]
        %v2081 = vld [vmem:[%s2073 + $0x38] sm:$0xff]
        %2083 = vset.pattern.permute.xlu0 0
        %2084 = vperm.xlu0 %2083, %v2074
        %v2085 = vpop.permute.xlu0 %2084
        %2088 = vset.pattern.permute.xlu0 0
        %2089 = vperm.xlu0 %2088, %v2075
        %v2090 = vpop.permute.xlu0 %2089
        %2093 = vset.pattern.permute.xlu0 0
        %2094 = vperm.xlu0 %2093, %v2076
        %v2095 = vpop.permute.xlu0 %2094
        %2098 = vset.pattern.permute.xlu0 0
        %2099 = vperm.xlu0 %2098, %v2077
        %v2100 = vpop.permute.xlu0 %2099
        %2103 = vset.pattern.permute.xlu0 0
        %2104 = vperm.xlu0 %2103, %v2078
        %v2105 = vpop.permute.xlu0 %2104
        %2108 = vset.pattern.permute.xlu0 0
        %2109 = vperm.xlu0 %2108, %v2079
        %v2110 = vpop.permute.xlu0 %2109
        %2113 = vset.pattern.permute.xlu0 0
        %2114 = vperm.xlu0 %2113, %v2080
        %v2115 = vpop.permute.xlu0 %2114
        %2118 = vset.pattern.permute.xlu0 0
        %2119 = vperm.xlu0 %2118, %v2081
        %v2120 = vpop.permute.xlu0 %2119
        %v2122 = vmul.f32 %v2085, %v811
        %v2123 = vmul.f32 %v2090, %v811
        %v2124 = vmul.f32 %v2095, %v811
        %v2125 = vmul.f32 %v2100, %v811
        %v2126 = vmul.f32 %v2105, %v811
        %v2127 = vmul.f32 %v2110, %v811
        %v2128 = vmul.f32 %v2115, %v811
        %v2129 = vmul.f32 %v2120, %v811
        %v2130 = vadd.f32 %v2064, %v2122
        %v2131 = vadd.f32 %v2065, %v2123
        %v2132 = vadd.f32 %v2066, %v2124
        %v2133 = vadd.f32 %v2067, %v2125
        %v2134 = vadd.f32 %v2068, %v2126
        %v2135 = vadd.f32 %v2069, %v2127
        %v2136 = vadd.f32 %v2070, %v2128
        %v2137 = vadd.f32 %v2071, %v2129
        %s2138 = sadd.s32 128, 34
        %s2139 = scalar_lea.vmem %s259, %s2138
        %v2140 = vld [vmem:[%s2139] sm:$0xff]
        %v2141 = vld [vmem:[%s2139 + $0x8] sm:$0xff]
        %v2142 = vld [vmem:[%s2139 + $0x10] sm:$0xff]
        %v2143 = vld [vmem:[%s2139 + $0x18] sm:$0xff]
        %v2144 = vld [vmem:[%s2139 + $0x20] sm:$0xff]
        %v2145 = vld [vmem:[%s2139 + $0x28] sm:$0xff]
        %v2146 = vld [vmem:[%s2139 + $0x30] sm:$0xff]
        %v2147 = vld [vmem:[%s2139 + $0x38] sm:$0xff]
        %2149 = vset.pattern.permute.xlu0 0
        %2150 = vperm.xlu0 %2149, %v2140
        %v2151 = vpop.permute.xlu0 %2150
        %2154 = vset.pattern.permute.xlu0 0
        %2155 = vperm.xlu0 %2154, %v2141
        %v2156 = vpop.permute.xlu0 %2155
        %2159 = vset.pattern.permute.xlu0 0
        %2160 = vperm.xlu0 %2159, %v2142
        %v2161 = vpop.permute.xlu0 %2160
        %2164 = vset.pattern.permute.xlu0 0
        %2165 = vperm.xlu0 %2164, %v2143
        %v2166 = vpop.permute.xlu0 %2165
        %2169 = vset.pattern.permute.xlu0 0
        %2170 = vperm.xlu0 %2169, %v2144
        %v2171 = vpop.permute.xlu0 %2170
        %2174 = vset.pattern.permute.xlu0 0
        %2175 = vperm.xlu0 %2174, %v2145
        %v2176 = vpop.permute.xlu0 %2175
        %2179 = vset.pattern.permute.xlu0 0
        %2180 = vperm.xlu0 %2179, %v2146
        %v2181 = vpop.permute.xlu0 %2180
        %2184 = vset.pattern.permute.xlu0 0
        %2185 = vperm.xlu0 %2184, %v2147
        %v2186 = vpop.permute.xlu0 %2185
        %v2188 = vmul.f32 %v2151, %v881
        %v2189 = vmul.f32 %v2156, %v881
        %v2190 = vmul.f32 %v2161, %v881
        %v2191 = vmul.f32 %v2166, %v881
        %v2192 = vmul.f32 %v2171, %v881
        %v2193 = vmul.f32 %v2176, %v881
        %v2194 = vmul.f32 %v2181, %v881
        %v2195 = vmul.f32 %v2186, %v881
        %v2196 = vadd.f32 %v2130, %v2188
        %v2197 = vadd.f32 %v2131, %v2189
        %v2198 = vadd.f32 %v2132, %v2190
        %v2199 = vadd.f32 %v2133, %v2191
        %v2200 = vadd.f32 %v2134, %v2192
        %v2201 = vadd.f32 %v2135, %v2193
        %v2202 = vadd.f32 %v2136, %v2194
        %v2203 = vadd.f32 %v2137, %v2195
        %v2204 = vadd.f32 %v2196, %v902
        %v2205 = vadd.f32 %v2197, %v902
        %v2206 = vadd.f32 %v2198, %v902
        %v2207 = vadd.f32 %v2199, %v902
        %v2208 = vadd.f32 %v2200, %v902
        %v2209 = vadd.f32 %v2201, %v902
        %v2210 = vadd.f32 %v2202, %v902
        %v2211 = vadd.f32 %v2203, %v902
        %v2212 = vmax.f32 %v2204, 0.0
        %v2213 = vmax.f32 %v2205, 0.0
        %v2214 = vmax.f32 %v2206, 0.0
        %v2215 = vmax.f32 %v2207, 0.0
        %v2216 = vmax.f32 %v2208, 0.0
        %v2217 = vmax.f32 %v2209, 0.0
        %v2218 = vmax.f32 %v2210, 0.0
        %v2219 = vmax.f32 %v2211, 0.0
        %v2220 = vpack.c.bf16 %v2213, %v2212
        %v2221 = vpack.c.bf16 %v2215, %v2214
        %v2222 = vpack.c.bf16 %v2217, %v2216
        %v2223 = vpack.c.bf16 %v2219, %v2218
        %v2228 = vunpack.c.l.b16 %v2220
        %v2229 = vunpack.c.h.b16 %v2220
        %v2230 = vunpack.c.l.b16 %v2221
        %v2231 = vunpack.c.h.b16 %v2221
        %v2232 = vunpack.c.l.b16 %v2222
        %v2233 = vunpack.c.h.b16 %v2222
        %v2234 = vunpack.c.l.b16 %v2223
        %v2235 = vunpack.c.h.b16 %v2223
        %v2236 = vpack.c.b16 %v2228, %v2228
        %v2237 = vpack.c.b16 %v2229, %v2229
        %v2238 = vpack.c.b16 %v2230, %v2230
        %v2239 = vpack.c.b16 %v2231, %v2231
        %v2240 = vpack.c.b16 %v2232, %v2232
        %v2241 = vpack.c.b16 %v2233, %v2233
        %v2242 = vpack.c.b16 %v2234, %v2234
        %v2243 = vpack.c.b16 %v2235, %v2235
        %s2252 = scalar_lea.vmem [#allocation2], 64
        %2253 = vst.msk [vmem:[%s2252] sm:$0xf] %vm952, %v2236
        %2254 = vst.msk [vmem:[%s2252 + $0x4] sm:$0xf] %vm952, %v2237
        %2255 = vst.msk [vmem:[%s2252 + $0x8] sm:$0xf] %vm952, %v2238
        %2256 = vst.msk [vmem:[%s2252 + $0xc] sm:$0xf] %vm952, %v2239
        %2257 = vst.msk [vmem:[%s2252 + $0x10] sm:$0xf] %vm952, %v2240
        %2258 = vst.msk [vmem:[%s2252 + $0x14] sm:$0xf] %vm952, %v2241
        %2259 = vst.msk [vmem:[%s2252 + $0x18] sm:$0xf] %vm952, %v2242
        %2260 = vst.msk [vmem:[%s2252 + $0x1c] sm:$0xf] %vm952, %v2243
        %s2261 = scalar_lea.vmem %s259, 192
        %v2262 = vld [vmem:[%s2261] sm:$0xff]
        %v2263 = vld [vmem:[%s2261 + $0x8] sm:$0xff]
        %v2264 = vld [vmem:[%s2261 + $0x10] sm:$0xff]
        %v2265 = vld [vmem:[%s2261 + $0x18] sm:$0xff]
        %v2266 = vld [vmem:[%s2261 + $0x20] sm:$0xff]
        %v2267 = vld [vmem:[%s2261 + $0x28] sm:$0xff]
        %v2268 = vld [vmem:[%s2261 + $0x30] sm:$0xff]
        %v2269 = vld [vmem:[%s2261 + $0x38] sm:$0xff]
        %2271 = vset.pattern.permute.xlu0 0
        %2272 = vperm.xlu0 %2271, %v2262
        %v2273 = vpop.permute.xlu0 %2272
        %2276 = vset.pattern.permute.xlu0 0
        %2277 = vperm.xlu0 %2276, %v2263
        %v2278 = vpop.permute.xlu0 %2277
        %2281 = vset.pattern.permute.xlu0 0
        %2282 = vperm.xlu0 %2281, %v2264
        %v2283 = vpop.permute.xlu0 %2282
        %2286 = vset.pattern.permute.xlu0 0
        %2287 = vperm.xlu0 %2286, %v2265
        %v2288 = vpop.permute.xlu0 %2287
        %2291 = vset.pattern.permute.xlu0 0
        %2292 = vperm.xlu0 %2291, %v2266
        %v2293 = vpop.permute.xlu0 %2292
        %2296 = vset.pattern.permute.xlu0 0
        %2297 = vperm.xlu0 %2296, %v2267
        %v2298 = vpop.permute.xlu0 %2297
        %2301 = vset.pattern.permute.xlu0 0
        %2302 = vperm.xlu0 %2301, %v2268
        %v2303 = vpop.permute.xlu0 %2302
        %2306 = vset.pattern.permute.xlu0 0
        %2307 = vperm.xlu0 %2306, %v2269
        %v2308 = vpop.permute.xlu0 %2307
        %v2310 = vmul.f32 %v2273, %v321
        %v2311 = vmul.f32 %v2278, %v321
        %v2312 = vmul.f32 %v2283, %v321
        %v2313 = vmul.f32 %v2288, %v321
        %v2314 = vmul.f32 %v2293, %v321
        %v2315 = vmul.f32 %v2298, %v321
        %v2316 = vmul.f32 %v2303, %v321
        %v2317 = vmul.f32 %v2308, %v321
        %v2318 = vadd.f32 %v2310, 0.0
        %v2319 = vadd.f32 %v2311, 0.0
        %v2320 = vadd.f32 %v2312, 0.0
        %v2321 = vadd.f32 %v2313, 0.0
        %v2322 = vadd.f32 %v2314, 0.0
        %v2323 = vadd.f32 %v2315, 0.0
        %v2324 = vadd.f32 %v2316, 0.0
        %v2325 = vadd.f32 %v2317, 0.0
        %s2326 = sadd.s32 192, 1
        %s2327 = scalar_lea.vmem %s259, %s2326
        %v2328 = vld [vmem:[%s2327] sm:$0xff]
        %v2329 = vld [vmem:[%s2327 + $0x8] sm:$0xff]
        %v2330 = vld [vmem:[%s2327 + $0x10] sm:$0xff]
        %v2331 = vld [vmem:[%s2327 + $0x18] sm:$0xff]
        %v2332 = vld [vmem:[%s2327 + $0x20] sm:$0xff]
        %v2333 = vld [vmem:[%s2327 + $0x28] sm:$0xff]
        %v2334 = vld [vmem:[%s2327 + $0x30] sm:$0xff]
        %v2335 = vld [vmem:[%s2327 + $0x38] sm:$0xff]
        %2337 = vset.pattern.permute.xlu0 0
        %2338 = vperm.xlu0 %2337, %v2328
        %v2339 = vpop.permute.xlu0 %2338
        %2342 = vset.pattern.permute.xlu0 0
        %2343 = vperm.xlu0 %2342, %v2329
        %v2344 = vpop.permute.xlu0 %2343
        %2347 = vset.pattern.permute.xlu0 0
        %2348 = vperm.xlu0 %2347, %v2330
        %v2349 = vpop.permute.xlu0 %2348
        %2352 = vset.pattern.permute.xlu0 0
        %2353 = vperm.xlu0 %2352, %v2331
        %v2354 = vpop.permute.xlu0 %2353
        %2357 = vset.pattern.permute.xlu0 0
        %2358 = vperm.xlu0 %2357, %v2332
        %v2359 = vpop.permute.xlu0 %2358
        %2362 = vset.pattern.permute.xlu0 0
        %2363 = vperm.xlu0 %2362, %v2333
        %v2364 = vpop.permute.xlu0 %2363
        %2367 = vset.pattern.permute.xlu0 0
        %2368 = vperm.xlu0 %2367, %v2334
        %v2369 = vpop.permute.xlu0 %2368
        %2372 = vset.pattern.permute.xlu0 0
        %2373 = vperm.xlu0 %2372, %v2335
        %v2374 = vpop.permute.xlu0 %2373
        %v2376 = vmul.f32 %v2339, %v391
        %v2377 = vmul.f32 %v2344, %v391
        %v2378 = vmul.f32 %v2349, %v391
        %v2379 = vmul.f32 %v2354, %v391
        %v2380 = vmul.f32 %v2359, %v391
        %v2381 = vmul.f32 %v2364, %v391
        %v2382 = vmul.f32 %v2369, %v391
        %v2383 = vmul.f32 %v2374, %v391
        %v2384 = vadd.f32 %v2318, %v2376
        %v2385 = vadd.f32 %v2319, %v2377
        %v2386 = vadd.f32 %v2320, %v2378
        %v2387 = vadd.f32 %v2321, %v2379
        %v2388 = vadd.f32 %v2322, %v2380
        %v2389 = vadd.f32 %v2323, %v2381
        %v2390 = vadd.f32 %v2324, %v2382
        %v2391 = vadd.f32 %v2325, %v2383
        %s2392 = sadd.s32 192, 2
        %s2393 = scalar_lea.vmem %s259, %s2392
        %v2394 = vld [vmem:[%s2393] sm:$0xff]
        %v2395 = vld [vmem:[%s2393 + $0x8] sm:$0xff]
        %v2396 = vld [vmem:[%s2393 + $0x10] sm:$0xff]
        %v2397 = vld [vmem:[%s2393 + $0x18] sm:$0xff]
        %v2398 = vld [vmem:[%s2393 + $0x20] sm:$0xff]
        %v2399 = vld [vmem:[%s2393 + $0x28] sm:$0xff]
        %v2400 = vld [vmem:[%s2393 + $0x30] sm:$0xff]
        %v2401 = vld [vmem:[%s2393 + $0x38] sm:$0xff]
        %2403 = vset.pattern.permute.xlu0 0
        %2404 = vperm.xlu0 %2403, %v2394
        %v2405 = vpop.permute.xlu0 %2404
        %2408 = vset.pattern.permute.xlu0 0
        %2409 = vperm.xlu0 %2408, %v2395
        %v2410 = vpop.permute.xlu0 %2409
        %2413 = vset.pattern.permute.xlu0 0
        %2414 = vperm.xlu0 %2413, %v2396
        %v2415 = vpop.permute.xlu0 %2414
        %2418 = vset.pattern.permute.xlu0 0
        %2419 = vperm.xlu0 %2418, %v2397
        %v2420 = vpop.permute.xlu0 %2419
        %2423 = vset.pattern.permute.xlu0 0
        %2424 = vperm.xlu0 %2423, %v2398
        %v2425 = vpop.permute.xlu0 %2424
        %2428 = vset.pattern.permute.xlu0 0
        %2429 = vperm.xlu0 %2428, %v2399
        %v2430 = vpop.permute.xlu0 %2429
        %2433 = vset.pattern.permute.xlu0 0
        %2434 = vperm.xlu0 %2433, %v2400
        %v2435 = vpop.permute.xlu0 %2434
        %2438 = vset.pattern.permute.xlu0 0
        %2439 = vperm.xlu0 %2438, %v2401
        %v2440 = vpop.permute.xlu0 %2439
        %v2442 = vmul.f32 %v2405, %v461
        %v2443 = vmul.f32 %v2410, %v461
        %v2444 = vmul.f32 %v2415, %v461
        %v2445 = vmul.f32 %v2420, %v461
        %v2446 = vmul.f32 %v2425, %v461
        %v2447 = vmul.f32 %v2430, %v461
        %v2448 = vmul.f32 %v2435, %v461
        %v2449 = vmul.f32 %v2440, %v461
        %v2450 = vadd.f32 %v2384, %v2442
        %v2451 = vadd.f32 %v2385, %v2443
        %v2452 = vadd.f32 %v2386, %v2444
        %v2453 = vadd.f32 %v2387, %v2445
        %v2454 = vadd.f32 %v2388, %v2446
        %v2455 = vadd.f32 %v2389, %v2447
        %v2456 = vadd.f32 %v2390, %v2448
        %v2457 = vadd.f32 %v2391, %v2449
        %s2458 = sadd.s32 192, 16
        %s2459 = scalar_lea.vmem %s259, %s2458
        %v2460 = vld [vmem:[%s2459] sm:$0xff]
        %v2461 = vld [vmem:[%s2459 + $0x8] sm:$0xff]
        %v2462 = vld [vmem:[%s2459 + $0x10] sm:$0xff]
        %v2463 = vld [vmem:[%s2459 + $0x18] sm:$0xff]
        %v2464 = vld [vmem:[%s2459 + $0x20] sm:$0xff]
        %v2465 = vld [vmem:[%s2459 + $0x28] sm:$0xff]
        %v2466 = vld [vmem:[%s2459 + $0x30] sm:$0xff]
        %v2467 = vld [vmem:[%s2459 + $0x38] sm:$0xff]
        %2469 = vset.pattern.permute.xlu0 0
        %2470 = vperm.xlu0 %2469, %v2460
        %v2471 = vpop.permute.xlu0 %2470
        %2474 = vset.pattern.permute.xlu0 0
        %2475 = vperm.xlu0 %2474, %v2461
        %v2476 = vpop.permute.xlu0 %2475
        %2479 = vset.pattern.permute.xlu0 0
        %2480 = vperm.xlu0 %2479, %v2462
        %v2481 = vpop.permute.xlu0 %2480
        %2484 = vset.pattern.permute.xlu0 0
        %2485 = vperm.xlu0 %2484, %v2463
        %v2486 = vpop.permute.xlu0 %2485
        %2489 = vset.pattern.permute.xlu0 0
        %2490 = vperm.xlu0 %2489, %v2464
        %v2491 = vpop.permute.xlu0 %2490
        %2494 = vset.pattern.permute.xlu0 0
        %2495 = vperm.xlu0 %2494, %v2465
        %v2496 = vpop.permute.xlu0 %2495
        %2499 = vset.pattern.permute.xlu0 0
        %2500 = vperm.xlu0 %2499, %v2466
        %v2501 = vpop.permute.xlu0 %2500
        %2504 = vset.pattern.permute.xlu0 0
        %2505 = vperm.xlu0 %2504, %v2467
        %v2506 = vpop.permute.xlu0 %2505
        %v2508 = vmul.f32 %v2471, %v531
        %v2509 = vmul.f32 %v2476, %v531
        %v2510 = vmul.f32 %v2481, %v531
        %v2511 = vmul.f32 %v2486, %v531
        %v2512 = vmul.f32 %v2491, %v531
        %v2513 = vmul.f32 %v2496, %v531
        %v2514 = vmul.f32 %v2501, %v531
        %v2515 = vmul.f32 %v2506, %v531
        %v2516 = vadd.f32 %v2450, %v2508
        %v2517 = vadd.f32 %v2451, %v2509
        %v2518 = vadd.f32 %v2452, %v2510
        %v2519 = vadd.f32 %v2453, %v2511
        %v2520 = vadd.f32 %v2454, %v2512
        %v2521 = vadd.f32 %v2455, %v2513
        %v2522 = vadd.f32 %v2456, %v2514
        %v2523 = vadd.f32 %v2457, %v2515
        %s2524 = sadd.s32 192, 17
        %s2525 = scalar_lea.vmem %s259, %s2524
        %v2526 = vld [vmem:[%s2525] sm:$0xff]
        %v2527 = vld [vmem:[%s2525 + $0x8] sm:$0xff]
        %v2528 = vld [vmem:[%s2525 + $0x10] sm:$0xff]
        %v2529 = vld [vmem:[%s2525 + $0x18] sm:$0xff]
        %v2530 = vld [vmem:[%s2525 + $0x20] sm:$0xff]
        %v2531 = vld [vmem:[%s2525 + $0x28] sm:$0xff]
        %v2532 = vld [vmem:[%s2525 + $0x30] sm:$0xff]
        %v2533 = vld [vmem:[%s2525 + $0x38] sm:$0xff]
        %2535 = vset.pattern.permute.xlu0 0
        %2536 = vperm.xlu0 %2535, %v2526
        %v2537 = vpop.permute.xlu0 %2536
        %2540 = vset.pattern.permute.xlu0 0
        %2541 = vperm.xlu0 %2540, %v2527
        %v2542 = vpop.permute.xlu0 %2541
        %2545 = vset.pattern.permute.xlu0 0
        %2546 = vperm.xlu0 %2545, %v2528
        %v2547 = vpop.permute.xlu0 %2546
        %2550 = vset.pattern.permute.xlu0 0
        %2551 = vperm.xlu0 %2550, %v2529
        %v2552 = vpop.permute.xlu0 %2551
        %2555 = vset.pattern.permute.xlu0 0
        %2556 = vperm.xlu0 %2555, %v2530
        %v2557 = vpop.permute.xlu0 %2556
        %2560 = vset.pattern.permute.xlu0 0
        %2561 = vperm.xlu0 %2560, %v2531
        %v2562 = vpop.permute.xlu0 %2561
        %2565 = vset.pattern.permute.xlu0 0
        %2566 = vperm.xlu0 %2565, %v2532
        %v2567 = vpop.permute.xlu0 %2566
        %2570 = vset.pattern.permute.xlu0 0
        %2571 = vperm.xlu0 %2570, %v2533
        %v2572 = vpop.permute.xlu0 %2571
        %v2574 = vmul.f32 %v2537, %v601
        %v2575 = vmul.f32 %v2542, %v601
        %v2576 = vmul.f32 %v2547, %v601
        %v2577 = vmul.f32 %v2552, %v601
        %v2578 = vmul.f32 %v2557, %v601
        %v2579 = vmul.f32 %v2562, %v601
        %v2580 = vmul.f32 %v2567, %v601
        %v2581 = vmul.f32 %v2572, %v601
        %v2582 = vadd.f32 %v2516, %v2574
        %v2583 = vadd.f32 %v2517, %v2575
        %v2584 = vadd.f32 %v2518, %v2576
        %v2585 = vadd.f32 %v2519, %v2577
        %v2586 = vadd.f32 %v2520, %v2578
        %v2587 = vadd.f32 %v2521, %v2579
        %v2588 = vadd.f32 %v2522, %v2580
        %v2589 = vadd.f32 %v2523, %v2581
        %s2590 = sadd.s32 192, 18
        %s2591 = scalar_lea.vmem %s259, %s2590
        %v2592 = vld [vmem:[%s2591] sm:$0xff]
        %v2593 = vld [vmem:[%s2591 + $0x8] sm:$0xff]
        %v2594 = vld [vmem:[%s2591 + $0x10] sm:$0xff]
        %v2595 = vld [vmem:[%s2591 + $0x18] sm:$0xff]
        %v2596 = vld [vmem:[%s2591 + $0x20] sm:$0xff]
        %v2597 = vld [vmem:[%s2591 + $0x28] sm:$0xff]
        %v2598 = vld [vmem:[%s2591 + $0x30] sm:$0xff]
        %v2599 = vld [vmem:[%s2591 + $0x38] sm:$0xff]
        %2601 = vset.pattern.permute.xlu0 0
        %2602 = vperm.xlu0 %2601, %v2592
        %v2603 = vpop.permute.xlu0 %2602
        %2606 = vset.pattern.permute.xlu0 0
        %2607 = vperm.xlu0 %2606, %v2593
        %v2608 = vpop.permute.xlu0 %2607
        %2611 = vset.pattern.permute.xlu0 0
        %2612 = vperm.xlu0 %2611, %v2594
        %v2613 = vpop.permute.xlu0 %2612
        %2616 = vset.pattern.permute.xlu0 0
        %2617 = vperm.xlu0 %2616, %v2595
        %v2618 = vpop.permute.xlu0 %2617
        %2621 = vset.pattern.permute.xlu0 0
        %2622 = vperm.xlu0 %2621, %v2596
        %v2623 = vpop.permute.xlu0 %2622
        %2626 = vset.pattern.permute.xlu0 0
        %2627 = vperm.xlu0 %2626, %v2597
        %v2628 = vpop.permute.xlu0 %2627
        %2631 = vset.pattern.permute.xlu0 0
        %2632 = vperm.xlu0 %2631, %v2598
        %v2633 = vpop.permute.xlu0 %2632
        %2636 = vset.pattern.permute.xlu0 0
        %2637 = vperm.xlu0 %2636, %v2599
        %v2638 = vpop.permute.xlu0 %2637
        %v2640 = vmul.f32 %v2603, %v671
        %v2641 = vmul.f32 %v2608, %v671
        %v2642 = vmul.f32 %v2613, %v671
        %v2643 = vmul.f32 %v2618, %v671
        %v2644 = vmul.f32 %v2623, %v671
        %v2645 = vmul.f32 %v2628, %v671
        %v2646 = vmul.f32 %v2633, %v671
        %v2647 = vmul.f32 %v2638, %v671
        %v2648 = vadd.f32 %v2582, %v2640
        %v2649 = vadd.f32 %v2583, %v2641
        %v2650 = vadd.f32 %v2584, %v2642
        %v2651 = vadd.f32 %v2585, %v2643
        %v2652 = vadd.f32 %v2586, %v2644
        %v2653 = vadd.f32 %v2587, %v2645
        %v2654 = vadd.f32 %v2588, %v2646
        %v2655 = vadd.f32 %v2589, %v2647
        %s2656 = sadd.s32 192, 32
        %s2657 = scalar_lea.vmem %s259, %s2656
        %v2658 = vld [vmem:[%s2657] sm:$0xff]
        %v2659 = vld [vmem:[%s2657 + $0x8] sm:$0xff]
        %v2660 = vld [vmem:[%s2657 + $0x10] sm:$0xff]
        %v2661 = vld [vmem:[%s2657 + $0x18] sm:$0xff]
        %v2662 = vld [vmem:[%s2657 + $0x20] sm:$0xff]
        %v2663 = vld [vmem:[%s2657 + $0x28] sm:$0xff]
        %v2664 = vld [vmem:[%s2657 + $0x30] sm:$0xff]
        %v2665 = vld [vmem:[%s2657 + $0x38] sm:$0xff]
        %2667 = vset.pattern.permute.xlu0 0
        %2668 = vperm.xlu0 %2667, %v2658
        %v2669 = vpop.permute.xlu0 %2668
        %2672 = vset.pattern.permute.xlu0 0
        %2673 = vperm.xlu0 %2672, %v2659
        %v2674 = vpop.permute.xlu0 %2673
        %2677 = vset.pattern.permute.xlu0 0
        %2678 = vperm.xlu0 %2677, %v2660
        %v2679 = vpop.permute.xlu0 %2678
        %2682 = vset.pattern.permute.xlu0 0
        %2683 = vperm.xlu0 %2682, %v2661
        %v2684 = vpop.permute.xlu0 %2683
        %2687 = vset.pattern.permute.xlu0 0
        %2688 = vperm.xlu0 %2687, %v2662
        %v2689 = vpop.permute.xlu0 %2688
        %2692 = vset.pattern.permute.xlu0 0
        %2693 = vperm.xlu0 %2692, %v2663
        %v2694 = vpop.permute.xlu0 %2693
        %2697 = vset.pattern.permute.xlu0 0
        %2698 = vperm.xlu0 %2697, %v2664
        %v2699 = vpop.permute.xlu0 %2698
        %2702 = vset.pattern.permute.xlu0 0
        %2703 = vperm.xlu0 %2702, %v2665
        %v2704 = vpop.permute.xlu0 %2703
        %v2706 = vmul.f32 %v2669, %v741
        %v2707 = vmul.f32 %v2674, %v741
        %v2708 = vmul.f32 %v2679, %v741
        %v2709 = vmul.f32 %v2684, %v741
        %v2710 = vmul.f32 %v2689, %v741
        %v2711 = vmul.f32 %v2694, %v741
        %v2712 = vmul.f32 %v2699, %v741
        %v2713 = vmul.f32 %v2704, %v741
        %v2714 = vadd.f32 %v2648, %v2706
        %v2715 = vadd.f32 %v2649, %v2707
        %v2716 = vadd.f32 %v2650, %v2708
        %v2717 = vadd.f32 %v2651, %v2709
        %v2718 = vadd.f32 %v2652, %v2710
        %v2719 = vadd.f32 %v2653, %v2711
        %v2720 = vadd.f32 %v2654, %v2712
        %v2721 = vadd.f32 %v2655, %v2713
        %s2722 = sadd.s32 192, 33
        %s2723 = scalar_lea.vmem %s259, %s2722
        %v2724 = vld [vmem:[%s2723] sm:$0xff]
        %v2725 = vld [vmem:[%s2723 + $0x8] sm:$0xff]
        %v2726 = vld [vmem:[%s2723 + $0x10] sm:$0xff]
        %v2727 = vld [vmem:[%s2723 + $0x18] sm:$0xff]
        %v2728 = vld [vmem:[%s2723 + $0x20] sm:$0xff]
        %v2729 = vld [vmem:[%s2723 + $0x28] sm:$0xff]
        %v2730 = vld [vmem:[%s2723 + $0x30] sm:$0xff]
        %v2731 = vld [vmem:[%s2723 + $0x38] sm:$0xff]
        %2733 = vset.pattern.permute.xlu0 0
        %2734 = vperm.xlu0 %2733, %v2724
        %v2735 = vpop.permute.xlu0 %2734
        %2738 = vset.pattern.permute.xlu0 0
        %2739 = vperm.xlu0 %2738, %v2725
        %v2740 = vpop.permute.xlu0 %2739
        %2743 = vset.pattern.permute.xlu0 0
        %2744 = vperm.xlu0 %2743, %v2726
        %v2745 = vpop.permute.xlu0 %2744
        %2748 = vset.pattern.permute.xlu0 0
        %2749 = vperm.xlu0 %2748, %v2727
        %v2750 = vpop.permute.xlu0 %2749
        %2753 = vset.pattern.permute.xlu0 0
        %2754 = vperm.xlu0 %2753, %v2728
        %v2755 = vpop.permute.xlu0 %2754
        %2758 = vset.pattern.permute.xlu0 0
        %2759 = vperm.xlu0 %2758, %v2729
        %v2760 = vpop.permute.xlu0 %2759
        %2763 = vset.pattern.permute.xlu0 0
        %2764 = vperm.xlu0 %2763, %v2730
        %v2765 = vpop.permute.xlu0 %2764
        %2768 = vset.pattern.permute.xlu0 0
        %2769 = vperm.xlu0 %2768, %v2731
        %v2770 = vpop.permute.xlu0 %2769
        %v2772 = vmul.f32 %v2735, %v811
        %v2773 = vmul.f32 %v2740, %v811
        %v2774 = vmul.f32 %v2745, %v811
        %v2775 = vmul.f32 %v2750, %v811
        %v2776 = vmul.f32 %v2755, %v811
        %v2777 = vmul.f32 %v2760, %v811
        %v2778 = vmul.f32 %v2765, %v811
        %v2779 = vmul.f32 %v2770, %v811
        %v2780 = vadd.f32 %v2714, %v2772
        %v2781 = vadd.f32 %v2715, %v2773
        %v2782 = vadd.f32 %v2716, %v2774
        %v2783 = vadd.f32 %v2717, %v2775
        %v2784 = vadd.f32 %v2718, %v2776
        %v2785 = vadd.f32 %v2719, %v2777
        %v2786 = vadd.f32 %v2720, %v2778
        %v2787 = vadd.f32 %v2721, %v2779
        %s2788 = sadd.s32 192, 34
        %s2789 = scalar_lea.vmem %s259, %s2788
        %v2790 = vld [vmem:[%s2789] sm:$0xff]
        %v2791 = vld [vmem:[%s2789 + $0x8] sm:$0xff]
        %v2792 = vld [vmem:[%s2789 + $0x10] sm:$0xff]
        %v2793 = vld [vmem:[%s2789 + $0x18] sm:$0xff]
        %v2794 = vld [vmem:[%s2789 + $0x20] sm:$0xff]
        %v2795 = vld [vmem:[%s2789 + $0x28] sm:$0xff]
        %v2796 = vld [vmem:[%s2789 + $0x30] sm:$0xff]
        %v2797 = vld [vmem:[%s2789 + $0x38] sm:$0xff]
        %2799 = vset.pattern.permute.xlu0 0
        %2800 = vperm.xlu0 %2799, %v2790
        %v2801 = vpop.permute.xlu0 %2800
        %2804 = vset.pattern.permute.xlu0 0
        %2805 = vperm.xlu0 %2804, %v2791
        %v2806 = vpop.permute.xlu0 %2805
        %2809 = vset.pattern.permute.xlu0 0
        %2810 = vperm.xlu0 %2809, %v2792
        %v2811 = vpop.permute.xlu0 %2810
        %2814 = vset.pattern.permute.xlu0 0
        %2815 = vperm.xlu0 %2814, %v2793
        %v2816 = vpop.permute.xlu0 %2815
        %2819 = vset.pattern.permute.xlu0 0
        %2820 = vperm.xlu0 %2819, %v2794
        %v2821 = vpop.permute.xlu0 %2820
        %2824 = vset.pattern.permute.xlu0 0
        %2825 = vperm.xlu0 %2824, %v2795
        %v2826 = vpop.permute.xlu0 %2825
        %2829 = vset.pattern.permute.xlu0 0
        %2830 = vperm.xlu0 %2829, %v2796
        %v2831 = vpop.permute.xlu0 %2830
        %2834 = vset.pattern.permute.xlu0 0
        %2835 = vperm.xlu0 %2834, %v2797
        %v2836 = vpop.permute.xlu0 %2835
        %v2838 = vmul.f32 %v2801, %v881
        %v2839 = vmul.f32 %v2806, %v881
        %v2840 = vmul.f32 %v2811, %v881
        %v2841 = vmul.f32 %v2816, %v881
        %v2842 = vmul.f32 %v2821, %v881
        %v2843 = vmul.f32 %v2826, %v881
        %v2844 = vmul.f32 %v2831, %v881
        %v2845 = vmul.f32 %v2836, %v881
        %v2846 = vadd.f32 %v2780, %v2838
        %v2847 = vadd.f32 %v2781, %v2839
        %v2848 = vadd.f32 %v2782, %v2840
        %v2849 = vadd.f32 %v2783, %v2841
        %v2850 = vadd.f32 %v2784, %v2842
        %v2851 = vadd.f32 %v2785, %v2843
        %v2852 = vadd.f32 %v2786, %v2844
        %v2853 = vadd.f32 %v2787, %v2845
        %v2854 = vadd.f32 %v2846, %v902
        %v2855 = vadd.f32 %v2847, %v902
        %v2856 = vadd.f32 %v2848, %v902
        %v2857 = vadd.f32 %v2849, %v902
        %v2858 = vadd.f32 %v2850, %v902
        %v2859 = vadd.f32 %v2851, %v902
        %v2860 = vadd.f32 %v2852, %v902
        %v2861 = vadd.f32 %v2853, %v902
        %v2862 = vmax.f32 %v2854, 0.0
        %v2863 = vmax.f32 %v2855, 0.0
        %v2864 = vmax.f32 %v2856, 0.0
        %v2865 = vmax.f32 %v2857, 0.0
        %v2866 = vmax.f32 %v2858, 0.0
        %v2867 = vmax.f32 %v2859, 0.0
        %v2868 = vmax.f32 %v2860, 0.0
        %v2869 = vmax.f32 %v2861, 0.0
        %v2870 = vpack.c.bf16 %v2863, %v2862
        %v2871 = vpack.c.bf16 %v2865, %v2864
        %v2872 = vpack.c.bf16 %v2867, %v2866
        %v2873 = vpack.c.bf16 %v2869, %v2868
        %v2878 = vunpack.c.l.b16 %v2870
        %v2879 = vunpack.c.h.b16 %v2870
        %v2880 = vunpack.c.l.b16 %v2871
        %v2881 = vunpack.c.h.b16 %v2871
        %v2882 = vunpack.c.l.b16 %v2872
        %v2883 = vunpack.c.h.b16 %v2872
        %v2884 = vunpack.c.l.b16 %v2873
        %v2885 = vunpack.c.h.b16 %v2873
        %v2886 = vpack.c.b16 %v2878, %v2878
        %v2887 = vpack.c.b16 %v2879, %v2879
        %v2888 = vpack.c.b16 %v2880, %v2880
        %v2889 = vpack.c.b16 %v2881, %v2881
        %v2890 = vpack.c.b16 %v2882, %v2882
        %v2891 = vpack.c.b16 %v2883, %v2883
        %v2892 = vpack.c.b16 %v2884, %v2884
        %v2893 = vpack.c.b16 %v2885, %v2885
        %s2902 = scalar_lea.vmem [#allocation2], 96
        %2903 = vst.msk [vmem:[%s2902] sm:$0xf] %vm952, %v2886
        %2904 = vst.msk [vmem:[%s2902 + $0x4] sm:$0xf] %vm952, %v2887
        %2905 = vst.msk [vmem:[%s2902 + $0x8] sm:$0xf] %vm952, %v2888
        %2906 = vst.msk [vmem:[%s2902 + $0xc] sm:$0xf] %vm952, %v2889
        %2907 = vst.msk [vmem:[%s2902 + $0x10] sm:$0xf] %vm952, %v2890
        %2908 = vst.msk [vmem:[%s2902 + $0x14] sm:$0xf] %vm952, %v2891
        %2909 = vst.msk [vmem:[%s2902 + $0x18] sm:$0xf] %vm952, %v2892
        %2910 = vst.msk [vmem:[%s2902 + $0x1c] sm:$0xf] %vm952, %v2893
        %v2911 = vld [vmem:[#allocation2] sm:$0xf]
        %v2912 = vld [vmem:[#allocation2 + $0x4] sm:$0xf]
        %v2913 = vld [vmem:[#allocation2 + $0x8] sm:$0xf]
        %v2914 = vld [vmem:[#allocation2 + $0xc] sm:$0xf]
        %v2915 = vld [vmem:[#allocation2 + $0x10] sm:$0xf]
        %v2916 = vld [vmem:[#allocation2 + $0x14] sm:$0xf]
        %v2917 = vld [vmem:[#allocation2 + $0x18] sm:$0xf]
        %v2918 = vld [vmem:[#allocation2 + $0x1c] sm:$0xf]
        %v2919 = vld [vmem:[#allocation2 + $0x20] sm:$0xf]
        %v2920 = vld [vmem:[#allocation2 + $0x24] sm:$0xf]
        %v2921 = vld [vmem:[#allocation2 + $0x28] sm:$0xf]
        %v2922 = vld [vmem:[#allocation2 + $0x2c] sm:$0xf]
        %v2923 = vld [vmem:[#allocation2 + $0x30] sm:$0xf]
        %v2924 = vld [vmem:[#allocation2 + $0x34] sm:$0xf]
        %v2925 = vld [vmem:[#allocation2 + $0x38] sm:$0xf]
        %v2926 = vld [vmem:[#allocation2 + $0x3c] sm:$0xf]
        %v2927 = vld [vmem:[#allocation2 + $0x40] sm:$0xf]
        %v2928 = vld [vmem:[#allocation2 + $0x44] sm:$0xf]
        %v2929 = vld [vmem:[#allocation2 + $0x48] sm:$0xf]
        %v2930 = vld [vmem:[#allocation2 + $0x4c] sm:$0xf]
        %v2931 = vld [vmem:[#allocation2 + $0x50] sm:$0xf]
        %v2932 = vld [vmem:[#allocation2 + $0x54] sm:$0xf]
        %v2933 = vld [vmem:[#allocation2 + $0x58] sm:$0xf]
        %v2934 = vld [vmem:[#allocation2 + $0x5c] sm:$0xf]
        %v2935 = vld [vmem:[#allocation2 + $0x60] sm:$0x1]
        %v2936 = vld [vmem:[#allocation2] sm:$0xe]
        %v2937 = vld [vmem:[#allocation2 + $0x60] sm:$0xf]
        %v2938 = vld [vmem:[#allocation2 + $0x64] sm:$0xf]
        %v2939 = vld [vmem:[#allocation2 + $0x68] sm:$0x1]
        %v2940 = vld [vmem:[#allocation2 + $0x8] sm:$0xe]
        %v2941 = vld [vmem:[#allocation2 + $0x68] sm:$0xf]
        %v2942 = vld [vmem:[#allocation2 + $0x6c] sm:$0xf]
        %v2943 = vld [vmem:[#allocation2 + $0x70] sm:$0x1]
        %v2944 = vld [vmem:[#allocation2 + $0x10] sm:$0xe]
        %v2969 = vunpack.c.l.b16 %v2911
        %v2970 = vunpack.c.l.b16 %v2912
        %v2971 = vunpack.c.l.b16 %v2913
        %v2972 = vunpack.c.l.b16 %v2914
        %v2973 = vunpack.c.l.b16 %v2915
        %v2974 = vunpack.c.l.b16 %v2916
        %v2975 = vunpack.c.l.b16 %v2917
        %v2976 = vunpack.c.l.b16 %v2918
        %v2977 = vunpack.c.l.b16 %v2919
        %v2978 = vunpack.c.l.b16 %v2920
        %v2979 = vunpack.c.l.b16 %v2921
        %v2980 = vunpack.c.l.b16 %v2922
        %v2981 = vunpack.c.l.b16 %v2923
        %v2982 = vunpack.c.l.b16 %v2924
        %v2983 = vunpack.c.l.b16 %v2925
        %v2984 = vunpack.c.l.b16 %v2926
        %v2985 = vunpack.c.l.b16 %v2927
        %v2986 = vunpack.c.l.b16 %v2928
        %v2987 = vunpack.c.l.b16 %v2929
        %v2988 = vunpack.c.l.b16 %v2930
        %v2989 = vunpack.c.l.b16 %v2931
        %v2990 = vunpack.c.l.b16 %v2932
        %v2991 = vunpack.c.l.b16 %v2933
        %v2992 = vunpack.c.l.b16 %v2934
        %v2993 = vpack.c.b16 %v2970, %v2969
        %v2994 = vpack.c.b16 %v2972, %v2971
        %v2995 = vpack.c.b16 %v2974, %v2973
        %v2996 = vpack.c.b16 %v2976, %v2975
        %v2997 = vpack.c.b16 %v2978, %v2977
        %v2998 = vpack.c.b16 %v2980, %v2979
        %v2999 = vpack.c.b16 %v2982, %v2981
        %v3000 = vpack.c.b16 %v2984, %v2983
        %v3001 = vpack.c.b16 %v2986, %v2985
        %v3002 = vpack.c.b16 %v2988, %v2987
        %v3003 = vpack.c.b16 %v2990, %v2989
        %v3004 = vpack.c.b16 %v2992, %v2991
        %v3006 = vunpack.c.l.b16 %v2935
        %v3007 = vpack.c.b16 %v3006, %v3006
        %vm3008 = vsmask.f32 7424
        %v3010 = vshrl.u32 %v2993, 16
        %v3012 = vshll.u32 %v2993, 16
        %v3014 = vrot.slane %v3012, 1
        %v3015 = vor.u32 %v3010, %v3014
        %v3017 = vshll.u32 %v2994, 16
        %v3019 = vrot.slane %v3017, 1
        %v3020 = vsel %vm3008, %v3015, %v3019
        %v3021 = vshrl.u32 %v2994, 16
        %v3023 = vor.u32 %v3021, %v3019
        %v3025 = vshll.u32 %v2995, 16
        %v3027 = vrot.slane %v3025, 1
        %v3028 = vsel %vm3008, %v3023, %v3027
        %v3029 = vshrl.u32 %v2995, 16
        %v3031 = vor.u32 %v3029, %v3027
        %v3033 = vshll.u32 %v2996, 16
        %v3035 = vrot.slane %v3033, 1
        %v3036 = vsel %vm3008, %v3031, %v3035
        %v3037 = vshrl.u32 %v2996, 16
        %v3039 = vor.u32 %v3037, %v3035
        %v3041 = vshll.u32 %v2997, 16
        %v3043 = vrot.slane %v3041, 1
        %v3044 = vsel %vm3008, %v3039, %v3043
        %v3045 = vshrl.u32 %v2997, 16
        %v3047 = vor.u32 %v3045, %v3043
        %v3049 = vshll.u32 %v2998, 16
        %v3051 = vrot.slane %v3049, 1
        %v3052 = vsel %vm3008, %v3047, %v3051
        %v3053 = vshrl.u32 %v2998, 16
        %v3055 = vor.u32 %v3053, %v3051
        %v3057 = vshll.u32 %v2999, 16
        %v3059 = vrot.slane %v3057, 1
        %v3060 = vsel %vm3008, %v3055, %v3059
        %v3061 = vshrl.u32 %v2999, 16
        %v3063 = vor.u32 %v3061, %v3059
        %v3065 = vshll.u32 %v3000, 16
        %v3067 = vrot.slane %v3065, 1
        %v3068 = vsel %vm3008, %v3063, %v3067
        %v3069 = vshrl.u32 %v3000, 16
        %v3071 = vor.u32 %v3069, %v3067
        %v3073 = vshll.u32 %v3001, 16
        %v3075 = vrot.slane %v3073, 1
        %v3076 = vsel %vm3008, %v3071, %v3075
        %v3077 = vshrl.u32 %v3001, 16
        %v3079 = vor.u32 %v3077, %v3075
        %v3081 = vshll.u32 %v3002, 16
        %v3083 = vrot.slane %v3081, 1
        %v3084 = vsel %vm3008, %v3079, %v3083
        %v3085 = vshrl.u32 %v3002, 16
        %v3087 = vor.u32 %v3085, %v3083
        %v3089 = vshll.u32 %v3003, 16
        %v3091 = vrot.slane %v3089, 1
        %v3092 = vsel %vm3008, %v3087, %v3091
        %v3093 = vshrl.u32 %v3003, 16
        %v3095 = vor.u32 %v3093, %v3091
        %v3097 = vshll.u32 %v3004, 16
        %v3099 = vrot.slane %v3097, 1
        %v3100 = vsel %vm3008, %v3095, %v3099
        %v3101 = vshrl.u32 %v3004, 16
        %v3103 = vor.u32 %v3101, %v3099
        %v3105 = vshll.u32 %v3007, 16
        %v3107 = vrot.slane %v3105, 1
        %v3108 = vsel %vm3008, %v3103, %v3107
        %3109 = vrot.lane.b32.xlu0 %v3020, 32
        %v3110 = vpop.permute.xlu0 %3109
        %3111 = vrot.lane.b32.xlu0 %v3028, 32
        %v3112 = vpop.permute.xlu0 %3111
        %3113 = vrot.lane.b32.xlu0 %v3036, 32
        %v3114 = vpop.permute.xlu0 %3113
        %3115 = vrot.lane.b32.xlu0 %v3044, 32
        %v3116 = vpop.permute.xlu0 %3115
        %3117 = vrot.lane.b32.xlu0 %v3052, 32
        %v3118 = vpop.permute.xlu0 %3117
        %3119 = vrot.lane.b32.xlu0 %v3060, 32
        %v3120 = vpop.permute.xlu0 %3119
        %3121 = vrot.lane.b32.xlu0 %v3068, 32
        %v3122 = vpop.permute.xlu0 %3121
        %3123 = vrot.lane.b32.xlu0 %v3076, 32
        %v3124 = vpop.permute.xlu0 %3123
        %3125 = vrot.lane.b32.xlu0 %v3084, 32
        %v3126 = vpop.permute.xlu0 %3125
        %3127 = vrot.lane.b32.xlu0 %v3092, 32
        %v3128 = vpop.permute.xlu0 %3127
        %3129 = vrot.lane.b32.xlu0 %v3100, 32
        %v3130 = vpop.permute.xlu0 %3129
        %3131 = vrot.lane.b32.xlu0 %v3108, 32
        %v3132 = vpop.permute.xlu0 %3131
        %v3134 = vunpack.c.l.b16 %v2936
        %v3135 = vpack.c.b16 %v2970, %v3134
        %vm3136 = vcmask 1046528
        %v3137 = vrot.slane %v3135, 1
        %v3138 = vrot.slane %v2994, 1
        %v3139 = vsel %vm3136, %v3137, %v3138
        %v3140 = vrot.slane %v2995, 1
        %v3141 = vsel %vm3136, %v3138, %v3140
        %v3142 = vrot.slane %v2996, 1
        %v3143 = vsel %vm3136, %v3140, %v3142
        %v3144 = vrot.slane %v2997, 1
        %v3145 = vsel %vm3136, %v3142, %v3144
        %v3146 = vrot.slane %v2998, 1
        %v3147 = vsel %vm3136, %v3144, %v3146
        %v3148 = vrot.slane %v2999, 1
        %v3149 = vsel %vm3136, %v3146, %v3148
        %v3150 = vrot.slane %v3000, 1
        %v3151 = vsel %vm3136, %v3148, %v3150
        %v3152 = vrot.slane %v3001, 1
        %v3153 = vsel %vm3136, %v3150, %v3152
        %v3154 = vrot.slane %v3002, 1
        %v3155 = vsel %vm3136, %v3152, %v3154
        %v3156 = vrot.slane %v3003, 1
        %v3157 = vsel %vm3136, %v3154, %v3156
        %v3158 = vrot.slane %v3004, 1
        %v3159 = vsel %vm3136, %v3156, %v3158
        %v3160 = vrot.slane %v3007, 1
        %v3161 = vsel %vm3136, %v3158, %v3160
        %3162 = vrot.lane.b32.xlu0 %v3139, 64
        %v3163 = vpop.permute.xlu0 %3162
        %3164 = vrot.lane.b32.xlu0 %v3141, 64
        %v3165 = vpop.permute.xlu0 %3164
        %3166 = vrot.lane.b32.xlu0 %v3143, 64
        %v3167 = vpop.permute.xlu0 %3166
        %3168 = vrot.lane.b32.xlu0 %v3145, 64
        %v3169 = vpop.permute.xlu0 %3168
        %3170 = vrot.lane.b32.xlu0 %v3147, 64
        %v3171 = vpop.permute.xlu0 %3170
        %3172 = vrot.lane.b32.xlu0 %v3149, 64
        %v3173 = vpop.permute.xlu0 %3172
        %3174 = vrot.lane.b32.xlu0 %v3151, 64
        %v3175 = vpop.permute.xlu0 %3174
        %3176 = vrot.lane.b32.xlu0 %v3153, 64
        %v3177 = vpop.permute.xlu0 %3176
        %3178 = vrot.lane.b32.xlu0 %v3155, 64
        %v3179 = vpop.permute.xlu0 %3178
        %3180 = vrot.lane.b32.xlu0 %v3157, 64
        %v3181 = vpop.permute.xlu0 %3180
        %3182 = vrot.lane.b32.xlu0 %v3159, 64
        %v3183 = vpop.permute.xlu0 %3182
        %3184 = vrot.lane.b32.xlu0 %v3161, 64
        %v3185 = vpop.permute.xlu0 %3184
        %v3188 = vunpack.c.l.b16 %v2937
        %v3189 = vunpack.c.l.b16 %v2938
        %v3190 = vpack.c.b16 %v3189, %v3188
        %3191 = vrot.lane.b32.xlu0 %v2994, 96
        %v3192 = vpop.permute.xlu0 %3191
        %3193 = vrot.lane.b32.xlu0 %v2995, 96
        %v3194 = vpop.permute.xlu0 %3193
        %3195 = vrot.lane.b32.xlu0 %v2996, 96
        %v3196 = vpop.permute.xlu0 %3195
        %3197 = vrot.lane.b32.xlu0 %v2997, 96
        %v3198 = vpop.permute.xlu0 %3197
        %3199 = vrot.lane.b32.xlu0 %v2998, 96
        %v3200 = vpop.permute.xlu0 %3199
        %3201 = vrot.lane.b32.xlu0 %v2999, 96
        %v3202 = vpop.permute.xlu0 %3201
        %3203 = vrot.lane.b32.xlu0 %v3000, 96
        %v3204 = vpop.permute.xlu0 %3203
        %3205 = vrot.lane.b32.xlu0 %v3001, 96
        %v3206 = vpop.permute.xlu0 %3205
        %3207 = vrot.lane.b32.xlu0 %v3002, 96
        %v3208 = vpop.permute.xlu0 %3207
        %3209 = vrot.lane.b32.xlu0 %v3003, 96
        %v3210 = vpop.permute.xlu0 %3209
        %3211 = vrot.lane.b32.xlu0 %v3004, 96
        %v3212 = vpop.permute.xlu0 %3211
        %3213 = vrot.lane.b32.xlu0 %v3190, 96
        %v3214 = vpop.permute.xlu0 %3213
        %v3216 = vunpack.c.l.b16 %v2939
        %v3217 = vpack.c.b16 %v3216, %v3216
        %v3219 = vshll.u32 %v3190, 16
        %v3221 = vrot.slane %v3219, 1
        %v3222 = vsel %vm3008, %v3103, %v3221
        %v3223 = vshrl.u32 %v3190, 16
        %v3225 = vor.u32 %v3223, %v3221
        %v3227 = vshll.u32 %v3217, 16
        %v3229 = vrot.slane %v3227, 1
        %v3230 = vsel %vm3008, %v3225, %v3229
        %v3232 = vunpack.c.l.b16 %v2940
        %v3233 = vpack.c.b16 %v2972, %v3232
        %v3234 = vrot.slane %v3233, 1
        %v3235 = vsel %vm3136, %v3234, %v3140
        %v3236 = vrot.slane %v3190, 1
        %v3237 = vsel %vm3136, %v3158, %v3236
        %v3238 = vrot.slane %v3217, 1
        %v3239 = vsel %vm3136, %v3236, %v3238
        %3240 = vrot.lane.b32.xlu0 %v3235, 32
        %v3241 = vpop.permute.xlu0 %3240
        %3242 = vrot.lane.b32.xlu0 %v3143, 32
        %v3243 = vpop.permute.xlu0 %3242
        %3244 = vrot.lane.b32.xlu0 %v3145, 32
        %v3245 = vpop.permute.xlu0 %3244
        %3246 = vrot.lane.b32.xlu0 %v3147, 32
        %v3247 = vpop.permute.xlu0 %3246
        %3248 = vrot.lane.b32.xlu0 %v3149, 32
        %v3249 = vpop.permute.xlu0 %3248
        %3250 = vrot.lane.b32.xlu0 %v3151, 32
        %v3251 = vpop.permute.xlu0 %3250
        %3252 = vrot.lane.b32.xlu0 %v3153, 32
        %v3253 = vpop.permute.xlu0 %3252
        %3254 = vrot.lane.b32.xlu0 %v3155, 32
        %v3255 = vpop.permute.xlu0 %3254
        %3256 = vrot.lane.b32.xlu0 %v3157, 32
        %v3257 = vpop.permute.xlu0 %3256
        %3258 = vrot.lane.b32.xlu0 %v3159, 32
        %v3259 = vpop.permute.xlu0 %3258
        %3260 = vrot.lane.b32.xlu0 %v3237, 32
        %v3261 = vpop.permute.xlu0 %3260
        %3262 = vrot.lane.b32.xlu0 %v3239, 32
        %v3263 = vpop.permute.xlu0 %3262
        %v3266 = vunpack.c.l.b16 %v2941
        %v3267 = vunpack.c.l.b16 %v2942
        %v3268 = vpack.c.b16 %v3267, %v3266
        %3269 = vrot.lane.b32.xlu0 %v2995, 64
        %v3270 = vpop.permute.xlu0 %3269
        %3271 = vrot.lane.b32.xlu0 %v2996, 64
        %v3272 = vpop.permute.xlu0 %3271
        %3273 = vrot.lane.b32.xlu0 %v2997, 64
        %v3274 = vpop.permute.xlu0 %3273
        %3275 = vrot.lane.b32.xlu0 %v2998, 64
        %v3276 = vpop.permute.xlu0 %3275
        %3277 = vrot.lane.b32.xlu0 %v2999, 64
        %v3278 = vpop.permute.xlu0 %3277
        %3279 = vrot.lane.b32.xlu0 %v3000, 64
        %v3280 = vpop.permute.xlu0 %3279
        %3281 = vrot.lane.b32.xlu0 %v3001, 64
        %v3282 = vpop.permute.xlu0 %3281
        %3283 = vrot.lane.b32.xlu0 %v3002, 64
        %v3284 = vpop.permute.xlu0 %3283
        %3285 = vrot.lane.b32.xlu0 %v3003, 64
        %v3286 = vpop.permute.xlu0 %3285
        %3287 = vrot.lane.b32.xlu0 %v3004, 64
        %v3288 = vpop.permute.xlu0 %3287
        %3289 = vrot.lane.b32.xlu0 %v3190, 64
        %v3290 = vpop.permute.xlu0 %3289
        %3291 = vrot.lane.b32.xlu0 %v3268, 64
        %v3292 = vpop.permute.xlu0 %3291
        %v3294 = vunpack.c.l.b16 %v2943
        %v3295 = vpack.c.b16 %v3294, %v3294
        %v3297 = vshll.u32 %v3268, 16
        %v3299 = vrot.slane %v3297, 1
        %v3300 = vsel %vm3008, %v3225, %v3299
        %v3301 = vshrl.u32 %v3268, 16
        %v3303 = vor.u32 %v3301, %v3299
        %v3305 = vshll.u32 %v3295, 16
        %v3307 = vrot.slane %v3305, 1
        %v3308 = vsel %vm3008, %v3303, %v3307
        %3309 = vrot.lane.b32.xlu0 %v3036, 96
        %v3310 = vpop.permute.xlu0 %3309
        %3311 = vrot.lane.b32.xlu0 %v3044, 96
        %v3312 = vpop.permute.xlu0 %3311
        %3313 = vrot.lane.b32.xlu0 %v3052, 96
        %v3314 = vpop.permute.xlu0 %3313
        %3315 = vrot.lane.b32.xlu0 %v3060, 96
        %v3316 = vpop.permute.xlu0 %3315
        %3317 = vrot.lane.b32.xlu0 %v3068, 96
        %v3318 = vpop.permute.xlu0 %3317
        %3319 = vrot.lane.b32.xlu0 %v3076, 96
        %v3320 = vpop.permute.xlu0 %3319
        %3321 = vrot.lane.b32.xlu0 %v3084, 96
        %v3322 = vpop.permute.xlu0 %3321
        %3323 = vrot.lane.b32.xlu0 %v3092, 96
        %v3324 = vpop.permute.xlu0 %3323
        %3325 = vrot.lane.b32.xlu0 %v3100, 96
        %v3326 = vpop.permute.xlu0 %3325
        %3327 = vrot.lane.b32.xlu0 %v3222, 96
        %v3328 = vpop.permute.xlu0 %3327
        %3329 = vrot.lane.b32.xlu0 %v3300, 96
        %v3330 = vpop.permute.xlu0 %3329
        %3331 = vrot.lane.b32.xlu0 %v3308, 96
        %v3332 = vpop.permute.xlu0 %3331
        %v3334 = vunpack.c.l.b16 %v2944
        %v3335 = vpack.c.b16 %v2974, %v3334
        %v3336 = vrot.slane %v3335, 1
        %v3337 = vsel %vm3136, %v3336, %v3142
        %v3338 = vrot.slane %v3268, 1
        %v3339 = vsel %vm3136, %v3236, %v3338
        %v3340 = vrot.slane %v3295, 1
        %v3341 = vsel %vm3136, %v3338, %v3340
        %vm3342 = vcmask 261120
        %v3344 = vsel %vm3342, %v2993, %v3110
        %v3346 = vsel %vm3342, %v2994, %v3112
        %v3348 = vsel %vm3342, %v2995, %v3114
        %v3350 = vsel %vm3342, %v2996, %v3116
        %v3352 = vsel %vm3342, %v2997, %v3118
        %v3354 = vsel %vm3342, %v2998, %v3120
        %v3356 = vsel %vm3342, %v2999, %v3122
        %v3358 = vsel %vm3342, %v3000, %v3124
        %v3360 = vsel %vm3342, %v3001, %v3126
        %v3362 = vsel %vm3342, %v3002, %v3128
        %v3364 = vsel %vm3342, %v3003, %v3130
        %v3366 = vsel %vm3342, %v3004, %v3132
        %vm3367 = vcmask 523264
        %v3369 = vsel %vm3367, %v3344, %v3163
        %v3371 = vsel %vm3367, %v3346, %v3165
        %v3373 = vsel %vm3367, %v3348, %v3167
        %v3375 = vsel %vm3367, %v3350, %v3169
        %v3377 = vsel %vm3367, %v3352, %v3171
        %v3379 = vsel %vm3367, %v3354, %v3173
        %v3381 = vsel %vm3367, %v3356, %v3175
        %v3383 = vsel %vm3367, %v3358, %v3177
        %v3385 = vsel %vm3367, %v3360, %v3179
        %v3387 = vsel %vm3367, %v3362, %v3181
        %v3389 = vsel %vm3367, %v3364, %v3183
        %v3391 = vsel %vm3367, %v3366, %v3185
        %vm3392 = vcmask 785408
        %v3394 = vsel %vm3392, %v3369, %v3192
        %v3397 = vsel %vm3392, %v3371, %v3194
        %v3400 = vsel %vm3392, %v3373, %v3196
        %v3403 = vsel %vm3392, %v3375, %v3198
        %v3406 = vsel %vm3392, %v3377, %v3200
        %v3409 = vsel %vm3392, %v3379, %v3202
        %v3412 = vsel %vm3392, %v3381, %v3204
        %v3415 = vsel %vm3392, %v3383, %v3206
        %v3418 = vsel %vm3392, %v3385, %v3208
        %v3421 = vsel %vm3392, %v3387, %v3210
        %v3424 = vsel %vm3392, %v3389, %v3212
        %v3427 = vsel %vm3392, %v3391, %v3214
        %v3431 = vsel %vm3342, %v3028, %v3241
        %v3434 = vsel %vm3342, %v3036, %v3243
        %v3437 = vsel %vm3342, %v3044, %v3245
        %v3440 = vsel %vm3342, %v3052, %v3247
        %v3443 = vsel %vm3342, %v3060, %v3249
        %v3446 = vsel %vm3342, %v3068, %v3251
        %v3449 = vsel %vm3342, %v3076, %v3253
        %v3452 = vsel %vm3342, %v3084, %v3255
        %v3455 = vsel %vm3342, %v3092, %v3257
        %v3458 = vsel %vm3342, %v3100, %v3259
        %v3461 = vsel %vm3342, %v3222, %v3261
        %v3464 = vsel %vm3342, %v3230, %v3263
        %v3466 = vsel %vm3367, %v3431, %v3270
        %v3468 = vsel %vm3367, %v3434, %v3272
        %v3470 = vsel %vm3367, %v3437, %v3274
        %v3472 = vsel %vm3367, %v3440, %v3276
        %v3474 = vsel %vm3367, %v3443, %v3278
        %v3476 = vsel %vm3367, %v3446, %v3280
        %v3478 = vsel %vm3367, %v3449, %v3282
        %v3480 = vsel %vm3367, %v3452, %v3284
        %v3482 = vsel %vm3367, %v3455, %v3286
        %v3484 = vsel %vm3367, %v3458, %v3288
        %v3486 = vsel %vm3367, %v3461, %v3290
        %v3488 = vsel %vm3367, %v3464, %v3292
        %v3490 = vsel %vm3392, %v3466, %v3310
        %v3493 = vsel %vm3392, %v3468, %v3312
        %v3496 = vsel %vm3392, %v3470, %v3314
        %v3499 = vsel %vm3392, %v3472, %v3316
        %v3502 = vsel %vm3392, %v3474, %v3318
        %v3505 = vsel %vm3392, %v3476, %v3320
        %v3508 = vsel %vm3392, %v3478, %v3322
        %v3511 = vsel %vm3392, %v3480, %v3324
        %v3514 = vsel %vm3392, %v3482, %v3326
        %v3517 = vsel %vm3392, %v3484, %v3328
        %v3520 = vsel %vm3392, %v3486, %v3330
        %v3523 = vsel %vm3392, %v3488, %v3332
        %v3525 = vld [vmem:[%s3] sm:$0xf]
        %v3526 = vld [vmem:[%s3 + $0x4] sm:$0xf]
        %v3527 = vld [vmem:[%s3 + $0x8] sm:$0xf]
        %v3528 = vld [vmem:[%s3 + $0xc] sm:$0xf]
        %v3529 = vld [vmem:[%s3 + $0x10] sm:$0xf]
        %v3530 = vld [vmem:[%s3 + $0x14] sm:$0xf]
        %v3531 = vld [vmem:[%s3 + $0x18] sm:$0xf]
        %v3532 = vld [vmem:[%s3 + $0x1c] sm:$0xf]
        %v3533 = vld [vmem:[%s3 + $0x20] sm:$0xf]
        %v3534 = vld [vmem:[%s3 + $0x24] sm:$0xf]
        %v3535 = vld [vmem:[%s3 + $0x28] sm:$0xf]
        %v3536 = vld [vmem:[%s3 + $0x2c] sm:$0xf]
        %v3537 = vld [vmem:[%s3 + $0x30] sm:$0xf]
        %v3538 = vld [vmem:[%s3 + $0x34] sm:$0xf]
        %v3539 = vld [vmem:[%s3 + $0x38] sm:$0xf]
        %v3540 = vld [vmem:[%s3 + $0x3c] sm:$0xf]
        %v3541 = vld [vmem:[%s3 + $0x40] sm:$0xf]
        %v3542 = vld [vmem:[%s3 + $0x44] sm:$0xf]
        %v3543 = vld [vmem:[%s3 + $0x48] sm:$0xf]
        %v3544 = vld [vmem:[%s3 + $0x4c] sm:$0xf]
        %v3545 = vld [vmem:[%s3 + $0x50] sm:$0xf]
        %v3546 = vld [vmem:[%s3 + $0x54] sm:$0xf]
        %v3547 = vld [vmem:[%s3 + $0x58] sm:$0xf]
        %v3548 = vld [vmem:[%s3 + $0x5c] sm:$0xf]
        %v3549 = vld [vmem:[%s3 + $0x60] sm:$0xf]
        %v3550 = vld [vmem:[%s3 + $0x64] sm:$0xf]
        %v3551 = vld [vmem:[%s3 + $0x68] sm:$0xf]
        %v3552 = vld [vmem:[%s3 + $0x6c] sm:$0xf]
        %v3553 = vld [vmem:[%s3 + $0x70] sm:$0xf]
        %v3554 = vld [vmem:[%s3 + $0x74] sm:$0xf]
        %v3555 = vld [vmem:[%s3 + $0x78] sm:$0xf]
        %v3556 = vld [vmem:[%s3 + $0x7c] sm:$0xf]
        %v3557 = vld [vmem:[%s3 + $0x80] sm:$0xf]
        %v3558 = vld [vmem:[%s3 + $0x84] sm:$0xf]
        %v3559 = vld [vmem:[%s3 + $0x88] sm:$0xf]
        %v3560 = vld [vmem:[%s3 + $0x8c] sm:$0xf]
        %v3562 = vlaneseq
        %v3563 = vshrl.u32 %v3562, 7
        %v3564 = vsub.s32 0, %v3563
        %v3565 = vrot.slane %v269, %v3564
        %v3603 = vunpack.c.l.b16 %v3525
        %v3604 = vunpack.c.l.b16 %v3526
        %v3605 = vunpack.c.l.b16 %v3527
        %v3606 = vunpack.c.l.b16 %v3528
        %v3607 = vunpack.c.l.b16 %v3529
        %v3608 = vunpack.c.l.b16 %v3530
        %v3609 = vunpack.c.l.b16 %v3531
        %v3610 = vunpack.c.l.b16 %v3532
        %v3611 = vunpack.c.l.b16 %v3533
        %v3612 = vunpack.c.l.b16 %v3534
        %v3613 = vunpack.c.l.b16 %v3535
        %v3614 = vunpack.c.l.b16 %v3536
        %v3615 = vunpack.c.l.b16 %v3537
        %v3616 = vunpack.c.l.b16 %v3538
        %v3617 = vunpack.c.l.b16 %v3539
        %v3618 = vunpack.c.l.b16 %v3540
        %v3619 = vunpack.c.l.b16 %v3541
        %v3620 = vunpack.c.l.b16 %v3542
        %v3621 = vunpack.c.l.b16 %v3543
        %v3622 = vunpack.c.l.b16 %v3544
        %v3623 = vunpack.c.l.b16 %v3545
        %v3624 = vunpack.c.l.b16 %v3546
        %v3625 = vunpack.c.l.b16 %v3547
        %v3626 = vunpack.c.l.b16 %v3548
        %v3627 = vunpack.c.l.b16 %v3549
        %v3628 = vunpack.c.l.b16 %v3550
        %v3629 = vunpack.c.l.b16 %v3551
        %v3630 = vunpack.c.l.b16 %v3552
        %v3631 = vunpack.c.l.b16 %v3553
        %v3632 = vunpack.c.l.b16 %v3554
        %v3633 = vunpack.c.l.b16 %v3555
        %v3634 = vunpack.c.l.b16 %v3556
        %v3635 = vunpack.c.l.b16 %v3557
        %v3636 = vunpack.c.l.b16 %v3558
        %v3637 = vunpack.c.l.b16 %v3559
        %v3638 = vunpack.c.l.b16 %v3560
        %v3639 = vpack.c.b16 %v3604, %v3603
        %v3640 = vpack.c.b16 %v3606, %v3605
        %v3641 = vpack.c.b16 %v3608, %v3607
        %v3642 = vpack.c.b16 %v3610, %v3609
        %v3643 = vpack.c.b16 %v3612, %v3611
        %v3644 = vpack.c.b16 %v3614, %v3613
        %v3645 = vpack.c.b16 %v3616, %v3615
        %v3646 = vpack.c.b16 %v3618, %v3617
        %v3647 = vpack.c.b16 %v3620, %v3619
        %v3648 = vpack.c.b16 %v3622, %v3621
        %v3649 = vpack.c.b16 %v3624, %v3623
        %v3650 = vpack.c.b16 %v3626, %v3625
        %v3651 = vpack.c.b16 %v3628, %v3627
        %v3652 = vpack.c.b16 %v3630, %v3629
        %v3653 = vpack.c.b16 %v3632, %v3631
        %v3654 = vpack.c.b16 %v3634, %v3633
        %v3655 = vpack.c.b16 %v3636, %v3635
        %v3656 = vpack.c.b16 %v3638, %v3637
        %v3676 = vsel %vm3342, %v3337, 0
        %v3679 = vsel %vm3342, %v3145, 0
        %v3682 = vsel %vm3342, %v3147, 0
        %v3685 = vsel %vm3342, %v3149, 0
        %v3688 = vsel %vm3342, %v3151, 0
        %v3691 = vsel %vm3342, %v3153, 0
        %v3694 = vsel %vm3342, %v3155, 0
        %v3697 = vsel %vm3342, %v3157, 0
        %v3700 = vsel %vm3342, %v3159, 0
        %v3703 = vsel %vm3342, %v3237, 0
        %v3706 = vsel %vm3342, %v3339, 0
        %v3709 = vsel %vm3342, %v3341, 0
        %3711 = vmatprep.subr.bf16.mxu0 0
        %3712 = vmatpush1.bf16.msra.mxu0 %v3646
        %3713 = vmatprep.subr.bf16.mxu0 0
        %3714 = vmatpush1.bf16.msra.mxu0 %v3645
        %3715 = vmatprep.subr.bf16.mxu0 0
        %3716 = vmatpush1.bf16.msra.mxu0 %v3644
        %3717 = vmatprep.subr.bf16.mxu0 0
        %3718 = vmatpush1.bf16.msra.mxu0 %v3643
        %3719 = vmatprep.subr.bf16.mxu0 0
        %3720 = vmatpush1.bf16.msra.mxu0 %v3642
        %3721 = vmatprep.subr.bf16.mxu0 0
        %3722 = vmatpush1.bf16.msra.mxu0 %v3641
        %3723 = vmatprep.subr.bf16.mxu0 0
        %3724 = vmatpush1.bf16.msra.mxu0 %v3640
        %3725 = vmatprep.subr.bf16.mxu0 0
        %3726 = vmatpush1.bf16.msra.mxu0 %v3639
        %3727 = vmatprep.subr.bf16.mxu0 0
        %3728 = vmatpush2.bf16.msra.mxu0 %v3654
        %3729 = vmatprep.subr.bf16.mxu0 0
        %3730 = vmatpush2.bf16.msra.mxu0 %v3653
        %3731 = vmatprep.subr.bf16.mxu0 0
        %3732 = vmatpush2.bf16.msra.mxu0 %v3652
        %3733 = vmatprep.subr.bf16.mxu0 0
        %3734 = vmatpush2.bf16.msra.mxu0 %v3651
        %3735 = vmatprep.subr.bf16.mxu0 0
        %3736 = vmatpush2.bf16.msra.mxu0 %v3650
        %3737 = vmatprep.subr.bf16.mxu0 0
        %3738 = vmatpush2.bf16.msra.mxu0 %v3649
        %3739 = vmatprep.subr.bf16.mxu0 0
        %3740 = vmatpush2.bf16.msra.mxu0 %v3648
        %3741 = vmatprep.subr.bf16.mxu0 0
        %3742 = vmatpush2.bf16.msra.mxu0 %v3647
        %3743 = vmatprep.mubr.bf16.mxu0 %v3490
        %3744 = vmatmul.mubr.bf16.gmra.mxu0 %v3394
        %v3745 = vpop.f32.mrf.mxu0
        %v3746 = vadd.f32 %v3565, %v3745
        %v3747 = vpop.f32.mrf.mxu0
        %v3748 = vpop.f32.mrf.mxu0
        %v3749 = vadd.f32 %v3565, %v3748
        %v3750 = vpop.f32.mrf.mxu0
        %3751 = vmatprep.mubr.bf16.mxu0 %v3493
        %3752 = vmatmul.mubr.bf16.gmra.mxu0 %v3397
        %v3753 = vpop.f32.mrf.mxu0
        %v3754 = vadd.f32 %v3565, %v3753
        %v3755 = vpop.f32.mrf.mxu0
        %v3756 = vpop.f32.mrf.mxu0
        %v3757 = vadd.f32 %v3565, %v3756
        %v3758 = vpop.f32.mrf.mxu0
        %3759 = vmatprep.mubr.bf16.mxu0 %v3496
        %3760 = vmatmul.mubr.bf16.gmra.mxu0 %v3400
        %v3761 = vpop.f32.mrf.mxu0
        %v3762 = vadd.f32 %v3565, %v3761
        %v3763 = vpop.f32.mrf.mxu0
        %v3764 = vpop.f32.mrf.mxu0
        %v3765 = vadd.f32 %v3565, %v3764
        %v3766 = vpop.f32.mrf.mxu0
        %3767 = vmatprep.mubr.bf16.mxu0 %v3499
        %3768 = vmatmul.mubr.bf16.gmra.mxu0 %v3403
        %v3769 = vpop.f32.mrf.mxu0
        %v3770 = vadd.f32 %v3565, %v3769
        %v3771 = vpop.f32.mrf.mxu0
        %v3772 = vpop.f32.mrf.mxu0
        %v3773 = vadd.f32 %v3565, %v3772
        %v3774 = vpop.f32.mrf.mxu0
        %3775 = vmatprep.mubr.bf16.mxu0 %v3502
        %3776 = vmatmul.mubr.bf16.gmra.mxu0 %v3406
        %v3777 = vpop.f32.mrf.mxu0
        %v3778 = vadd.f32 %v3565, %v3777
        %v3779 = vpop.f32.mrf.mxu0
        %v3780 = vpop.f32.mrf.mxu0
        %v3781 = vadd.f32 %v3565, %v3780
        %v3782 = vpop.f32.mrf.mxu0
        %3783 = vmatprep.mubr.bf16.mxu0 %v3505
        %3784 = vmatmul.mubr.bf16.gmra.mxu0 %v3409
        %v3785 = vpop.f32.mrf.mxu0
        %v3786 = vadd.f32 %v3565, %v3785
        %v3787 = vpop.f32.mrf.mxu0
        %v3788 = vpop.f32.mrf.mxu0
        %v3789 = vadd.f32 %v3565, %v3788
        %v3790 = vpop.f32.mrf.mxu0
        %3791 = vmatprep.mubr.bf16.mxu0 %v3508
        %3792 = vmatmul.mubr.bf16.gmra.mxu0 %v3412
        %v3793 = vpop.f32.mrf.mxu0
        %v3794 = vadd.f32 %v3565, %v3793
        %v3795 = vpop.f32.mrf.mxu0
        %v3796 = vpop.f32.mrf.mxu0
        %v3797 = vadd.f32 %v3565, %v3796
        %v3798 = vpop.f32.mrf.mxu0
        %3799 = vmatprep.mubr.bf16.mxu0 %v3511
        %3800 = vmatmul.mubr.bf16.gmra.mxu0 %v3415
        %v3801 = vpop.f32.mrf.mxu0
        %v3802 = vadd.f32 %v3565, %v3801
        %v3803 = vpop.f32.mrf.mxu0
        %v3804 = vpop.f32.mrf.mxu0
        %v3805 = vadd.f32 %v3565, %v3804
        %v3806 = vpop.f32.mrf.mxu0
        %3807 = vmatprep.mubr.bf16.mxu0 %v3514
        %3808 = vmatmul.mubr.bf16.gmra.mxu0 %v3418
        %v3809 = vpop.f32.mrf.mxu0
        %v3810 = vadd.f32 %v3565, %v3809
        %v3811 = vpop.f32.mrf.mxu0
        %v3812 = vpop.f32.mrf.mxu0
        %v3813 = vadd.f32 %v3565, %v3812
        %v3814 = vpop.f32.mrf.mxu0
        %3815 = vmatprep.mubr.bf16.mxu0 %v3517
        %3816 = vmatmul.mubr.bf16.gmra.mxu0 %v3421
        %v3817 = vpop.f32.mrf.mxu0
        %v3818 = vadd.f32 %v3565, %v3817
        %v3819 = vpop.f32.mrf.mxu0
        %v3820 = vpop.f32.mrf.mxu0
        %v3821 = vadd.f32 %v3565, %v3820
        %v3822 = vpop.f32.mrf.mxu0
        %3823 = vmatprep.mubr.bf16.mxu0 %v3520
        %3824 = vmatmul.mubr.bf16.gmra.mxu0 %v3424
        %v3825 = vpop.f32.mrf.mxu0
        %v3826 = vadd.f32 %v3565, %v3825
        %v3827 = vpop.f32.mrf.mxu0
        %v3828 = vpop.f32.mrf.mxu0
        %v3829 = vadd.f32 %v3565, %v3828
        %v3830 = vpop.f32.mrf.mxu0
        %3831 = vmatprep.mubr.bf16.mxu0 %v3523
        %3832 = vmatmul.mubr.bf16.gmra.mxu0 %v3427
        %v3833 = vpop.f32.mrf.mxu0
        %v3834 = vadd.f32 %v3565, %v3833
        %v3835 = vpop.f32.mrf.mxu0
        %v3836 = vpop.f32.mrf.mxu0
        %v3837 = vadd.f32 %v3565, %v3836
        %v3838 = vpop.f32.mrf.mxu0
        %3839 = vdwg.mxu0
        %3840 = vmatprep.subr.bf16.mxu0 0
        %3841 = vmatpush1.bf16.msra.mxu0 0
        %3842 = vmatprep.subr.bf16.mxu0 0
        %3843 = vmatpush1.bf16.msra.mxu0 0
        %3844 = vmatprep.subr.bf16.mxu0 0
        %3845 = vmatpush1.bf16.msra.mxu0 0
        %3846 = vmatprep.subr.bf16.mxu0 0
        %3847 = vmatpush1.bf16.msra.mxu0 0
        %3848 = vmatprep.subr.bf16.mxu0 0
        %3849 = vmatpush1.bf16.msra.mxu0 0
        %3850 = vmatprep.subr.bf16.mxu0 0
        %3851 = vmatpush1.bf16.msra.mxu0 0
        %3852 = vmatprep.subr.bf16.mxu0 0
        %3853 = vmatpush1.bf16.msra.mxu0 %v3656
        %3854 = vmatprep.subr.bf16.mxu0 0
        %3855 = vmatpush1.bf16.msra.mxu0 %v3655
        %3856 = vmatprep.subr.bf16.mxu0 0
        %3857 = vmatpush2.bf16.msra.mxu0 0
        %3858 = vmatprep.subr.bf16.mxu0 0
        %3859 = vmatpush2.bf16.msra.mxu0 0
        %3860 = vmatprep.subr.bf16.mxu0 0
        %3861 = vmatpush2.bf16.msra.mxu0 0
        %3862 = vmatprep.subr.bf16.mxu0 0
        %3863 = vmatpush2.bf16.msra.mxu0 0
        %3864 = vmatprep.subr.bf16.mxu0 0
        %3865 = vmatpush2.bf16.msra.mxu0 0
        %3866 = vmatprep.subr.bf16.mxu0 0
        %3867 = vmatpush2.bf16.msra.mxu0 0
        %3868 = vmatprep.subr.bf16.mxu0 0
        %3869 = vmatpush2.bf16.msra.mxu0 0
        %3870 = vmatprep.subr.bf16.mxu0 0
        %3871 = vmatpush2.bf16.msra.mxu0 0
        %3872 = vmatprep.mubr.bf16.mxu0 0
        %3873 = vmatmul.mubr.bf16.gmra.mxu0 %v3676
        %v3874 = vpop.f32.mrf.mxu0
        %v3875 = vadd.f32 %v3746, %v3874
        %v3876 = vpop.f32.mrf.mxu0
        %v3877 = vpop.f32.mrf.mxu0
        %v3878 = vadd.f32 %v3749, %v3877
        %v3879 = vpop.f32.mrf.mxu0
        %3880 = vmatprep.mubr.bf16.mxu0 0
        %3881 = vmatmul.mubr.bf16.gmra.mxu0 %v3679
        %v3882 = vpop.f32.mrf.mxu0
        %v3883 = vadd.f32 %v3754, %v3882
        %v3884 = vpop.f32.mrf.mxu0
        %v3885 = vpop.f32.mrf.mxu0
        %v3886 = vadd.f32 %v3757, %v3885
        %v3887 = vpop.f32.mrf.mxu0
        %3888 = vmatprep.mubr.bf16.mxu0 0
        %3889 = vmatmul.mubr.bf16.gmra.mxu0 %v3682
        %v3890 = vpop.f32.mrf.mxu0
        %v3891 = vadd.f32 %v3762, %v3890
        %v3892 = vpop.f32.mrf.mxu0
        %v3893 = vpop.f32.mrf.mxu0
        %v3894 = vadd.f32 %v3765, %v3893
        %v3895 = vpop.f32.mrf.mxu0
        %3896 = vmatprep.mubr.bf16.mxu0 0
        %3897 = vmatmul.mubr.bf16.gmra.mxu0 %v3685
        %v3898 = vpop.f32.mrf.mxu0
        %v3899 = vadd.f32 %v3770, %v3898
        %v3900 = vpop.f32.mrf.mxu0
        %v3901 = vpop.f32.mrf.mxu0
        %v3902 = vadd.f32 %v3773, %v3901
        %v3903 = vpop.f32.mrf.mxu0
        %3904 = vmatprep.mubr.bf16.mxu0 0
        %3905 = vmatmul.mubr.bf16.gmra.mxu0 %v3688
        %v3906 = vpop.f32.mrf.mxu0
        %v3907 = vadd.f32 %v3778, %v3906
        %v3908 = vpop.f32.mrf.mxu0
        %v3909 = vpop.f32.mrf.mxu0
        %v3910 = vadd.f32 %v3781, %v3909
        %v3911 = vpop.f32.mrf.mxu0
        %3912 = vmatprep.mubr.bf16.mxu0 0
        %3913 = vmatmul.mubr.bf16.gmra.mxu0 %v3691
        %v3914 = vpop.f32.mrf.mxu0
        %v3915 = vadd.f32 %v3786, %v3914
        %v3916 = vpop.f32.mrf.mxu0
        %v3917 = vpop.f32.mrf.mxu0
        %v3918 = vadd.f32 %v3789, %v3917
        %v3919 = vpop.f32.mrf.mxu0
        %3920 = vmatprep.mubr.bf16.mxu0 0
        %3921 = vmatmul.mubr.bf16.gmra.mxu0 %v3694
        %v3922 = vpop.f32.mrf.mxu0
        %v3923 = vadd.f32 %v3794, %v3922
        %v3924 = vpop.f32.mrf.mxu0
        %v3925 = vpop.f32.mrf.mxu0
        %v3926 = vadd.f32 %v3797, %v3925
        %v3927 = vpop.f32.mrf.mxu0
        %3928 = vmatprep.mubr.bf16.mxu0 0
        %3929 = vmatmul.mubr.bf16.gmra.mxu0 %v3697
        %v3930 = vpop.f32.mrf.mxu0
        %v3931 = vadd.f32 %v3802, %v3930
        %v3932 = vpop.f32.mrf.mxu0
        %v3933 = vpop.f32.mrf.mxu0
        %v3934 = vadd.f32 %v3805, %v3933
        %v3935 = vpop.f32.mrf.mxu0
        %3936 = vmatprep.mubr.bf16.mxu0 0
        %3937 = vmatmul.mubr.bf16.gmra.mxu0 %v3700
        %v3938 = vpop.f32.mrf.mxu0
        %v3939 = vadd.f32 %v3810, %v3938
        %v3940 = vpop.f32.mrf.mxu0
        %v3941 = vpop.f32.mrf.mxu0
        %v3942 = vadd.f32 %v3813, %v3941
        %v3943 = vpop.f32.mrf.mxu0
        %3944 = vmatprep.mubr.bf16.mxu0 0
        %3945 = vmatmul.mubr.bf16.gmra.mxu0 %v3703
        %v3946 = vpop.f32.mrf.mxu0
        %v3947 = vadd.f32 %v3818, %v3946
        %v3948 = vpop.f32.mrf.mxu0
        %v3949 = vpop.f32.mrf.mxu0
        %v3950 = vadd.f32 %v3821, %v3949
        %v3951 = vpop.f32.mrf.mxu0
        %3952 = vmatprep.mubr.bf16.mxu0 0
        %3953 = vmatmul.mubr.bf16.gmra.mxu0 %v3706
        %v3954 = vpop.f32.mrf.mxu0
        %v3955 = vadd.f32 %v3826, %v3954
        %v3956 = vpop.f32.mrf.mxu0
        %v3957 = vpop.f32.mrf.mxu0
        %v3958 = vadd.f32 %v3829, %v3957
        %v3959 = vpop.f32.mrf.mxu0
        %3960 = vmatprep.mubr.bf16.mxu0 0
        %3961 = vmatmul.mubr.bf16.gmra.mxu0 %v3709
        %v3962 = vpop.f32.mrf.mxu0
        %v3963 = vadd.f32 %v3834, %v3962
        %v3964 = vpop.f32.mrf.mxu0
        %v3965 = vpop.f32.mrf.mxu0
        %v3966 = vadd.f32 %v3837, %v3965
        %v3967 = vpop.f32.mrf.mxu0
        %3968 = vdwg.mxu0
        %v3969 = vmax.f32 %v3875, 0.0
        %v3970 = vmax.f32 %v3878, 0.0
        %v3971 = vmax.f32 %v3883, 0.0
        %v3972 = vmax.f32 %v3886, 0.0
        %v3973 = vmax.f32 %v3891, 0.0
        %v3974 = vmax.f32 %v3894, 0.0
        %v3975 = vmax.f32 %v3899, 0.0
        %v3976 = vmax.f32 %v3902, 0.0
        %v3977 = vmax.f32 %v3907, 0.0
        %v3978 = vmax.f32 %v3910, 0.0
        %v3979 = vmax.f32 %v3915, 0.0
        %v3980 = vmax.f32 %v3918, 0.0
        %v3981 = vmax.f32 %v3923, 0.0
        %v3982 = vmax.f32 %v3926, 0.0
        %v3983 = vmax.f32 %v3931, 0.0
        %v3984 = vmax.f32 %v3934, 0.0
        %v3985 = vmax.f32 %v3939, 0.0
        %v3986 = vmax.f32 %v3942, 0.0
        %v3987 = vmax.f32 %v3947, 0.0
        %v3988 = vmax.f32 %v3950, 0.0
        %v3989 = vmax.f32 %v3955, 0.0
        %v3990 = vmax.f32 %v3958, 0.0
        %v3991 = vmax.f32 %v3963, 0.0
        %v3992 = vmax.f32 %v3966, 0.0
        %v3993 = vmax.f32 %v3969, %v3971
        %v3994 = vmax.f32 %v3970, %v3972
        %v3995 = vmax.f32 %v3973, %v3975
        %v3996 = vmax.f32 %v3974, %v3976
        %v3997 = vmax.f32 %v3977, %v3979
        %v3998 = vmax.f32 %v3978, %v3980
        %v3999 = vmax.f32 %v3981, %v3983
        %v4000 = vmax.f32 %v3982, %v3984
        %v4001 = vmax.f32 %v3985, %v3987
        %v4002 = vmax.f32 %v3986, %v3988
        %v4003 = vmax.f32 %v3989, %v3991
        %v4004 = vmax.f32 %v3990, %v3992
        %vm4017 = vcmask 1046528
        %v4018 = vrot.slane %v3993, 1
        %v4019 = vrot.slane %v3994, 1
        %v4020 = vsel %vm4017, %v4018, %v4019
        %v4021 = vrot.slane %v3995, 1
        %v4022 = vrot.slane %v3996, 1
        %v4023 = vsel %vm4017, %v4021, %v4022
        %v4024 = vrot.slane %v3997, 1
        %v4025 = vrot.slane %v3998, 1
        %v4026 = vsel %vm4017, %v4024, %v4025
        %v4027 = vrot.slane %v3999, 1
        %v4028 = vrot.slane %v4000, 1
        %v4029 = vsel %vm4017, %v4027, %v4028
        %v4030 = vrot.slane %v4001, 1
        %v4031 = vrot.slane %v4002, 1
        %v4032 = vsel %vm4017, %v4030, %v4031
        %v4033 = vrot.slane %v4003, 1
        %v4034 = vrot.slane %v4004, 1
        %v4035 = vsel %vm4017, %v4033, %v4034
        %v4048 = vmax.f32 %v3993, %v4020
        %v4049 = vmax.f32 %v3994, %v4019
        %v4050 = vmax.f32 %v3995, %v4023
        %v4051 = vmax.f32 %v3996, %v4022
        %v4052 = vmax.f32 %v3997, %v4026
        %v4053 = vmax.f32 %v3998, %v4025
        %v4054 = vmax.f32 %v3999, %v4029
        %v4055 = vmax.f32 %v4000, %v4028
        %v4056 = vmax.f32 %v4001, %v4032
        %v4057 = vmax.f32 %v4002, %v4031
        %v4058 = vmax.f32 %v4003, %v4035
        %v4059 = vmax.f32 %v4004, %v4034
        %v4066 = vrot.slane %v4050, 7
        %vm4067 = vcmask 1041409
        %v4068 = vsel %vm4067, %v4066, %v4048
        %v4069 = vrot.slane %v4052, 6
        %vm4070 = vcmask 1042434
        %v4071 = vsel %vm4070, %v4069, %v4068
        %v4072 = vrot.slane %v4054, 5
        %vm4073 = vcmask 1043459
        %v4074 = vsel %vm4073, %v4072, %v4071
        %v4075 = vrot.slane %v4056, 4
        %vm4076 = vcmask 1044484
        %v4077 = vsel %vm4076, %v4075, %v4074
        %v4078 = vrot.slane %v4058, 3
        %vm4079 = vcmask 1045509
        %v4080 = vsel %vm4079, %v4078, %v4077
        %v4082 = vrot.slane %v4048, 2
        %v4083 = vrot.slane %v4050, 1
        %v4084 = vsel %vm4067, %v4083, %v4082
        %v4085 = vsel %vm4070, %v4052, %v4084
        %v4086 = vrot.slane %v4054, 7
        %v4087 = vsel %vm4073, %v4086, %v4085
        %v4088 = vrot.slane %v4056, 6
        %v4089 = vsel %vm4076, %v4088, %v4087
        %v4090 = vrot.slane %v4058, 5
        %v4091 = vsel %vm4079, %v4090, %v4089
        %4092 = vrot.lane.b32.xlu0 %v4091, 64
        %v4093 = vpop.permute.xlu0 %4092
        %v4095 = vrot.slane %v4048, 4
        %v4096 = vrot.slane %v4050, 3
        %v4097 = vsel %vm4067, %v4096, %v4095
        %v4098 = vrot.slane %v4052, 2
        %v4099 = vsel %vm4070, %v4098, %v4097
        %v4100 = vrot.slane %v4054, 1
        %v4101 = vsel %vm4073, %v4100, %v4099
        %v4102 = vsel %vm4076, %v4056, %v4101
        %v4103 = vrot.slane %v4058, 7
        %v4104 = vsel %vm4079, %v4103, %v4102
        %v4106 = vrot.slane %v4048, 6
        %v4107 = vrot.slane %v4050, 5
        %v4108 = vsel %vm4067, %v4107, %v4106
        %v4109 = vrot.slane %v4052, 4
        %v4110 = vsel %vm4070, %v4109, %v4108
        %v4111 = vrot.slane %v4054, 3
        %v4112 = vsel %vm4073, %v4111, %v4110
        %v4113 = vrot.slane %v4056, 2
        %v4114 = vsel %vm4076, %v4113, %v4112
        %v4115 = vrot.slane %v4058, 1
        %v4116 = vsel %vm4079, %v4115, %v4114
        %4117 = vrot.lane.b32.xlu0 %v4116, 64
        %v4118 = vpop.permute.xlu0 %4117
        %v4126 = vrot.slane %v4051, 7
        %v4127 = vsel %vm4067, %v4126, %v4049
        %v4128 = vrot.slane %v4053, 6
        %v4129 = vsel %vm4070, %v4128, %v4127
        %v4130 = vrot.slane %v4055, 5
        %v4131 = vsel %vm4073, %v4130, %v4129
        %v4132 = vrot.slane %v4057, 4
        %v4133 = vsel %vm4076, %v4132, %v4131
        %v4134 = vrot.slane %v4059, 3
        %v4135 = vsel %vm4079, %v4134, %v4133
        %v4137 = vrot.slane %v4049, 2
        %v4138 = vrot.slane %v4051, 1
        %v4139 = vsel %vm4067, %v4138, %v4137
        %v4140 = vsel %vm4070, %v4053, %v4139
        %v4141 = vrot.slane %v4055, 7
        %v4142 = vsel %vm4073, %v4141, %v4140
        %v4143 = vrot.slane %v4057, 6
        %v4144 = vsel %vm4076, %v4143, %v4142
        %v4145 = vrot.slane %v4059, 5
        %v4146 = vsel %vm4079, %v4145, %v4144
        %4147 = vrot.lane.b32.xlu0 %v4146, 64
        %v4148 = vpop.permute.xlu0 %4147
        %v4150 = vsel %vm3367, %v4080, %v4093
        %v4151 = vsel %vm3367, %v4104, %v4118
        %v4152 = vsel %vm3367, %v4135, %v4148
        %v4153 = vpack.c.bf16 %v4150, %v4150
        %v4154 = vpack.c.bf16 %v4151, %v4151
        %v4155 = vpack.c.bf16 %v4152, %v4152
        %v4159 = vunpack.c.l.b16 %v4153
        %v4160 = vunpack.c.l.b16 %v4154
        %v4161 = vunpack.c.l.b16 %v4155
        %v4162 = vpack.c.b16 %v4160, %v4159
        %v4163 = vpack.c.b16 %v4161, %v4161
        %4166 = vst [vmem:[%s264] sm:$0x77] %v4162
        %4167 = vst [vmem:[%s264 + $0x8] sm:$0x7] %v4163
        %p4168 = scmp.lt.s32.totalorder %s18, 1
        %s4169 = scalar_select %p4168, %s18, 1
        %s4170 = smul.addr %s4169, 3
        %s4171 = smul.addr %s4170, 4
        %s4172 = scalar_lea.vmem %s5, %s4171
        // Predicated region
        $region53: #{net_forward.2} parent=39 // pred_check
          %p4173 = pneg %p146
        $region54: #{net_forward.2} parent=39 // pred_check_branch
          %4175 = sbr.rel (%p4173) target = $region56
        $region55: #{net_forward.2} parent=39 // pred_region
          _
        $region56: #{net_forward.2} parent=39 // pred_fallthru
          _
      $region40: #{net_forward.2} parent=5 // pred_fallthru
        _
      %p4176 = scmp.le.s32.totalorder 2, %s13
      // Predicated region
      $region57: #{net_forward.2} parent=5 // pred_check
        %p4177 = pneg %p4176
      $region58: #{net_forward.2} parent=5 // pred_check_branch
        %4179 = sbr.rel (%p4177) target = $region60
      $region59: #{net_forward.2} parent=5 // pred_region
        %s4180 = ssub.s32 %s13, 2
        // Predicated region
        $region61: #{net_forward.2} parent=59 // pred_check
          %p4181 = pneg %p152
        $region62: #{net_forward.2} parent=59 // pred_check_branch
          %4183 = sbr.rel (%p4181) target = $region64
        $region63: #{net_forward.2} parent=59 // pred_region
          %p4184 = scmp.lt.s32.totalorder %s19, 1
          %s4185 = scalar_select %p4184, %s19, 1
          %s4186 = smul.addr %s4185, 3
          %s4187 = smul.addr %s4186, 4
          %s4188 = scalar_lea.vmem %s5, %s4187
        $region64: #{net_forward.2} parent=59 // pred_fallthru
          _
      $region60: #{net_forward.2} parent=5 // pred_fallthru
        _
    $region6: #{net_forward.2} parent=1 // loop_footer
      %s17 = sadd.s32 1, %s13
    $region7: #{net_forward.2} parent=1 // loop_footer_branch
      %12 = sbr.rel target = $region3
    $region8: #{net_forward.2} parent=1 // loop_exit
      _
    %4189 = vsyncpa [#allocation4], 1
    %s4190 = scalar_lea.sflag [#allocation4], 1
    %4191 = vsyncpa %s4190, 1
    %4192 = vsyncpa [#allocation6], 1

// kernel: net_forward.3
$region0: #{net_forward.3}
  #allocation0 [shape = 'u32[]', space=smem, size = 0x4, offset = 0x4, fixed_abs, tag = 'smem constant byte address 0x4 - core index']
  #allocation1 [shape = 'u32[144,128]{1,0:T(1,128)}', space=vmem, size = 0x12000, scoped, tag = 'internal scratch']
  %s0 = inlined_call_operand.vmem [shape: bf16[2,2304], index: 0, kind: input, shape index: {}]
  %s1 = inlined_call_operand.hbm [shape: bf16[2304,512], index: 1, kind: input, shape index: {}]
  %s2 = inlined_call_operand.hbm [shape: f32[1,512], index: 2, kind: input, shape index: {}]
  %s3 = inlined_call_operand.hbm [shape: bf16[512,128], index: 3, kind: input, shape index: {}]
  %s4 = inlined_call_operand.hbm [shape: f32[1,128], index: 4, kind: input, shape index: {}]
  %s5 = inlined_call_operand.hbm [shape: f32[2,128], index: 5, kind: output, shape index: {}]
  %s6 = sld [smem:[#allocation0]]
  $region46: #{net_forward.3} parent=0
    _
  %s8 = ssub.s32 1, %s6
  %s9 = scalar_select 0, %s8, %s6
  $region1: #{net_forward.3} parent=0
    #allocation2 [shape = 'u8[2359296]{0}', space=vmem, size = 0x240000, scoped, tag = 'input window, operand 1, single buffered']
    #allocation3 [shape = 's32[1]{0}', space=sflag, size = 0x4, scoped, tag = 'scoped memory for net_forward.3']
    #allocation4 [shape = 's32[1]{0}', space=sflag, size = 0x4, scoped, tag = 'scoped memory for net_forward.3']
    #allocation5 [shape = 'u8[2048]{0}', space=vmem, size = 0x800, scoped, tag = 'input window, operand 2, single buffered']
    #allocation6 [shape = 's32[1]{0}', space=sflag, size = 0x4, scoped, tag = 'scoped memory for net_forward.3']
    #allocation7 [shape = 'u8[131072]{0}', space=vmem, size = 0x20000, scoped, tag = 'input window, operand 3, single buffered']
    #allocation8 [shape = 'u8[512]{0}', space=vmem, size = 0x400, scoped, tag = 'input window, operand 4, single buffered']
    #allocation9 [shape = 's32[1]{0}', space=sflag, size = 0x4, scoped, tag = 'scoped memory for net_forward.3']
    #allocation10 [shape = 'u8[1024]{0}', space=vmem, size = 0x400, scoped, tag = 'output window, operand 0, single buffered']
    %10 = vsyncpa [#allocation3], 0
    %11 = vsyncpa [#allocation6], 0
    %12 = vsyncpa [#allocation9], 0
    %13 = vsyncpa [#allocation4], 0
    // Predicated region
    $region2: #{net_forward.3} parent=1 // pred_check
      _
    $region3: #{net_forward.3} parent=1 // pred_check_branch
      %15 = sbr.rel (0) target = $region5
    $region4: #{net_forward.3} parent=1 // pred_region
      _
    $region5: #{net_forward.3} parent=1 // pred_fallthru
      _
    // Predicated region
    $region6: #{net_forward.3} parent=1 // pred_check
      _
    $region7: #{net_forward.3} parent=1 // pred_check_branch
      %17 = sbr.rel (0) target = $region9
    $region8: #{net_forward.3} parent=1 // pred_region
      %s19 = ssub.s32 73728, 73728
      %20 = vsyncadd [#allocation3], %s19
      %s21 = sshll.u32 [#allocation2], 4
      %s22 = int_to_ptr.vmem [resolvable:$true] %s21
      %27 = dma.hbm_to_vmem [thread:$0]  %s1, 73728, %s22, [#allocation3], 256, 256, 16
    $region9: #{net_forward.3} parent=1 // pred_fallthru
      _
    // Predicated region
    $region10: #{net_forward.3} parent=1 // pred_check
      _
    $region11: #{net_forward.3} parent=1 // pred_check_branch
      %29 = sbr.rel (0) target = $region13
    $region12: #{net_forward.3} parent=1 // pred_region
      %s31 = ssub.s32 64, 64
      %32 = vsyncadd [#allocation6], %s31
      %s34 = sshll.u32 [#allocation5], 4
      %s35 = int_to_ptr.vmem [resolvable:$true] %s34
      %37 = dma.hbm_to_vmem [thread:$0]  %s2, 64, %s35, [#allocation6]
    $region13: #{net_forward.3} parent=1 // pred_fallthru
      _
    // Predicated region
    $region14: #{net_forward.3} parent=1 // pred_check
      _
    $region15: #{net_forward.3} parent=1 // pred_check_branch
      %39 = sbr.rel (0) target = $region17
    $region16: #{net_forward.3} parent=1 // pred_region
      %s41 = ssub.s32 4096, 4096
      %42 = vsyncadd [#allocation6], %s41
      %s43 = sshll.u32 [#allocation7], 4
      %s44 = int_to_ptr.vmem [resolvable:$true] %s43
      %49 = dma.hbm_to_vmem [thread:$0]  %s3, 4096, %s44, [#allocation6], 64, 64, 4
    $region17: #{net_forward.3} parent=1 // pred_fallthru
      _
    // Predicated region
    $region18: #{net_forward.3} parent=1 // pred_check
      _
    $region19: #{net_forward.3} parent=1 // pred_check_branch
      %51 = sbr.rel (0) target = $region21
    $region20: #{net_forward.3} parent=1 // pred_region
      %s53 = ssub.s32 16, 16
      %54 = vsyncadd [#allocation9], %s53
      %s56 = sshll.u32 [#allocation8], 4
      %s57 = int_to_ptr.vmem [resolvable:$true] %s56
      %59 = dma.hbm_to_vmem [thread:$0]  %s4, 16, %s57, [#allocation9]
    $region21: #{net_forward.3} parent=1 // pred_fallthru
      _
    // Predicated region
    $region22: #{net_forward.3} parent=1 // pred_check
      _
    $region23: #{net_forward.3} parent=1 // pred_check_branch
      %61 = sbr.rel (0) target = $region25
    $region24: #{net_forward.3} parent=1 // pred_region
      %62 = dma.done [#allocation3], 73728
    $region25: #{net_forward.3} parent=1 // pred_fallthru
      _
    // Predicated region
    $region26: #{net_forward.3} parent=1 // pred_check
      _
    $region27: #{net_forward.3} parent=1 // pred_check_branch
      %64 = sbr.rel (0) target = $region29
    $region28: #{net_forward.3} parent=1 // pred_region
      %65 = dma.done [#allocation6], 64
    $region29: #{net_forward.3} parent=1 // pred_fallthru
      _
    // Predicated region
    $region30: #{net_forward.3} parent=1 // pred_check
      _
    $region31: #{net_forward.3} parent=1 // pred_check_branch
      %67 = sbr.rel (0) target = $region33
    $region32: #{net_forward.3} parent=1 // pred_region
      %68 = dma.done [#allocation6], 4096
    $region33: #{net_forward.3} parent=1 // pred_fallthru
      _
    // Predicated region
    $region34: #{net_forward.3} parent=1 // pred_check
      _
    $region35: #{net_forward.3} parent=1 // pred_check_branch
      %70 = sbr.rel (0) target = $region37
    $region36: #{net_forward.3} parent=1 // pred_region
      %71 = dma.done [#allocation9], 16
    $region37: #{net_forward.3} parent=1 // pred_fallthru
      _
    %v73 = vld [vmem:[%s0] sm:$0xff]
    %v74 = vld [vmem:[%s0 + $0x8] sm:$0xff]
    %v75 = vld [vmem:[%s0 + $0x10] sm:$0x3]
    %v76 = vld [vmem:[#allocation2] sm:$0xff]
    %v77 = vld [vmem:[#allocation2 + $0x8] sm:$0xff]
    %v78 = vld [vmem:[#allocation2 + $0x10] sm:$0xff]
    %v79 = vld [vmem:[#allocation2 + $0x18] sm:$0xff]
    %v80 = vld [vmem:[#allocation2 + $0x20] sm:$0xff]
    %v81 = vld [vmem:[#allocation2 + $0x28] sm:$0xff]
    %v82 = vld [vmem:[#allocation2 + $0x30] sm:$0xff]
    %v83 = vld [vmem:[#allocation2 + $0x38] sm:$0xff]
    %v84 = vld [vmem:[#allocation2 + $0x40] sm:$0xff]
    %v85 = vld [vmem:[#allocation2 + $0x48] sm:$0xff]
    %v86 = vld [vmem:[#allocation2 + $0x50] sm:$0xff]
    %v87 = vld [vmem:[#allocation2 + $0x58] sm:$0xff]
    %v88 = vld [vmem:[#allocation2 + $0x60] sm:$0xff]
    %v89 = vld [vmem:[#allocation2 + $0x68] sm:$0xff]
    %v90 = vld [vmem:[#allocation2 + $0x70] sm:$0xff]
    %v91 = vld [vmem:[#allocation2 + $0x78] sm:$0xff]
    %v92 = vld [vmem:[#allocation2 + $0x80] sm:$0xff]
    %v93 = vld [vmem:[#allocation2 + $0x88] sm:$0xff]
    %v94 = vld [vmem:[#allocation2 + $0x90] sm:$0xff]
    %v95 = vld [vmem:[#allocation2 + $0x98] sm:$0xff]
    %v96 = vld [vmem:[#allocation2 + $0xa0] sm:$0xff]
    %v97 = vld [vmem:[#allocation2 + $0xa8] sm:$0xff]
    %v98 = vld [vmem:[#allocation2 + $0xb0] sm:$0xff]
    %v99 = vld [vmem:[#allocation2 + $0xb8] sm:$0xff]
    %v100 = vld [vmem:[#allocation2 + $0xc0] sm:$0xff]
    %v101 = vld [vmem:[#allocation2 + $0xc8] sm:$0xff]
    %v102 = vld [vmem:[#allocation2 + $0xd0] sm:$0xff]
    %v103 = vld [vmem:[#allocation2 + $0xd8] sm:$0xff]
    %v104 = vld [vmem:[#allocation2 + $0xe0] sm:$0xff]
    %v105 = vld [vmem:[#allocation2 + $0xe8] sm:$0xff]
    %v106 = vld [vmem:[#allocation2 + $0xf0] sm:$0xff]
    %v107 = vld [vmem:[#allocation2 + $0xf8] sm:$0xff]
    %v108 = vld [vmem:[#allocation2 + $0x100] sm:$0xff]
    %v109 = vld [vmem:[#allocation2 + $0x108] sm:$0xff]
    %v110 = vld [vmem:[#allocation2 + $0x110] sm:$0xff]
    %v111 = vld [vmem:[#allocation2 + $0x118] sm:$0xff]
    %v112 = vld [vmem:[#allocation2 + $0x120] sm:$0xff]
    %v113 = vld [vmem:[#allocation2 + $0x128] sm:$0xff]
    %v114 = vld [vmem:[#allocation2 + $0x130] sm:$0xff]
    %v115 = vld [vmem:[#allocation2 + $0x138] sm:$0xff]
    %v116 = vld [vmem:[#allocation2 + $0x140] sm:$0xff]
    %v117 = vld [vmem:[#allocation2 + $0x148] sm:$0xff]
    %v118 = vld [vmem:[#allocation2 + $0x150] sm:$0xff]
    %v119 = vld [vmem:[#allocation2 + $0x158] sm:$0xff]
    %v120 = vld [vmem:[#allocation2 + $0x160] sm:$0xff]
    %v121 = vld [vmem:[#allocation2 + $0x168] sm:$0xff]
    %v122 = vld [vmem:[#allocation2 + $0x170] sm:$0xff]
    %v123 = vld [vmem:[#allocation2 + $0x178] sm:$0xff]
    %v124 = vld [vmem:[#allocation2 + $0x180] sm:$0xff]
    %v125 = vld [vmem:[#allocation2 + $0x188] sm:$0xff]
    %v126 = vld [vmem:[#allocation2 + $0x190] sm:$0xff]
    %v127 = vld [vmem:[#allocation2 + $0x198] sm:$0xff]
    %v128 = vld [vmem:[#allocation2 + $0x1a0] sm:$0xff]
    %v129 = vld [vmem:[#allocation2 + $0x1a8] sm:$0xff]
    %v130 = vld [vmem:[#allocation2 + $0x1b0] sm:$0xff]
    %v131 = vld [vmem:[#allocation2 + $0x1b8] sm:$0xff]
    %v132 = vld [vmem:[#allocation2 + $0x1c0] sm:$0xff]
    %v133 = vld [vmem:[#allocation2 + $0x1c8] sm:$0xff]
    %v134 = vld [vmem:[#allocation2 + $0x1d0] sm:$0xff]
    %v135 = vld [vmem:[#allocation2 + $0x1d8] sm:$0xff]
    %v136 = vld [vmem:[#allocation2 + $0x1e0] sm:$0xff]
    %v137 = vld [vmem:[#allocation2 + $0x1e8] sm:$0xff]
    %v138 = vld [vmem:[#allocation2 + $0x1f0] sm:$0xff]
    %v139 = vld [vmem:[#allocation2 + $0x1f8] sm:$0xff]
    %v140 = vld [vmem:[#allocation2 + $0x200] sm:$0xff]
    %v141 = vld [vmem:[#allocation2 + $0x208] sm:$0xff]
    %v142 = vld [vmem:[#allocation2 + $0x210] sm:$0xff]
    %v143 = vld [vmem:[#allocation2 + $0x218] sm:$0xff]
    %v144 = vld [vmem:[#allocation2 + $0x220] sm:$0xff]
    %v145 = vld [vmem:[#allocation2 + $0x228] sm:$0xff]
    %v146 = vld [vmem:[#allocation2 + $0x230] sm:$0xff]
    %v147 = vld [vmem:[#allocation2 + $0x238] sm:$0xff]
    %v148 = vld [vmem:[#allocation2 + $0x240] sm:$0xff]
    %v149 = vld [vmem:[#allocation2 + $0x248] sm:$0xff]
    %v150 = vld [vmem:[#allocation2 + $0x250] sm:$0xff]
    %v151 = vld [vmem:[#allocation2 + $0x258] sm:$0xff]
    %v152 = vld [vmem:[#allocation2 + $0x260] sm:$0xff]
    %v153 = vld [vmem:[#allocation2 + $0x268] sm:$0xff]
    %v154 = vld [vmem:[#allocation2 + $0x270] sm:$0xff]
    %v155 = vld [vmem:[#allocation2 + $0x278] sm:$0xff]
    %v156 = vld [vmem:[#allocation2 + $0x280] sm:$0xff]
    %v157 = vld [vmem:[#allocation2 + $0x288] sm:$0xff]
    %v158 = vld [vmem:[#allocation2 + $0x290] sm:$0xff]
    %v159 = vld [vmem:[#allocation2 + $0x298] sm:$0xff]
    %v160 = vld [vmem:[#allocation2 + $0x2a0] sm:$0xff]
    %v161 = vld [vmem:[#allocation2 + $0x2a8] sm:$0xff]
    %v162 = vld [vmem:[#allocation2 + $0x2b0] sm:$0xff]
    %v163 = vld [vmem:[#allocation2 + $0x2b8] sm:$0xff]
    %v164 = vld [vmem:[#allocation2 + $0x2c0] sm:$0xff]
    %v165 = vld [vmem:[#allocation2 + $0x2c8] sm:$0xff]
    %v166 = vld [vmem:[#allocation2 + $0x2d0] sm:$0xff]
    %v167 = vld [vmem:[#allocation2 + $0x2d8] sm:$0xff]
    %v168 = vld [vmem:[#allocation2 + $0x2e0] sm:$0xff]
    %v169 = vld [vmem:[#allocation2 + $0x2e8] sm:$0xff]
    %v170 = vld [vmem:[#allocation2 + $0x2f0] sm:$0xff]
    %v171 = vld [vmem:[#allocation2 + $0x2f8] sm:$0xff]
    %v172 = vld [vmem:[#allocation2 + $0x300] sm:$0xff]
    %v173 = vld [vmem:[#allocation2 + $0x308] sm:$0xff]
    %v174 = vld [vmem:[#allocation2 + $0x310] sm:$0xff]
    %v175 = vld [vmem:[#allocation2 + $0x318] sm:$0xff]
    %v176 = vld [vmem:[#allocation2 + $0x320] sm:$0xff]
    %v177 = vld [vmem:[#allocation2 + $0x328] sm:$0xff]
    %v178 = vld [vmem:[#allocation2 + $0x330] sm:$0xff]
    %v179 = vld [vmem:[#allocation2 + $0x338] sm:$0xff]
    %v180 = vld [vmem:[#allocation2 + $0x340] sm:$0xff]
    %v181 = vld [vmem:[#allocation2 + $0x348] sm:$0xff]
    %v182 = vld [vmem:[#allocation2 + $0x350] sm:$0xff]
    %v183 = vld [vmem:[#allocation2 + $0x358] sm:$0xff]
    %v184 = vld [vmem:[#allocation2 + $0x360] sm:$0xff]
    %v185 = vld [vmem:[#allocation2 + $0x368] sm:$0xff]
    %v186 = vld [vmem:[#allocation2 + $0x370] sm:$0xff]
    %v187 = vld [vmem:[#allocation2 + $0x378] sm:$0xff]
    %v188 = vld [vmem:[#allocation2 + $0x380] sm:$0xff]
    %v189 = vld [vmem:[#allocation2 + $0x388] sm:$0xff]
    %v190 = vld [vmem:[#allocation2 + $0x390] sm:$0xff]
    %v191 = vld [vmem:[#allocation2 + $0x398] sm:$0xff]
    %v192 = vld [vmem:[#allocation2 + $0x3a0] sm:$0xff]
    %v193 = vld [vmem:[#allocation2 + $0x3a8] sm:$0xff]
    %v194 = vld [vmem:[#allocation2 + $0x3b0] sm:$0xff]
    %v195 = vld [vmem:[#allocation2 + $0x3b8] sm:$0xff]
    %v196 = vld [vmem:[#allocation2 + $0x3c0] sm:$0xff]
    %v197 = vld [vmem:[#allocation2 + $0x3c8] sm:$0xff]
    %v198 = vld [vmem:[#allocation2 + $0x3d0] sm:$0xff]
    %v199 = vld [vmem:[#allocation2 + $0x3d8] sm:$0xff]
    %v200 = vld [vmem:[#allocation2 + $0x3e0] sm:$0xff]
    %v201 = vld [vmem:[#allocation2 + $0x3e8] sm:$0xff]
    %v202 = vld [vmem:[#allocation2 + $0x3f0] sm:$0xff]
    %v203 = vld [vmem:[#allocation2 + $0x3f8] sm:$0xff]
    %v204 = vld [vmem:[#allocation2 + $0x400] sm:$0xff]
    %v205 = vld [vmem:[#allocation2 + $0x408] sm:$0xff]
    %v206 = vld [vmem:[#allocation2 + $0x410] sm:$0xff]
    %v207 = vld [vmem:[#allocation2 + $0x418] sm:$0xff]
    %v208 = vld [vmem:[#allocation2 + $0x420] sm:$0xff]
    %v209 = vld [vmem:[#allocation2 + $0x428] sm:$0xff]
    %v210 = vld [vmem:[#allocation2 + $0x430] sm:$0xff]
    %v211 = vld [vmem:[#allocation2 + $0x438] sm:$0xff]
    %v212 = vld [vmem:[#allocation2 + $0x440] sm:$0xff]
    %v213 = vld [vmem:[#allocation2 + $0x448] sm:$0xff]
    %v214 = vld [vmem:[#allocation2 + $0x450] sm:$0xff]
    %v215 = vld [vmem:[#allocation2 + $0x458] sm:$0xff]
    %v216 = vld [vmem:[#allocation2 + $0x460] sm:$0xff]
    %v217 = vld [vmem:[#allocation2 + $0x468] sm:$0xff]
    %v218 = vld [vmem:[#allocation2 + $0x470] sm:$0xff]
    %v219 = vld [vmem:[#allocation2 + $0x478] sm:$0xff]
    %v220 = vld [vmem:[#allocation2 + $0x480] sm:$0xff]
    %v221 = vld [vmem:[#allocation2 + $0x488] sm:$0xff]
    %v222 = vld [vmem:[#allocation2 + $0x490] sm:$0xff]
    %v223 = vld [vmem:[#allocation2 + $0x498] sm:$0xff]
    %v224 = vld [vmem:[#allocation2 + $0x4a0] sm:$0xff]
    %v225 = vld [vmem:[#allocation2 + $0x4a8] sm:$0xff]
    %v226 = vld [vmem:[#allocation2 + $0x4b0] sm:$0xff]
    %v227 = vld [vmem:[#allocation2 + $0x4b8] sm:$0xff]
    %v228 = vld [vmem:[#allocation2 + $0x4c0] sm:$0xff]
    %v229 = vld [vmem:[#allocation2 + $0x4c8] sm:$0xff]
    %v230 = vld [vmem:[#allocation2 + $0x4d0] sm:$0xff]
    %v231 = vld [vmem:[#allocation2 + $0x4d8] sm:$0xff]
    %v232 = vld [vmem:[#allocation2 + $0x4e0] sm:$0xff]
    %v233 = vld [vmem:[#allocation2 + $0x4e8] sm:$0xff]
    %v234 = vld [vmem:[#allocation2 + $0x4f0] sm:$0xff]
    %v235 = vld [vmem:[#allocation2 + $0x4f8] sm:$0xff]
    %v236 = vld [vmem:[#allocation2 + $0x500] sm:$0xff]
    %v237 = vld [vmem:[#allocation2 + $0x508] sm:$0xff]
    %v238 = vld [vmem:[#allocation2 + $0x510] sm:$0xff]
    %v239 = vld [vmem:[#allocation2 + $0x518] sm:$0xff]
    %v240 = vld [vmem:[#allocation2 + $0x520] sm:$0xff]
    %v241 = vld [vmem:[#allocation2 + $0x528] sm:$0xff]
    %v242 = vld [vmem:[#allocation2 + $0x530] sm:$0xff]
    %v243 = vld [vmem:[#allocation2 + $0x538] sm:$0xff]
    %v244 = vld [vmem:[#allocation2 + $0x540] sm:$0xff]
    %v245 = vld [vmem:[#allocation2 + $0x548] sm:$0xff]
    %v246 = vld [vmem:[#allocation2 + $0x550] sm:$0xff]
    %v247 = vld [vmem:[#allocation2 + $0x558] sm:$0xff]
    %v248 = vld [vmem:[#allocation2 + $0x560] sm:$0xff]
    %v249 = vld [vmem:[#allocation2 + $0x568] sm:$0xff]
    %v250 = vld [vmem:[#allocation2 + $0x570] sm:$0xff]
    %v251 = vld [vmem:[#allocation2 + $0x578] sm:$0xff]
    %v252 = vld [vmem:[#allocation2 + $0x580] sm:$0xff]
    %v253 = vld [vmem:[#allocation2 + $0x588] sm:$0xff]
    %v254 = vld [vmem:[#allocation2 + $0x590] sm:$0xff]
    %v255 = vld [vmem:[#allocation2 + $0x598] sm:$0xff]
    %v256 = vld [vmem:[#allocation2 + $0x5a0] sm:$0xff]
    %v257 = vld [vmem:[#allocation2 + $0x5a8] sm:$0xff]
    %v258 = vld [vmem:[#allocation2 + $0x5b0] sm:$0xff]
    %v259 = vld [vmem:[#allocation2 + $0x5b8] sm:$0xff]
    %v260 = vld [vmem:[#allocation2 + $0x5c0] sm:$0xff]
    %v261 = vld [vmem:[#allocation2 + $0x5c8] sm:$0xff]
    %v262 = vld [vmem:[#allocation2 + $0x5d0] sm:$0xff]
    %v263 = vld [vmem:[#allocation2 + $0x5d8] sm:$0xff]
    %v264 = vld [vmem:[#allocation2 + $0x5e0] sm:$0xff]
    %v265 = vld [vmem:[#allocation2 + $0x5e8] sm:$0xff]
    %v266 = vld [vmem:[#allocation2 + $0x5f0] sm:$0xff]
    %v267 = vld [vmem:[#allocation2 + $0x5f8] sm:$0xff]
    %v268 = vld [vmem:[#allocation2 + $0x600] sm:$0xff]
    %v269 = vld [vmem:[#allocation2 + $0x608] sm:$0xff]
    %v270 = vld [vmem:[#allocation2 + $0x610] sm:$0xff]
    %v271 = vld [vmem:[#allocation2 + $0x618] sm:$0xff]
    %v272 = vld [vmem:[#allocation2 + $0x620] sm:$0xff]
    %v273 = vld [vmem:[#allocation2 + $0x628] sm:$0xff]
    %v274 = vld [vmem:[#allocation2 + $0x630] sm:$0xff]
    %v275 = vld [vmem:[#allocation2 + $0x638] sm:$0xff]
    %v276 = vld [vmem:[#allocation2 + $0x640] sm:$0xff]
    %v277 = vld [vmem:[#allocation2 + $0x648] sm:$0xff]
    %v278 = vld [vmem:[#allocation2 + $0x650] sm:$0xff]
    %v279 = vld [vmem:[#allocation2 + $0x658] sm:$0xff]
    %v280 = vld [vmem:[#allocation2 + $0x660] sm:$0xff]
    %v281 = vld [vmem:[#allocation2 + $0x668] sm:$0xff]
    %v282 = vld [vmem:[#allocation2 + $0x670] sm:$0xff]
    %v283 = vld [vmem:[#allocation2 + $0x678] sm:$0xff]
    %v284 = vld [vmem:[#allocation2 + $0x680] sm:$0xff]
    %v285 = vld [vmem:[#allocation2 + $0x688] sm:$0xff]
    %v286 = vld [vmem:[#allocation2 + $0x690] sm:$0xff]
    %v287 = vld [vmem:[#allocation2 + $0x698] sm:$0xff]
    %v288 = vld [vmem:[#allocation2 + $0x6a0] sm:$0xff]
    %v289 = vld [vmem:[#allocation2 + $0x6a8] sm:$0xff]
    %v290 = vld [vmem:[#allocation2 + $0x6b0] sm:$0xff]
    %v291 = vld [vmem:[#allocation2 + $0x6b8] sm:$0xff]
    %v292 = vld [vmem:[#allocation2 + $0x6c0] sm:$0xff]
    %v293 = vld [vmem:[#allocation2 + $0x6c8] sm:$0xff]
    %v294 = vld [vmem:[#allocation2 + $0x6d0] sm:$0xff]
    %v295 = vld [vmem:[#allocation2 + $0x6d8] sm:$0xff]
    %v296 = vld [vmem:[#allocation2 + $0x6e0] sm:$0xff]
    %v297 = vld [vmem:[#allocation2 + $0x6e8] sm:$0xff]
    %v298 = vld [vmem:[#allocation2 + $0x6f0] sm:$0xff]
    %v299 = vld [vmem:[#allocation2 + $0x6f8] sm:$0xff]
    %v300 = vld [vmem:[#allocation2 + $0x700] sm:$0xff]
    %v301 = vld [vmem:[#allocation2 + $0x708] sm:$0xff]
    %v302 = vld [vmem:[#allocation2 + $0x710] sm:$0xff]
    %v303 = vld [vmem:[#allocation2 + $0x718] sm:$0xff]
    %v304 = vld [vmem:[#allocation2 + $0x720] sm:$0xff]
    %v305 = vld [vmem:[#allocation2 + $0x728] sm:$0xff]
    %v306 = vld [vmem:[#allocation2 + $0x730] sm:$0xff]
    %v307 = vld [vmem:[#allocation2 + $0x738] sm:$0xff]
    %v308 = vld [vmem:[#allocation2 + $0x740] sm:$0xff]
    %v309 = vld [vmem:[#allocation2 + $0x748] sm:$0xff]
    %v310 = vld [vmem:[#allocation2 + $0x750] sm:$0xff]
    %v311 = vld [vmem:[#allocation2 + $0x758] sm:$0xff]
    %v312 = vld [vmem:[#allocation2 + $0x760] sm:$0xff]
    %v313 = vld [vmem:[#allocation2 + $0x768] sm:$0xff]
    %v314 = vld [vmem:[#allocation2 + $0x770] sm:$0xff]
    %v315 = vld [vmem:[#allocation2 + $0x778] sm:$0xff]
    %v316 = vld [vmem:[#allocation2 + $0x780] sm:$0xff]
    %v317 = vld [vmem:[#allocation2 + $0x788] sm:$0xff]
    %v318 = vld [vmem:[#allocation2 + $0x790] sm:$0xff]
    %v319 = vld [vmem:[#allocation2 + $0x798] sm:$0xff]
    %v320 = vld [vmem:[#allocation2 + $0x7a0] sm:$0xff]
    %v321 = vld [vmem:[#allocation2 + $0x7a8] sm:$0xff]
    %v322 = vld [vmem:[#allocation2 + $0x7b0] sm:$0xff]
    %v323 = vld [vmem:[#allocation2 + $0x7b8] sm:$0xff]
    %v324 = vld [vmem:[#allocation2 + $0x7c0] sm:$0xff]
    %v325 = vld [vmem:[#allocation2 + $0x7c8] sm:$0xff]
    %v326 = vld [vmem:[#allocation2 + $0x7d0] sm:$0xff]
    %v327 = vld [vmem:[#allocation2 + $0x7d8] sm:$0xff]
    %v328 = vld [vmem:[#allocation2 + $0x7e0] sm:$0xff]
    %v329 = vld [vmem:[#allocation2 + $0x7e8] sm:$0xff]
    %v330 = vld [vmem:[#allocation2 + $0x7f0] sm:$0xff]
    %v331 = vld [vmem:[#allocation2 + $0x7f8] sm:$0xff]
    %v332 = vld [vmem:[#allocation2 + $0x800] sm:$0xff]
    %v333 = vld [vmem:[#allocation2 + $0x808] sm:$0xff]
    %v334 = vld [vmem:[#allocation2 + $0x810] sm:$0xff]
    %v335 = vld [vmem:[#allocation2 + $0x818] sm:$0xff]
    %v336 = vld [vmem:[#allocation2 + $0x820] sm:$0xff]
    %v337 = vld [vmem:[#allocation2 + $0x828] sm:$0xff]
    %v338 = vld [vmem:[#allocation2 + $0x830] sm:$0xff]
    %v339 = vld [vmem:[#allocation2 + $0x838] sm:$0xff]
    %v340 = vld [vmem:[#allocation2 + $0x840] sm:$0xff]
    %v341 = vld [vmem:[#allocation2 + $0x848] sm:$0xff]
    %v342 = vld [vmem:[#allocation2 + $0x850] sm:$0xff]
    %v343 = vld [vmem:[#allocation2 + $0x858] sm:$0xff]
    %v344 = vld [vmem:[#allocation2 + $0x860] sm:$0xff]
    %v345 = vld [vmem:[#allocation2 + $0x868] sm:$0xff]
    %v346 = vld [vmem:[#allocation2 + $0x870] sm:$0xff]
    %v347 = vld [vmem:[#allocation2 + $0x878] sm:$0xff]
    %v348 = vld [vmem:[#allocation2 + $0x880] sm:$0xff]
    %v349 = vld [vmem:[#allocation2 + $0x888] sm:$0xff]
    %v350 = vld [vmem:[#allocation2 + $0x890] sm:$0xff]
    %v351 = vld [vmem:[#allocation2 + $0x898] sm:$0xff]
    %v352 = vld [vmem:[#allocation2 + $0x8a0] sm:$0xff]
    %v353 = vld [vmem:[#allocation2 + $0x8a8] sm:$0xff]
    %v354 = vld [vmem:[#allocation2 + $0x8b0] sm:$0xff]
    %v355 = vld [vmem:[#allocation2 + $0x8b8] sm:$0xff]
    %v356 = vld [vmem:[#allocation2 + $0x8c0] sm:$0xff]
    %v357 = vld [vmem:[#allocation2 + $0x8c8] sm:$0xff]
    %v358 = vld [vmem:[#allocation2 + $0x8d0] sm:$0xff]
    %v359 = vld [vmem:[#allocation2 + $0x8d8] sm:$0xff]
    %v360 = vld [vmem:[#allocation2 + $0x8e0] sm:$0xff]
    %v361 = vld [vmem:[#allocation2 + $0x8e8] sm:$0xff]
    %v362 = vld [vmem:[#allocation2 + $0x8f0] sm:$0xff]
    %v363 = vld [vmem:[#allocation2 + $0x8f8] sm:$0xff]
    %v364 = vld [vmem:[#allocation2 + $0x900] sm:$0xff]
    %v365 = vld [vmem:[#allocation2 + $0x908] sm:$0xff]
    %v366 = vld [vmem:[#allocation2 + $0x910] sm:$0xff]
    %v367 = vld [vmem:[#allocation2 + $0x918] sm:$0xff]
    %v368 = vld [vmem:[#allocation2 + $0x920] sm:$0xff]
    %v369 = vld [vmem:[#allocation2 + $0x928] sm:$0xff]
    %v370 = vld [vmem:[#allocation2 + $0x930] sm:$0xff]
    %v371 = vld [vmem:[#allocation2 + $0x938] sm:$0xff]
    %v372 = vld [vmem:[#allocation2 + $0x940] sm:$0xff]
    %v373 = vld [vmem:[#allocation2 + $0x948] sm:$0xff]
    %v374 = vld [vmem:[#allocation2 + $0x950] sm:$0xff]
    %v375 = vld [vmem:[#allocation2 + $0x958] sm:$0xff]
    %v376 = vld [vmem:[#allocation2 + $0x960] sm:$0xff]
    %v377 = vld [vmem:[#allocation2 + $0x968] sm:$0xff]
    %v378 = vld [vmem:[#allocation2 + $0x970] sm:$0xff]
    %v379 = vld [vmem:[#allocation2 + $0x978] sm:$0xff]
    %v380 = vld [vmem:[#allocation2 + $0x980] sm:$0xff]
    %v381 = vld [vmem:[#allocation2 + $0x988] sm:$0xff]
    %v382 = vld [vmem:[#allocation2 + $0x990] sm:$0xff]
    %v383 = vld [vmem:[#allocation2 + $0x998] sm:$0xff]
    %v384 = vld [vmem:[#allocation2 + $0x9a0] sm:$0xff]
    %v385 = vld [vmem:[#allocation2 + $0x9a8] sm:$0xff]
    %v386 = vld [vmem:[#allocation2 + $0x9b0] sm:$0xff]
    %v387 = vld [vmem:[#allocation2 + $0x9b8] sm:$0xff]
    %v388 = vld [vmem:[#allocation2 + $0x9c0] sm:$0xff]
    %v389 = vld [vmem:[#allocation2 + $0x9c8] sm:$0xff]
    %v390 = vld [vmem:[#allocation2 + $0x9d0] sm:$0xff]
    %v391 = vld [vmem:[#allocation2 + $0x9d8] sm:$0xff]
    %v392 = vld [vmem:[#allocation2 + $0x9e0] sm:$0xff]
    %v393 = vld [vmem:[#allocation2 + $0x9e8] sm:$0xff]
    %v394 = vld [vmem:[#allocation2 + $0x9f0] sm:$0xff]
    %v395 = vld [vmem:[#allocation2 + $0x9f8] sm:$0xff]
    %v396 = vld [vmem:[#allocation2 + $0xa00] sm:$0xff]
    %v397 = vld [vmem:[#allocation2 + $0xa08] sm:$0xff]
    %v398 = vld [vmem:[#allocation2 + $0xa10] sm:$0xff]
    %v399 = vld [vmem:[#allocation2 + $0xa18] sm:$0xff]
    %v400 = vld [vmem:[#allocation2 + $0xa20] sm:$0xff]
    %v401 = vld [vmem:[#allocation2 + $0xa28] sm:$0xff]
    %v402 = vld [vmem:[#allocation2 + $0xa30] sm:$0xff]
    %v403 = vld [vmem:[#allocation2 + $0xa38] sm:$0xff]
    %v404 = vld [vmem:[#allocation2 + $0xa40] sm:$0xff]
    %v405 = vld [vmem:[#allocation2 + $0xa48] sm:$0xff]
    %v406 = vld [vmem:[#allocation2 + $0xa50] sm:$0xff]
    %v407 = vld [vmem:[#allocation2 + $0xa58] sm:$0xff]
    %v408 = vld [vmem:[#allocation2 + $0xa60] sm:$0xff]
    %v409 = vld [vmem:[#allocation2 + $0xa68] sm:$0xff]
    %v410 = vld [vmem:[#allocation2 + $0xa70] sm:$0xff]
    %v411 = vld [vmem:[#allocation2 + $0xa78] sm:$0xff]
    %v412 = vld [vmem:[#allocation2 + $0xa80] sm:$0xff]
    %v413 = vld [vmem:[#allocation2 + $0xa88] sm:$0xff]
    %v414 = vld [vmem:[#allocation2 + $0xa90] sm:$0xff]
    %v415 = vld [vmem:[#allocation2 + $0xa98] sm:$0xff]
    %v416 = vld [vmem:[#allocation2 + $0xaa0] sm:$0xff]
    %v417 = vld [vmem:[#allocation2 + $0xaa8] sm:$0xff]
    %v418 = vld [vmem:[#allocation2 + $0xab0] sm:$0xff]
    %v419 = vld [vmem:[#allocation2 + $0xab8] sm:$0xff]
    %v420 = vld [vmem:[#allocation2 + $0xac0] sm:$0xff]
    %v421 = vld [vmem:[#allocation2 + $0xac8] sm:$0xff]
    %v422 = vld [vmem:[#allocation2 + $0xad0] sm:$0xff]
    %v423 = vld [vmem:[#allocation2 + $0xad8] sm:$0xff]
    %v424 = vld [vmem:[#allocation2 + $0xae0] sm:$0xff]
    %v425 = vld [vmem:[#allocation2 + $0xae8] sm:$0xff]
    %v426 = vld [vmem:[#allocation2 + $0xaf0] sm:$0xff]
    %v427 = vld [vmem:[#allocation2 + $0xaf8] sm:$0xff]
    %v428 = vld [vmem:[#allocation2 + $0xb00] sm:$0xff]
    %v429 = vld [vmem:[#allocation2 + $0xb08] sm:$0xff]
    %v430 = vld [vmem:[#allocation2 + $0xb10] sm:$0xff]
    %v431 = vld [vmem:[#allocation2 + $0xb18] sm:$0xff]
    %v432 = vld [vmem:[#allocation2 + $0xb20] sm:$0xff]
    %v433 = vld [vmem:[#allocation2 + $0xb28] sm:$0xff]
    %v434 = vld [vmem:[#allocation2 + $0xb30] sm:$0xff]
    %v435 = vld [vmem:[#allocation2 + $0xb38] sm:$0xff]
    %v436 = vld [vmem:[#allocation2 + $0xb40] sm:$0xff]
    %v437 = vld [vmem:[#allocation2 + $0xb48] sm:$0xff]
    %v438 = vld [vmem:[#allocation2 + $0xb50] sm:$0xff]
    %v439 = vld [vmem:[#allocation2 + $0xb58] sm:$0xff]
    %v440 = vld [vmem:[#allocation2 + $0xb60] sm:$0xff]
    %v441 = vld [vmem:[#allocation2 + $0xb68] sm:$0xff]
    %v442 = vld [vmem:[#allocation2 + $0xb70] sm:$0xff]
    %v443 = vld [vmem:[#allocation2 + $0xb78] sm:$0xff]
    %v444 = vld [vmem:[#allocation2 + $0xb80] sm:$0xff]
    %v445 = vld [vmem:[#allocation2 + $0xb88] sm:$0xff]
    %v446 = vld [vmem:[#allocation2 + $0xb90] sm:$0xff]
    %v447 = vld [vmem:[#allocation2 + $0xb98] sm:$0xff]
    %v448 = vld [vmem:[#allocation2 + $0xba0] sm:$0xff]
    %v449 = vld [vmem:[#allocation2 + $0xba8] sm:$0xff]
    %v450 = vld [vmem:[#allocation2 + $0xbb0] sm:$0xff]
    %v451 = vld [vmem:[#allocation2 + $0xbb8] sm:$0xff]
    %v452 = vld [vmem:[#allocation2 + $0xbc0] sm:$0xff]
    %v453 = vld [vmem:[#allocation2 + $0xbc8] sm:$0xff]
    %v454 = vld [vmem:[#allocation2 + $0xbd0] sm:$0xff]
    %v455 = vld [vmem:[#allocation2 + $0xbd8] sm:$0xff]
    %v456 = vld [vmem:[#allocation2 + $0xbe0] sm:$0xff]
    %v457 = vld [vmem:[#allocation2 + $0xbe8] sm:$0xff]
    %v458 = vld [vmem:[#allocation2 + $0xbf0] sm:$0xff]
    %v459 = vld [vmem:[#allocation2 + $0xbf8] sm:$0xff]
    %v460 = vld [vmem:[#allocation2 + $0xc00] sm:$0xff]
    %v461 = vld [vmem:[#allocation2 + $0xc08] sm:$0xff]
    %v462 = vld [vmem:[#allocation2 + $0xc10] sm:$0xff]
    %v463 = vld [vmem:[#allocation2 + $0xc18] sm:$0xff]
    %v464 = vld [vmem:[#allocation2 + $0xc20] sm:$0xff]
    %v465 = vld [vmem:[#allocation2 + $0xc28] sm:$0xff]
    %v466 = vld [vmem:[#allocation2 + $0xc30] sm:$0xff]
    %v467 = vld [vmem:[#allocation2 + $0xc38] sm:$0xff]
    %v468 = vld [vmem:[#allocation2 + $0xc40] sm:$0xff]
    %v469 = vld [vmem:[#allocation2 + $0xc48] sm:$0xff]
    %v470 = vld [vmem:[#allocation2 + $0xc50] sm:$0xff]
    %v471 = vld [vmem:[#allocation2 + $0xc58] sm:$0xff]
    %v472 = vld [vmem:[#allocation2 + $0xc60] sm:$0xff]
    %v473 = vld [vmem:[#allocation2 + $0xc68] sm:$0xff]
    %v474 = vld [vmem:[#allocation2 + $0xc70] sm:$0xff]
    %v475 = vld [vmem:[#allocation2 + $0xc78] sm:$0xff]
    %v476 = vld [vmem:[#allocation2 + $0xc80] sm:$0xff]
    %v477 = vld [vmem:[#allocation2 + $0xc88] sm:$0xff]
    %v478 = vld [vmem:[#allocation2 + $0xc90] sm:$0xff]
    %v479 = vld [vmem:[#allocation2 + $0xc98] sm:$0xff]
    %v480 = vld [vmem:[#allocation2 + $0xca0] sm:$0xff]
    %v481 = vld [vmem:[#allocation2 + $0xca8] sm:$0xff]
    %v482 = vld [vmem:[#allocation2 + $0xcb0] sm:$0xff]
    %v483 = vld [vmem:[#allocation2 + $0xcb8] sm:$0xff]
    %v484 = vld [vmem:[#allocation2 + $0xcc0] sm:$0xff]
    %v485 = vld [vmem:[#allocation2 + $0xcc8] sm:$0xff]
    %v486 = vld [vmem:[#allocation2 + $0xcd0] sm:$0xff]
    %v487 = vld [vmem:[#allocation2 + $0xcd8] sm:$0xff]
    %v488 = vld [vmem:[#allocation2 + $0xce0] sm:$0xff]
    %v489 = vld [vmem:[#allocation2 + $0xce8] sm:$0xff]
    %v490 = vld [vmem:[#allocation2 + $0xcf0] sm:$0xff]
    %v491 = vld [vmem:[#allocation2 + $0xcf8] sm:$0xff]
    %v492 = vld [vmem:[#allocation2 + $0xd00] sm:$0xff]
    %v493 = vld [vmem:[#allocation2 + $0xd08] sm:$0xff]
    %v494 = vld [vmem:[#allocation2 + $0xd10] sm:$0xff]
    %v495 = vld [vmem:[#allocation2 + $0xd18] sm:$0xff]
    %v496 = vld [vmem:[#allocation2 + $0xd20] sm:$0xff]
    %v497 = vld [vmem:[#allocation2 + $0xd28] sm:$0xff]
    %v498 = vld [vmem:[#allocation2 + $0xd30] sm:$0xff]
    %v499 = vld [vmem:[#allocation2 + $0xd38] sm:$0xff]
    %v500 = vld [vmem:[#allocation2 + $0xd40] sm:$0xff]
    %v501 = vld [vmem:[#allocation2 + $0xd48] sm:$0xff]
    %v502 = vld [vmem:[#allocation2 + $0xd50] sm:$0xff]
    %v503 = vld [vmem:[#allocation2 + $0xd58] sm:$0xff]
    %v504 = vld [vmem:[#allocation2 + $0xd60] sm:$0xff]
    %v505 = vld [vmem:[#allocation2 + $0xd68] sm:$0xff]
    %v506 = vld [vmem:[#allocation2 + $0xd70] sm:$0xff]
    %v507 = vld [vmem:[#allocation2 + $0xd78] sm:$0xff]
    %v508 = vld [vmem:[#allocation2 + $0xd80] sm:$0xff]
    %v509 = vld [vmem:[#allocation2 + $0xd88] sm:$0xff]
    %v510 = vld [vmem:[#allocation2 + $0xd90] sm:$0xff]
    %v511 = vld [vmem:[#allocation2 + $0xd98] sm:$0xff]
    %v512 = vld [vmem:[#allocation2 + $0xda0] sm:$0xff]
    %v513 = vld [vmem:[#allocation2 + $0xda8] sm:$0xff]
    %v514 = vld [vmem:[#allocation2 + $0xdb0] sm:$0xff]
    %v515 = vld [vmem:[#allocation2 + $0xdb8] sm:$0xff]
    %v516 = vld [vmem:[#allocation2 + $0xdc0] sm:$0xff]
    %v517 = vld [vmem:[#allocation2 + $0xdc8] sm:$0xff]
    %v518 = vld [vmem:[#allocation2 + $0xdd0] sm:$0xff]
    %v519 = vld [vmem:[#allocation2 + $0xdd8] sm:$0xff]
    %v520 = vld [vmem:[#allocation2 + $0xde0] sm:$0xff]
    %v521 = vld [vmem:[#allocation2 + $0xde8] sm:$0xff]
    %v522 = vld [vmem:[#allocation2 + $0xdf0] sm:$0xff]
    %v523 = vld [vmem:[#allocation2 + $0xdf8] sm:$0xff]
    %v524 = vld [vmem:[#allocation2 + $0xe00] sm:$0xff]
    %v525 = vld [vmem:[#allocation2 + $0xe08] sm:$0xff]
    %v526 = vld [vmem:[#allocation2 + $0xe10] sm:$0xff]
    %v527 = vld [vmem:[#allocation2 + $0xe18] sm:$0xff]
    %v528 = vld [vmem:[#allocation2 + $0xe20] sm:$0xff]
    %v529 = vld [vmem:[#allocation2 + $0xe28] sm:$0xff]
    %v530 = vld [vmem:[#allocation2 + $0xe30] sm:$0xff]
    %v531 = vld [vmem:[#allocation2 + $0xe38] sm:$0xff]
    %v532 = vld [vmem:[#allocation2 + $0xe40] sm:$0xff]
    %v533 = vld [vmem:[#allocation2 + $0xe48] sm:$0xff]
    %v534 = vld [vmem:[#allocation2 + $0xe50] sm:$0xff]
    %v535 = vld [vmem:[#allocation2 + $0xe58] sm:$0xff]
    %v536 = vld [vmem:[#allocation2 + $0xe60] sm:$0xff]
    %v537 = vld [vmem:[#allocation2 + $0xe68] sm:$0xff]
    %v538 = vld [vmem:[#allocation2 + $0xe70] sm:$0xff]
    %v539 = vld [vmem:[#allocation2 + $0xe78] sm:$0xff]
    %v540 = vld [vmem:[#allocation2 + $0xe80] sm:$0xff]
    %v541 = vld [vmem:[#allocation2 + $0xe88] sm:$0xff]
    %v542 = vld [vmem:[#allocation2 + $0xe90] sm:$0xff]
    %v543 = vld [vmem:[#allocation2 + $0xe98] sm:$0xff]
    %v544 = vld [vmem:[#allocation2 + $0xea0] sm:$0xff]
    %v545 = vld [vmem:[#allocation2 + $0xea8] sm:$0xff]
    %v546 = vld [vmem:[#allocation2 + $0xeb0] sm:$0xff]
    %v547 = vld [vmem:[#allocation2 + $0xeb8] sm:$0xff]
    %v548 = vld [vmem:[#allocation2 + $0xec0] sm:$0xff]
    %v549 = vld [vmem:[#allocation2 + $0xec8] sm:$0xff]
    %v550 = vld [vmem:[#allocation2 + $0xed0] sm:$0xff]
    %v551 = vld [vmem:[#allocation2 + $0xed8] sm:$0xff]
    %v552 = vld [vmem:[#allocation2 + $0xee0] sm:$0xff]
    %v553 = vld [vmem:[#allocation2 + $0xee8] sm:$0xff]
    %v554 = vld [vmem:[#allocation2 + $0xef0] sm:$0xff]
    %v555 = vld [vmem:[#allocation2 + $0xef8] sm:$0xff]
    %v556 = vld [vmem:[#allocation2 + $0xf00] sm:$0xff]
    %v557 = vld [vmem:[#allocation2 + $0xf08] sm:$0xff]
    %v558 = vld [vmem:[#allocation2 + $0xf10] sm:$0xff]
    %v559 = vld [vmem:[#allocation2 + $0xf18] sm:$0xff]
    %v560 = vld [vmem:[#allocation2 + $0xf20] sm:$0xff]
    %v561 = vld [vmem:[#allocation2 + $0xf28] sm:$0xff]
    %v562 = vld [vmem:[#allocation2 + $0xf30] sm:$0xff]
    %v563 = vld [vmem:[#allocation2 + $0xf38] sm:$0xff]
    %v564 = vld [vmem:[#allocation2 + $0xf40] sm:$0xff]
    %v565 = vld [vmem:[#allocation2 + $0xf48] sm:$0xff]
    %v566 = vld [vmem:[#allocation2 + $0xf50] sm:$0xff]
    %v567 = vld [vmem:[#allocation2 + $0xf58] sm:$0xff]
    %v568 = vld [vmem:[#allocation2 + $0xf60] sm:$0xff]
    %v569 = vld [vmem:[#allocation2 + $0xf68] sm:$0xff]
    %v570 = vld [vmem:[#allocation2 + $0xf70] sm:$0xff]
    %v571 = vld [vmem:[#allocation2 + $0xf78] sm:$0xff]
    %v572 = vld [vmem:[#allocation2 + $0xf80] sm:$0xff]
    %v573 = vld [vmem:[#allocation2 + $0xf88] sm:$0xff]
    %v574 = vld [vmem:[#allocation2 + $0xf90] sm:$0xff]
    %v575 = vld [vmem:[#allocation2 + $0xf98] sm:$0xff]
    %v576 = vld [vmem:[#allocation2 + $0xfa0] sm:$0xff]
    %v577 = vld [vmem:[#allocation2 + $0xfa8] sm:$0xff]
    %v578 = vld [vmem:[#allocation2 + $0xfb0] sm:$0xff]
    %v579 = vld [vmem:[#allocation2 + $0xfb8] sm:$0xff]
    %v580 = vld [vmem:[#allocation2 + $0xfc0] sm:$0xff]
    %v581 = vld [vmem:[#allocation2 + $0xfc8] sm:$0xff]
    %v582 = vld [vmem:[#allocation2 + $0xfd0] sm:$0xff]
    %v583 = vld [vmem:[#allocation2 + $0xfd8] sm:$0xff]
    %v584 = vld [vmem:[#allocation2 + $0xfe0] sm:$0xff]
    %v585 = vld [vmem:[#allocation2 + $0xfe8] sm:$0xff]
    %v586 = vld [vmem:[#allocation2 + $0xff0] sm:$0xff]
    %v587 = vld [vmem:[#allocation2 + $0xff8] sm:$0xff]
    %v588 = vld [vmem:[#allocation2 + $0x1000] sm:$0xff]
    %v589 = vld [vmem:[#allocation2 + $0x1008] sm:$0xff]
    %v590 = vld [vmem:[#allocation2 + $0x1010] sm:$0xff]
    %v591 = vld [vmem:[#allocation2 + $0x1018] sm:$0xff]
    %v592 = vld [vmem:[#allocation2 + $0x1020] sm:$0xff]
    %v593 = vld [vmem:[#allocation2 + $0x1028] sm:$0xff]
    %v594 = vld [vmem:[#allocation2 + $0x1030] sm:$0xff]
    %v595 = vld [vmem:[#allocation2 + $0x1038] sm:$0xff]
    %v596 = vld [vmem:[#allocation2 + $0x1040] sm:$0xff]
    %v597 = vld [vmem:[#allocation2 + $0x1048] sm:$0xff]
    %v598 = vld [vmem:[#allocation2 + $0x1050] sm:$0xff]
    %v599 = vld [vmem:[#allocation2 + $0x1058] sm:$0xff]
    %v600 = vld [vmem:[#allocation2 + $0x1060] sm:$0xff]
    %v601 = vld [vmem:[#allocation2 + $0x1068] sm:$0xff]
    %v602 = vld [vmem:[#allocation2 + $0x1070] sm:$0xff]
    %v603 = vld [vmem:[#allocation2 + $0x1078] sm:$0xff]
    %v604 = vld [vmem:[#allocation2 + $0x1080] sm:$0xff]
    %v605 = vld [vmem:[#allocation2 + $0x1088] sm:$0xff]
    %v606 = vld [vmem:[#allocation2 + $0x1090] sm:$0xff]
    %v607 = vld [vmem:[#allocation2 + $0x1098] sm:$0xff]
    %v608 = vld [vmem:[#allocation2 + $0x10a0] sm:$0xff]
    %v609 = vld [vmem:[#allocation2 + $0x10a8] sm:$0xff]
    %v610 = vld [vmem:[#allocation2 + $0x10b0] sm:$0xff]
    %v611 = vld [vmem:[#allocation2 + $0x10b8] sm:$0xff]
    %v612 = vld [vmem:[#allocation2 + $0x10c0] sm:$0xff]
    %v613 = vld [vmem:[#allocation2 + $0x10c8] sm:$0xff]
    %v614 = vld [vmem:[#allocation2 + $0x10d0] sm:$0xff]
    %v615 = vld [vmem:[#allocation2 + $0x10d8] sm:$0xff]
    %v616 = vld [vmem:[#allocation2 + $0x10e0] sm:$0xff]
    %v617 = vld [vmem:[#allocation2 + $0x10e8] sm:$0xff]
    %v618 = vld [vmem:[#allocation2 + $0x10f0] sm:$0xff]
    %v619 = vld [vmem:[#allocation2 + $0x10f8] sm:$0xff]
    %v620 = vld [vmem:[#allocation2 + $0x1100] sm:$0xff]
    %v621 = vld [vmem:[#allocation2 + $0x1108] sm:$0xff]
    %v622 = vld [vmem:[#allocation2 + $0x1110] sm:$0xff]
    %v623 = vld [vmem:[#allocation2 + $0x1118] sm:$0xff]
    %v624 = vld [vmem:[#allocation2 + $0x1120] sm:$0xff]
    %v625 = vld [vmem:[#allocation2 + $0x1128] sm:$0xff]
    %v626 = vld [vmem:[#allocation2 + $0x1130] sm:$0xff]
    %v627 = vld [vmem:[#allocation2 + $0x1138] sm:$0xff]
    %v628 = vld [vmem:[#allocation2 + $0x1140] sm:$0xff]
    %v629 = vld [vmem:[#allocation2 + $0x1148] sm:$0xff]
    %v630 = vld [vmem:[#allocation2 + $0x1150] sm:$0xff]
    %v631 = vld [vmem:[#allocation2 + $0x1158] sm:$0xff]
    %v632 = vld [vmem:[#allocation2 + $0x1160] sm:$0xff]
    %v633 = vld [vmem:[#allocation2 + $0x1168] sm:$0xff]
    %v634 = vld [vmem:[#allocation2 + $0x1170] sm:$0xff]
    %v635 = vld [vmem:[#allocation2 + $0x1178] sm:$0xff]
    %v636 = vld [vmem:[#allocation2 + $0x1180] sm:$0xff]
    %v637 = vld [vmem:[#allocation2 + $0x1188] sm:$0xff]
    %v638 = vld [vmem:[#allocation2 + $0x1190] sm:$0xff]
    %v639 = vld [vmem:[#allocation2 + $0x1198] sm:$0xff]
    %v640 = vld [vmem:[#allocation2 + $0x11a0] sm:$0xff]
    %v641 = vld [vmem:[#allocation2 + $0x11a8] sm:$0xff]
    %v642 = vld [vmem:[#allocation2 + $0x11b0] sm:$0xff]
    %v643 = vld [vmem:[#allocation2 + $0x11b8] sm:$0xff]
    %v644 = vld [vmem:[#allocation2 + $0x11c0] sm:$0xff]
    %v645 = vld [vmem:[#allocation2 + $0x11c8] sm:$0xff]
    %v646 = vld [vmem:[#allocation2 + $0x11d0] sm:$0xff]
    %v647 = vld [vmem:[#allocation2 + $0x11d8] sm:$0xff]
    %v648 = vld [vmem:[#allocation2 + $0x11e0] sm:$0xff]
    %v649 = vld [vmem:[#allocation2 + $0x11e8] sm:$0xff]
    %v650 = vld [vmem:[#allocation2 + $0x11f0] sm:$0xff]
    %v651 = vld [vmem:[#allocation2 + $0x11f8] sm:$0xff]
    %v652 = vld [vmem:[#allocation5] sm:$0xf]
    %v654 = vlaneseq
    %v655 = vshrl.u32 %v654, 7
    %v656 = vsub.s32 0, %v655
    %v657 = vrot.slane %v652, %v656
    %v658 = vlaneseq
    %v659 = vshrl.u32 %v658, 7
    %v660 = vsub.s32 1, %v659
    %v661 = vrot.slane %v652, %v660
    %v662 = vlaneseq
    %v663 = vshrl.u32 %v662, 7
    %v664 = vsub.s32 2, %v663
    %v665 = vrot.slane %v652, %v664
    %v666 = vlaneseq
    %v667 = vshrl.u32 %v666, 7
    %v668 = vsub.s32 3, %v667
    %v669 = vrot.slane %v652, %v668
    %v677 = vcombine.high %v73, %v73
    %v679 = vunpack.c.l.s4 1966171168
    %v680 = vunpack.c.0.s8 %v679
    %v681 = vlaneseq
    %v682 = vshrl.u32 %v681, 7
    %v683 = vsub.s32 %v680, %v682
    %v684 = vrot.slane %v73, %v683
    %v686 = vunpack.c.l.s4 1966171168
    %v687 = vunpack.c.0.s8 %v686
    %v688 = vlaneseq
    %v689 = vshrl.u32 %v688, 7
    %v690 = vsub.s32 %v687, %v689
    %v691 = vrot.slane %v677, %v690
    %v692 = vcombine.high %v684, %v684
    %v693 = vcombine.high %v691, %v691
    %v695 = vunpack.c.l.s4 1966171168
    %v696 = vunpack.c.0.s8 %v695
    %v697 = vlaneseq
    %v698 = vshrl.u32 %v697, 7
    %v699 = vsub.s32 %v696, %v698
    %v700 = vrot.slane %v684, %v699
    %v702 = vunpack.c.l.s4 1966171168
    %v703 = vunpack.c.0.s8 %v702
    %v704 = vlaneseq
    %v705 = vshrl.u32 %v704, 7
    %v706 = vsub.s32 %v703, %v705
    %v707 = vrot.slane %v691, %v706
    %v709 = vunpack.c.l.s4 1966171168
    %v710 = vunpack.c.0.s8 %v709
    %v711 = vlaneseq
    %v712 = vshrl.u32 %v711, 7
    %v713 = vsub.s32 %v710, %v712
    %v714 = vrot.slane %v692, %v713
    %v716 = vunpack.c.l.s4 1966171168
    %v717 = vunpack.c.0.s8 %v716
    %v718 = vlaneseq
    %v719 = vshrl.u32 %v718, 7
    %v720 = vsub.s32 %v717, %v719
    %v721 = vrot.slane %v693, %v720
    %v722 = vcombine.high %v700, %v700
    %v723 = vcombine.high %v707, %v707
    %v724 = vcombine.high %v714, %v714
    %v725 = vcombine.high %v721, %v721
    %v726 = vcombine.high %v74, %v74
    %v728 = vunpack.c.l.s4 1966171168
    %v729 = vunpack.c.0.s8 %v728
    %v730 = vlaneseq
    %v731 = vshrl.u32 %v730, 7
    %v732 = vsub.s32 %v729, %v731
    %v733 = vrot.slane %v74, %v732
    %v735 = vunpack.c.l.s4 1966171168
    %v736 = vunpack.c.0.s8 %v735
    %v737 = vlaneseq
    %v738 = vshrl.u32 %v737, 7
    %v739 = vsub.s32 %v736, %v738
    %v740 = vrot.slane %v726, %v739
    %v741 = vcombine.high %v733, %v733
    %v742 = vcombine.high %v740, %v740
    %v744 = vunpack.c.l.s4 1966171168
    %v745 = vunpack.c.0.s8 %v744
    %v746 = vlaneseq
    %v747 = vshrl.u32 %v746, 7
    %v748 = vsub.s32 %v745, %v747
    %v749 = vrot.slane %v733, %v748
    %v751 = vunpack.c.l.s4 1966171168
    %v752 = vunpack.c.0.s8 %v751
    %v753 = vlaneseq
    %v754 = vshrl.u32 %v753, 7
    %v755 = vsub.s32 %v752, %v754
    %v756 = vrot.slane %v740, %v755
    %v758 = vunpack.c.l.s4 1966171168
    %v759 = vunpack.c.0.s8 %v758
    %v760 = vlaneseq
    %v761 = vshrl.u32 %v760, 7
    %v762 = vsub.s32 %v759, %v761
    %v763 = vrot.slane %v741, %v762
    %v765 = vunpack.c.l.s4 1966171168
    %v766 = vunpack.c.0.s8 %v765
    %v767 = vlaneseq
    %v768 = vshrl.u32 %v767, 7
    %v769 = vsub.s32 %v766, %v768
    %v770 = vrot.slane %v742, %v769
    %v771 = vcombine.high %v749, %v749
    %v772 = vcombine.high %v756, %v756
    %v773 = vcombine.high %v763, %v763
    %v774 = vcombine.high %v770, %v770
    %v776 = vunpack.c.l.s4 1966171168
    %v777 = vunpack.c.0.s8 %v776
    %v778 = vlaneseq
    %v779 = vshrl.u32 %v778, 7
    %v780 = vsub.s32 %v777, %v779
    %v781 = vrot.slane %v75, %v780
    %v782 = vcombine.high %v781, %v781
    %v784 = vunpack.c.l.s4 1966171168
    %v785 = vunpack.c.0.s8 %v784
    %v786 = vlaneseq
    %v787 = vshrl.u32 %v786, 7
    %v788 = vsub.s32 %v785, %v787
    %v789 = vrot.slane %v781, %v788
    %v791 = vunpack.c.l.s4 1966171168
    %v792 = vunpack.c.0.s8 %v791
    %v793 = vlaneseq
    %v794 = vshrl.u32 %v793, 7
    %v795 = vsub.s32 %v792, %v794
    %v796 = vrot.slane %v782, %v795
    %v1391 = vunpack.c.l.b16 %v76
    %v1392 = vunpack.c.h.b16 %v76
    %v1393 = vunpack.c.l.b16 %v77
    %v1394 = vunpack.c.h.b16 %v77
    %v1395 = vunpack.c.l.b16 %v78
    %v1396 = vunpack.c.h.b16 %v78
    %v1397 = vunpack.c.l.b16 %v79
    %v1398 = vunpack.c.h.b16 %v79
    %v1399 = vunpack.c.l.b16 %v80
    %v1400 = vunpack.c.h.b16 %v80
    %v1401 = vunpack.c.l.b16 %v81
    %v1402 = vunpack.c.h.b16 %v81
    %v1403 = vunpack.c.l.b16 %v82
    %v1404 = vunpack.c.h.b16 %v82
    %v1405 = vunpack.c.l.b16 %v83
    %v1406 = vunpack.c.h.b16 %v83
    %v1407 = vunpack.c.l.b16 %v84
    %v1408 = vunpack.c.h.b16 %v84
    %v1409 = vunpack.c.l.b16 %v85
    %v1410 = vunpack.c.h.b16 %v85
    %v1411 = vunpack.c.l.b16 %v86
    %v1412 = vunpack.c.h.b16 %v86
    %v1413 = vunpack.c.l.b16 %v87
    %v1414 = vunpack.c.h.b16 %v87
    %v1415 = vunpack.c.l.b16 %v88
    %v1416 = vunpack.c.h.b16 %v88
    %v1417 = vunpack.c.l.b16 %v89
    %v1418 = vunpack.c.h.b16 %v89
    %v1419 = vunpack.c.l.b16 %v90
    %v1420 = vunpack.c.h.b16 %v90
    %v1421 = vunpack.c.l.b16 %v91
    %v1422 = vunpack.c.h.b16 %v91
    %v1423 = vunpack.c.l.b16 %v92
    %v1424 = vunpack.c.h.b16 %v92
    %v1425 = vunpack.c.l.b16 %v93
    %v1426 = vunpack.c.h.b16 %v93
    %v1427 = vunpack.c.l.b16 %v94
    %v1428 = vunpack.c.h.b16 %v94
    %v1429 = vunpack.c.l.b16 %v95
    %v1430 = vunpack.c.h.b16 %v95
    %v1431 = vunpack.c.l.b16 %v96
    %v1432 = vunpack.c.h.b16 %v96
    %v1433 = vunpack.c.l.b16 %v97
    %v1434 = vunpack.c.h.b16 %v97
    %v1435 = vunpack.c.l.b16 %v98
    %v1436 = vunpack.c.h.b16 %v98
    %v1437 = vunpack.c.l.b16 %v99
    %v1438 = vunpack.c.h.b16 %v99
    %v1439 = vunpack.c.l.b16 %v100
    %v1440 = vunpack.c.h.b16 %v100
    %v1441 = vunpack.c.l.b16 %v101
    %v1442 = vunpack.c.h.b16 %v101
    %v1443 = vunpack.c.l.b16 %v102
    %v1444 = vunpack.c.h.b16 %v102
    %v1445 = vunpack.c.l.b16 %v103
    %v1446 = vunpack.c.h.b16 %v103
    %v1447 = vunpack.c.l.b16 %v104
    %v1448 = vunpack.c.h.b16 %v104
    %v1449 = vunpack.c.l.b16 %v105
    %v1450 = vunpack.c.h.b16 %v105
    %v1451 = vunpack.c.l.b16 %v106
    %v1452 = vunpack.c.h.b16 %v106
    %v1453 = vunpack.c.l.b16 %v107
    %v1454 = vunpack.c.h.b16 %v107
    %v1455 = vunpack.c.l.b16 %v108
    %v1456 = vunpack.c.h.b16 %v108
    %v1457 = vunpack.c.l.b16 %v109
    %v1458 = vunpack.c.h.b16 %v109
    %v1459 = vunpack.c.l.b16 %v110
    %v1460 = vunpack.c.h.b16 %v110
    %v1461 = vunpack.c.l.b16 %v111
    %v1462 = vunpack.c.h.b16 %v111
    %v1463 = vunpack.c.l.b16 %v112
    %v1464 = vunpack.c.h.b16 %v112
    %v1465 = vunpack.c.l.b16 %v113
    %v1466 = vunpack.c.h.b16 %v113
    %v1467 = vunpack.c.l.b16 %v114
    %v1468 = vunpack.c.h.b16 %v114
    %v1469 = vunpack.c.l.b16 %v115
    %v1470 = vunpack.c.h.b16 %v115
    %v1471 = vunpack.c.l.b16 %v116
    %v1472 = vunpack.c.h.b16 %v116
    %v1473 = vunpack.c.l.b16 %v117
    %v1474 = vunpack.c.h.b16 %v117
    %v1475 = vunpack.c.l.b16 %v118
    %v1476 = vunpack.c.h.b16 %v118
    %v1477 = vunpack.c.l.b16 %v119
    %v1478 = vunpack.c.h.b16 %v119
    %v1479 = vunpack.c.l.b16 %v120
    %v1480 = vunpack.c.h.b16 %v120
    %v1481 = vunpack.c.l.b16 %v121
    %v1482 = vunpack.c.h.b16 %v121
    %v1483 = vunpack.c.l.b16 %v122
    %v1484 = vunpack.c.h.b16 %v122
    %v1485 = vunpack.c.l.b16 %v123
    %v1486 = vunpack.c.h.b16 %v123
    %v1487 = vunpack.c.l.b16 %v124
    %v1488 = vunpack.c.h.b16 %v124
    %v1489 = vunpack.c.l.b16 %v125
    %v1490 = vunpack.c.h.b16 %v125
    %v1491 = vunpack.c.l.b16 %v126
    %v1492 = vunpack.c.h.b16 %v126
    %v1493 = vunpack.c.l.b16 %v127
    %v1494 = vunpack.c.h.b16 %v127
    %v1495 = vunpack.c.l.b16 %v128
    %v1496 = vunpack.c.h.b16 %v128
    %v1497 = vunpack.c.l.b16 %v129
    %v1498 = vunpack.c.h.b16 %v129
    %v1499 = vunpack.c.l.b16 %v130
    %v1500 = vunpack.c.h.b16 %v130
    %v1501 = vunpack.c.l.b16 %v131
    %v1502 = vunpack.c.h.b16 %v131
    %v1503 = vunpack.c.l.b16 %v132
    %v1504 = vunpack.c.h.b16 %v132
    %v1505 = vunpack.c.l.b16 %v133
    %v1506 = vunpack.c.h.b16 %v133
    %v1507 = vunpack.c.l.b16 %v134
    %v1508 = vunpack.c.h.b16 %v134
    %v1509 = vunpack.c.l.b16 %v135
    %v1510 = vunpack.c.h.b16 %v135
    %v1511 = vunpack.c.l.b16 %v136
    %v1512 = vunpack.c.h.b16 %v136
    %v1513 = vunpack.c.l.b16 %v137
    %v1514 = vunpack.c.h.b16 %v137
    %v1515 = vunpack.c.l.b16 %v138
    %v1516 = vunpack.c.h.b16 %v138
    %v1517 = vunpack.c.l.b16 %v139
    %v1518 = vunpack.c.h.b16 %v139
    %v1519 = vunpack.c.l.b16 %v140
    %v1520 = vunpack.c.h.b16 %v140
    %v1521 = vunpack.c.l.b16 %v141
    %v1522 = vunpack.c.h.b16 %v141
    %v1523 = vunpack.c.l.b16 %v142
    %v1524 = vunpack.c.h.b16 %v142
    %v1525 = vunpack.c.l.b16 %v143
    %v1526 = vunpack.c.h.b16 %v143
    %v1527 = vunpack.c.l.b16 %v144
    %v1528 = vunpack.c.h.b16 %v144
    %v1529 = vunpack.c.l.b16 %v145
    %v1530 = vunpack.c.h.b16 %v145
    %v1531 = vunpack.c.l.b16 %v146
    %v1532 = vunpack.c.h.b16 %v146
    %v1533 = vunpack.c.l.b16 %v147
    %v1534 = vunpack.c.h.b16 %v147
    %v1535 = vunpack.c.l.b16 %v148
    %v1536 = vunpack.c.h.b16 %v148
    %v1537 = vunpack.c.l.b16 %v149
    %v1538 = vunpack.c.h.b16 %v149
    %v1539 = vunpack.c.l.b16 %v150
    %v1540 = vunpack.c.h.b16 %v150
    %v1541 = vunpack.c.l.b16 %v151
    %v1542 = vunpack.c.h.b16 %v151
    %v1543 = vunpack.c.l.b16 %v152
    %v1544 = vunpack.c.h.b16 %v152
    %v1545 = vunpack.c.l.b16 %v153
    %v1546 = vunpack.c.h.b16 %v153
    %v1547 = vunpack.c.l.b16 %v154
    %v1548 = vunpack.c.h.b16 %v154
    %v1549 = vunpack.c.l.b16 %v155
    %v1550 = vunpack.c.h.b16 %v155
    %v1551 = vunpack.c.l.b16 %v156
    %v1552 = vunpack.c.h.b16 %v156
    %v1553 = vunpack.c.l.b16 %v157
    %v1554 = vunpack.c.h.b16 %v157
    %v1555 = vunpack.c.l.b16 %v158
    %v1556 = vunpack.c.h.b16 %v158
    %v1557 = vunpack.c.l.b16 %v159
    %v1558 = vunpack.c.h.b16 %v159
    %v1559 = vunpack.c.l.b16 %v160
    %v1560 = vunpack.c.h.b16 %v160
    %v1561 = vunpack.c.l.b16 %v161
    %v1562 = vunpack.c.h.b16 %v161
    %v1563 = vunpack.c.l.b16 %v162
    %v1564 = vunpack.c.h.b16 %v162
    %v1565 = vunpack.c.l.b16 %v163
    %v1566 = vunpack.c.h.b16 %v163
    %v1567 = vunpack.c.l.b16 %v164
    %v1568 = vunpack.c.h.b16 %v164
    %v1569 = vunpack.c.l.b16 %v165
    %v1570 = vunpack.c.h.b16 %v165
    %v1571 = vunpack.c.l.b16 %v166
    %v1572 = vunpack.c.h.b16 %v166
    %v1573 = vunpack.c.l.b16 %v167
    %v1574 = vunpack.c.h.b16 %v167
    %v1575 = vunpack.c.l.b16 %v168
    %v1576 = vunpack.c.h.b16 %v168
    %v1577 = vunpack.c.l.b16 %v169
    %v1578 = vunpack.c.h.b16 %v169
    %v1579 = vunpack.c.l.b16 %v170
    %v1580 = vunpack.c.h.b16 %v170
    %v1581 = vunpack.c.l.b16 %v171
    %v1582 = vunpack.c.h.b16 %v171
    %v1583 = vunpack.c.l.b16 %v172
    %v1584 = vunpack.c.h.b16 %v172
    %v1585 = vunpack.c.l.b16 %v173
    %v1586 = vunpack.c.h.b16 %v173
    %v1587 = vunpack.c.l.b16 %v174
    %v1588 = vunpack.c.h.b16 %v174
    %v1589 = vunpack.c.l.b16 %v175
    %v1590 = vunpack.c.h.b16 %v175
    %v1591 = vunpack.c.l.b16 %v176
    %v1592 = vunpack.c.h.b16 %v176
    %v1593 = vunpack.c.l.b16 %v177
    %v1594 = vunpack.c.h.b16 %v177
    %v1595 = vunpack.c.l.b16 %v178
    %v1596 = vunpack.c.h.b16 %v178
    %v1597 = vunpack.c.l.b16 %v179
    %v1598 = vunpack.c.h.b16 %v179
    %v1599 = vunpack.c.l.b16 %v180
    %v1600 = vunpack.c.h.b16 %v180
    %v1601 = vunpack.c.l.b16 %v181
    %v1602 = vunpack.c.h.b16 %v181
    %v1603 = vunpack.c.l.b16 %v182
    %v1604 = vunpack.c.h.b16 %v182
    %v1605 = vunpack.c.l.b16 %v183
    %v1606 = vunpack.c.h.b16 %v183
    %v1607 = vunpack.c.l.b16 %v184
    %v1608 = vunpack.c.h.b16 %v184
    %v1609 = vunpack.c.l.b16 %v185
    %v1610 = vunpack.c.h.b16 %v185
    %v1611 = vunpack.c.l.b16 %v186
    %v1612 = vunpack.c.h.b16 %v186
    %v1613 = vunpack.c.l.b16 %v187
    %v1614 = vunpack.c.h.b16 %v187
    %v1615 = vunpack.c.l.b16 %v188
    %v1616 = vunpack.c.h.b16 %v188
    %v1617 = vunpack.c.l.b16 %v189
    %v1618 = vunpack.c.h.b16 %v189
    %v1619 = vunpack.c.l.b16 %v190
    %v1620 = vunpack.c.h.b16 %v190
    %v1621 = vunpack.c.l.b16 %v191
    %v1622 = vunpack.c.h.b16 %v191
    %v1623 = vunpack.c.l.b16 %v192
    %v1624 = vunpack.c.h.b16 %v192
    %v1625 = vunpack.c.l.b16 %v193
    %v1626 = vunpack.c.h.b16 %v193
    %v1627 = vunpack.c.l.b16 %v194
    %v1628 = vunpack.c.h.b16 %v194
    %v1629 = vunpack.c.l.b16 %v195
    %v1630 = vunpack.c.h.b16 %v195
    %v1631 = vunpack.c.l.b16 %v196
    %v1632 = vunpack.c.h.b16 %v196
    %v1633 = vunpack.c.l.b16 %v197
    %v1634 = vunpack.c.h.b16 %v197
    %v1635 = vunpack.c.l.b16 %v198
    %v1636 = vunpack.c.h.b16 %v198
    %v1637 = vunpack.c.l.b16 %v199
    %v1638 = vunpack.c.h.b16 %v199
    %v1639 = vunpack.c.l.b16 %v200
    %v1640 = vunpack.c.h.b16 %v200
    %v1641 = vunpack.c.l.b16 %v201
    %v1642 = vunpack.c.h.b16 %v201
    %v1643 = vunpack.c.l.b16 %v202
    %v1644 = vunpack.c.h.b16 %v202
    %v1645 = vunpack.c.l.b16 %v203
    %v1646 = vunpack.c.h.b16 %v203
    %v1647 = vunpack.c.l.b16 %v204
    %v1648 = vunpack.c.h.b16 %v204
    %v1649 = vunpack.c.l.b16 %v205
    %v1650 = vunpack.c.h.b16 %v205
    %v1651 = vunpack.c.l.b16 %v206
    %v1652 = vunpack.c.h.b16 %v206
    %v1653 = vunpack.c.l.b16 %v207
    %v1654 = vunpack.c.h.b16 %v207
    %v1655 = vunpack.c.l.b16 %v208
    %v1656 = vunpack.c.h.b16 %v208
    %v1657 = vunpack.c.l.b16 %v209
    %v1658 = vunpack.c.h.b16 %v209
    %v1659 = vunpack.c.l.b16 %v210
    %v1660 = vunpack.c.h.b16 %v210
    %v1661 = vunpack.c.l.b16 %v211
    %v1662 = vunpack.c.h.b16 %v211
    %v1663 = vunpack.c.l.b16 %v212
    %v1664 = vunpack.c.h.b16 %v212
    %v1665 = vunpack.c.l.b16 %v213
    %v1666 = vunpack.c.h.b16 %v213
    %v1667 = vunpack.c.l.b16 %v214
    %v1668 = vunpack.c.h.b16 %v214
    %v1669 = vunpack.c.l.b16 %v215
    %v1670 = vunpack.c.h.b16 %v215
    %v1671 = vunpack.c.l.b16 %v216
    %v1672 = vunpack.c.h.b16 %v216
    %v1673 = vunpack.c.l.b16 %v217
    %v1674 = vunpack.c.h.b16 %v217
    %v1675 = vunpack.c.l.b16 %v218
    %v1676 = vunpack.c.h.b16 %v218
    %v1677 = vunpack.c.l.b16 %v219
    %v1678 = vunpack.c.h.b16 %v219
    %v1679 = vunpack.c.l.b16 %v220
    %v1680 = vunpack.c.h.b16 %v220
    %v1681 = vunpack.c.l.b16 %v221
    %v1682 = vunpack.c.h.b16 %v221
    %v1683 = vunpack.c.l.b16 %v222
    %v1684 = vunpack.c.h.b16 %v222
    %v1685 = vunpack.c.l.b16 %v223
    %v1686 = vunpack.c.h.b16 %v223
    %v1687 = vunpack.c.l.b16 %v224
    %v1688 = vunpack.c.h.b16 %v224
    %v1689 = vunpack.c.l.b16 %v225
    %v1690 = vunpack.c.h.b16 %v225
    %v1691 = vunpack.c.l.b16 %v226
    %v1692 = vunpack.c.h.b16 %v226
    %v1693 = vunpack.c.l.b16 %v227
    %v1694 = vunpack.c.h.b16 %v227
    %v1695 = vunpack.c.l.b16 %v228
    %v1696 = vunpack.c.h.b16 %v228
    %v1697 = vunpack.c.l.b16 %v229
    %v1698 = vunpack.c.h.b16 %v229
    %v1699 = vunpack.c.l.b16 %v230
    %v1700 = vunpack.c.h.b16 %v230
    %v1701 = vunpack.c.l.b16 %v231
    %v1702 = vunpack.c.h.b16 %v231
    %v1703 = vunpack.c.l.b16 %v232
    %v1704 = vunpack.c.h.b16 %v232
    %v1705 = vunpack.c.l.b16 %v233
    %v1706 = vunpack.c.h.b16 %v233
    %v1707 = vunpack.c.l.b16 %v234
    %v1708 = vunpack.c.h.b16 %v234
    %v1709 = vunpack.c.l.b16 %v235
    %v1710 = vunpack.c.h.b16 %v235
    %v1711 = vunpack.c.l.b16 %v236
    %v1712 = vunpack.c.h.b16 %v236
    %v1713 = vunpack.c.l.b16 %v237
    %v1714 = vunpack.c.h.b16 %v237
    %v1715 = vunpack.c.l.b16 %v238
    %v1716 = vunpack.c.h.b16 %v238
    %v1717 = vunpack.c.l.b16 %v239
    %v1718 = vunpack.c.h.b16 %v239
    %v1719 = vunpack.c.l.b16 %v240
    %v1720 = vunpack.c.h.b16 %v240
    %v1721 = vunpack.c.l.b16 %v241
    %v1722 = vunpack.c.h.b16 %v241
    %v1723 = vunpack.c.l.b16 %v242
    %v1724 = vunpack.c.h.b16 %v242
    %v1725 = vunpack.c.l.b16 %v243
    %v1726 = vunpack.c.h.b16 %v243
    %v1727 = vunpack.c.l.b16 %v244
    %v1728 = vunpack.c.h.b16 %v244
    %v1729 = vunpack.c.l.b16 %v245
    %v1730 = vunpack.c.h.b16 %v245
    %v1731 = vunpack.c.l.b16 %v246
    %v1732 = vunpack.c.h.b16 %v246
    %v1733 = vunpack.c.l.b16 %v247
    %v1734 = vunpack.c.h.b16 %v247
    %v1735 = vunpack.c.l.b16 %v248
    %v1736 = vunpack.c.h.b16 %v248
    %v1737 = vunpack.c.l.b16 %v249
    %v1738 = vunpack.c.h.b16 %v249
    %v1739 = vunpack.c.l.b16 %v250
    %v1740 = vunpack.c.h.b16 %v250
    %v1741 = vunpack.c.l.b16 %v251
    %v1742 = vunpack.c.h.b16 %v251
    %v1743 = vunpack.c.l.b16 %v252
    %v1744 = vunpack.c.h.b16 %v252
    %v1745 = vunpack.c.l.b16 %v253
    %v1746 = vunpack.c.h.b16 %v253
    %v1747 = vunpack.c.l.b16 %v254
    %v1748 = vunpack.c.h.b16 %v254
    %v1749 = vunpack.c.l.b16 %v255
    %v1750 = vunpack.c.h.b16 %v255
    %v1751 = vunpack.c.l.b16 %v256
    %v1752 = vunpack.c.h.b16 %v256
    %v1753 = vunpack.c.l.b16 %v257
    %v1754 = vunpack.c.h.b16 %v257
    %v1755 = vunpack.c.l.b16 %v258
    %v1756 = vunpack.c.h.b16 %v258
    %v1757 = vunpack.c.l.b16 %v259
    %v1758 = vunpack.c.h.b16 %v259
    %v1759 = vunpack.c.l.b16 %v260
    %v1760 = vunpack.c.h.b16 %v260
    %v1761 = vunpack.c.l.b16 %v261
    %v1762 = vunpack.c.h.b16 %v261
    %v1763 = vunpack.c.l.b16 %v262
    %v1764 = vunpack.c.h.b16 %v262
    %v1765 = vunpack.c.l.b16 %v263
    %v1766 = vunpack.c.h.b16 %v263
    %v1767 = vunpack.c.l.b16 %v264
    %v1768 = vunpack.c.h.b16 %v264
    %v1769 = vunpack.c.l.b16 %v265
    %v1770 = vunpack.c.h.b16 %v265
    %v1771 = vunpack.c.l.b16 %v266
    %v1772 = vunpack.c.h.b16 %v266
    %v1773 = vunpack.c.l.b16 %v267
    %v1774 = vunpack.c.h.b16 %v267
    %v1775 = vunpack.c.l.b16 %v268
    %v1776 = vunpack.c.h.b16 %v268
    %v1777 = vunpack.c.l.b16 %v269
    %v1778 = vunpack.c.h.b16 %v269
    %v1779 = vunpack.c.l.b16 %v270
    %v1780 = vunpack.c.h.b16 %v270
    %v1781 = vunpack.c.l.b16 %v271
    %v1782 = vunpack.c.h.b16 %v271
    %v1783 = vunpack.c.l.b16 %v272
    %v1784 = vunpack.c.h.b16 %v272
    %v1785 = vunpack.c.l.b16 %v273
    %v1786 = vunpack.c.h.b16 %v273
    %v1787 = vunpack.c.l.b16 %v274
    %v1788 = vunpack.c.h.b16 %v274
    %v1789 = vunpack.c.l.b16 %v275
    %v1790 = vunpack.c.h.b16 %v275
    %v1791 = vunpack.c.l.b16 %v276
    %v1792 = vunpack.c.h.b16 %v276
    %v1793 = vunpack.c.l.b16 %v277
    %v1794 = vunpack.c.h.b16 %v277
    %v1795 = vunpack.c.l.b16 %v278
    %v1796 = vunpack.c.h.b16 %v278
    %v1797 = vunpack.c.l.b16 %v279
    %v1798 = vunpack.c.h.b16 %v279
    %v1799 = vunpack.c.l.b16 %v280
    %v1800 = vunpack.c.h.b16 %v280
    %v1801 = vunpack.c.l.b16 %v281
    %v1802 = vunpack.c.h.b16 %v281
    %v1803 = vunpack.c.l.b16 %v282
    %v1804 = vunpack.c.h.b16 %v282
    %v1805 = vunpack.c.l.b16 %v283
    %v1806 = vunpack.c.h.b16 %v283
    %v1807 = vunpack.c.l.b16 %v284
    %v1808 = vunpack.c.h.b16 %v284
    %v1809 = vunpack.c.l.b16 %v285
    %v1810 = vunpack.c.h.b16 %v285
    %v1811 = vunpack.c.l.b16 %v286
    %v1812 = vunpack.c.h.b16 %v286
    %v1813 = vunpack.c.l.b16 %v287
    %v1814 = vunpack.c.h.b16 %v287
    %v1815 = vunpack.c.l.b16 %v288
    %v1816 = vunpack.c.h.b16 %v288
    %v1817 = vunpack.c.l.b16 %v289
    %v1818 = vunpack.c.h.b16 %v289
    %v1819 = vunpack.c.l.b16 %v290
    %v1820 = vunpack.c.h.b16 %v290
    %v1821 = vunpack.c.l.b16 %v291
    %v1822 = vunpack.c.h.b16 %v291
    %v1823 = vunpack.c.l.b16 %v292
    %v1824 = vunpack.c.h.b16 %v292
    %v1825 = vunpack.c.l.b16 %v293
    %v1826 = vunpack.c.h.b16 %v293
    %v1827 = vunpack.c.l.b16 %v294
    %v1828 = vunpack.c.h.b16 %v294
    %v1829 = vunpack.c.l.b16 %v295
    %v1830 = vunpack.c.h.b16 %v295
    %v1831 = vunpack.c.l.b16 %v296
    %v1832 = vunpack.c.h.b16 %v296
    %v1833 = vunpack.c.l.b16 %v297
    %v1834 = vunpack.c.h.b16 %v297
    %v1835 = vunpack.c.l.b16 %v298
    %v1836 = vunpack.c.h.b16 %v298
    %v1837 = vunpack.c.l.b16 %v299
    %v1838 = vunpack.c.h.b16 %v299
    %v1839 = vunpack.c.l.b16 %v300
    %v1840 = vunpack.c.h.b16 %v300
    %v1841 = vunpack.c.l.b16 %v301
    %v1842 = vunpack.c.h.b16 %v301
    %v1843 = vunpack.c.l.b16 %v302
    %v1844 = vunpack.c.h.b16 %v302
    %v1845 = vunpack.c.l.b16 %v303
    %v1846 = vunpack.c.h.b16 %v303
    %v1847 = vunpack.c.l.b16 %v304
    %v1848 = vunpack.c.h.b16 %v304
    %v1849 = vunpack.c.l.b16 %v305
    %v1850 = vunpack.c.h.b16 %v305
    %v1851 = vunpack.c.l.b16 %v306
    %v1852 = vunpack.c.h.b16 %v306
    %v1853 = vunpack.c.l.b16 %v307
    %v1854 = vunpack.c.h.b16 %v307
    %v1855 = vunpack.c.l.b16 %v308
    %v1856 = vunpack.c.h.b16 %v308
    %v1857 = vunpack.c.l.b16 %v309
    %v1858 = vunpack.c.h.b16 %v309
    %v1859 = vunpack.c.l.b16 %v310
    %v1860 = vunpack.c.h.b16 %v310
    %v1861 = vunpack.c.l.b16 %v311
    %v1862 = vunpack.c.h.b16 %v311
    %v1863 = vunpack.c.l.b16 %v312
    %v1864 = vunpack.c.h.b16 %v312
    %v1865 = vunpack.c.l.b16 %v313
    %v1866 = vunpack.c.h.b16 %v313
    %v1867 = vunpack.c.l.b16 %v314
    %v1868 = vunpack.c.h.b16 %v314
    %v1869 = vunpack.c.l.b16 %v315
    %v1870 = vunpack.c.h.b16 %v315
    %v1871 = vunpack.c.l.b16 %v316
    %v1872 = vunpack.c.h.b16 %v316
    %v1873 = vunpack.c.l.b16 %v317
    %v1874 = vunpack.c.h.b16 %v317
    %v1875 = vunpack.c.l.b16 %v318
    %v1876 = vunpack.c.h.b16 %v318
    %v1877 = vunpack.c.l.b16 %v319
    %v1878 = vunpack.c.h.b16 %v319
    %v1879 = vunpack.c.l.b16 %v320
    %v1880 = vunpack.c.h.b16 %v320
    %v1881 = vunpack.c.l.b16 %v321
    %v1882 = vunpack.c.h.b16 %v321
    %v1883 = vunpack.c.l.b16 %v322
    %v1884 = vunpack.c.h.b16 %v322
    %v1885 = vunpack.c.l.b16 %v323
    %v1886 = vunpack.c.h.b16 %v323
    %v1887 = vunpack.c.l.b16 %v324
    %v1888 = vunpack.c.h.b16 %v324
    %v1889 = vunpack.c.l.b16 %v325
    %v1890 = vunpack.c.h.b16 %v325
    %v1891 = vunpack.c.l.b16 %v326
    %v1892 = vunpack.c.h.b16 %v326
    %v1893 = vunpack.c.l.b16 %v327
    %v1894 = vunpack.c.h.b16 %v327
    %v1895 = vunpack.c.l.b16 %v328
    %v1896 = vunpack.c.h.b16 %v328
    %v1897 = vunpack.c.l.b16 %v329
    %v1898 = vunpack.c.h.b16 %v329
    %v1899 = vunpack.c.l.b16 %v330
    %v1900 = vunpack.c.h.b16 %v330
    %v1901 = vunpack.c.l.b16 %v331
    %v1902 = vunpack.c.h.b16 %v331
    %v1903 = vunpack.c.l.b16 %v332
    %v1904 = vunpack.c.h.b16 %v332
    %v1905 = vunpack.c.l.b16 %v333
    %v1906 = vunpack.c.h.b16 %v333
    %v1907 = vunpack.c.l.b16 %v334
    %v1908 = vunpack.c.h.b16 %v334
    %v1909 = vunpack.c.l.b16 %v335
    %v1910 = vunpack.c.h.b16 %v335
    %v1911 = vunpack.c.l.b16 %v336
    %v1912 = vunpack.c.h.b16 %v336
    %v1913 = vunpack.c.l.b16 %v337
    %v1914 = vunpack.c.h.b16 %v337
    %v1915 = vunpack.c.l.b16 %v338
    %v1916 = vunpack.c.h.b16 %v338
    %v1917 = vunpack.c.l.b16 %v339
    %v1918 = vunpack.c.h.b16 %v339
    %v1919 = vunpack.c.l.b16 %v340
    %v1920 = vunpack.c.h.b16 %v340
    %v1921 = vunpack.c.l.b16 %v341
    %v1922 = vunpack.c.h.b16 %v341
    %v1923 = vunpack.c.l.b16 %v342
    %v1924 = vunpack.c.h.b16 %v342
    %v1925 = vunpack.c.l.b16 %v343
    %v1926 = vunpack.c.h.b16 %v343
    %v1927 = vunpack.c.l.b16 %v344
    %v1928 = vunpack.c.h.b16 %v344
    %v1929 = vunpack.c.l.b16 %v345
    %v1930 = vunpack.c.h.b16 %v345
    %v1931 = vunpack.c.l.b16 %v346
    %v1932 = vunpack.c.h.b16 %v346
    %v1933 = vunpack.c.l.b16 %v347
    %v1934 = vunpack.c.h.b16 %v347
    %v1935 = vunpack.c.l.b16 %v348
    %v1936 = vunpack.c.h.b16 %v348
    %v1937 = vunpack.c.l.b16 %v349
    %v1938 = vunpack.c.h.b16 %v349
    %v1939 = vunpack.c.l.b16 %v350
    %v1940 = vunpack.c.h.b16 %v350
    %v1941 = vunpack.c.l.b16 %v351
    %v1942 = vunpack.c.h.b16 %v351
    %v1943 = vunpack.c.l.b16 %v352
    %v1944 = vunpack.c.h.b16 %v352
    %v1945 = vunpack.c.l.b16 %v353
    %v1946 = vunpack.c.h.b16 %v353
    %v1947 = vunpack.c.l.b16 %v354
    %v1948 = vunpack.c.h.b16 %v354
    %v1949 = vunpack.c.l.b16 %v355
    %v1950 = vunpack.c.h.b16 %v355
    %v1951 = vunpack.c.l.b16 %v356
    %v1952 = vunpack.c.h.b16 %v356
    %v1953 = vunpack.c.l.b16 %v357
    %v1954 = vunpack.c.h.b16 %v357
    %v1955 = vunpack.c.l.b16 %v358
    %v1956 = vunpack.c.h.b16 %v358
    %v1957 = vunpack.c.l.b16 %v359
    %v1958 = vunpack.c.h.b16 %v359
    %v1959 = vunpack.c.l.b16 %v360
    %v1960 = vunpack.c.h.b16 %v360
    %v1961 = vunpack.c.l.b16 %v361
    %v1962 = vunpack.c.h.b16 %v361
    %v1963 = vunpack.c.l.b16 %v362
    %v1964 = vunpack.c.h.b16 %v362
    %v1965 = vunpack.c.l.b16 %v363
    %v1966 = vunpack.c.h.b16 %v363
    %v1967 = vunpack.c.l.b16 %v364
    %v1968 = vunpack.c.h.b16 %v364
    %v1969 = vunpack.c.l.b16 %v365
    %v1970 = vunpack.c.h.b16 %v365
    %v1971 = vunpack.c.l.b16 %v366
    %v1972 = vunpack.c.h.b16 %v366
    %v1973 = vunpack.c.l.b16 %v367
    %v1974 = vunpack.c.h.b16 %v367
    %v1975 = vunpack.c.l.b16 %v368
    %v1976 = vunpack.c.h.b16 %v368
    %v1977 = vunpack.c.l.b16 %v369
    %v1978 = vunpack.c.h.b16 %v369
    %v1979 = vunpack.c.l.b16 %v370
    %v1980 = vunpack.c.h.b16 %v370
    %v1981 = vunpack.c.l.b16 %v371
    %v1982 = vunpack.c.h.b16 %v371
    %v1983 = vunpack.c.l.b16 %v372
    %v1984 = vunpack.c.h.b16 %v372
    %v1985 = vunpack.c.l.b16 %v373
    %v1986 = vunpack.c.h.b16 %v373
    %v1987 = vunpack.c.l.b16 %v374
    %v1988 = vunpack.c.h.b16 %v374
    %v1989 = vunpack.c.l.b16 %v375
    %v1990 = vunpack.c.h.b16 %v375
    %v1991 = vunpack.c.l.b16 %v376
    %v1992 = vunpack.c.h.b16 %v376
    %v1993 = vunpack.c.l.b16 %v377
    %v1994 = vunpack.c.h.b16 %v377
    %v1995 = vunpack.c.l.b16 %v378
    %v1996 = vunpack.c.h.b16 %v378
    %v1997 = vunpack.c.l.b16 %v379
    %v1998 = vunpack.c.h.b16 %v379
    %v1999 = vunpack.c.l.b16 %v380
    %v2000 = vunpack.c.h.b16 %v380
    %v2001 = vunpack.c.l.b16 %v381
    %v2002 = vunpack.c.h.b16 %v381
    %v2003 = vunpack.c.l.b16 %v382
    %v2004 = vunpack.c.h.b16 %v382
    %v2005 = vunpack.c.l.b16 %v383
    %v2006 = vunpack.c.h.b16 %v383
    %v2007 = vunpack.c.l.b16 %v384
    %v2008 = vunpack.c.h.b16 %v384
    %v2009 = vunpack.c.l.b16 %v385
    %v2010 = vunpack.c.h.b16 %v385
    %v2011 = vunpack.c.l.b16 %v386
    %v2012 = vunpack.c.h.b16 %v386
    %v2013 = vunpack.c.l.b16 %v387
    %v2014 = vunpack.c.h.b16 %v387
    %v2015 = vunpack.c.l.b16 %v388
    %v2016 = vunpack.c.h.b16 %v388
    %v2017 = vunpack.c.l.b16 %v389
    %v2018 = vunpack.c.h.b16 %v389
    %v2019 = vunpack.c.l.b16 %v390
    %v2020 = vunpack.c.h.b16 %v390
    %v2021 = vunpack.c.l.b16 %v391
    %v2022 = vunpack.c.h.b16 %v391
    %v2023 = vunpack.c.l.b16 %v392
    %v2024 = vunpack.c.h.b16 %v392
    %v2025 = vunpack.c.l.b16 %v393
    %v2026 = vunpack.c.h.b16 %v393
    %v2027 = vunpack.c.l.b16 %v394
    %v2028 = vunpack.c.h.b16 %v394
    %v2029 = vunpack.c.l.b16 %v395
    %v2030 = vunpack.c.h.b16 %v395
    %v2031 = vunpack.c.l.b16 %v396
    %v2032 = vunpack.c.h.b16 %v396
    %v2033 = vunpack.c.l.b16 %v397
    %v2034 = vunpack.c.h.b16 %v397
    %v2035 = vunpack.c.l.b16 %v398
    %v2036 = vunpack.c.h.b16 %v398
    %v2037 = vunpack.c.l.b16 %v399
    %v2038 = vunpack.c.h.b16 %v399
    %v2039 = vunpack.c.l.b16 %v400
    %v2040 = vunpack.c.h.b16 %v400
    %v2041 = vunpack.c.l.b16 %v401
    %v2042 = vunpack.c.h.b16 %v401
    %v2043 = vunpack.c.l.b16 %v402
    %v2044 = vunpack.c.h.b16 %v402
    %v2045 = vunpack.c.l.b16 %v403
    %v2046 = vunpack.c.h.b16 %v403
    %v2047 = vunpack.c.l.b16 %v404
    %v2048 = vunpack.c.h.b16 %v404
    %v2049 = vunpack.c.l.b16 %v405
    %v2050 = vunpack.c.h.b16 %v405
    %v2051 = vunpack.c.l.b16 %v406
    %v2052 = vunpack.c.h.b16 %v406
    %v2053 = vunpack.c.l.b16 %v407
    %v2054 = vunpack.c.h.b16 %v407
    %v2055 = vunpack.c.l.b16 %v408
    %v2056 = vunpack.c.h.b16 %v408
    %v2057 = vunpack.c.l.b16 %v409
    %v2058 = vunpack.c.h.b16 %v409
    %v2059 = vunpack.c.l.b16 %v410
    %v2060 = vunpack.c.h.b16 %v410
    %v2061 = vunpack.c.l.b16 %v411
    %v2062 = vunpack.c.h.b16 %v411
    %v2063 = vunpack.c.l.b16 %v412
    %v2064 = vunpack.c.h.b16 %v412
    %v2065 = vunpack.c.l.b16 %v413
    %v2066 = vunpack.c.h.b16 %v413
    %v2067 = vunpack.c.l.b16 %v414
    %v2068 = vunpack.c.h.b16 %v414
    %v2069 = vunpack.c.l.b16 %v415
    %v2070 = vunpack.c.h.b16 %v415
    %v2071 = vunpack.c.l.b16 %v416
    %v2072 = vunpack.c.h.b16 %v416
    %v2073 = vunpack.c.l.b16 %v417
    %v2074 = vunpack.c.h.b16 %v417
    %v2075 = vunpack.c.l.b16 %v418
    %v2076 = vunpack.c.h.b16 %v418
    %v2077 = vunpack.c.l.b16 %v419
    %v2078 = vunpack.c.h.b16 %v419
    %v2079 = vunpack.c.l.b16 %v420
    %v2080 = vunpack.c.h.b16 %v420
    %v2081 = vunpack.c.l.b16 %v421
    %v2082 = vunpack.c.h.b16 %v421
    %v2083 = vunpack.c.l.b16 %v422
    %v2084 = vunpack.c.h.b16 %v422
    %v2085 = vunpack.c.l.b16 %v423
    %v2086 = vunpack.c.h.b16 %v423
    %v2087 = vunpack.c.l.b16 %v424
    %v2088 = vunpack.c.h.b16 %v424
    %v2089 = vunpack.c.l.b16 %v425
    %v2090 = vunpack.c.h.b16 %v425
    %v2091 = vunpack.c.l.b16 %v426
    %v2092 = vunpack.c.h.b16 %v426
    %v2093 = vunpack.c.l.b16 %v427
    %v2094 = vunpack.c.h.b16 %v427
    %v2095 = vunpack.c.l.b16 %v428
    %v2096 = vunpack.c.h.b16 %v428
    %v2097 = vunpack.c.l.b16 %v429
    %v2098 = vunpack.c.h.b16 %v429
    %v2099 = vunpack.c.l.b16 %v430
    %v2100 = vunpack.c.h.b16 %v430
    %v2101 = vunpack.c.l.b16 %v431
    %v2102 = vunpack.c.h.b16 %v431
    %v2103 = vunpack.c.l.b16 %v432
    %v2104 = vunpack.c.h.b16 %v432
    %v2105 = vunpack.c.l.b16 %v433
    %v2106 = vunpack.c.h.b16 %v433
    %v2107 = vunpack.c.l.b16 %v434
    %v2108 = vunpack.c.h.b16 %v434
    %v2109 = vunpack.c.l.b16 %v435
    %v2110 = vunpack.c.h.b16 %v435
    %v2111 = vunpack.c.l.b16 %v436
    %v2112 = vunpack.c.h.b16 %v436
    %v2113 = vunpack.c.l.b16 %v437
    %v2114 = vunpack.c.h.b16 %v437
    %v2115 = vunpack.c.l.b16 %v438
    %v2116 = vunpack.c.h.b16 %v438
    %v2117 = vunpack.c.l.b16 %v439
    %v2118 = vunpack.c.h.b16 %v439
    %v2119 = vunpack.c.l.b16 %v440
    %v2120 = vunpack.c.h.b16 %v440
    %v2121 = vunpack.c.l.b16 %v441
    %v2122 = vunpack.c.h.b16 %v441
    %v2123 = vunpack.c.l.b16 %v442
    %v2124 = vunpack.c.h.b16 %v442
    %v2125 = vunpack.c.l.b16 %v443
    %v2126 = vunpack.c.h.b16 %v443
    %v2127 = vunpack.c.l.b16 %v444
    %v2128 = vunpack.c.h.b16 %v444
    %v2129 = vunpack.c.l.b16 %v445
    %v2130 = vunpack.c.h.b16 %v445
    %v2131 = vunpack.c.l.b16 %v446
    %v2132 = vunpack.c.h.b16 %v446
    %v2133 = vunpack.c.l.b16 %v447
    %v2134 = vunpack.c.h.b16 %v447
    %v2135 = vunpack.c.l.b16 %v448
    %v2136 = vunpack.c.h.b16 %v448
    %v2137 = vunpack.c.l.b16 %v449
    %v2138 = vunpack.c.h.b16 %v449
    %v2139 = vunpack.c.l.b16 %v450
    %v2140 = vunpack.c.h.b16 %v450
    %v2141 = vunpack.c.l.b16 %v451
    %v2142 = vunpack.c.h.b16 %v451
    %v2143 = vunpack.c.l.b16 %v452
    %v2144 = vunpack.c.h.b16 %v452
    %v2145 = vunpack.c.l.b16 %v453
    %v2146 = vunpack.c.h.b16 %v453
    %v2147 = vunpack.c.l.b16 %v454
    %v2148 = vunpack.c.h.b16 %v454
    %v2149 = vunpack.c.l.b16 %v455
    %v2150 = vunpack.c.h.b16 %v455
    %v2151 = vunpack.c.l.b16 %v456
    %v2152 = vunpack.c.h.b16 %v456
    %v2153 = vunpack.c.l.b16 %v457
    %v2154 = vunpack.c.h.b16 %v457
    %v2155 = vunpack.c.l.b16 %v458
    %v2156 = vunpack.c.h.b16 %v458
    %v2157 = vunpack.c.l.b16 %v459
    %v2158 = vunpack.c.h.b16 %v459
    %v2159 = vunpack.c.l.b16 %v460
    %v2160 = vunpack.c.h.b16 %v460
    %v2161 = vunpack.c.l.b16 %v461
    %v2162 = vunpack.c.h.b16 %v461
    %v2163 = vunpack.c.l.b16 %v462
    %v2164 = vunpack.c.h.b16 %v462
    %v2165 = vunpack.c.l.b16 %v463
    %v2166 = vunpack.c.h.b16 %v463
    %v2167 = vunpack.c.l.b16 %v464
    %v2168 = vunpack.c.h.b16 %v464
    %v2169 = vunpack.c.l.b16 %v465
    %v2170 = vunpack.c.h.b16 %v465
    %v2171 = vunpack.c.l.b16 %v466
    %v2172 = vunpack.c.h.b16 %v466
    %v2173 = vunpack.c.l.b16 %v467
    %v2174 = vunpack.c.h.b16 %v467
    %v2175 = vunpack.c.l.b16 %v468
    %v2176 = vunpack.c.h.b16 %v468
    %v2177 = vunpack.c.l.b16 %v469
    %v2178 = vunpack.c.h.b16 %v469
    %v2179 = vunpack.c.l.b16 %v470
    %v2180 = vunpack.c.h.b16 %v470
    %v2181 = vunpack.c.l.b16 %v471
    %v2182 = vunpack.c.h.b16 %v471
    %v2183 = vunpack.c.l.b16 %v472
    %v2184 = vunpack.c.h.b16 %v472
    %v2185 = vunpack.c.l.b16 %v473
    %v2186 = vunpack.c.h.b16 %v473
    %v2187 = vunpack.c.l.b16 %v474
    %v2188 = vunpack.c.h.b16 %v474
    %v2189 = vunpack.c.l.b16 %v475
    %v2190 = vunpack.c.h.b16 %v475
    %v2191 = vunpack.c.l.b16 %v476
    %v2192 = vunpack.c.h.b16 %v476
    %v2193 = vunpack.c.l.b16 %v477
    %v2194 = vunpack.c.h.b16 %v477
    %v2195 = vunpack.c.l.b16 %v478
    %v2196 = vunpack.c.h.b16 %v478
    %v2197 = vunpack.c.l.b16 %v479
    %v2198 = vunpack.c.h.b16 %v479
    %v2199 = vunpack.c.l.b16 %v480
    %v2200 = vunpack.c.h.b16 %v480
    %v2201 = vunpack.c.l.b16 %v481
    %v2202 = vunpack.c.h.b16 %v481
    %v2203 = vunpack.c.l.b16 %v482
    %v2204 = vunpack.c.h.b16 %v482
    %v2205 = vunpack.c.l.b16 %v483
    %v2206 = vunpack.c.h.b16 %v483
    %v2207 = vunpack.c.l.b16 %v484
    %v2208 = vunpack.c.h.b16 %v484
    %v2209 = vunpack.c.l.b16 %v485
    %v2210 = vunpack.c.h.b16 %v485
    %v2211 = vunpack.c.l.b16 %v486
    %v2212 = vunpack.c.h.b16 %v486
    %v2213 = vunpack.c.l.b16 %v487
    %v2214 = vunpack.c.h.b16 %v487
    %v2215 = vunpack.c.l.b16 %v488
    %v2216 = vunpack.c.h.b16 %v488
    %v2217 = vunpack.c.l.b16 %v489
    %v2218 = vunpack.c.h.b16 %v489
    %v2219 = vunpack.c.l.b16 %v490
    %v2220 = vunpack.c.h.b16 %v490
    %v2221 = vunpack.c.l.b16 %v491
    %v2222 = vunpack.c.h.b16 %v491
    %v2223 = vunpack.c.l.b16 %v492
    %v2224 = vunpack.c.h.b16 %v492
    %v2225 = vunpack.c.l.b16 %v493
    %v2226 = vunpack.c.h.b16 %v493
    %v2227 = vunpack.c.l.b16 %v494
    %v2228 = vunpack.c.h.b16 %v494
    %v2229 = vunpack.c.l.b16 %v495
    %v2230 = vunpack.c.h.b16 %v495
    %v2231 = vunpack.c.l.b16 %v496
    %v2232 = vunpack.c.h.b16 %v496
    %v2233 = vunpack.c.l.b16 %v497
    %v2234 = vunpack.c.h.b16 %v497
    %v2235 = vunpack.c.l.b16 %v498
    %v2236 = vunpack.c.h.b16 %v498
    %v2237 = vunpack.c.l.b16 %v499
    %v2238 = vunpack.c.h.b16 %v499
    %v2239 = vunpack.c.l.b16 %v500
    %v2240 = vunpack.c.h.b16 %v500
    %v2241 = vunpack.c.l.b16 %v501
    %v2242 = vunpack.c.h.b16 %v501
    %v2243 = vunpack.c.l.b16 %v502
    %v2244 = vunpack.c.h.b16 %v502
    %v2245 = vunpack.c.l.b16 %v503
    %v2246 = vunpack.c.h.b16 %v503
    %v2247 = vunpack.c.l.b16 %v504
    %v2248 = vunpack.c.h.b16 %v504
    %v2249 = vunpack.c.l.b16 %v505
    %v2250 = vunpack.c.h.b16 %v505
    %v2251 = vunpack.c.l.b16 %v506
    %v2252 = vunpack.c.h.b16 %v506
    %v2253 = vunpack.c.l.b16 %v507
    %v2254 = vunpack.c.h.b16 %v507
    %v2255 = vunpack.c.l.b16 %v508
    %v2256 = vunpack.c.h.b16 %v508
    %v2257 = vunpack.c.l.b16 %v509
    %v2258 = vunpack.c.h.b16 %v509
    %v2259 = vunpack.c.l.b16 %v510
    %v2260 = vunpack.c.h.b16 %v510
    %v2261 = vunpack.c.l.b16 %v511
    %v2262 = vunpack.c.h.b16 %v511
    %v2263 = vunpack.c.l.b16 %v512
    %v2264 = vunpack.c.h.b16 %v512
    %v2265 = vunpack.c.l.b16 %v513
    %v2266 = vunpack.c.h.b16 %v513
    %v2267 = vunpack.c.l.b16 %v514
    %v2268 = vunpack.c.h.b16 %v514
    %v2269 = vunpack.c.l.b16 %v515
    %v2270 = vunpack.c.h.b16 %v515
    %v2271 = vunpack.c.l.b16 %v516
    %v2272 = vunpack.c.h.b16 %v516
    %v2273 = vunpack.c.l.b16 %v517
    %v2274 = vunpack.c.h.b16 %v517
    %v2275 = vunpack.c.l.b16 %v518
    %v2276 = vunpack.c.h.b16 %v518
    %v2277 = vunpack.c.l.b16 %v519
    %v2278 = vunpack.c.h.b16 %v519
    %v2279 = vunpack.c.l.b16 %v520
    %v2280 = vunpack.c.h.b16 %v520
    %v2281 = vunpack.c.l.b16 %v521
    %v2282 = vunpack.c.h.b16 %v521
    %v2283 = vunpack.c.l.b16 %v522
    %v2284 = vunpack.c.h.b16 %v522
    %v2285 = vunpack.c.l.b16 %v523
    %v2286 = vunpack.c.h.b16 %v523
    %v2287 = vunpack.c.l.b16 %v524
    %v2288 = vunpack.c.h.b16 %v524
    %v2289 = vunpack.c.l.b16 %v525
    %v2290 = vunpack.c.h.b16 %v525
    %v2291 = vunpack.c.l.b16 %v526
    %v2292 = vunpack.c.h.b16 %v526
    %v2293 = vunpack.c.l.b16 %v527
    %v2294 = vunpack.c.h.b16 %v527
    %v2295 = vunpack.c.l.b16 %v528
    %v2296 = vunpack.c.h.b16 %v528
    %v2297 = vunpack.c.l.b16 %v529
    %v2298 = vunpack.c.h.b16 %v529
    %v2299 = vunpack.c.l.b16 %v530
    %v2300 = vunpack.c.h.b16 %v530
    %v2301 = vunpack.c.l.b16 %v531
    %v2302 = vunpack.c.h.b16 %v531
    %v2303 = vunpack.c.l.b16 %v532
    %v2304 = vunpack.c.h.b16 %v532
    %v2305 = vunpack.c.l.b16 %v533
    %v2306 = vunpack.c.h.b16 %v533
    %v2307 = vunpack.c.l.b16 %v534
    %v2308 = vunpack.c.h.b16 %v534
    %v2309 = vunpack.c.l.b16 %v535
    %v2310 = vunpack.c.h.b16 %v535
    %v2311 = vunpack.c.l.b16 %v536
    %v2312 = vunpack.c.h.b16 %v536
    %v2313 = vunpack.c.l.b16 %v537
    %v2314 = vunpack.c.h.b16 %v537
    %v2315 = vunpack.c.l.b16 %v538
    %v2316 = vunpack.c.h.b16 %v538
    %v2317 = vunpack.c.l.b16 %v539
    %v2318 = vunpack.c.h.b16 %v539
    %v2319 = vunpack.c.l.b16 %v540
    %v2320 = vunpack.c.h.b16 %v540
    %v2321 = vunpack.c.l.b16 %v541
    %v2322 = vunpack.c.h.b16 %v541
    %v2323 = vunpack.c.l.b16 %v542
    %v2324 = vunpack.c.h.b16 %v542
    %v2325 = vunpack.c.l.b16 %v543
    %v2326 = vunpack.c.h.b16 %v543
    %v2327 = vunpack.c.l.b16 %v544
    %v2328 = vunpack.c.h.b16 %v544
    %v2329 = vunpack.c.l.b16 %v545
    %v2330 = vunpack.c.h.b16 %v545
    %v2331 = vunpack.c.l.b16 %v546
    %v2332 = vunpack.c.h.b16 %v546
    %v2333 = vunpack.c.l.b16 %v547
    %v2334 = vunpack.c.h.b16 %v547
    %v2335 = vunpack.c.l.b16 %v548
    %v2336 = vunpack.c.h.b16 %v548
    %v2337 = vunpack.c.l.b16 %v549
    %v2338 = vunpack.c.h.b16 %v549
    %v2339 = vunpack.c.l.b16 %v550
    %v2340 = vunpack.c.h.b16 %v550
    %v2341 = vunpack.c.l.b16 %v551
    %v2342 = vunpack.c.h.b16 %v551
    %v2343 = vunpack.c.l.b16 %v552
    %v2344 = vunpack.c.h.b16 %v552
    %v2345 = vunpack.c.l.b16 %v553
    %v2346 = vunpack.c.h.b16 %v553
    %v2347 = vunpack.c.l.b16 %v554
    %v2348 = vunpack.c.h.b16 %v554
    %v2349 = vunpack.c.l.b16 %v555
    %v2350 = vunpack.c.h.b16 %v555
    %v2351 = vunpack.c.l.b16 %v556
    %v2352 = vunpack.c.h.b16 %v556
    %v2353 = vunpack.c.l.b16 %v557
    %v2354 = vunpack.c.h.b16 %v557
    %v2355 = vunpack.c.l.b16 %v558
    %v2356 = vunpack.c.h.b16 %v558
    %v2357 = vunpack.c.l.b16 %v559
    %v2358 = vunpack.c.h.b16 %v559
    %v2359 = vunpack.c.l.b16 %v560
    %v2360 = vunpack.c.h.b16 %v560
    %v2361 = vunpack.c.l.b16 %v561
    %v2362 = vunpack.c.h.b16 %v561
    %v2363 = vunpack.c.l.b16 %v562
    %v2364 = vunpack.c.h.b16 %v562
    %v2365 = vunpack.c.l.b16 %v563
    %v2366 = vunpack.c.h.b16 %v563
    %v2367 = vunpack.c.l.b16 %v564
    %v2368 = vunpack.c.h.b16 %v564
    %v2369 = vunpack.c.l.b16 %v565
    %v2370 = vunpack.c.h.b16 %v565
    %v2371 = vunpack.c.l.b16 %v566
    %v2372 = vunpack.c.h.b16 %v566
    %v2373 = vunpack.c.l.b16 %v567
    %v2374 = vunpack.c.h.b16 %v567
    %v2375 = vunpack.c.l.b16 %v568
    %v2376 = vunpack.c.h.b16 %v568
    %v2377 = vunpack.c.l.b16 %v569
    %v2378 = vunpack.c.h.b16 %v569
    %v2379 = vunpack.c.l.b16 %v570
    %v2380 = vunpack.c.h.b16 %v570
    %v2381 = vunpack.c.l.b16 %v571
    %v2382 = vunpack.c.h.b16 %v571
    %v2383 = vunpack.c.l.b16 %v572
    %v2384 = vunpack.c.h.b16 %v572
    %v2385 = vunpack.c.l.b16 %v573
    %v2386 = vunpack.c.h.b16 %v573
    %v2387 = vunpack.c.l.b16 %v574
    %v2388 = vunpack.c.h.b16 %v574
    %v2389 = vunpack.c.l.b16 %v575
    %v2390 = vunpack.c.h.b16 %v575
    %v2391 = vunpack.c.l.b16 %v576
    %v2392 = vunpack.c.h.b16 %v576
    %v2393 = vunpack.c.l.b16 %v577
    %v2394 = vunpack.c.h.b16 %v577
    %v2395 = vunpack.c.l.b16 %v578
    %v2396 = vunpack.c.h.b16 %v578
    %v2397 = vunpack.c.l.b16 %v579
    %v2398 = vunpack.c.h.b16 %v579
    %v2399 = vunpack.c.l.b16 %v580
    %v2400 = vunpack.c.h.b16 %v580
    %v2401 = vunpack.c.l.b16 %v581
    %v2402 = vunpack.c.h.b16 %v581
    %v2403 = vunpack.c.l.b16 %v582
    %v2404 = vunpack.c.h.b16 %v582
    %v2405 = vunpack.c.l.b16 %v583
    %v2406 = vunpack.c.h.b16 %v583
    %v2407 = vunpack.c.l.b16 %v584
    %v2408 = vunpack.c.h.b16 %v584
    %v2409 = vunpack.c.l.b16 %v585
    %v2410 = vunpack.c.h.b16 %v585
    %v2411 = vunpack.c.l.b16 %v586
    %v2412 = vunpack.c.h.b16 %v586
    %v2413 = vunpack.c.l.b16 %v587
    %v2414 = vunpack.c.h.b16 %v587
    %v2415 = vunpack.c.l.b16 %v588
    %v2416 = vunpack.c.h.b16 %v588
    %v2417 = vunpack.c.l.b16 %v589
    %v2418 = vunpack.c.h.b16 %v589
    %v2419 = vunpack.c.l.b16 %v590
    %v2420 = vunpack.c.h.b16 %v590
    %v2421 = vunpack.c.l.b16 %v591
    %v2422 = vunpack.c.h.b16 %v591
    %v2423 = vunpack.c.l.b16 %v592
    %v2424 = vunpack.c.h.b16 %v592
    %v2425 = vunpack.c.l.b16 %v593
    %v2426 = vunpack.c.h.b16 %v593
    %v2427 = vunpack.c.l.b16 %v594
    %v2428 = vunpack.c.h.b16 %v594
    %v2429 = vunpack.c.l.b16 %v595
    %v2430 = vunpack.c.h.b16 %v595
    %v2431 = vunpack.c.l.b16 %v596
    %v2432 = vunpack.c.h.b16 %v596
    %v2433 = vunpack.c.l.b16 %v597
    %v2434 = vunpack.c.h.b16 %v597
    %v2435 = vunpack.c.l.b16 %v598
    %v2436 = vunpack.c.h.b16 %v598
    %v2437 = vunpack.c.l.b16 %v599
    %v2438 = vunpack.c.h.b16 %v599
    %v2439 = vunpack.c.l.b16 %v600
    %v2440 = vunpack.c.h.b16 %v600
    %v2441 = vunpack.c.l.b16 %v601
    %v2442 = vunpack.c.h.b16 %v601
    %v2443 = vunpack.c.l.b16 %v602
    %v2444 = vunpack.c.h.b16 %v602
    %v2445 = vunpack.c.l.b16 %v603
    %v2446 = vunpack.c.h.b16 %v603
    %v2447 = vunpack.c.l.b16 %v604
    %v2448 = vunpack.c.h.b16 %v604
    %v2449 = vunpack.c.l.b16 %v605
    %v2450 = vunpack.c.h.b16 %v605
    %v2451 = vunpack.c.l.b16 %v606
    %v2452 = vunpack.c.h.b16 %v606
    %v2453 = vunpack.c.l.b16 %v607
    %v2454 = vunpack.c.h.b16 %v607
    %v2455 = vunpack.c.l.b16 %v608
    %v2456 = vunpack.c.h.b16 %v608
    %v2457 = vunpack.c.l.b16 %v609
    %v2458 = vunpack.c.h.b16 %v609
    %v2459 = vunpack.c.l.b16 %v610
    %v2460 = vunpack.c.h.b16 %v610
    %v2461 = vunpack.c.l.b16 %v611
    %v2462 = vunpack.c.h.b16 %v611
    %v2463 = vunpack.c.l.b16 %v612
    %v2464 = vunpack.c.h.b16 %v612
    %v2465 = vunpack.c.l.b16 %v613
    %v2466 = vunpack.c.h.b16 %v613
    %v2467 = vunpack.c.l.b16 %v614
    %v2468 = vunpack.c.h.b16 %v614
    %v2469 = vunpack.c.l.b16 %v615
    %v2470 = vunpack.c.h.b16 %v615
    %v2471 = vunpack.c.l.b16 %v616
    %v2472 = vunpack.c.h.b16 %v616
    %v2473 = vunpack.c.l.b16 %v617
    %v2474 = vunpack.c.h.b16 %v617
    %v2475 = vunpack.c.l.b16 %v618
    %v2476 = vunpack.c.h.b16 %v618
    %v2477 = vunpack.c.l.b16 %v619
    %v2478 = vunpack.c.h.b16 %v619
    %v2479 = vunpack.c.l.b16 %v620
    %v2480 = vunpack.c.h.b16 %v620
    %v2481 = vunpack.c.l.b16 %v621
    %v2482 = vunpack.c.h.b16 %v621
    %v2483 = vunpack.c.l.b16 %v622
    %v2484 = vunpack.c.h.b16 %v622
    %v2485 = vunpack.c.l.b16 %v623
    %v2486 = vunpack.c.h.b16 %v623
    %v2487 = vunpack.c.l.b16 %v624
    %v2488 = vunpack.c.h.b16 %v624
    %v2489 = vunpack.c.l.b16 %v625
    %v2490 = vunpack.c.h.b16 %v625
    %v2491 = vunpack.c.l.b16 %v626
    %v2492 = vunpack.c.h.b16 %v626
    %v2493 = vunpack.c.l.b16 %v627
    %v2494 = vunpack.c.h.b16 %v627
    %v2495 = vunpack.c.l.b16 %v628
    %v2496 = vunpack.c.h.b16 %v628
    %v2497 = vunpack.c.l.b16 %v629
    %v2498 = vunpack.c.h.b16 %v629
    %v2499 = vunpack.c.l.b16 %v630
    %v2500 = vunpack.c.h.b16 %v630
    %v2501 = vunpack.c.l.b16 %v631
    %v2502 = vunpack.c.h.b16 %v631
    %v2503 = vunpack.c.l.b16 %v632
    %v2504 = vunpack.c.h.b16 %v632
    %v2505 = vunpack.c.l.b16 %v633
    %v2506 = vunpack.c.h.b16 %v633
    %v2507 = vunpack.c.l.b16 %v634
    %v2508 = vunpack.c.h.b16 %v634
    %v2509 = vunpack.c.l.b16 %v635
    %v2510 = vunpack.c.h.b16 %v635
    %v2511 = vunpack.c.l.b16 %v636
    %v2512 = vunpack.c.h.b16 %v636
    %v2513 = vunpack.c.l.b16 %v637
    %v2514 = vunpack.c.h.b16 %v637
    %v2515 = vunpack.c.l.b16 %v638
    %v2516 = vunpack.c.h.b16 %v638
    %v2517 = vunpack.c.l.b16 %v639
    %v2518 = vunpack.c.h.b16 %v639
    %v2519 = vunpack.c.l.b16 %v640
    %v2520 = vunpack.c.h.b16 %v640
    %v2521 = vunpack.c.l.b16 %v641
    %v2522 = vunpack.c.h.b16 %v641
    %v2523 = vunpack.c.l.b16 %v642
    %v2524 = vunpack.c.h.b16 %v642
    %v2525 = vunpack.c.l.b16 %v643
    %v2526 = vunpack.c.h.b16 %v643
    %v2527 = vunpack.c.l.b16 %v644
    %v2528 = vunpack.c.h.b16 %v644
    %v2529 = vunpack.c.l.b16 %v645
    %v2530 = vunpack.c.h.b16 %v645
    %v2531 = vunpack.c.l.b16 %v646
    %v2532 = vunpack.c.h.b16 %v646
    %v2533 = vunpack.c.l.b16 %v647
    %v2534 = vunpack.c.h.b16 %v647
    %v2535 = vunpack.c.l.b16 %v648
    %v2536 = vunpack.c.h.b16 %v648
    %v2537 = vunpack.c.l.b16 %v649
    %v2538 = vunpack.c.h.b16 %v649
    %v2539 = vunpack.c.l.b16 %v650
    %v2540 = vunpack.c.h.b16 %v650
    %v2541 = vunpack.c.l.b16 %v651
    %v2542 = vunpack.c.h.b16 %v651
    %v2543 = vpack.c.b16 %v1395, %v1391
    %v2544 = vpack.c.b16 %v1396, %v1392
    %v2545 = vpack.c.b16 %v1397, %v1393
    %v2546 = vpack.c.b16 %v1398, %v1394
    %v2547 = vpack.c.b16 %v1403, %v1399
    %v2548 = vpack.c.b16 %v1404, %v1400
    %v2549 = vpack.c.b16 %v1405, %v1401
    %v2550 = vpack.c.b16 %v1406, %v1402
    %v2551 = vpack.c.b16 %v1411, %v1407
    %v2552 = vpack.c.b16 %v1412, %v1408
    %v2553 = vpack.c.b16 %v1413, %v1409
    %v2554 = vpack.c.b16 %v1414, %v1410
    %v2555 = vpack.c.b16 %v1419, %v1415
    %v2556 = vpack.c.b16 %v1420, %v1416
    %v2557 = vpack.c.b16 %v1421, %v1417
    %v2558 = vpack.c.b16 %v1422, %v1418
    %v2559 = vpack.c.b16 %v1427, %v1423
    %v2560 = vpack.c.b16 %v1428, %v1424
    %v2561 = vpack.c.b16 %v1429, %v1425
    %v2562 = vpack.c.b16 %v1430, %v1426
    %v2563 = vpack.c.b16 %v1435, %v1431
    %v2564 = vpack.c.b16 %v1436, %v1432
    %v2565 = vpack.c.b16 %v1437, %v1433
    %v2566 = vpack.c.b16 %v1438, %v1434
    %v2567 = vpack.c.b16 %v1443, %v1439
    %v2568 = vpack.c.b16 %v1444, %v1440
    %v2569 = vpack.c.b16 %v1445, %v1441
    %v2570 = vpack.c.b16 %v1446, %v1442
    %v2571 = vpack.c.b16 %v1451, %v1447
    %v2572 = vpack.c.b16 %v1452, %v1448
    %v2573 = vpack.c.b16 %v1453, %v1449
    %v2574 = vpack.c.b16 %v1454, %v1450
    %v2575 = vpack.c.b16 %v1459, %v1455
    %v2576 = vpack.c.b16 %v1460, %v1456
    %v2577 = vpack.c.b16 %v1461, %v1457
    %v2578 = vpack.c.b16 %v1462, %v1458
    %v2579 = vpack.c.b16 %v1467, %v1463
    %v2580 = vpack.c.b16 %v1468, %v1464
    %v2581 = vpack.c.b16 %v1469, %v1465
    %v2582 = vpack.c.b16 %v1470, %v1466
    %v2583 = vpack.c.b16 %v1475, %v1471
    %v2584 = vpack.c.b16 %v1476, %v1472
    %v2585 = vpack.c.b16 %v1477, %v1473
    %v2586 = vpack.c.b16 %v1478, %v1474
    %v2587 = vpack.c.b16 %v1483, %v1479
    %v2588 = vpack.c.b16 %v1484, %v1480
    %v2589 = vpack.c.b16 %v1485, %v1481
    %v2590 = vpack.c.b16 %v1486, %v1482
    %v2591 = vpack.c.b16 %v1491, %v1487
    %v2592 = vpack.c.b16 %v1492, %v1488
    %v2593 = vpack.c.b16 %v1493, %v1489
    %v2594 = vpack.c.b16 %v1494, %v1490
    %v2595 = vpack.c.b16 %v1499, %v1495
    %v2596 = vpack.c.b16 %v1500, %v1496
    %v2597 = vpack.c.b16 %v1501, %v1497
    %v2598 = vpack.c.b16 %v1502, %v1498
    %v2599 = vpack.c.b16 %v1507, %v1503
    %v2600 = vpack.c.b16 %v1508, %v1504
    %v2601 = vpack.c.b16 %v1509, %v1505
    %v2602 = vpack.c.b16 %v1510, %v1506
    %v2603 = vpack.c.b16 %v1515, %v1511
    %v2604 = vpack.c.b16 %v1516, %v1512
    %v2605 = vpack.c.b16 %v1517, %v1513
    %v2606 = vpack.c.b16 %v1518, %v1514
    %v2607 = vpack.c.b16 %v1523, %v1519
    %v2608 = vpack.c.b16 %v1524, %v1520
    %v2609 = vpack.c.b16 %v1525, %v1521
    %v2610 = vpack.c.b16 %v1526, %v1522
    %v2611 = vpack.c.b16 %v1531, %v1527
    %v2612 = vpack.c.b16 %v1532, %v1528
    %v2613 = vpack.c.b16 %v1533, %v1529
    %v2614 = vpack.c.b16 %v1534, %v1530
    %v2615 = vpack.c.b16 %v1539, %v1535
    %v2616 = vpack.c.b16 %v1540, %v1536
    %v2617 = vpack.c.b16 %v1541, %v1537
    %v2618 = vpack.c.b16 %v1542, %v1538
    %v2619 = vpack.c.b16 %v1547, %v1543
    %v2620 = vpack.c.b16 %v1548, %v1544
    %v2621 = vpack.c.b16 %v1549, %v1545
    %v2622 = vpack.c.b16 %v1550, %v1546
    %v2623 = vpack.c.b16 %v1555, %v1551
    %v2624 = vpack.c.b16 %v1556, %v1552
    %v2625 = vpack.c.b16 %v1557, %v1553
    %v2626 = vpack.c.b16 %v1558, %v1554
    %v2627 = vpack.c.b16 %v1563, %v1559
    %v2628 = vpack.c.b16 %v1564, %v1560
    %v2629 = vpack.c.b16 %v1565, %v1561
    %v2630 = vpack.c.b16 %v1566, %v1562
    %v2631 = vpack.c.b16 %v1571, %v1567
    %v2632 = vpack.c.b16 %v1572, %v1568
    %v2633 = vpack.c.b16 %v1573, %v1569
    %v2634 = vpack.c.b16 %v1574, %v1570
    %v2635 = vpack.c.b16 %v1579, %v1575
    %v2636 = vpack.c.b16 %v1580, %v1576
    %v2637 = vpack.c.b16 %v1581, %v1577
    %v2638 = vpack.c.b16 %v1582, %v1578
    %v2639 = vpack.c.b16 %v1587, %v1583
    %v2640 = vpack.c.b16 %v1588, %v1584
    %v2641 = vpack.c.b16 %v1589, %v1585
    %v2642 = vpack.c.b16 %v1590, %v1586
    %v2643 = vpack.c.b16 %v1595, %v1591
    %v2644 = vpack.c.b16 %v1596, %v1592
    %v2645 = vpack.c.b16 %v1597, %v1593
    %v2646 = vpack.c.b16 %v1598, %v1594
    %v2647 = vpack.c.b16 %v1603, %v1599
    %v2648 = vpack.c.b16 %v1604, %v1600
    %v2649 = vpack.c.b16 %v1605, %v1601
    %v2650 = vpack.c.b16 %v1606, %v1602
    %v2651 = vpack.c.b16 %v1611, %v1607
    %v2652 = vpack.c.b16 %v1612, %v1608
    %v2653 = vpack.c.b16 %v1613, %v1609
    %v2654 = vpack.c.b16 %v1614, %v1610
    %v2655 = vpack.c.b16 %v1619, %v1615
    %v2656 = vpack.c.b16 %v1620, %v1616
    %v2657 = vpack.c.b16 %v1621, %v1617
    %v2658 = vpack.c.b16 %v1622, %v1618
    %v2659 = vpack.c.b16 %v1627, %v1623
    %v2660 = vpack.c.b16 %v1628, %v1624
    %v2661 = vpack.c.b16 %v1629, %v1625
    %v2662 = vpack.c.b16 %v1630, %v1626
    %v2663 = vpack.c.b16 %v1635, %v1631
    %v2664 = vpack.c.b16 %v1636, %v1632
    %v2665 = vpack.c.b16 %v1637, %v1633
    %v2666 = vpack.c.b16 %v1638, %v1634
    %v2667 = vpack.c.b16 %v1643, %v1639
    %v2668 = vpack.c.b16 %v1644, %v1640
    %v2669 = vpack.c.b16 %v1645, %v1641
    %v2670 = vpack.c.b16 %v1646, %v1642
    %v2671 = vpack.c.b16 %v1651, %v1647
    %v2672 = vpack.c.b16 %v1652, %v1648
    %v2673 = vpack.c.b16 %v1653, %v1649
    %v2674 = vpack.c.b16 %v1654, %v1650
    %v2675 = vpack.c.b16 %v1659, %v1655
    %v2676 = vpack.c.b16 %v1660, %v1656
    %v2677 = vpack.c.b16 %v1661, %v1657
    %v2678 = vpack.c.b16 %v1662, %v1658
    %v2679 = vpack.c.b16 %v1667, %v1663
    %v2680 = vpack.c.b16 %v1668, %v1664
    %v2681 = vpack.c.b16 %v1669, %v1665
    %v2682 = vpack.c.b16 %v1670, %v1666
    %v2683 = vpack.c.b16 %v1675, %v1671
    %v2684 = vpack.c.b16 %v1676, %v1672
    %v2685 = vpack.c.b16 %v1677, %v1673
    %v2686 = vpack.c.b16 %v1678, %v1674
    %v2687 = vpack.c.b16 %v1683, %v1679
    %v2688 = vpack.c.b16 %v1684, %v1680
    %v2689 = vpack.c.b16 %v1685, %v1681
    %v2690 = vpack.c.b16 %v1686, %v1682
    %v2691 = vpack.c.b16 %v1691, %v1687
    %v2692 = vpack.c.b16 %v1692, %v1688
    %v2693 = vpack.c.b16 %v1693, %v1689
    %v2694 = vpack.c.b16 %v1694, %v1690
    %v2695 = vpack.c.b16 %v1699, %v1695
    %v2696 = vpack.c.b16 %v1700, %v1696
    %v2697 = vpack.c.b16 %v1701, %v1697
    %v2698 = vpack.c.b16 %v1702, %v1698
    %v2699 = vpack.c.b16 %v1707, %v1703
    %v2700 = vpack.c.b16 %v1708, %v1704
    %v2701 = vpack.c.b16 %v1709, %v1705
    %v2702 = vpack.c.b16 %v1710, %v1706
    %v2703 = vpack.c.b16 %v1715, %v1711
    %v2704 = vpack.c.b16 %v1716, %v1712
    %v2705 = vpack.c.b16 %v1717, %v1713
    %v2706 = vpack.c.b16 %v1718, %v1714
    %v2707 = vpack.c.b16 %v1723, %v1719
    %v2708 = vpack.c.b16 %v1724, %v1720
    %v2709 = vpack.c.b16 %v1725, %v1721
    %v2710 = vpack.c.b16 %v1726, %v1722
    %v2711 = vpack.c.b16 %v1731, %v1727
    %v2712 = vpack.c.b16 %v1732, %v1728
    %v2713 = vpack.c.b16 %v1733, %v1729
    %v2714 = vpack.c.b16 %v1734, %v1730
    %v2715 = vpack.c.b16 %v1739, %v1735
    %v2716 = vpack.c.b16 %v1740, %v1736
    %v2717 = vpack.c.b16 %v1741, %v1737
    %v2718 = vpack.c.b16 %v1742, %v1738
    %v2719 = vpack.c.b16 %v1747, %v1743
    %v2720 = vpack.c.b16 %v1748, %v1744
    %v2721 = vpack.c.b16 %v1749, %v1745
    %v2722 = vpack.c.b16 %v1750, %v1746
    %v2723 = vpack.c.b16 %v1755, %v1751
    %v2724 = vpack.c.b16 %v1756, %v1752
    %v2725 = vpack.c.b16 %v1757, %v1753
    %v2726 = vpack.c.b16 %v1758, %v1754
    %v2727 = vpack.c.b16 %v1763, %v1759
    %v2728 = vpack.c.b16 %v1764, %v1760
    %v2729 = vpack.c.b16 %v1765, %v1761
    %v2730 = vpack.c.b16 %v1766, %v1762
    %v2731 = vpack.c.b16 %v1771, %v1767
    %v2732 = vpack.c.b16 %v1772, %v1768
    %v2733 = vpack.c.b16 %v1773, %v1769
    %v2734 = vpack.c.b16 %v1774, %v1770
    %v2735 = vpack.c.b16 %v1779, %v1775
    %v2736 = vpack.c.b16 %v1780, %v1776
    %v2737 = vpack.c.b16 %v1781, %v1777
    %v2738 = vpack.c.b16 %v1782, %v1778
    %v2739 = vpack.c.b16 %v1787, %v1783
    %v2740 = vpack.c.b16 %v1788, %v1784
    %v2741 = vpack.c.b16 %v1789, %v1785
    %v2742 = vpack.c.b16 %v1790, %v1786
    %v2743 = vpack.c.b16 %v1795, %v1791
    %v2744 = vpack.c.b16 %v1796, %v1792
    %v2745 = vpack.c.b16 %v1797, %v1793
    %v2746 = vpack.c.b16 %v1798, %v1794
    %v2747 = vpack.c.b16 %v1803, %v1799
    %v2748 = vpack.c.b16 %v1804, %v1800
    %v2749 = vpack.c.b16 %v1805, %v1801
    %v2750 = vpack.c.b16 %v1806, %v1802
    %v2751 = vpack.c.b16 %v1811, %v1807
    %v2752 = vpack.c.b16 %v1812, %v1808
    %v2753 = vpack.c.b16 %v1813, %v1809
    %v2754 = vpack.c.b16 %v1814, %v1810
    %v2755 = vpack.c.b16 %v1819, %v1815
    %v2756 = vpack.c.b16 %v1820, %v1816
    %v2757 = vpack.c.b16 %v1821, %v1817
    %v2758 = vpack.c.b16 %v1822, %v1818
    %v2759 = vpack.c.b16 %v1827, %v1823
    %v2760 = vpack.c.b16 %v1828, %v1824
    %v2761 = vpack.c.b16 %v1829, %v1825
    %v2762 = vpack.c.b16 %v1830, %v1826
    %v2763 = vpack.c.b16 %v1835, %v1831
    %v2764 = vpack.c.b16 %v1836, %v1832
    %v2765 = vpack.c.b16 %v1837, %v1833
    %v2766 = vpack.c.b16 %v1838, %v1834
    %v2767 = vpack.c.b16 %v1843, %v1839
    %v2768 = vpack.c.b16 %v1844, %v1840
    %v2769 = vpack.c.b16 %v1845, %v1841
    %v2770 = vpack.c.b16 %v1846, %v1842
    %v2771 = vpack.c.b16 %v1851, %v1847
    %v2772 = vpack.c.b16 %v1852, %v1848
    %v2773 = vpack.c.b16 %v1853, %v1849
    %v2774 = vpack.c.b16 %v1854, %v1850
    %v2775 = vpack.c.b16 %v1859, %v1855
    %v2776 = vpack.c.b16 %v1860, %v1856
    %v2777 = vpack.c.b16 %v1861, %v1857
    %v2778 = vpack.c.b16 %v1862, %v1858
    %v2779 = vpack.c.b16 %v1867, %v1863
    %v2780 = vpack.c.b16 %v1868, %v1864
    %v2781 = vpack.c.b16 %v1869, %v1865
    %v2782 = vpack.c.b16 %v1870, %v1866
    %v2783 = vpack.c.b16 %v1875, %v1871
    %v2784 = vpack.c.b16 %v1876, %v1872
    %v2785 = vpack.c.b16 %v1877, %v1873
    %v2786 = vpack.c.b16 %v1878, %v1874
    %v2787 = vpack.c.b16 %v1883, %v1879
    %v2788 = vpack.c.b16 %v1884, %v1880
    %v2789 = vpack.c.b16 %v1885, %v1881
    %v2790 = vpack.c.b16 %v1886, %v1882
    %v2791 = vpack.c.b16 %v1891, %v1887
    %v2792 = vpack.c.b16 %v1892, %v1888
    %v2793 = vpack.c.b16 %v1893, %v1889
    %v2794 = vpack.c.b16 %v1894, %v1890
    %v2795 = vpack.c.b16 %v1899, %v1895
    %v2796 = vpack.c.b16 %v1900, %v1896
    %v2797 = vpack.c.b16 %v1901, %v1897
    %v2798 = vpack.c.b16 %v1902, %v1898
    %v2799 = vpack.c.b16 %v1907, %v1903
    %v2800 = vpack.c.b16 %v1908, %v1904
    %v2801 = vpack.c.b16 %v1909, %v1905
    %v2802 = vpack.c.b16 %v1910, %v1906
    %v2803 = vpack.c.b16 %v1915, %v1911
    %v2804 = vpack.c.b16 %v1916, %v1912
    %v2805 = vpack.c.b16 %v1917, %v1913
    %v2806 = vpack.c.b16 %v1918, %v1914
    %v2807 = vpack.c.b16 %v1923, %v1919
    %v2808 = vpack.c.b16 %v1924, %v1920
    %v2809 = vpack.c.b16 %v1925, %v1921
    %v2810 = vpack.c.b16 %v1926, %v1922
    %v2811 = vpack.c.b16 %v1931, %v1927
    %v2812 = vpack.c.b16 %v1932, %v1928
    %v2813 = vpack.c.b16 %v1933, %v1929
    %v2814 = vpack.c.b16 %v1934, %v1930
    %v2815 = vpack.c.b16 %v1939, %v1935
    %v2816 = vpack.c.b16 %v1940, %v1936
    %v2817 = vpack.c.b16 %v1941, %v1937
    %v2818 = vpack.c.b16 %v1942, %v1938
    %v2819 = vpack.c.b16 %v1947, %v1943
    %v2820 = vpack.c.b16 %v1948, %v1944
    %v2821 = vpack.c.b16 %v1949, %v1945
    %v2822 = vpack.c.b16 %v1950, %v1946
    %v2823 = vpack.c.b16 %v1955, %v1951
    %v2824 = vpack.c.b16 %v1956, %v1952
    %v2825 = vpack.c.b16 %v1957, %v1953
    %v2826 = vpack.c.b16 %v1958, %v1954
    %v2827 = vpack.c.b16 %v1963, %v1959
    %v2828 = vpack.c.b16 %v1964, %v1960
    %v2829 = vpack.c.b16 %v1965, %v1961
    %v2830 = vpack.c.b16 %v1966, %v1962
    %v2831 = vpack.c.b16 %v1971, %v1967
    %v2832 = vpack.c.b16 %v1972, %v1968
    %v2833 = vpack.c.b16 %v1973, %v1969
    %v2834 = vpack.c.b16 %v1974, %v1970
    %v2835 = vpack.c.b16 %v1979, %v1975
    %v2836 = vpack.c.b16 %v1980, %v1976
    %v2837 = vpack.c.b16 %v1981, %v1977
    %v2838 = vpack.c.b16 %v1982, %v1978
    %v2839 = vpack.c.b16 %v1987, %v1983
    %v2840 = vpack.c.b16 %v1988, %v1984
    %v2841 = vpack.c.b16 %v1989, %v1985
    %v2842 = vpack.c.b16 %v1990, %v1986
    %v2843 = vpack.c.b16 %v1995, %v1991
    %v2844 = vpack.c.b16 %v1996, %v1992
    %v2845 = vpack.c.b16 %v1997, %v1993
    %v2846 = vpack.c.b16 %v1998, %v1994
    %v2847 = vpack.c.b16 %v2003, %v1999
    %v2848 = vpack.c.b16 %v2004, %v2000
    %v2849 = vpack.c.b16 %v2005, %v2001
    %v2850 = vpack.c.b16 %v2006, %v2002
    %v2851 = vpack.c.b16 %v2011, %v2007
    %v2852 = vpack.c.b16 %v2012, %v2008
    %v2853 = vpack.c.b16 %v2013, %v2009
    %v2854 = vpack.c.b16 %v2014, %v2010
    %v2855 = vpack.c.b16 %v2019, %v2015
    %v2856 = vpack.c.b16 %v2020, %v2016
    %v2857 = vpack.c.b16 %v2021, %v2017
    %v2858 = vpack.c.b16 %v2022, %v2018
    %v2859 = vpack.c.b16 %v2027, %v2023
    %v2860 = vpack.c.b16 %v2028, %v2024
    %v2861 = vpack.c.b16 %v2029, %v2025
    %v2862 = vpack.c.b16 %v2030, %v2026
    %v2863 = vpack.c.b16 %v2035, %v2031
    %v2864 = vpack.c.b16 %v2036, %v2032
    %v2865 = vpack.c.b16 %v2037, %v2033
    %v2866 = vpack.c.b16 %v2038, %v2034
    %v2867 = vpack.c.b16 %v2043, %v2039
    %v2868 = vpack.c.b16 %v2044, %v2040
    %v2869 = vpack.c.b16 %v2045, %v2041
    %v2870 = vpack.c.b16 %v2046, %v2042
    %v2871 = vpack.c.b16 %v2051, %v2047
    %v2872 = vpack.c.b16 %v2052, %v2048
    %v2873 = vpack.c.b16 %v2053, %v2049
    %v2874 = vpack.c.b16 %v2054, %v2050
    %v2875 = vpack.c.b16 %v2059, %v2055
    %v2876 = vpack.c.b16 %v2060, %v2056
    %v2877 = vpack.c.b16 %v2061, %v2057
    %v2878 = vpack.c.b16 %v2062, %v2058
    %v2879 = vpack.c.b16 %v2067, %v2063
    %v2880 = vpack.c.b16 %v2068, %v2064
    %v2881 = vpack.c.b16 %v2069, %v2065
    %v2882 = vpack.c.b16 %v2070, %v2066
    %v2883 = vpack.c.b16 %v2075, %v2071
    %v2884 = vpack.c.b16 %v2076, %v2072
    %v2885 = vpack.c.b16 %v2077, %v2073
    %v2886 = vpack.c.b16 %v2078, %v2074
    %v2887 = vpack.c.b16 %v2083, %v2079
    %v2888 = vpack.c.b16 %v2084, %v2080
    %v2889 = vpack.c.b16 %v2085, %v2081
    %v2890 = vpack.c.b16 %v2086, %v2082
    %v2891 = vpack.c.b16 %v2091, %v2087
    %v2892 = vpack.c.b16 %v2092, %v2088
    %v2893 = vpack.c.b16 %v2093, %v2089
    %v2894 = vpack.c.b16 %v2094, %v2090
    %v2895 = vpack.c.b16 %v2099, %v2095
    %v2896 = vpack.c.b16 %v2100, %v2096
    %v2897 = vpack.c.b16 %v2101, %v2097
    %v2898 = vpack.c.b16 %v2102, %v2098
    %v2899 = vpack.c.b16 %v2107, %v2103
    %v2900 = vpack.c.b16 %v2108, %v2104
    %v2901 = vpack.c.b16 %v2109, %v2105
    %v2902 = vpack.c.b16 %v2110, %v2106
    %v2903 = vpack.c.b16 %v2115, %v2111
    %v2904 = vpack.c.b16 %v2116, %v2112
    %v2905 = vpack.c.b16 %v2117, %v2113
    %v2906 = vpack.c.b16 %v2118, %v2114
    %v2907 = vpack.c.b16 %v2123, %v2119
    %v2908 = vpack.c.b16 %v2124, %v2120
    %v2909 = vpack.c.b16 %v2125, %v2121
    %v2910 = vpack.c.b16 %v2126, %v2122
    %v2911 = vpack.c.b16 %v2131, %v2127
    %v2912 = vpack.c.b16 %v2132, %v2128
    %v2913 = vpack.c.b16 %v2133, %v2129
    %v2914 = vpack.c.b16 %v2134, %v2130
    %v2915 = vpack.c.b16 %v2139, %v2135
    %v2916 = vpack.c.b16 %v2140, %v2136
    %v2917 = vpack.c.b16 %v2141, %v2137
    %v2918 = vpack.c.b16 %v2142, %v2138
    %v2919 = vpack.c.b16 %v2147, %v2143
    %v2920 = vpack.c.b16 %v2148, %v2144
    %v2921 = vpack.c.b16 %v2149, %v2145
    %v2922 = vpack.c.b16 %v2150, %v2146
    %v2923 = vpack.c.b16 %v2155, %v2151
    %v2924 = vpack.c.b16 %v2156, %v2152
    %v2925 = vpack.c.b16 %v2157, %v2153
    %v2926 = vpack.c.b16 %v2158, %v2154
    %v2927 = vpack.c.b16 %v2163, %v2159
    %v2928 = vpack.c.b16 %v2164, %v2160
    %v2929 = vpack.c.b16 %v2165, %v2161
    %v2930 = vpack.c.b16 %v2166, %v2162
    %v2931 = vpack.c.b16 %v2171, %v2167
    %v2932 = vpack.c.b16 %v2172, %v2168
    %v2933 = vpack.c.b16 %v2173, %v2169
    %v2934 = vpack.c.b16 %v2174, %v2170
    %v2935 = vpack.c.b16 %v2179, %v2175
    %v2936 = vpack.c.b16 %v2180, %v2176
    %v2937 = vpack.c.b16 %v2181, %v2177
    %v2938 = vpack.c.b16 %v2182, %v2178
    %v2939 = vpack.c.b16 %v2187, %v2183
    %v2940 = vpack.c.b16 %v2188, %v2184
    %v2941 = vpack.c.b16 %v2189, %v2185
    %v2942 = vpack.c.b16 %v2190, %v2186
    %v2943 = vpack.c.b16 %v2195, %v2191
    %v2944 = vpack.c.b16 %v2196, %v2192
    %v2945 = vpack.c.b16 %v2197, %v2193
    %v2946 = vpack.c.b16 %v2198, %v2194
    %v2947 = vpack.c.b16 %v2203, %v2199
    %v2948 = vpack.c.b16 %v2204, %v2200
    %v2949 = vpack.c.b16 %v2205, %v2201
    %v2950 = vpack.c.b16 %v2206, %v2202
    %v2951 = vpack.c.b16 %v2211, %v2207
    %v2952 = vpack.c.b16 %v2212, %v2208
    %v2953 = vpack.c.b16 %v2213, %v2209
    %v2954 = vpack.c.b16 %v2214, %v2210
    %v2955 = vpack.c.b16 %v2219, %v2215
    %v2956 = vpack.c.b16 %v2220, %v2216
    %v2957 = vpack.c.b16 %v2221, %v2217
    %v2958 = vpack.c.b16 %v2222, %v2218
    %v2959 = vpack.c.b16 %v2227, %v2223
    %v2960 = vpack.c.b16 %v2228, %v2224
    %v2961 = vpack.c.b16 %v2229, %v2225
    %v2962 = vpack.c.b16 %v2230, %v2226
    %v2963 = vpack.c.b16 %v2235, %v2231
    %v2964 = vpack.c.b16 %v2236, %v2232
    %v2965 = vpack.c.b16 %v2237, %v2233
    %v2966 = vpack.c.b16 %v2238, %v2234
    %v2967 = vpack.c.b16 %v2243, %v2239
    %v2968 = vpack.c.b16 %v2244, %v2240
    %v2969 = vpack.c.b16 %v2245, %v2241
    %v2970 = vpack.c.b16 %v2246, %v2242
    %v2971 = vpack.c.b16 %v2251, %v2247
    %v2972 = vpack.c.b16 %v2252, %v2248
    %v2973 = vpack.c.b16 %v2253, %v2249
    %v2974 = vpack.c.b16 %v2254, %v2250
    %v2975 = vpack.c.b16 %v2259, %v2255
    %v2976 = vpack.c.b16 %v2260, %v2256
    %v2977 = vpack.c.b16 %v2261, %v2257
    %v2978 = vpack.c.b16 %v2262, %v2258
    %v2979 = vpack.c.b16 %v2267, %v2263
    %v2980 = vpack.c.b16 %v2268, %v2264
    %v2981 = vpack.c.b16 %v2269, %v2265
    %v2982 = vpack.c.b16 %v2270, %v2266
    %v2983 = vpack.c.b16 %v2275, %v2271
    %v2984 = vpack.c.b16 %v2276, %v2272
    %v2985 = vpack.c.b16 %v2277, %v2273
    %v2986 = vpack.c.b16 %v2278, %v2274
    %v2987 = vpack.c.b16 %v2283, %v2279
    %v2988 = vpack.c.b16 %v2284, %v2280
    %v2989 = vpack.c.b16 %v2285, %v2281
    %v2990 = vpack.c.b16 %v2286, %v2282
    %v2991 = vpack.c.b16 %v2291, %v2287
    %v2992 = vpack.c.b16 %v2292, %v2288
    %v2993 = vpack.c.b16 %v2293, %v2289
    %v2994 = vpack.c.b16 %v2294, %v2290
    %v2995 = vpack.c.b16 %v2299, %v2295
    %v2996 = vpack.c.b16 %v2300, %v2296
    %v2997 = vpack.c.b16 %v2301, %v2297
    %v2998 = vpack.c.b16 %v2302, %v2298
    %v2999 = vpack.c.b16 %v2307, %v2303
    %v3000 = vpack.c.b16 %v2308, %v2304
    %v3001 = vpack.c.b16 %v2309, %v2305
    %v3002 = vpack.c.b16 %v2310, %v2306
    %v3003 = vpack.c.b16 %v2315, %v2311
    %v3004 = vpack.c.b16 %v2316, %v2312
    %v3005 = vpack.c.b16 %v2317, %v2313
    %v3006 = vpack.c.b16 %v2318, %v2314
    %v3007 = vpack.c.b16 %v2323, %v2319
    %v3008 = vpack.c.b16 %v2324, %v2320
    %v3009 = vpack.c.b16 %v2325, %v2321
    %v3010 = vpack.c.b16 %v2326, %v2322
    %v3011 = vpack.c.b16 %v2331, %v2327
    %v3012 = vpack.c.b16 %v2332, %v2328
    %v3013 = vpack.c.b16 %v2333, %v2329
    %v3014 = vpack.c.b16 %v2334, %v2330
    %v3015 = vpack.c.b16 %v2339, %v2335
    %v3016 = vpack.c.b16 %v2340, %v2336
    %v3017 = vpack.c.b16 %v2341, %v2337
    %v3018 = vpack.c.b16 %v2342, %v2338
    %v3019 = vpack.c.b16 %v2347, %v2343
    %v3020 = vpack.c.b16 %v2348, %v2344
    %v3021 = vpack.c.b16 %v2349, %v2345
    %v3022 = vpack.c.b16 %v2350, %v2346
    %v3023 = vpack.c.b16 %v2355, %v2351
    %v3024 = vpack.c.b16 %v2356, %v2352
    %v3025 = vpack.c.b16 %v2357, %v2353
    %v3026 = vpack.c.b16 %v2358, %v2354
    %v3027 = vpack.c.b16 %v2363, %v2359
    %v3028 = vpack.c.b16 %v2364, %v2360
    %v3029 = vpack.c.b16 %v2365, %v2361
    %v3030 = vpack.c.b16 %v2366, %v2362
    %v3031 = vpack.c.b16 %v2371, %v2367
    %v3032 = vpack.c.b16 %v2372, %v2368
    %v3033 = vpack.c.b16 %v2373, %v2369
    %v3034 = vpack.c.b16 %v2374, %v2370
    %v3035 = vpack.c.b16 %v2379, %v2375
    %v3036 = vpack.c.b16 %v2380, %v2376
    %v3037 = vpack.c.b16 %v2381, %v2377
    %v3038 = vpack.c.b16 %v2382, %v2378
    %v3039 = vpack.c.b16 %v2387, %v2383
    %v3040 = vpack.c.b16 %v2388, %v2384
    %v3041 = vpack.c.b16 %v2389, %v2385
    %v3042 = vpack.c.b16 %v2390, %v2386
    %v3043 = vpack.c.b16 %v2395, %v2391
    %v3044 = vpack.c.b16 %v2396, %v2392
    %v3045 = vpack.c.b16 %v2397, %v2393
    %v3046 = vpack.c.b16 %v2398, %v2394
    %v3047 = vpack.c.b16 %v2403, %v2399
    %v3048 = vpack.c.b16 %v2404, %v2400
    %v3049 = vpack.c.b16 %v2405, %v2401
    %v3050 = vpack.c.b16 %v2406, %v2402
    %v3051 = vpack.c.b16 %v2411, %v2407
    %v3052 = vpack.c.b16 %v2412, %v2408
    %v3053 = vpack.c.b16 %v2413, %v2409
    %v3054 = vpack.c.b16 %v2414, %v2410
    %v3055 = vpack.c.b16 %v2419, %v2415
    %v3056 = vpack.c.b16 %v2420, %v2416
    %v3057 = vpack.c.b16 %v2421, %v2417
    %v3058 = vpack.c.b16 %v2422, %v2418
    %v3059 = vpack.c.b16 %v2427, %v2423
    %v3060 = vpack.c.b16 %v2428, %v2424
    %v3061 = vpack.c.b16 %v2429, %v2425
    %v3062 = vpack.c.b16 %v2430, %v2426
    %v3063 = vpack.c.b16 %v2435, %v2431
    %v3064 = vpack.c.b16 %v2436, %v2432
    %v3065 = vpack.c.b16 %v2437, %v2433
    %v3066 = vpack.c.b16 %v2438, %v2434
    %v3067 = vpack.c.b16 %v2443, %v2439
    %v3068 = vpack.c.b16 %v2444, %v2440
    %v3069 = vpack.c.b16 %v2445, %v2441
    %v3070 = vpack.c.b16 %v2446, %v2442
    %v3071 = vpack.c.b16 %v2451, %v2447
    %v3072 = vpack.c.b16 %v2452, %v2448
    %v3073 = vpack.c.b16 %v2453, %v2449
    %v3074 = vpack.c.b16 %v2454, %v2450
    %v3075 = vpack.c.b16 %v2459, %v2455
    %v3076 = vpack.c.b16 %v2460, %v2456
    %v3077 = vpack.c.b16 %v2461, %v2457
    %v3078 = vpack.c.b16 %v2462, %v2458
    %v3079 = vpack.c.b16 %v2467, %v2463
    %v3080 = vpack.c.b16 %v2468, %v2464
    %v3081 = vpack.c.b16 %v2469, %v2465
    %v3082 = vpack.c.b16 %v2470, %v2466
    %v3083 = vpack.c.b16 %v2475, %v2471
    %v3084 = vpack.c.b16 %v2476, %v2472
    %v3085 = vpack.c.b16 %v2477, %v2473
    %v3086 = vpack.c.b16 %v2478, %v2474
    %v3087 = vpack.c.b16 %v2483, %v2479
    %v3088 = vpack.c.b16 %v2484, %v2480
    %v3089 = vpack.c.b16 %v2485, %v2481
    %v3090 = vpack.c.b16 %v2486, %v2482
    %v3091 = vpack.c.b16 %v2491, %v2487
    %v3092 = vpack.c.b16 %v2492, %v2488
    %v3093 = vpack.c.b16 %v2493, %v2489
    %v3094 = vpack.c.b16 %v2494, %v2490
    %v3095 = vpack.c.b16 %v2499, %v2495
    %v3096 = vpack.c.b16 %v2500, %v2496
    %v3097 = vpack.c.b16 %v2501, %v2497
    %v3098 = vpack.c.b16 %v2502, %v2498
    %v3099 = vpack.c.b16 %v2507, %v2503
    %v3100 = vpack.c.b16 %v2508, %v2504
    %v3101 = vpack.c.b16 %v2509, %v2505
    %v3102 = vpack.c.b16 %v2510, %v2506
    %v3103 = vpack.c.b16 %v2515, %v2511
    %v3104 = vpack.c.b16 %v2516, %v2512
    %v3105 = vpack.c.b16 %v2517, %v2513
    %v3106 = vpack.c.b16 %v2518, %v2514
    %v3107 = vpack.c.b16 %v2523, %v2519
    %v3108 = vpack.c.b16 %v2524, %v2520
    %v3109 = vpack.c.b16 %v2525, %v2521
    %v3110 = vpack.c.b16 %v2526, %v2522
    %v3111 = vpack.c.b16 %v2531, %v2527
    %v3112 = vpack.c.b16 %v2532, %v2528
    %v3113 = vpack.c.b16 %v2533, %v2529
    %v3114 = vpack.c.b16 %v2534, %v2530
    %v3115 = vpack.c.b16 %v2539, %v2535
    %v3116 = vpack.c.b16 %v2540, %v2536
    %v3117 = vpack.c.b16 %v2541, %v2537
    %v3118 = vpack.c.b16 %v2542, %v2538
    %3695 = vmatprep.subr.bf16.mxu0 %v2572
    %3696 = vmatpush1.bf16.msra.mxu0 %v2571
    %3697 = vmatprep.subr.bf16.mxu0 %v2568
    %3698 = vmatpush1.bf16.msra.mxu0 %v2567
    %3699 = vmatprep.subr.bf16.mxu0 %v2564
    %3700 = vmatpush1.bf16.msra.mxu0 %v2563
    %3701 = vmatprep.subr.bf16.mxu0 %v2560
    %3702 = vmatpush1.bf16.msra.mxu0 %v2559
    %3703 = vmatprep.subr.bf16.mxu0 %v2556
    %3704 = vmatpush1.bf16.msra.mxu0 %v2555
    %3705 = vmatprep.subr.bf16.mxu0 %v2552
    %3706 = vmatpush1.bf16.msra.mxu0 %v2551
    %3707 = vmatprep.subr.bf16.mxu0 %v2548
    %3708 = vmatpush1.bf16.msra.mxu0 %v2547
    %3709 = vmatprep.subr.bf16.mxu0 %v2544
    %3710 = vmatpush1.bf16.msra.mxu0 %v2543
    %3711 = vmatprep.subr.bf16.mxu0 %v2604
    %3712 = vmatpush2.bf16.msra.mxu0 %v2603
    %3713 = vmatprep.subr.bf16.mxu0 %v2600
    %3714 = vmatpush2.bf16.msra.mxu0 %v2599
    %3715 = vmatprep.subr.bf16.mxu0 %v2596
    %3716 = vmatpush2.bf16.msra.mxu0 %v2595
    %3717 = vmatprep.subr.bf16.mxu0 %v2592
    %3718 = vmatpush2.bf16.msra.mxu0 %v2591
    %3719 = vmatprep.subr.bf16.mxu0 %v2588
    %3720 = vmatpush2.bf16.msra.mxu0 %v2587
    %3721 = vmatprep.subr.bf16.mxu0 %v2584
    %3722 = vmatpush2.bf16.msra.mxu0 %v2583
    %3723 = vmatprep.subr.bf16.mxu0 %v2580
    %3724 = vmatpush2.bf16.msra.mxu0 %v2579
    %3725 = vmatprep.subr.bf16.mxu0 %v2576
    %3726 = vmatpush2.bf16.msra.mxu0 %v2575
    %3727 = vmatprep.mubr.bf16.mxu0 %v714
    %3728 = vmatmul.mubr.bf16.gmra.mxu0 %v700
    %v3729 = vpop.f32.mrf.mxu0
    %v3730 = vadd.f32 %v657, %v3729
    %v3731 = vpop.f32.mrf.mxu0
    %v3732 = vadd.f32 %v661, %v3731
    %v3733 = vpop.f32.mrf.mxu0
    %v3734 = vpop.f32.mrf.mxu0
    %3735 = vdwg.mxu0
    %3736 = vmatprep.subr.bf16.mxu0 %v2636
    %3737 = vmatpush1.bf16.msra.mxu0 %v2635
    %3738 = vmatprep.subr.bf16.mxu0 %v2632
    %3739 = vmatpush1.bf16.msra.mxu0 %v2631
    %3740 = vmatprep.subr.bf16.mxu0 %v2628
    %3741 = vmatpush1.bf16.msra.mxu0 %v2627
    %3742 = vmatprep.subr.bf16.mxu0 %v2624
    %3743 = vmatpush1.bf16.msra.mxu0 %v2623
    %3744 = vmatprep.subr.bf16.mxu0 %v2620
    %3745 = vmatpush1.bf16.msra.mxu0 %v2619
    %3746 = vmatprep.subr.bf16.mxu0 %v2616
    %3747 = vmatpush1.bf16.msra.mxu0 %v2615
    %3748 = vmatprep.subr.bf16.mxu0 %v2612
    %3749 = vmatpush1.bf16.msra.mxu0 %v2611
    %3750 = vmatprep.subr.bf16.mxu0 %v2608
    %3751 = vmatpush1.bf16.msra.mxu0 %v2607
    %3752 = vmatprep.subr.bf16.mxu0 %v2668
    %3753 = vmatpush2.bf16.msra.mxu0 %v2667
    %3754 = vmatprep.subr.bf16.mxu0 %v2664
    %3755 = vmatpush2.bf16.msra.mxu0 %v2663
    %3756 = vmatprep.subr.bf16.mxu0 %v2660
    %3757 = vmatpush2.bf16.msra.mxu0 %v2659
    %3758 = vmatprep.subr.bf16.mxu0 %v2656
    %3759 = vmatpush2.bf16.msra.mxu0 %v2655
    %3760 = vmatprep.subr.bf16.mxu0 %v2652
    %3761 = vmatpush2.bf16.msra.mxu0 %v2651
    %3762 = vmatprep.subr.bf16.mxu0 %v2648
    %3763 = vmatpush2.bf16.msra.mxu0 %v2647
    %3764 = vmatprep.subr.bf16.mxu0 %v2644
    %3765 = vmatpush2.bf16.msra.mxu0 %v2643
    %3766 = vmatprep.subr.bf16.mxu0 %v2640
    %3767 = vmatpush2.bf16.msra.mxu0 %v2639
    %3768 = vmatprep.mubr.bf16.mxu0 %v724
    %3769 = vmatmul.mubr.bf16.gmra.mxu0 %v722
    %v3770 = vpop.f32.mrf.mxu0
    %v3771 = vadd.f32 %v3730, %v3770
    %v3772 = vpop.f32.mrf.mxu0
    %v3773 = vadd.f32 %v3732, %v3772
    %v3774 = vpop.f32.mrf.mxu0
    %v3775 = vpop.f32.mrf.mxu0
    %3776 = vdwg.mxu0
    %3777 = vmatprep.subr.bf16.mxu0 %v2700
    %3778 = vmatpush1.bf16.msra.mxu0 %v2699
    %3779 = vmatprep.subr.bf16.mxu0 %v2696
    %3780 = vmatpush1.bf16.msra.mxu0 %v2695
    %3781 = vmatprep.subr.bf16.mxu0 %v2692
    %3782 = vmatpush1.bf16.msra.mxu0 %v2691
    %3783 = vmatprep.subr.bf16.mxu0 %v2688
    %3784 = vmatpush1.bf16.msra.mxu0 %v2687
    %3785 = vmatprep.subr.bf16.mxu0 %v2684
    %3786 = vmatpush1.bf16.msra.mxu0 %v2683
    %3787 = vmatprep.subr.bf16.mxu0 %v2680
    %3788 = vmatpush1.bf16.msra.mxu0 %v2679
    %3789 = vmatprep.subr.bf16.mxu0 %v2676
    %3790 = vmatpush1.bf16.msra.mxu0 %v2675
    %3791 = vmatprep.subr.bf16.mxu0 %v2672
    %3792 = vmatpush1.bf16.msra.mxu0 %v2671
    %3793 = vmatprep.subr.bf16.mxu0 %v2732
    %3794 = vmatpush2.bf16.msra.mxu0 %v2731
    %3795 = vmatprep.subr.bf16.mxu0 %v2728
    %3796 = vmatpush2.bf16.msra.mxu0 %v2727
    %3797 = vmatprep.subr.bf16.mxu0 %v2724
    %3798 = vmatpush2.bf16.msra.mxu0 %v2723
    %3799 = vmatprep.subr.bf16.mxu0 %v2720
    %3800 = vmatpush2.bf16.msra.mxu0 %v2719
    %3801 = vmatprep.subr.bf16.mxu0 %v2716
    %3802 = vmatpush2.bf16.msra.mxu0 %v2715
    %3803 = vmatprep.subr.bf16.mxu0 %v2712
    %3804 = vmatpush2.bf16.msra.mxu0 %v2711
    %3805 = vmatprep.subr.bf16.mxu0 %v2708
    %3806 = vmatpush2.bf16.msra.mxu0 %v2707
    %3807 = vmatprep.subr.bf16.mxu0 %v2704
    %3808 = vmatpush2.bf16.msra.mxu0 %v2703
    %3809 = vmatprep.mubr.bf16.mxu0 %v721
    %3810 = vmatmul.mubr.bf16.gmra.mxu0 %v707
    %v3811 = vpop.f32.mrf.mxu0
    %v3812 = vadd.f32 %v3771, %v3811
    %v3813 = vpop.f32.mrf.mxu0
    %v3814 = vadd.f32 %v3773, %v3813
    %v3815 = vpop.f32.mrf.mxu0
    %v3816 = vpop.f32.mrf.mxu0
    %3817 = vdwg.mxu0
    %3818 = vmatprep.subr.bf16.mxu0 %v2764
    %3819 = vmatpush1.bf16.msra.mxu0 %v2763
    %3820 = vmatprep.subr.bf16.mxu0 %v2760
    %3821 = vmatpush1.bf16.msra.mxu0 %v2759
    %3822 = vmatprep.subr.bf16.mxu0 %v2756
    %3823 = vmatpush1.bf16.msra.mxu0 %v2755
    %3824 = vmatprep.subr.bf16.mxu0 %v2752
    %3825 = vmatpush1.bf16.msra.mxu0 %v2751
    %3826 = vmatprep.subr.bf16.mxu0 %v2748
    %3827 = vmatpush1.bf16.msra.mxu0 %v2747
    %3828 = vmatprep.subr.bf16.mxu0 %v2744
    %3829 = vmatpush1.bf16.msra.mxu0 %v2743
    %3830 = vmatprep.subr.bf16.mxu0 %v2740
    %3831 = vmatpush1.bf16.msra.mxu0 %v2739
    %3832 = vmatprep.subr.bf16.mxu0 %v2736
    %3833 = vmatpush1.bf16.msra.mxu0 %v2735
    %3834 = vmatprep.subr.bf16.mxu0 %v2796
    %3835 = vmatpush2.bf16.msra.mxu0 %v2795
    %3836 = vmatprep.subr.bf16.mxu0 %v2792
    %3837 = vmatpush2.bf16.msra.mxu0 %v2791
    %3838 = vmatprep.subr.bf16.mxu0 %v2788
    %3839 = vmatpush2.bf16.msra.mxu0 %v2787
    %3840 = vmatprep.subr.bf16.mxu0 %v2784
    %3841 = vmatpush2.bf16.msra.mxu0 %v2783
    %3842 = vmatprep.subr.bf16.mxu0 %v2780
    %3843 = vmatpush2.bf16.msra.mxu0 %v2779
    %3844 = vmatprep.subr.bf16.mxu0 %v2776
    %3845 = vmatpush2.bf16.msra.mxu0 %v2775
    %3846 = vmatprep.subr.bf16.mxu0 %v2772
    %3847 = vmatpush2.bf16.msra.mxu0 %v2771
    %3848 = vmatprep.subr.bf16.mxu0 %v2768
    %3849 = vmatpush2.bf16.msra.mxu0 %v2767
    %3850 = vmatprep.mubr.bf16.mxu0 %v725
    %3851 = vmatmul.mubr.bf16.gmra.mxu0 %v723
    %v3852 = vpop.f32.mrf.mxu0
    %v3853 = vadd.f32 %v3812, %v3852
    %v3854 = vpop.f32.mrf.mxu0
    %v3855 = vadd.f32 %v3814, %v3854
    %v3856 = vpop.f32.mrf.mxu0
    %v3857 = vpop.f32.mrf.mxu0
    %3858 = vdwg.mxu0
    %3859 = vmatprep.subr.bf16.mxu0 %v2828
    %3860 = vmatpush1.bf16.msra.mxu0 %v2827
    %3861 = vmatprep.subr.bf16.mxu0 %v2824
    %3862 = vmatpush1.bf16.msra.mxu0 %v2823
    %3863 = vmatprep.subr.bf16.mxu0 %v2820
    %3864 = vmatpush1.bf16.msra.mxu0 %v2819
    %3865 = vmatprep.subr.bf16.mxu0 %v2816
    %3866 = vmatpush1.bf16.msra.mxu0 %v2815
    %3867 = vmatprep.subr.bf16.mxu0 %v2812
    %3868 = vmatpush1.bf16.msra.mxu0 %v2811
    %3869 = vmatprep.subr.bf16.mxu0 %v2808
    %3870 = vmatpush1.bf16.msra.mxu0 %v2807
    %3871 = vmatprep.subr.bf16.mxu0 %v2804
    %3872 = vmatpush1.bf16.msra.mxu0 %v2803
    %3873 = vmatprep.subr.bf16.mxu0 %v2800
    %3874 = vmatpush1.bf16.msra.mxu0 %v2799
    %3875 = vmatprep.subr.bf16.mxu0 %v2860
    %3876 = vmatpush2.bf16.msra.mxu0 %v2859
    %3877 = vmatprep.subr.bf16.mxu0 %v2856
    %3878 = vmatpush2.bf16.msra.mxu0 %v2855
    %3879 = vmatprep.subr.bf16.mxu0 %v2852
    %3880 = vmatpush2.bf16.msra.mxu0 %v2851
    %3881 = vmatprep.subr.bf16.mxu0 %v2848
    %3882 = vmatpush2.bf16.msra.mxu0 %v2847
    %3883 = vmatprep.subr.bf16.mxu0 %v2844
    %3884 = vmatpush2.bf16.msra.mxu0 %v2843
    %3885 = vmatprep.subr.bf16.mxu0 %v2840
    %3886 = vmatpush2.bf16.msra.mxu0 %v2839
    %3887 = vmatprep.subr.bf16.mxu0 %v2836
    %3888 = vmatpush2.bf16.msra.mxu0 %v2835
    %3889 = vmatprep.subr.bf16.mxu0 %v2832
    %3890 = vmatpush2.bf16.msra.mxu0 %v2831
    %3891 = vmatprep.mubr.bf16.mxu0 %v763
    %3892 = vmatmul.mubr.bf16.gmra.mxu0 %v749
    %v3893 = vpop.f32.mrf.mxu0
    %v3894 = vadd.f32 %v3853, %v3893
    %v3895 = vpop.f32.mrf.mxu0
    %v3896 = vadd.f32 %v3855, %v3895
    %v3897 = vpop.f32.mrf.mxu0
    %v3898 = vpop.f32.mrf.mxu0
    %3899 = vdwg.mxu0
    %3900 = vmatprep.subr.bf16.mxu0 %v2892
    %3901 = vmatpush1.bf16.msra.mxu0 %v2891
    %3902 = vmatprep.subr.bf16.mxu0 %v2888
    %3903 = vmatpush1.bf16.msra.mxu0 %v2887
    %3904 = vmatprep.subr.bf16.mxu0 %v2884
    %3905 = vmatpush1.bf16.msra.mxu0 %v2883
    %3906 = vmatprep.subr.bf16.mxu0 %v2880
    %3907 = vmatpush1.bf16.msra.mxu0 %v2879
    %3908 = vmatprep.subr.bf16.mxu0 %v2876
    %3909 = vmatpush1.bf16.msra.mxu0 %v2875
    %3910 = vmatprep.subr.bf16.mxu0 %v2872
    %3911 = vmatpush1.bf16.msra.mxu0 %v2871
    %3912 = vmatprep.subr.bf16.mxu0 %v2868
    %3913 = vmatpush1.bf16.msra.mxu0 %v2867
    %3914 = vmatprep.subr.bf16.mxu0 %v2864
    %3915 = vmatpush1.bf16.msra.mxu0 %v2863
    %3916 = vmatprep.subr.bf16.mxu0 %v2924
    %3917 = vmatpush2.bf16.msra.mxu0 %v2923
    %3918 = vmatprep.subr.bf16.mxu0 %v2920
    %3919 = vmatpush2.bf16.msra.mxu0 %v2919
    %3920 = vmatprep.subr.bf16.mxu0 %v2916
    %3921 = vmatpush2.bf16.msra.mxu0 %v2915
    %3922 = vmatprep.subr.bf16.mxu0 %v2912
    %3923 = vmatpush2.bf16.msra.mxu0 %v2911
    %3924 = vmatprep.subr.bf16.mxu0 %v2908
    %3925 = vmatpush2.bf16.msra.mxu0 %v2907
    %3926 = vmatprep.subr.bf16.mxu0 %v2904
    %3927 = vmatpush2.bf16.msra.mxu0 %v2903
    %3928 = vmatprep.subr.bf16.mxu0 %v2900
    %3929 = vmatpush2.bf16.msra.mxu0 %v2899
    %3930 = vmatprep.subr.bf16.mxu0 %v2896
    %3931 = vmatpush2.bf16.msra.mxu0 %v2895
    %3932 = vmatprep.mubr.bf16.mxu0 %v773
    %3933 = vmatmul.mubr.bf16.gmra.mxu0 %v771
    %v3934 = vpop.f32.mrf.mxu0
    %v3935 = vadd.f32 %v3894, %v3934
    %v3936 = vpop.f32.mrf.mxu0
    %v3937 = vadd.f32 %v3896, %v3936
    %v3938 = vpop.f32.mrf.mxu0
    %v3939 = vpop.f32.mrf.mxu0
    %3940 = vdwg.mxu0
    %3941 = vmatprep.subr.bf16.mxu0 %v2956
    %3942 = vmatpush1.bf16.msra.mxu0 %v2955
    %3943 = vmatprep.subr.bf16.mxu0 %v2952
    %3944 = vmatpush1.bf16.msra.mxu0 %v2951
    %3945 = vmatprep.subr.bf16.mxu0 %v2948
    %3946 = vmatpush1.bf16.msra.mxu0 %v2947
    %3947 = vmatprep.subr.bf16.mxu0 %v2944
    %3948 = vmatpush1.bf16.msra.mxu0 %v2943
    %3949 = vmatprep.subr.bf16.mxu0 %v2940
    %3950 = vmatpush1.bf16.msra.mxu0 %v2939
    %3951 = vmatprep.subr.bf16.mxu0 %v2936
    %3952 = vmatpush1.bf16.msra.mxu0 %v2935
    %3953 = vmatprep.subr.bf16.mxu0 %v2932
    %3954 = vmatpush1.bf16.msra.mxu0 %v2931
    %3955 = vmatprep.subr.bf16.mxu0 %v2928
    %3956 = vmatpush1.bf16.msra.mxu0 %v2927
    %3957 = vmatprep.subr.bf16.mxu0 %v2988
    %3958 = vmatpush2.bf16.msra.mxu0 %v2987
    %3959 = vmatprep.subr.bf16.mxu0 %v2984
    %3960 = vmatpush2.bf16.msra.mxu0 %v2983
    %3961 = vmatprep.subr.bf16.mxu0 %v2980
    %3962 = vmatpush2.bf16.msra.mxu0 %v2979
    %3963 = vmatprep.subr.bf16.mxu0 %v2976
    %3964 = vmatpush2.bf16.msra.mxu0 %v2975
    %3965 = vmatprep.subr.bf16.mxu0 %v2972
    %3966 = vmatpush2.bf16.msra.mxu0 %v2971
    %3967 = vmatprep.subr.bf16.mxu0 %v2968
    %3968 = vmatpush2.bf16.msra.mxu0 %v2967
    %3969 = vmatprep.subr.bf16.mxu0 %v2964
    %3970 = vmatpush2.bf16.msra.mxu0 %v2963
    %3971 = vmatprep.subr.bf16.mxu0 %v2960
    %3972 = vmatpush2.bf16.msra.mxu0 %v2959
    %3973 = vmatprep.mubr.bf16.mxu0 %v770
    %3974 = vmatmul.mubr.bf16.gmra.mxu0 %v756
    %v3975 = vpop.f32.mrf.mxu0
    %v3976 = vadd.f32 %v3935, %v3975
    %v3977 = vpop.f32.mrf.mxu0
    %v3978 = vadd.f32 %v3937, %v3977
    %v3979 = vpop.f32.mrf.mxu0
    %v3980 = vpop.f32.mrf.mxu0
    %3981 = vdwg.mxu0
    %3982 = vmatprep.subr.bf16.mxu0 %v3020
    %3983 = vmatpush1.bf16.msra.mxu0 %v3019
    %3984 = vmatprep.subr.bf16.mxu0 %v3016
    %3985 = vmatpush1.bf16.msra.mxu0 %v3015
    %3986 = vmatprep.subr.bf16.mxu0 %v3012
    %3987 = vmatpush1.bf16.msra.mxu0 %v3011
    %3988 = vmatprep.subr.bf16.mxu0 %v3008
    %3989 = vmatpush1.bf16.msra.mxu0 %v3007
    %3990 = vmatprep.subr.bf16.mxu0 %v3004
    %3991 = vmatpush1.bf16.msra.mxu0 %v3003
    %3992 = vmatprep.subr.bf16.mxu0 %v3000
    %3993 = vmatpush1.bf16.msra.mxu0 %v2999
    %3994 = vmatprep.subr.bf16.mxu0 %v2996
    %3995 = vmatpush1.bf16.msra.mxu0 %v2995
    %3996 = vmatprep.subr.bf16.mxu0 %v2992
    %3997 = vmatpush1.bf16.msra.mxu0 %v2991
    %3998 = vmatprep.subr.bf16.mxu0 %v3052
    %3999 = vmatpush2.bf16.msra.mxu0 %v3051
    %4000 = vmatprep.subr.bf16.mxu0 %v3048
    %4001 = vmatpush2.bf16.msra.mxu0 %v3047
    %4002 = vmatprep.subr.bf16.mxu0 %v3044
    %4003 = vmatpush2.bf16.msra.mxu0 %v3043
    %4004 = vmatprep.subr.bf16.mxu0 %v3040
    %4005 = vmatpush2.bf16.msra.mxu0 %v3039
    %4006 = vmatprep.subr.bf16.mxu0 %v3036
    %4007 = vmatpush2.bf16.msra.mxu0 %v3035
    %4008 = vmatprep.subr.bf16.mxu0 %v3032
    %4009 = vmatpush2.bf16.msra.mxu0 %v3031
    %4010 = vmatprep.subr.bf16.mxu0 %v3028
    %4011 = vmatpush2.bf16.msra.mxu0 %v3027
    %4012 = vmatprep.subr.bf16.mxu0 %v3024
    %4013 = vmatpush2.bf16.msra.mxu0 %v3023
    %4014 = vmatprep.mubr.bf16.mxu0 %v774
    %4015 = vmatmul.mubr.bf16.gmra.mxu0 %v772
    %v4016 = vpop.f32.mrf.mxu0
    %v4017 = vadd.f32 %v3976, %v4016
    %v4018 = vpop.f32.mrf.mxu0
    %v4019 = vadd.f32 %v3978, %v4018
    %v4020 = vpop.f32.mrf.mxu0
    %v4021 = vpop.f32.mrf.mxu0
    %4022 = vdwg.mxu0
    %4023 = vmatprep.subr.bf16.mxu0 %v3084
    %4024 = vmatpush1.bf16.msra.mxu0 %v3083
    %4025 = vmatprep.subr.bf16.mxu0 %v3080
    %4026 = vmatpush1.bf16.msra.mxu0 %v3079
    %4027 = vmatprep.subr.bf16.mxu0 %v3076
    %4028 = vmatpush1.bf16.msra.mxu0 %v3075
    %4029 = vmatprep.subr.bf16.mxu0 %v3072
    %4030 = vmatpush1.bf16.msra.mxu0 %v3071
    %4031 = vmatprep.subr.bf16.mxu0 %v3068
    %4032 = vmatpush1.bf16.msra.mxu0 %v3067
    %4033 = vmatprep.subr.bf16.mxu0 %v3064
    %4034 = vmatpush1.bf16.msra.mxu0 %v3063
    %4035 = vmatprep.subr.bf16.mxu0 %v3060
    %4036 = vmatpush1.bf16.msra.mxu0 %v3059
    %4037 = vmatprep.subr.bf16.mxu0 %v3056
    %4038 = vmatpush1.bf16.msra.mxu0 %v3055
    %4039 = vmatprep.subr.bf16.mxu0 %v3116
    %4040 = vmatpush2.bf16.msra.mxu0 %v3115
    %4041 = vmatprep.subr.bf16.mxu0 %v3112
    %4042 = vmatpush2.bf16.msra.mxu0 %v3111
    %4043 = vmatprep.subr.bf16.mxu0 %v3108
    %4044 = vmatpush2.bf16.msra.mxu0 %v3107
    %4045 = vmatprep.subr.bf16.mxu0 %v3104
    %4046 = vmatpush2.bf16.msra.mxu0 %v3103
    %4047 = vmatprep.subr.bf16.mxu0 %v3100
    %4048 = vmatpush2.bf16.msra.mxu0 %v3099
    %4049 = vmatprep.subr.bf16.mxu0 %v3096
    %4050 = vmatpush2.bf16.msra.mxu0 %v3095
    %4051 = vmatprep.subr.bf16.mxu0 %v3092
    %4052 = vmatpush2.bf16.msra.mxu0 %v3091
    %4053 = vmatprep.subr.bf16.mxu0 %v3088
    %4054 = vmatpush2.bf16.msra.mxu0 %v3087
    %4055 = vmatprep.mubr.bf16.mxu0 %v796
    %4056 = vmatmul.mubr.bf16.gmra.mxu0 %v789
    %v4057 = vpop.f32.mrf.mxu0
    %v4058 = vadd.f32 %v4017, %v4057
    %v4059 = vpop.f32.mrf.mxu0
    %v4060 = vadd.f32 %v4019, %v4059
    %v4061 = vpop.f32.mrf.mxu0
    %v4062 = vpop.f32.mrf.mxu0
    %4063 = vdwg.mxu0
    %4064 = vmatprep.subr.bf16.mxu0 %v2574
    %4065 = vmatpush1.bf16.msra.mxu0 %v2573
    %4066 = vmatprep.subr.bf16.mxu0 %v2570
    %4067 = vmatpush1.bf16.msra.mxu0 %v2569
    %4068 = vmatprep.subr.bf16.mxu0 %v2566
    %4069 = vmatpush1.bf16.msra.mxu0 %v2565
    %4070 = vmatprep.subr.bf16.mxu0 %v2562
    %4071 = vmatpush1.bf16.msra.mxu0 %v2561
    %4072 = vmatprep.subr.bf16.mxu0 %v2558
    %4073 = vmatpush1.bf16.msra.mxu0 %v2557
    %4074 = vmatprep.subr.bf16.mxu0 %v2554
    %4075 = vmatpush1.bf16.msra.mxu0 %v2553
    %4076 = vmatprep.subr.bf16.mxu0 %v2550
    %4077 = vmatpush1.bf16.msra.mxu0 %v2549
    %4078 = vmatprep.subr.bf16.mxu0 %v2546
    %4079 = vmatpush1.bf16.msra.mxu0 %v2545
    %4080 = vmatprep.subr.bf16.mxu0 %v2606
    %4081 = vmatpush2.bf16.msra.mxu0 %v2605
    %4082 = vmatprep.subr.bf16.mxu0 %v2602
    %4083 = vmatpush2.bf16.msra.mxu0 %v2601
    %4084 = vmatprep.subr.bf16.mxu0 %v2598
    %4085 = vmatpush2.bf16.msra.mxu0 %v2597
    %4086 = vmatprep.subr.bf16.mxu0 %v2594
    %4087 = vmatpush2.bf16.msra.mxu0 %v2593
    %4088 = vmatprep.subr.bf16.mxu0 %v2590
    %4089 = vmatpush2.bf16.msra.mxu0 %v2589
    %4090 = vmatprep.subr.bf16.mxu0 %v2586
    %4091 = vmatpush2.bf16.msra.mxu0 %v2585
    %4092 = vmatprep.subr.bf16.mxu0 %v2582
    %4093 = vmatpush2.bf16.msra.mxu0 %v2581
    %4094 = vmatprep.subr.bf16.mxu0 %v2578
    %4095 = vmatpush2.bf16.msra.mxu0 %v2577
    %4096 = vmatprep.mubr.bf16.mxu0 %v714
    %4097 = vmatmul.mubr.bf16.gmra.mxu0 %v700
    %v4098 = vpop.f32.mrf.mxu0
    %v4099 = vadd.f32 %v665, %v4098
    %v4100 = vpop.f32.mrf.mxu0
    %v4101 = vadd.f32 %v669, %v4100
    %v4102 = vpop.f32.mrf.mxu0
    %v4103 = vpop.f32.mrf.mxu0
    %4104 = vdwg.mxu0
    %4105 = vmatprep.subr.bf16.mxu0 %v2638
    %4106 = vmatpush1.bf16.msra.mxu0 %v2637
    %4107 = vmatprep.subr.bf16.mxu0 %v2634
    %4108 = vmatpush1.bf16.msra.mxu0 %v2633
    %4109 = vmatprep.subr.bf16.mxu0 %v2630
    %4110 = vmatpush1.bf16.msra.mxu0 %v2629
    %4111 = vmatprep.subr.bf16.mxu0 %v2626
    %4112 = vmatpush1.bf16.msra.mxu0 %v2625
    %4113 = vmatprep.subr.bf16.mxu0 %v2622
    %4114 = vmatpush1.bf16.msra.mxu0 %v2621
    %4115 = vmatprep.subr.bf16.mxu0 %v2618
    %4116 = vmatpush1.bf16.msra.mxu0 %v2617
    %4117 = vmatprep.subr.bf16.mxu0 %v2614
    %4118 = vmatpush1.bf16.msra.mxu0 %v2613
    %4119 = vmatprep.subr.bf16.mxu0 %v2610
    %4120 = vmatpush1.bf16.msra.mxu0 %v2609
    %4121 = vmatprep.subr.bf16.mxu0 %v2670
    %4122 = vmatpush2.bf16.msra.mxu0 %v2669
    %4123 = vmatprep.subr.bf16.mxu0 %v2666
    %4124 = vmatpush2.bf16.msra.mxu0 %v2665
    %4125 = vmatprep.subr.bf16.mxu0 %v2662
    %4126 = vmatpush2.bf16.msra.mxu0 %v2661
    %4127 = vmatprep.subr.bf16.mxu0 %v2658
    %4128 = vmatpush2.bf16.msra.mxu0 %v2657
    %4129 = vmatprep.subr.bf16.mxu0 %v2654
    %4130 = vmatpush2.bf16.msra.mxu0 %v2653
    %4131 = vmatprep.subr.bf16.mxu0 %v2650
    %4132 = vmatpush2.bf16.msra.mxu0 %v2649
    %4133 = vmatprep.subr.bf16.mxu0 %v2646
    %4134 = vmatpush2.bf16.msra.mxu0 %v2645
    %4135 = vmatprep.subr.bf16.mxu0 %v2642
    %4136 = vmatpush2.bf16.msra.mxu0 %v2641
    %4137 = vmatprep.mubr.bf16.mxu0 %v724
    %4138 = vmatmul.mubr.bf16.gmra.mxu0 %v722
    %v4139 = vpop.f32.mrf.mxu0
    %v4140 = vadd.f32 %v4099, %v4139
    %v4141 = vpop.f32.mrf.mxu0
    %v4142 = vadd.f32 %v4101, %v4141
    %v4143 = vpop.f32.mrf.mxu0
    %v4144 = vpop.f32.mrf.mxu0
    %4145 = vdwg.mxu0
    %4146 = vmatprep.subr.bf16.mxu0 %v2702
    %4147 = vmatpush1.bf16.msra.mxu0 %v2701
    %4148 = vmatprep.subr.bf16.mxu0 %v2698
    %4149 = vmatpush1.bf16.msra.mxu0 %v2697
    %4150 = vmatprep.subr.bf16.mxu0 %v2694
    %4151 = vmatpush1.bf16.msra.mxu0 %v2693
    %4152 = vmatprep.subr.bf16.mxu0 %v2690
    %4153 = vmatpush1.bf16.msra.mxu0 %v2689
    %4154 = vmatprep.subr.bf16.mxu0 %v2686
    %4155 = vmatpush1.bf16.msra.mxu0 %v2685
    %4156 = vmatprep.subr.bf16.mxu0 %v2682
    %4157 = vmatpush1.bf16.msra.mxu0 %v2681
    %4158 = vmatprep.subr.bf16.mxu0 %v2678
    %4159 = vmatpush1.bf16.msra.mxu0 %v2677
    %4160 = vmatprep.subr.bf16.mxu0 %v2674
    %4161 = vmatpush1.bf16.msra.mxu0 %v2673
    %4162 = vmatprep.subr.bf16.mxu0 %v2734
    %4163 = vmatpush2.bf16.msra.mxu0 %v2733
    %4164 = vmatprep.subr.bf16.mxu0 %v2730
    %4165 = vmatpush2.bf16.msra.mxu0 %v2729
    %4166 = vmatprep.subr.bf16.mxu0 %v2726
    %4167 = vmatpush2.bf16.msra.mxu0 %v2725
    %4168 = vmatprep.subr.bf16.mxu0 %v2722
    %4169 = vmatpush2.bf16.msra.mxu0 %v2721
    %4170 = vmatprep.subr.bf16.mxu0 %v2718
    %4171 = vmatpush2.bf16.msra.mxu0 %v2717
    %4172 = vmatprep.subr.bf16.mxu0 %v2714
    %4173 = vmatpush2.bf16.msra.mxu0 %v2713
    %4174 = vmatprep.subr.bf16.mxu0 %v2710
    %4175 = vmatpush2.bf16.msra.mxu0 %v2709
    %4176 = vmatprep.subr.bf16.mxu0 %v2706
    %4177 = vmatpush2.bf16.msra.mxu0 %v2705
    %4178 = vmatprep.mubr.bf16.mxu0 %v721
    %4179 = vmatmul.mubr.bf16.gmra.mxu0 %v707
    %v4180 = vpop.f32.mrf.mxu0
    %v4181 = vadd.f32 %v4140, %v4180
    %v4182 = vpop.f32.mrf.mxu0
    %v4183 = vadd.f32 %v4142, %v4182
    %v4184 = vpop.f32.mrf.mxu0
    %v4185 = vpop.f32.mrf.mxu0
    %4186 = vdwg.mxu0
    %4187 = vmatprep.subr.bf16.mxu0 %v2766
    %4188 = vmatpush1.bf16.msra.mxu0 %v2765
    %4189 = vmatprep.subr.bf16.mxu0 %v2762
    %4190 = vmatpush1.bf16.msra.mxu0 %v2761
    %4191 = vmatprep.subr.bf16.mxu0 %v2758
    %4192 = vmatpush1.bf16.msra.mxu0 %v2757
    %4193 = vmatprep.subr.bf16.mxu0 %v2754
    %4194 = vmatpush1.bf16.msra.mxu0 %v2753
    %4195 = vmatprep.subr.bf16.mxu0 %v2750
    %4196 = vmatpush1.bf16.msra.mxu0 %v2749
    %4197 = vmatprep.subr.bf16.mxu0 %v2746
    %4198 = vmatpush1.bf16.msra.mxu0 %v2745
    %4199 = vmatprep.subr.bf16.mxu0 %v2742
    %4200 = vmatpush1.bf16.msra.mxu0 %v2741
    %4201 = vmatprep.subr.bf16.mxu0 %v2738
    %4202 = vmatpush1.bf16.msra.mxu0 %v2737
    %4203 = vmatprep.subr.bf16.mxu0 %v2798
    %4204 = vmatpush2.bf16.msra.mxu0 %v2797
    %4205 = vmatprep.subr.bf16.mxu0 %v2794
    %4206 = vmatpush2.bf16.msra.mxu0 %v2793
    %4207 = vmatprep.subr.bf16.mxu0 %v2790
    %4208 = vmatpush2.bf16.msra.mxu0 %v2789
    %4209 = vmatprep.subr.bf16.mxu0 %v2786
    %4210 = vmatpush2.bf16.msra.mxu0 %v2785
    %4211 = vmatprep.subr.bf16.mxu0 %v2782
    %4212 = vmatpush2.bf16.msra.mxu0 %v2781
    %4213 = vmatprep.subr.bf16.mxu0 %v2778
    %4214 = vmatpush2.bf16.msra.mxu0 %v2777
    %4215 = vmatprep.subr.bf16.mxu0 %v2774
    %4216 = vmatpush2.bf16.msra.mxu0 %v2773
    %4217 = vmatprep.subr.bf16.mxu0 %v2770
    %4218 = vmatpush2.bf16.msra.mxu0 %v2769
    %4219 = vmatprep.mubr.bf16.mxu0 %v725
    %4220 = vmatmul.mubr.bf16.gmra.mxu0 %v723
    %v4221 = vpop.f32.mrf.mxu0
    %v4222 = vadd.f32 %v4181, %v4221
    %v4223 = vpop.f32.mrf.mxu0
    %v4224 = vadd.f32 %v4183, %v4223
    %v4225 = vpop.f32.mrf.mxu0
    %v4226 = vpop.f32.mrf.mxu0
    %4227 = vdwg.mxu0
    %4228 = vmatprep.subr.bf16.mxu0 %v2830
    %4229 = vmatpush1.bf16.msra.mxu0 %v2829
    %4230 = vmatprep.subr.bf16.mxu0 %v2826
    %4231 = vmatpush1.bf16.msra.mxu0 %v2825
    %4232 = vmatprep.subr.bf16.mxu0 %v2822
    %4233 = vmatpush1.bf16.msra.mxu0 %v2821
    %4234 = vmatprep.subr.bf16.mxu0 %v2818
    %4235 = vmatpush1.bf16.msra.mxu0 %v2817
    %4236 = vmatprep.subr.bf16.mxu0 %v2814
    %4237 = vmatpush1.bf16.msra.mxu0 %v2813
    %4238 = vmatprep.subr.bf16.mxu0 %v2810
    %4239 = vmatpush1.bf16.msra.mxu0 %v2809
    %4240 = vmatprep.subr.bf16.mxu0 %v2806
    %4241 = vmatpush1.bf16.msra.mxu0 %v2805
    %4242 = vmatprep.subr.bf16.mxu0 %v2802
    %4243 = vmatpush1.bf16.msra.mxu0 %v2801
    %4244 = vmatprep.subr.bf16.mxu0 %v2862
    %4245 = vmatpush2.bf16.msra.mxu0 %v2861
    %4246 = vmatprep.subr.bf16.mxu0 %v2858
    %4247 = vmatpush2.bf16.msra.mxu0 %v2857
    %4248 = vmatprep.subr.bf16.mxu0 %v2854
    %4249 = vmatpush2.bf16.msra.mxu0 %v2853
    %4250 = vmatprep.subr.bf16.mxu0 %v2850
    %4251 = vmatpush2.bf16.msra.mxu0 %v2849
    %4252 = vmatprep.subr.bf16.mxu0 %v2846
    %4253 = vmatpush2.bf16.msra.mxu0 %v2845
    %4254 = vmatprep.subr.bf16.mxu0 %v2842
    %4255 = vmatpush2.bf16.msra.mxu0 %v2841
    %4256 = vmatprep.subr.bf16.mxu0 %v2838
    %4257 = vmatpush2.bf16.msra.mxu0 %v2837
    %4258 = vmatprep.subr.bf16.mxu0 %v2834
    %4259 = vmatpush2.bf16.msra.mxu0 %v2833
    %4260 = vmatprep.mubr.bf16.mxu0 %v763
    %4261 = vmatmul.mubr.bf16.gmra.mxu0 %v749
    %v4262 = vpop.f32.mrf.mxu0
    %v4263 = vadd.f32 %v4222, %v4262
    %v4264 = vpop.f32.mrf.mxu0
    %v4265 = vadd.f32 %v4224, %v4264
    %v4266 = vpop.f32.mrf.mxu0
    %v4267 = vpop.f32.mrf.mxu0
    %4268 = vdwg.mxu0
    %4269 = vmatprep.subr.bf16.mxu0 %v2894
    %4270 = vmatpush1.bf16.msra.mxu0 %v2893
    %4271 = vmatprep.subr.bf16.mxu0 %v2890
    %4272 = vmatpush1.bf16.msra.mxu0 %v2889
    %4273 = vmatprep.subr.bf16.mxu0 %v2886
    %4274 = vmatpush1.bf16.msra.mxu0 %v2885
    %4275 = vmatprep.subr.bf16.mxu0 %v2882
    %4276 = vmatpush1.bf16.msra.mxu0 %v2881
    %4277 = vmatprep.subr.bf16.mxu0 %v2878
    %4278 = vmatpush1.bf16.msra.mxu0 %v2877
    %4279 = vmatprep.subr.bf16.mxu0 %v2874
    %4280 = vmatpush1.bf16.msra.mxu0 %v2873
    %4281 = vmatprep.subr.bf16.mxu0 %v2870
    %4282 = vmatpush1.bf16.msra.mxu0 %v2869
    %4283 = vmatprep.subr.bf16.mxu0 %v2866
    %4284 = vmatpush1.bf16.msra.mxu0 %v2865
    %4285 = vmatprep.subr.bf16.mxu0 %v2926
    %4286 = vmatpush2.bf16.msra.mxu0 %v2925
    %4287 = vmatprep.subr.bf16.mxu0 %v2922
    %4288 = vmatpush2.bf16.msra.mxu0 %v2921
    %4289 = vmatprep.subr.bf16.mxu0 %v2918
    %4290 = vmatpush2.bf16.msra.mxu0 %v2917
    %4291 = vmatprep.subr.bf16.mxu0 %v2914
    %4292 = vmatpush2.bf16.msra.mxu0 %v2913
    %4293 = vmatprep.subr.bf16.mxu0 %v2910
    %4294 = vmatpush2.bf16.msra.mxu0 %v2909
    %4295 = vmatprep.subr.bf16.mxu0 %v2906
    %4296 = vmatpush2.bf16.msra.mxu0 %v2905
    %4297 = vmatprep.subr.bf16.mxu0 %v2902
    %4298 = vmatpush2.bf16.msra.mxu0 %v2901
    %4299 = vmatprep.subr.bf16.mxu0 %v2898
    %4300 = vmatpush2.bf16.msra.mxu0 %v2897
    %4301 = vmatprep.mubr.bf16.mxu0 %v773
    %4302 = vmatmul.mubr.bf16.gmra.mxu0 %v771
    %v4303 = vpop.f32.mrf.mxu0
    %v4304 = vadd.f32 %v4263, %v4303
    %v4305 = vpop.f32.mrf.mxu0
    %v4306 = vadd.f32 %v4265, %v4305
    %v4307 = vpop.f32.mrf.mxu0
    %v4308 = vpop.f32.mrf.mxu0
    %4309 = vdwg.mxu0
    %4310 = vmatprep.subr.bf16.mxu0 %v2958
    %4311 = vmatpush1.bf16.msra.mxu0 %v2957
    %4312 = vmatprep.subr.bf16.mxu0 %v2954
    %4313 = vmatpush1.bf16.msra.mxu0 %v2953
    %4314 = vmatprep.subr.bf16.mxu0 %v2950
    %4315 = vmatpush1.bf16.msra.mxu0 %v2949
    %4316 = vmatprep.subr.bf16.mxu0 %v2946
    %4317 = vmatpush1.bf16.msra.mxu0 %v2945
    %4318 = vmatprep.subr.bf16.mxu0 %v2942
    %4319 = vmatpush1.bf16.msra.mxu0 %v2941
    %4320 = vmatprep.subr.bf16.mxu0 %v2938
    %4321 = vmatpush1.bf16.msra.mxu0 %v2937
    %4322 = vmatprep.subr.bf16.mxu0 %v2934
    %4323 = vmatpush1.bf16.msra.mxu0 %v2933
    %4324 = vmatprep.subr.bf16.mxu0 %v2930
    %4325 = vmatpush1.bf16.msra.mxu0 %v2929
    %4326 = vmatprep.subr.bf16.mxu0 %v2990
    %4327 = vmatpush2.bf16.msra.mxu0 %v2989
    %4328 = vmatprep.subr.bf16.mxu0 %v2986
    %4329 = vmatpush2.bf16.msra.mxu0 %v2985
    %4330 = vmatprep.subr.bf16.mxu0 %v2982
    %4331 = vmatpush2.bf16.msra.mxu0 %v2981
    %4332 = vmatprep.subr.bf16.mxu0 %v2978
    %4333 = vmatpush2.bf16.msra.mxu0 %v2977
    %4334 = vmatprep.subr.bf16.mxu0 %v2974
    %4335 = vmatpush2.bf16.msra.mxu0 %v2973
    %4336 = vmatprep.subr.bf16.mxu0 %v2970
    %4337 = vmatpush2.bf16.msra.mxu0 %v2969
    %4338 = vmatprep.subr.bf16.mxu0 %v2966
    %4339 = vmatpush2.bf16.msra.mxu0 %v2965
    %4340 = vmatprep.subr.bf16.mxu0 %v2962
    %4341 = vmatpush2.bf16.msra.mxu0 %v2961
    %4342 = vmatprep.mubr.bf16.mxu0 %v770
    %4343 = vmatmul.mubr.bf16.gmra.mxu0 %v756
    %v4344 = vpop.f32.mrf.mxu0
    %v4345 = vadd.f32 %v4304, %v4344
    %v4346 = vpop.f32.mrf.mxu0
    %v4347 = vadd.f32 %v4306, %v4346
    %v4348 = vpop.f32.mrf.mxu0
    %v4349 = vpop.f32.mrf.mxu0
    %4350 = vdwg.mxu0
    %4351 = vmatprep.subr.bf16.mxu0 %v3022
    %4352 = vmatpush1.bf16.msra.mxu0 %v3021
    %4353 = vmatprep.subr.bf16.mxu0 %v3018
    %4354 = vmatpush1.bf16.msra.mxu0 %v3017
    %4355 = vmatprep.subr.bf16.mxu0 %v3014
    %4356 = vmatpush1.bf16.msra.mxu0 %v3013
    %4357 = vmatprep.subr.bf16.mxu0 %v3010
    %4358 = vmatpush1.bf16.msra.mxu0 %v3009
    %4359 = vmatprep.subr.bf16.mxu0 %v3006
    %4360 = vmatpush1.bf16.msra.mxu0 %v3005
    %4361 = vmatprep.subr.bf16.mxu0 %v3002
    %4362 = vmatpush1.bf16.msra.mxu0 %v3001
    %4363 = vmatprep.subr.bf16.mxu0 %v2998
    %4364 = vmatpush1.bf16.msra.mxu0 %v2997
    %4365 = vmatprep.subr.bf16.mxu0 %v2994
    %4366 = vmatpush1.bf16.msra.mxu0 %v2993
    %4367 = vmatprep.subr.bf16.mxu0 %v3054
    %4368 = vmatpush2.bf16.msra.mxu0 %v3053
    %4369 = vmatprep.subr.bf16.mxu0 %v3050
    %4370 = vmatpush2.bf16.msra.mxu0 %v3049
    %4371 = vmatprep.subr.bf16.mxu0 %v3046
    %4372 = vmatpush2.bf16.msra.mxu0 %v3045
    %4373 = vmatprep.subr.bf16.mxu0 %v3042
    %4374 = vmatpush2.bf16.msra.mxu0 %v3041
    %4375 = vmatprep.subr.bf16.mxu0 %v3038
    %4376 = vmatpush2.bf16.msra.mxu0 %v3037
    %4377 = vmatprep.subr.bf16.mxu0 %v3034
    %4378 = vmatpush2.bf16.msra.mxu0 %v3033
    %4379 = vmatprep.subr.bf16.mxu0 %v3030
    %4380 = vmatpush2.bf16.msra.mxu0 %v3029
    %4381 = vmatprep.subr.bf16.mxu0 %v3026
    %4382 = vmatpush2.bf16.msra.mxu0 %v3025
    %4383 = vmatprep.mubr.bf16.mxu0 %v774
    %4384 = vmatmul.mubr.bf16.gmra.mxu0 %v772
    %v4385 = vpop.f32.mrf.mxu0
    %v4386 = vadd.f32 %v4345, %v4385
    %v4387 = vpop.f32.mrf.mxu0
    %v4388 = vadd.f32 %v4347, %v4387
    %v4389 = vpop.f32.mrf.mxu0
    %v4390 = vpop.f32.mrf.mxu0
    %4391 = vdwg.mxu0
    %4392 = vmatprep.subr.bf16.mxu0 %v3086
    %4393 = vmatpush1.bf16.msra.mxu0 %v3085
    %4394 = vmatprep.subr.bf16.mxu0 %v3082
    %4395 = vmatpush1.bf16.msra.mxu0 %v3081
    %4396 = vmatprep.subr.bf16.mxu0 %v3078
    %4397 = vmatpush1.bf16.msra.mxu0 %v3077
    %4398 = vmatprep.subr.bf16.mxu0 %v3074
    %4399 = vmatpush1.bf16.msra.mxu0 %v3073
    %4400 = vmatprep.subr.bf16.mxu0 %v3070
    %4401 = vmatpush1.bf16.msra.mxu0 %v3069
    %4402 = vmatprep.subr.bf16.mxu0 %v3066
    %4403 = vmatpush1.bf16.msra.mxu0 %v3065
    %4404 = vmatprep.subr.bf16.mxu0 %v3062
    %4405 = vmatpush1.bf16.msra.mxu0 %v3061
    %4406 = vmatprep.subr.bf16.mxu0 %v3058
    %4407 = vmatpush1.bf16.msra.mxu0 %v3057
    %4408 = vmatprep.subr.bf16.mxu0 %v3118
    %4409 = vmatpush2.bf16.msra.mxu0 %v3117
    %4410 = vmatprep.subr.bf16.mxu0 %v3114
    %4411 = vmatpush2.bf16.msra.mxu0 %v3113
    %4412 = vmatprep.subr.bf16.mxu0 %v3110
    %4413 = vmatpush2.bf16.msra.mxu0 %v3109
    %4414 = vmatprep.subr.bf16.mxu0 %v3106
    %4415 = vmatpush2.bf16.msra.mxu0 %v3105
    %4416 = vmatprep.subr.bf16.mxu0 %v3102
    %4417 = vmatpush2.bf16.msra.mxu0 %v3101
    %4418 = vmatprep.subr.bf16.mxu0 %v3098
    %4419 = vmatpush2.bf16.msra.mxu0 %v3097
    %4420 = vmatprep.subr.bf16.mxu0 %v3094
    %4421 = vmatpush2.bf16.msra.mxu0 %v3093
    %4422 = vmatprep.subr.bf16.mxu0 %v3090
    %4423 = vmatpush2.bf16.msra.mxu0 %v3089
    %4424 = vmatprep.mubr.bf16.mxu0 %v796
    %4425 = vmatmul.mubr.bf16.gmra.mxu0 %v789
    %v4426 = vpop.f32.mrf.mxu0
    %v4427 = vadd.f32 %v4386, %v4426
    %v4428 = vpop.f32.mrf.mxu0
    %v4429 = vadd.f32 %v4388, %v4428
    %v4430 = vpop.f32.mrf.mxu0
    %v4431 = vpop.f32.mrf.mxu0
    %4432 = vdwg.mxu0
    %v4433 = vmax.f32 %v4058, 0.0
    %v4434 = vmax.f32 %v4060, 0.0
    %v4435 = vmax.f32 %v4427, 0.0
    %v4436 = vmax.f32 %v4429, 0.0
    %v4437 = vpack.c.bf16 %v4433, %v4433
    %v4438 = vpack.c.bf16 %v4434, %v4434
    %v4439 = vpack.c.bf16 %v4435, %v4435
    %v4440 = vpack.c.bf16 %v4436, %v4436
    %v4441 = vld [vmem:[#allocation7] sm:$0xf]
    %v4442 = vld [vmem:[#allocation7 + $0x4] sm:$0xf]
    %v4443 = vld [vmem:[#allocation7 + $0x8] sm:$0xf]
    %v4444 = vld [vmem:[#allocation7 + $0xc] sm:$0xf]
    %v4445 = vld [vmem:[#allocation7 + $0x10] sm:$0xf]
    %v4446 = vld [vmem:[#allocation7 + $0x14] sm:$0xf]
    %v4447 = vld [vmem:[#allocation7 + $0x18] sm:$0xf]
    %v4448 = vld [vmem:[#allocation7 + $0x1c] sm:$0xf]
    %v4449 = vld [vmem:[#allocation7 + $0x20] sm:$0xf]
    %v4450 = vld [vmem:[#allocation7 + $0x24] sm:$0xf]
    %v4451 = vld [vmem:[#allocation7 + $0x28] sm:$0xf]
    %v4452 = vld [vmem:[#allocation7 + $0x2c] sm:$0xf]
    %v4453 = vld [vmem:[#allocation7 + $0x30] sm:$0xf]
    %v4454 = vld [vmem:[#allocation7 + $0x34] sm:$0xf]
    %v4455 = vld [vmem:[#allocation7 + $0x38] sm:$0xf]
    %v4456 = vld [vmem:[#allocation7 + $0x3c] sm:$0xf]
    %v4457 = vld [vmem:[#allocation7 + $0x40] sm:$0xf]
    %v4458 = vld [vmem:[#allocation7 + $0x44] sm:$0xf]
    %v4459 = vld [vmem:[#allocation7 + $0x48] sm:$0xf]
    %v4460 = vld [vmem:[#allocation7 + $0x4c] sm:$0xf]
    %v4461 = vld [vmem:[#allocation7 + $0x50] sm:$0xf]
    %v4462 = vld [vmem:[#allocation7 + $0x54] sm:$0xf]
    %v4463 = vld [vmem:[#allocation7 + $0x58] sm:$0xf]
    %v4464 = vld [vmem:[#allocation7 + $0x5c] sm:$0xf]
    %v4465 = vld [vmem:[#allocation7 + $0x60] sm:$0xf]
    %v4466 = vld [vmem:[#allocation7 + $0x64] sm:$0xf]
    %v4467 = vld [vmem:[#allocation7 + $0x68] sm:$0xf]
    %v4468 = vld [vmem:[#allocation7 + $0x6c] sm:$0xf]
    %v4469 = vld [vmem:[#allocation7 + $0x70] sm:$0xf]
    %v4470 = vld [vmem:[#allocation7 + $0x74] sm:$0xf]
    %v4471 = vld [vmem:[#allocation7 + $0x78] sm:$0xf]
    %v4472 = vld [vmem:[#allocation7 + $0x7c] sm:$0xf]
    %v4473 = vld [vmem:[#allocation7 + $0x80] sm:$0xf]
    %v4474 = vld [vmem:[#allocation7 + $0x84] sm:$0xf]
    %v4475 = vld [vmem:[#allocation7 + $0x88] sm:$0xf]
    %v4476 = vld [vmem:[#allocation7 + $0x8c] sm:$0xf]
    %v4477 = vld [vmem:[#allocation7 + $0x90] sm:$0xf]
    %v4478 = vld [vmem:[#allocation7 + $0x94] sm:$0xf]
    %v4479 = vld [vmem:[#allocation7 + $0x98] sm:$0xf]
    %v4480 = vld [vmem:[#allocation7 + $0x9c] sm:$0xf]
    %v4481 = vld [vmem:[#allocation7 + $0xa0] sm:$0xf]
    %v4482 = vld [vmem:[#allocation7 + $0xa4] sm:$0xf]
    %v4483 = vld [vmem:[#allocation7 + $0xa8] sm:$0xf]
    %v4484 = vld [vmem:[#allocation7 + $0xac] sm:$0xf]
    %v4485 = vld [vmem:[#allocation7 + $0xb0] sm:$0xf]
    %v4486 = vld [vmem:[#allocation7 + $0xb4] sm:$0xf]
    %v4487 = vld [vmem:[#allocation7 + $0xb8] sm:$0xf]
    %v4488 = vld [vmem:[#allocation7 + $0xbc] sm:$0xf]
    %v4489 = vld [vmem:[#allocation7 + $0xc0] sm:$0xf]
    %v4490 = vld [vmem:[#allocation7 + $0xc4] sm:$0xf]
    %v4491 = vld [vmem:[#allocation7 + $0xc8] sm:$0xf]
    %v4492 = vld [vmem:[#allocation7 + $0xcc] sm:$0xf]
    %v4493 = vld [vmem:[#allocation7 + $0xd0] sm:$0xf]
    %v4494 = vld [vmem:[#allocation7 + $0xd4] sm:$0xf]
    %v4495 = vld [vmem:[#allocation7 + $0xd8] sm:$0xf]
    %v4496 = vld [vmem:[#allocation7 + $0xdc] sm:$0xf]
    %v4497 = vld [vmem:[#allocation7 + $0xe0] sm:$0xf]
    %v4498 = vld [vmem:[#allocation7 + $0xe4] sm:$0xf]
    %v4499 = vld [vmem:[#allocation7 + $0xe8] sm:$0xf]
    %v4500 = vld [vmem:[#allocation7 + $0xec] sm:$0xf]
    %v4501 = vld [vmem:[#allocation7 + $0xf0] sm:$0xf]
    %v4502 = vld [vmem:[#allocation7 + $0xf4] sm:$0xf]
    %v4503 = vld [vmem:[#allocation7 + $0xf8] sm:$0xf]
    %v4504 = vld [vmem:[#allocation7 + $0xfc] sm:$0xf]
    %v4505 = vld [vmem:[#allocation8] sm:$0x1]
    %v4507 = vlaneseq
    %v4508 = vshrl.u32 %v4507, 7
    %v4509 = vsub.s32 0, %v4508
    %v4510 = vrot.slane %v4505, %v4509
    %v4576 = vunpack.c.l.b16 %v4441
    %v4577 = vunpack.c.l.b16 %v4442
    %v4578 = vunpack.c.l.b16 %v4443
    %v4579 = vunpack.c.l.b16 %v4444
    %v4580 = vunpack.c.l.b16 %v4445
    %v4581 = vunpack.c.l.b16 %v4446
    %v4582 = vunpack.c.l.b16 %v4447
    %v4583 = vunpack.c.l.b16 %v4448
    %v4584 = vunpack.c.l.b16 %v4449
    %v4585 = vunpack.c.l.b16 %v4450
    %v4586 = vunpack.c.l.b16 %v4451
    %v4587 = vunpack.c.l.b16 %v4452
    %v4588 = vunpack.c.l.b16 %v4453
    %v4589 = vunpack.c.l.b16 %v4454
    %v4590 = vunpack.c.l.b16 %v4455
    %v4591 = vunpack.c.l.b16 %v4456
    %v4592 = vunpack.c.l.b16 %v4457
    %v4593 = vunpack.c.l.b16 %v4458
    %v4594 = vunpack.c.l.b16 %v4459
    %v4595 = vunpack.c.l.b16 %v4460
    %v4596 = vunpack.c.l.b16 %v4461
    %v4597 = vunpack.c.l.b16 %v4462
    %v4598 = vunpack.c.l.b16 %v4463
    %v4599 = vunpack.c.l.b16 %v4464
    %v4600 = vunpack.c.l.b16 %v4465
    %v4601 = vunpack.c.l.b16 %v4466
    %v4602 = vunpack.c.l.b16 %v4467
    %v4603 = vunpack.c.l.b16 %v4468
    %v4604 = vunpack.c.l.b16 %v4469
    %v4605 = vunpack.c.l.b16 %v4470
    %v4606 = vunpack.c.l.b16 %v4471
    %v4607 = vunpack.c.l.b16 %v4472
    %v4608 = vunpack.c.l.b16 %v4473
    %v4609 = vunpack.c.l.b16 %v4474
    %v4610 = vunpack.c.l.b16 %v4475
    %v4611 = vunpack.c.l.b16 %v4476
    %v4612 = vunpack.c.l.b16 %v4477
    %v4613 = vunpack.c.l.b16 %v4478
    %v4614 = vunpack.c.l.b16 %v4479
    %v4615 = vunpack.c.l.b16 %v4480
    %v4616 = vunpack.c.l.b16 %v4481
    %v4617 = vunpack.c.l.b16 %v4482
    %v4618 = vunpack.c.l.b16 %v4483
    %v4619 = vunpack.c.l.b16 %v4484
    %v4620 = vunpack.c.l.b16 %v4485
    %v4621 = vunpack.c.l.b16 %v4486
    %v4622 = vunpack.c.l.b16 %v4487
    %v4623 = vunpack.c.l.b16 %v4488
    %v4624 = vunpack.c.l.b16 %v4489
    %v4625 = vunpack.c.l.b16 %v4490
    %v4626 = vunpack.c.l.b16 %v4491
    %v4627 = vunpack.c.l.b16 %v4492
    %v4628 = vunpack.c.l.b16 %v4493
    %v4629 = vunpack.c.l.b16 %v4494
    %v4630 = vunpack.c.l.b16 %v4495
    %v4631 = vunpack.c.l.b16 %v4496
    %v4632 = vunpack.c.l.b16 %v4497
    %v4633 = vunpack.c.l.b16 %v4498
    %v4634 = vunpack.c.l.b16 %v4499
    %v4635 = vunpack.c.l.b16 %v4500
    %v4636 = vunpack.c.l.b16 %v4501
    %v4637 = vunpack.c.l.b16 %v4502
    %v4638 = vunpack.c.l.b16 %v4503
    %v4639 = vunpack.c.l.b16 %v4504
    %v4640 = vpack.c.b16 %v4577, %v4576
    %v4641 = vpack.c.b16 %v4579, %v4578
    %v4642 = vpack.c.b16 %v4581, %v4580
    %v4643 = vpack.c.b16 %v4583, %v4582
    %v4644 = vpack.c.b16 %v4585, %v4584
    %v4645 = vpack.c.b16 %v4587, %v4586
    %v4646 = vpack.c.b16 %v4589, %v4588
    %v4647 = vpack.c.b16 %v4591, %v4590
    %v4648 = vpack.c.b16 %v4593, %v4592
    %v4649 = vpack.c.b16 %v4595, %v4594
    %v4650 = vpack.c.b16 %v4597, %v4596
    %v4651 = vpack.c.b16 %v4599, %v4598
    %v4652 = vpack.c.b16 %v4601, %v4600
    %v4653 = vpack.c.b16 %v4603, %v4602
    %v4654 = vpack.c.b16 %v4605, %v4604
    %v4655 = vpack.c.b16 %v4607, %v4606
    %v4656 = vpack.c.b16 %v4609, %v4608
    %v4657 = vpack.c.b16 %v4611, %v4610
    %v4658 = vpack.c.b16 %v4613, %v4612
    %v4659 = vpack.c.b16 %v4615, %v4614
    %v4660 = vpack.c.b16 %v4617, %v4616
    %v4661 = vpack.c.b16 %v4619, %v4618
    %v4662 = vpack.c.b16 %v4621, %v4620
    %v4663 = vpack.c.b16 %v4623, %v4622
    %v4664 = vpack.c.b16 %v4625, %v4624
    %v4665 = vpack.c.b16 %v4627, %v4626
    %v4666 = vpack.c.b16 %v4629, %v4628
    %v4667 = vpack.c.b16 %v4631, %v4630
    %v4668 = vpack.c.b16 %v4633, %v4632
    %v4669 = vpack.c.b16 %v4635, %v4634
    %v4670 = vpack.c.b16 %v4637, %v4636
    %v4671 = vpack.c.b16 %v4639, %v4638
    %4704 = vmatprep.subr.bf16.mxu0 0
    %4705 = vmatpush1.bf16.msra.mxu0 %v4647
    %4706 = vmatprep.subr.bf16.mxu0 0
    %4707 = vmatpush1.bf16.msra.mxu0 %v4646
    %4708 = vmatprep.subr.bf16.mxu0 0
    %4709 = vmatpush1.bf16.msra.mxu0 %v4645
    %4710 = vmatprep.subr.bf16.mxu0 0
    %4711 = vmatpush1.bf16.msra.mxu0 %v4644
    %4712 = vmatprep.subr.bf16.mxu0 0
    %4713 = vmatpush1.bf16.msra.mxu0 %v4643
    %4714 = vmatprep.subr.bf16.mxu0 0
    %4715 = vmatpush1.bf16.msra.mxu0 %v4642
    %4716 = vmatprep.subr.bf16.mxu0 0
    %4717 = vmatpush1.bf16.msra.mxu0 %v4641
    %4718 = vmatprep.subr.bf16.mxu0 0
    %4719 = vmatpush1.bf16.msra.mxu0 %v4640
    %4720 = vmatprep.subr.bf16.mxu0 0
    %4721 = vmatpush2.bf16.msra.mxu0 %v4655
    %4722 = vmatprep.subr.bf16.mxu0 0
    %4723 = vmatpush2.bf16.msra.mxu0 %v4654
    %4724 = vmatprep.subr.bf16.mxu0 0
    %4725 = vmatpush2.bf16.msra.mxu0 %v4653
    %4726 = vmatprep.subr.bf16.mxu0 0
    %4727 = vmatpush2.bf16.msra.mxu0 %v4652
    %4728 = vmatprep.subr.bf16.mxu0 0
    %4729 = vmatpush2.bf16.msra.mxu0 %v4651
    %4730 = vmatprep.subr.bf16.mxu0 0
    %4731 = vmatpush2.bf16.msra.mxu0 %v4650
    %4732 = vmatprep.subr.bf16.mxu0 0
    %4733 = vmatpush2.bf16.msra.mxu0 %v4649
    %4734 = vmatprep.subr.bf16.mxu0 0
    %4735 = vmatpush2.bf16.msra.mxu0 %v4648
    %4736 = vmatprep.mubr.bf16.mxu0 %v4438
    %4737 = vmatmul.mubr.bf16.gmra.mxu0 %v4437
    %v4738 = vpop.f32.mrf.mxu0
    %v4739 = vadd.f32 %v4510, %v4738
    %v4740 = vpop.f32.mrf.mxu0
    %v4741 = vpop.f32.mrf.mxu0
    %v4742 = vpop.f32.mrf.mxu0
    %4743 = vdwg.mxu0
    %4744 = vmatprep.subr.bf16.mxu0 0
    %4745 = vmatpush1.bf16.msra.mxu0 %v4663
    %4746 = vmatprep.subr.bf16.mxu0 0
    %4747 = vmatpush1.bf16.msra.mxu0 %v4662
    %4748 = vmatprep.subr.bf16.mxu0 0
    %4749 = vmatpush1.bf16.msra.mxu0 %v4661
    %4750 = vmatprep.subr.bf16.mxu0 0
    %4751 = vmatpush1.bf16.msra.mxu0 %v4660
    %4752 = vmatprep.subr.bf16.mxu0 0
    %4753 = vmatpush1.bf16.msra.mxu0 %v4659
    %4754 = vmatprep.subr.bf16.mxu0 0
    %4755 = vmatpush1.bf16.msra.mxu0 %v4658
    %4756 = vmatprep.subr.bf16.mxu0 0
    %4757 = vmatpush1.bf16.msra.mxu0 %v4657
    %4758 = vmatprep.subr.bf16.mxu0 0
    %4759 = vmatpush1.bf16.msra.mxu0 %v4656
    %4760 = vmatprep.subr.bf16.mxu0 0
    %4761 = vmatpush2.bf16.msra.mxu0 %v4671
    %4762 = vmatprep.subr.bf16.mxu0 0
    %4763 = vmatpush2.bf16.msra.mxu0 %v4670
    %4764 = vmatprep.subr.bf16.mxu0 0
    %4765 = vmatpush2.bf16.msra.mxu0 %v4669
    %4766 = vmatprep.subr.bf16.mxu0 0
    %4767 = vmatpush2.bf16.msra.mxu0 %v4668
    %4768 = vmatprep.subr.bf16.mxu0 0
    %4769 = vmatpush2.bf16.msra.mxu0 %v4667
    %4770 = vmatprep.subr.bf16.mxu0 0
    %4771 = vmatpush2.bf16.msra.mxu0 %v4666
    %4772 = vmatprep.subr.bf16.mxu0 0
    %4773 = vmatpush2.bf16.msra.mxu0 %v4665
    %4774 = vmatprep.subr.bf16.mxu0 0
    %4775 = vmatpush2.bf16.msra.mxu0 %v4664
    %4776 = vmatprep.mubr.bf16.mxu0 %v4440
    %4777 = vmatmul.mubr.bf16.gmra.mxu0 %v4439
    %v4778 = vpop.f32.mrf.mxu0
    %v4779 = vadd.f32 %v4739, %v4778
    %v4780 = vpop.f32.mrf.mxu0
    %v4781 = vpop.f32.mrf.mxu0
    %v4782 = vpop.f32.mrf.mxu0
    %4783 = vdwg.mxu0
    %vm4784 = vcmask 1041408
    %v4785 = vsel %vm4784, %v4779, -inf
    %4786 = vmax.xlane.f32.xlu0 %v4785
    %v4787 = vpop.xlane.xlu0 %4786
    %v4788 = vsub.f32 %v4779, %v4787
    %v4789 = vmul.f32 %v4788, 1.442695
    %v4790 = vpow.pop %v4789
    %v4791 = vsel %vm4784, %v4790, 0.0
    %4792 = vadd.xlane.f32.xlu0 %v4791
    %v4793 = vpop.xlane.xlu0 %4792
    %v4794 = vrcp.pop %v4793
    %v4795 = vmul.f32 %v4790, %v4794
    %4796 = vst [vmem:[#allocation10] sm:$0x3] %v4795
    // Predicated region
    $region38: #{net_forward.3} parent=1 // pred_check
      _
    $region39: #{net_forward.3} parent=1 // pred_check_branch
      %4798 = sbr.rel (0) target = $region41
    $region40: #{net_forward.3} parent=1 // pred_region
      %s4800 = ssub.s32 32, 32
      %4801 = vsyncadd [#allocation4], %s4800
      %s4803 = sshll.u32 [#allocation10], 4
      %s4804 = int_to_ptr.vmem [resolvable:$true] %s4803
      %4806 = dma.vmem_to_hbm [thread:$0]  %s4804, 32, %s5, [#allocation4]
    $region41: #{net_forward.3} parent=1 // pred_fallthru
      _
    // Predicated region
    $region42: #{net_forward.3} parent=1 // pred_check
      _
    $region43: #{net_forward.3} parent=1 // pred_check_branch
      %4808 = sbr.rel (0) target = $region45
    $region44: #{net_forward.3} parent=1 // pred_region
      %4809 = dma.done [#allocation4], 32
    $region45: #{net_forward.3} parent=1 // pred_fallthru
      _
    %4810 = vsyncpa [#allocation3], 1
    %4811 = vsyncpa [#allocation6], 1
    %4812 = vsyncpa [#allocation9], 1
    %4813 = vsyncpa [#allocation4], 1

</llo_original>
